<compile_context>
chip_gen: v7x
topology: tpu7x:2x2x1
jax: 0.10.0
libtpu: 0.0.40
codegen_flags: <defaults>
</compile_context>

<pallas_src>
import functools

import jax
import jax.numpy as jnp
from jax import lax
from jax.experimental import pallas as pl
from jax.experimental.pallas import tpu as pltpu


def _make_divisible(v, divisor=8, min_value=None):
    if min_value is None:
        min_value = divisor
    new_v = max(min_value, int(v + divisor / 2) // divisor * divisor)
    if new_v < 0.9 * v:
        new_v += divisor
    return new_v


# --------------------------------------------------------------------------
# Fused LFFN block kernel (one batch block per grid step, everything in VMEM)
# --------------------------------------------------------------------------
def lffn_kernel(x_ref,
                dww_r_ref, dwb_r_ref, sw1_r_ref, sb1_r_ref, sw2_r_ref, sb2_r_ref,
                dww_e_ref, dwb_e_ref, sw1_e_ref, sb1_e_ref, sw2_e_ref, sb2_e_ref,
                expw_ref, redw_ref,
                out_ref,
                pad_c_ref, pad_h_ref, y_c_ref, y_h_ref,
                *, K, PW, RH, use_res, compute_dtype, vpu_dtype):
    bb, H, W, C = x_ref.shape
    hidden = expw_ref.shape[1]
    pad = K // 2
    n_strips = H // RH
    f32 = jnp.float32

    # ---- zero only the halo strips the taps read (read window: all rows,
    # cols [PW-pad, PW+W+pad)).  The interior is fully rewritten before each
    # tap pass.  Done every step: under megacore each core owns its scratch.
    def zero_halo(ref):
        cc = ref.shape[-1]
        zrow = jnp.zeros((bb, pad, W + 2 * pad, cc), ref.dtype)
        ref[:, 0:pad, PW - pad:PW + W + pad, :] = zrow                   # top
        ref[:, pad + H:pad + H + pad, PW - pad:PW + W + pad, :] = zrow   # bottom
        zcol = jnp.zeros((bb, H, pad, cc), ref.dtype)
        ref[:, pad:pad + H, PW - pad:PW, :] = zcol                       # left
        ref[:, pad:pad + H, PW + W:PW + W + pad, :] = zcol               # right

    zero_halo(pad_c_ref)
    zero_halo(pad_h_ref)

    def mm(a, b):
        # MXU matmul: bf16 operands (default), f32 accumulation.
        return jnp.dot(a.astype(compute_dtype), b.astype(compute_dtype),
                       preferred_element_type=jnp.float32)

    def dw_block(pad_ref, y_ref, dww_ref, dwb_ref, w1_ref, b1_ref, w2_ref,
                 b2_ref, consume_strip):
        """depthwise KxK SAME conv (+bias) -> h_swish -> SE.  The SE-scaled
        result is handed to consume_strip(row0, strip) one H-strip at a time,
        so no full-size hidden-width value stays live in vregs."""
        Cc = pad_ref.shape[-1]
        w = dww_ref[...].astype(vpu_dtype)                               # (K,K,Cc)
        bias = jnp.broadcast_to(
            dwb_ref[...].reshape(1, 1, 1, Cc).astype(vpu_dtype),
            (bb, RH, W, Cc))

        # pass 1: taps + h_swish per strip (stored to VMEM); pooled channel
        # sums accumulate in a small f32 carry.
        def tap_body(r, pool):
            r0 = pl.multiple_of(r * RH, RH)
            acc = bias
            # Hoist the sublane (W) realignment: one narrow ref read per W
            # tap, then only cheap leading-dim (row) slices inside.
            for dw_i in range(K):
                c0 = PW + dw_i - pad
                col = pad_ref[:, pl.ds(r0, RH + 2 * pad), c0:c0 + W, :]
                col = col.astype(vpu_dtype)
                for dh_i in range(K):
                    acc = acc + col[:, dh_i:dh_i + RH, :, :] * w[dh_i, dw_i, :]
            # h_swish: x * relu6(x + 3) / 6
            y = acc * (jnp.clip(acc + 3.0, 0.0, 6.0) * (1.0 / 6.0))
            y_ref[:, pl.ds(r0, RH), :, :] = y.astype(y_ref.dtype)
            return pool + jnp.sum(y.astype(f32), axis=(1, 2))

        pool = lax.fori_loop(0, n_strips, tap_body,
                             jnp.zeros((bb, Cc), f32), unroll=True)

        # SE (batched over bb images): avg-pool -> fc1 -> relu -> fc2 -> h_sigmoid
        pooled = pool * (1.0 / (H * W))                                  # (bb,Cc)
        h = jnp.maximum(mm(pooled, w1_ref[...]) + b1_ref[...].astype(f32), 0.0)
        s = mm(h, w2_ref[...]) + b2_ref[...].astype(f32)
        s = jnp.clip(s + 3.0, 0.0, 6.0) * (1.0 / 6.0)                    # (bb,Cc)
        s_b = jnp.broadcast_to(s.astype(y_ref.dtype)[:, None, None, :],
                               (bb, RH, W, Cc))                          # hoisted

        # pass 2: SE scale + fused consumer (expand / reduce / residual+out).
        def cons_body(r, carry):
            r0 = pl.multiple_of(r * RH, RH)
            consume_strip(r0, y_ref[:, pl.ds(r0, RH), :, :] * s_b)
            return carry

        lax.fori_loop(0, n_strips, cons_body, jnp.int32(0), unroll=True)

    # stage the input block into the C-wide halo scratch interior
    # (W offset PW -> 8-sublane-aligned store; halo stays zero).
    pad_c_ref[:, pad:pad + H, PW:PW + W, :] = x_ref[...].astype(pad_c_ref.dtype)

    # 1) dw_conv_block_regular; consumer fuses the expand 1x1 and writes the
    #    hidden-wide halo scratch interior (2C tensor never leaves VMEM).
    def expand_consume(r0, ystrip):
        e = mm(ystrip.reshape(bb * RH * W, C), expw_ref[...])
        pad_h_ref[:, pl.ds(pad + r0, RH), PW:PW + W, :] = (
            e.reshape(bb, RH, W, hidden).astype(pad_h_ref.dtype))

    dw_block(pad_c_ref, y_c_ref,
             dww_r_ref, dwb_r_ref, sw1_r_ref, sb1_r_ref, sw2_r_ref, sb2_r_ref,
             expand_consume)

    # 2) dw_conv_block_expanded; consumer fuses the reduce 1x1 and refills the
    #    C-wide halo scratch interior for the third dw block.
    def reduce_consume(r0, ystrip):
        rdc = mm(ystrip.reshape(bb * RH * W, hidden), redw_ref[...])
        pad_c_ref[:, pl.ds(pad + r0, RH), PW:PW + W, :] = (
            rdc.reshape(bb, RH, W, C).astype(pad_c_ref.dtype))

    dw_block(pad_h_ref, y_h_ref,
             dww_e_ref, dwb_e_ref, sw1_e_ref, sb1_e_ref, sw2_e_ref, sb2_e_ref,
             reduce_consume)

    # 3) dw_conv_block_regular again (shared weights); consumer fuses the
    #    residual add and writes straight into the lane-dense output block.
    def out_consume(r0, ystrip):
        o = ystrip.astype(f32)
        if use_res:
            o = o + x_ref[:, pl.ds(r0, RH), :, :].astype(f32)
        out_ref[:, pl.ds(r0, RH), :, :] = o.astype(out_ref.dtype)

    dw_block(pad_c_ref, y_c_ref,
             dww_r_ref, dwb_r_ref, sw1_r_ref, sb1_r_ref, sw2_r_ref, sb2_r_ref,
             out_consume)


# --------------------------------------------------------------------------
# Generation-aware sizing helpers (chooser and vmem_limit share accounting)
# --------------------------------------------------------------------------
def _default_vpu_dtype():
    # v5e and older have no bf16 VALU; v6e / v7x do.
    try:
        kind = jax.devices()[0].device_kind.lower()
    except Exception:
        return jnp.float32
    if ("v6" in kind) or ("v7" in kind) or ("7x" in kind):
        return jnp.bfloat16
    return jnp.float32


def _vmem_capacity_bytes():
    try:
        return int(pltpu.get_tpu_info().vmem_capacity_bytes)
    except Exception:
        return 64 << 20            # conservative: v7x per-core VMEM


def _row_strip(H):
    """Largest divisor of H that is <= 8 rows (bounds per-strip live values)."""
    best = 1
    for d in range(1, min(H, 8) + 1):
        if H % d == 0:
            best = d
    return best


def _vmem_plan_bytes(bb, H, W, C, hidden, K, PW, RH, vpu_bytes, io_bytes,
                     weight_bytes):
    pad = K // 2
    hp, wp = H + 2 * pad, PW + W + pad
    scratch = bb * (hp * wp + H * W) * (C + hidden) * vpu_bytes   # halo + y bufs
    io = 2 * 2 * bb * H * W * C * io_bytes                        # in+out, double-buffered
    live = 6 * bb * RH * W * hidden * 4                           # strip working values
    return scratch + io + live + 2 * weight_bytes + (4 << 20)     # + headroom


def _choose_batch_block(B, H, W, C, hidden, K, PW, RH, vpu_bytes, io_bytes,
                        weight_bytes, budget):
    fits = [d for d in range(1, B + 1) if B % d == 0 and
            _vmem_plan_bytes(d, H, W, C, hidden, K, PW, RH, vpu_bytes,
                             io_bytes, weight_bytes) <= budget]
    if not fits:
        return 1
    for min_steps in (4, 2):       # >=2 grid steps per TensorCore on a 2-core chip
        cand = [d for d in fits if B // d >= min_steps]
        if cand:
            return max(cand)
    return max(fits)


# --------------------------------------------------------------------------
# Wrapper
# --------------------------------------------------------------------------
def lffn_forward(x, H, W, params, use_res_connect=True, *,
                 batch_block=None, compute_dtype=jnp.bfloat16, vpu_dtype=None):
    B, N, C = x.shape
    assert N == H * W, "N must equal H * W"
    if vpu_dtype is None:
        vpu_dtype = _default_vpu_dtype()

    K = params["reg"][0].shape[0]
    hidden = params["expand_w"].shape[1]
    pad = K // 2
    PW = ((pad + 7) // 8) * 8           # left halo: 8-sublane aligned interior store
    RH = _row_strip(H)
    hp, wp = H + 2 * pad, PW + W + pad  # right halo is only `pad` wide

    # NOTE: best perf wants C (and hidden) multiples of 128 lanes and W a
    # multiple of 8 sublanes (lane-dense stores, free (bb*H*W, C) reshapes);
    # other shapes stay correct but are lane-masked.
    x4 = x.reshape(B, H, W, C)          # tokens -> NHWC grid (layout-free view)

    # cast each weight to the dtype it is consumed in (bf16 halves weight VMEM
    # and MXU/VPU operand traffic; f32 accumulation is kept in-kernel).
    dww_r, dwb_r, sw1_r, sb1_r, sw2_r, sb2_r = params["reg"]
    dww_e, dwb_e, sw1_e, sb1_e, sw2_e, sb2_e = params["exp"]
    weights = (
        dww_r.astype(vpu_dtype), dwb_r.astype(vpu_dtype),
        sw1_r.astype(compute_dtype), sb1_r.astype(jnp.float32),
        sw2_r.astype(compute_dtype), sb2_r.astype(jnp.float32),
        dww_e.astype(vpu_dtype), dwb_e.astype(vpu_dtype),
        sw1_e.astype(compute_dtype), sb1_e.astype(jnp.float32),
        sw2_e.astype(compute_dtype), sb2_e.astype(jnp.float32),
        params["expand_w"].astype(compute_dtype),
        params["reduce_w"].astype(compute_dtype),
    )
    weight_bytes = sum(int(wg.size) * wg.dtype.itemsize for wg in weights)

    vpu_bytes = jnp.finfo(vpu_dtype).bits // 8
    io_bytes = x.dtype.itemsize

    cap = _vmem_capacity_bytes()
    budget = min(int(0.75 * cap), 96 << 20)
    if batch_block is None:
        bb = _choose_batch_block(B, H, W, C, hidden, K, PW, RH, vpu_bytes,
                                 io_bytes, weight_bytes, budget)
    else:
        bb = batch_block
    assert B % bb == 0, "batch block must divide B"
    grid = (B // bb,)

    need = _vmem_plan_bytes(bb, H, W, C, hidden, K, PW, RH, vpu_bytes,
                            io_bytes, weight_bytes)
    vmem_limit = int(min(max(need + (4 << 20), 32 << 20), cap - (2 << 20)))

    def _const_index_map(ndim):
        def imap(b):
            return (0,) * ndim
        return imap

    in_specs = [pl.BlockSpec((bb, H, W, C), lambda b: (b, 0, 0, 0))]
    # constant-index weights: single-buffered (no second VMEM copy / re-DMA).
    in_specs += [pl.BlockSpec(wg.shape, _const_index_map(wg.ndim),
                              pipeline_mode=pl.Buffered(1))
                 for wg in weights]

    flops = int(B * H * W * (2 * K * K * (2 * C + hidden) + 4 * C * hidden))
    bytes_accessed = int(2 * B * H * W * C * io_bytes + weight_bytes)

    kern = functools.partial(lffn_kernel, K=K, PW=PW, RH=RH,
                             use_res=use_res_connect,
                             compute_dtype=compute_dtype, vpu_dtype=vpu_dtype)

    out4 = pl.pallas_call(
        kern,
        out_shape=jax.ShapeDtypeStruct((B, H, W, C), x.dtype),
        grid_spec=pltpu.PrefetchScalarGridSpec(
            num_scalar_prefetch=0,
            grid=grid,
            in_specs=in_specs,
            out_specs=pl.BlockSpec((bb, H, W, C), lambda b: (b, 0, 0, 0)),
            scratch_shapes=[
                pltpu.VMEM((bb, hp, wp, C), vpu_dtype),       # C-wide halo scratch
                pltpu.VMEM((bb, hp, wp, hidden), vpu_dtype),  # hidden-wide halo scratch
                pltpu.VMEM((bb, H, W, C), vpu_dtype),         # y buffer (C wide)
                pltpu.VMEM((bb, H, W, hidden), vpu_dtype),    # y buffer (hidden wide)
            ]),
        compiler_params=pltpu.CompilerParams(
            dimension_semantics=("parallel",),                # batch shards across TCs
            vmem_limit_bytes=vmem_limit),
        cost_estimate=pl.CostEstimate(flops=flops, transcendentals=0,
                                      bytes_accessed=bytes_accessed),
    )(x4, *weights)

    return out4.reshape(B, N, C)


# --------------------------------------------------------------------------
# Pure-JAX reference (independent check of the fused Pallas kernel)
# --------------------------------------------------------------------------
def ref_dw_block(x, dww, dwb, w1, b1, w2, b2):
    B, H, W, C = x.shape
    K = dww.shape[0]
    wk = dww.reshape(K, K, 1, C)
    y = lax.conv_general_dilated(
        x, wk, window_strides=(1, 1), padding="SAME",
        dimension_numbers=("NHWC", "HWIO", "NHWC"), feature_group_count=C)
    y = y + dwb.reshape(1, 1, 1, C)
    y = y * (jnp.clip(y + 3.0, 0.0, 6.0) / 6.0)
    pooled = jnp.mean(y, axis=(1, 2))
    h = jnp.maximum(pooled @ w1 + b1, 0.0)
    s = jnp.clip(h @ w2 + b2 + 3.0, 0.0, 6.0) / 6.0
    return y * s[:, None, None, :]


def ref_forward(x, H, W, params, use_res_connect=True):
    B, N, C = x.shape
    x_inp = x
    y = x.reshape(B, H, W, C)
    y = ref_dw_block(y, *params["reg"])
    y = jnp.einsum("bhwc,cd->bhwd", y, params["expand_w"])
    y = ref_dw_block(y, *params["exp"])
    y = jnp.einsum("bhwc,cd->bhwd", y, params["reduce_w"])
    y = ref_dw_block(y, *params["reg"])
    y = y.reshape(B, N, C)
    return y + x_inp if use_res_connect else y


# --------------------------------------------------------------------------
# Deterministic parameter init (shapes follow the module's __init__)
# --------------------------------------------------------------------------
def init_params(key, C, expansion_ratio=2):
    hidden = C * expansion_ratio
    mid_r = _make_divisible(C // 4, 8)
    mid_e = _make_divisible(hidden // 4, 8)
    ks = jax.random.split(key, 14)

    def nrm(k, shape, scale=0.2):
        return jax.random.normal(k, shape, jnp.float32) * scale

    return {
        # (dw weight (K,K,C), dw bias (1,C), fc1 (C,mid), b1 (1,mid), fc2 (mid,C), b2 (1,C))
        "reg": (nrm(ks[0], (3, 3, C)), nrm(ks[1], (1, C)),
                nrm(ks[2], (C, mid_r)), nrm(ks[3], (1, mid_r)),
                nrm(ks[4], (mid_r, C)), nrm(ks[5], (1, C))),
        "exp": (nrm(ks[6], (3, 3, hidden)), nrm(ks[7], (1, hidden)),
                nrm(ks[8], (hidden, mid_e)), nrm(ks[9], (1, mid_e)),
                nrm(ks[10], (mid_e, hidden)), nrm(ks[11], (1, hidden))),
        "expand_w": nrm(ks[12], (C, hidden)),
        "reduce_w": nrm(ks[13], (hidden, C)),
    }


if __name__ == "__main__":
    # lane-dense small demo: C = 128 lanes, W = 8 sublanes, 2 H-strips.
    B, H, W, C = 2, 16, 8, 128
    N = H * W
    key = jax.random.PRNGKey(0)
    kx, kp = jax.random.split(key)
    x = jax.random.normal(kx, (B, N, C), jnp.float32)
    params = init_params(kp, C, expansion_ratio=2)

    ref = jax.block_until_ready(ref_forward(x, H, W, params, True))

    # 1) full-f32 run: tight check against the XLA reference.
    fwd_f32 = jax.jit(lambda a: lffn_forward(a, H, W, params, True,
                                             compute_dtype=jnp.float32,
                                             vpu_dtype=jnp.float32))
    out_f32 = jax.block_until_ready(fwd_f32(x))
    assert out_f32.shape == (B, N, C)
    assert jnp.allclose(out_f32, ref, atol=1e-3, rtol=1e-3), "f32 mismatch vs reference"

    # 2) default run (bf16 MXU operands; bf16 VPU on v6e/v7x): looser check.
    fwd = jax.jit(lambda a: lffn_forward(a, H, W, params, True))
    out = jax.block_until_ready(fwd(x))
    assert out.shape == (B, N, C)
    assert jnp.allclose(out, ref, atol=3e-2, rtol=3e-2), "bf16 mismatch vs reference"

    print("KERNEL_OK")
</pallas_src>

<mosaic_0001>
module attributes {stable_mosaic.version = 11 : i64} {
  func.func @lffn_kernel(%arg0: i32, %arg1: memref<1x16x8x128xf32, #tpu.memory_space<vmem>>, %arg2: memref<3x3x128xf32, #tpu.memory_space<vmem>>, %arg3: memref<1x128xf32, #tpu.memory_space<vmem>>, %arg4: memref<128x32xf32, #tpu.memory_space<vmem>>, %arg5: memref<1x32xf32, #tpu.memory_space<vmem>>, %arg6: memref<32x128xf32, #tpu.memory_space<vmem>>, %arg7: memref<1x128xf32, #tpu.memory_space<vmem>>, %arg8: memref<3x3x256xf32, #tpu.memory_space<vmem>>, %arg9: memref<1x256xf32, #tpu.memory_space<vmem>>, %arg10: memref<256x64xf32, #tpu.memory_space<vmem>>, %arg11: memref<1x64xf32, #tpu.memory_space<vmem>>, %arg12: memref<64x256xf32, #tpu.memory_space<vmem>>, %arg13: memref<1x256xf32, #tpu.memory_space<vmem>>, %arg14: memref<128x256xf32, #tpu.memory_space<vmem>>, %arg15: memref<256x128xf32, #tpu.memory_space<vmem>>, %arg16: memref<1x16x8x128xf32, #tpu.memory_space<vmem>>, %arg17: memref<1x18x17x128xf32, #tpu.memory_space<vmem>>, %arg18: memref<1x18x17x256xf32, #tpu.memory_space<vmem>>, %arg19: memref<1x16x8x128xf32, #tpu.memory_space<vmem>>, %arg20: memref<1x16x8x256xf32, #tpu.memory_space<vmem>>) attributes {dimension_semantics = [#tpu.dimension_semantics<parallel>], iteration_bounds = array<i64: 2>, scalar_prefetch = 0 : i64, scratch_operands = 4 : i64, tpu.core_type = #tpu.core_type<tc>, window_params = [{transform_indices = @transform_0, window_bounds = array<i64: 1, 16, 8, 128>}, {pipeline_mode = #tpu.pipeline_mode<synchronous>, transform_indices = @transform_1, window_bounds = array<i64: 3, 3, 128>}, {pipeline_mode = #tpu.pipeline_mode<synchronous>, transform_indices = @transform_2, window_bounds = array<i64: 1, 128>}, {pipeline_mode = #tpu.pipeline_mode<synchronous>, transform_indices = @transform_3, window_bounds = array<i64: 128, 32>}, {pipeline_mode = #tpu.pipeline_mode<synchronous>, transform_indices = @transform_4, window_bounds = array<i64: 1, 32>}, {pipeline_mode = #tpu.pipeline_mode<synchronous>, transform_indices = @transform_5, window_bounds = array<i64: 32, 128>}, {pipeline_mode = #tpu.pipeline_mode<synchronous>, transform_indices = @transform_6, window_bounds = array<i64: 1, 128>}, {pipeline_mode = #tpu.pipeline_mode<synchronous>, transform_indices = @transform_7, window_bounds = array<i64: 3, 3, 256>}, {pipeline_mode = #tpu.pipeline_mode<synchronous>, transform_indices = @transform_8, window_bounds = array<i64: 1, 256>}, {pipeline_mode = #tpu.pipeline_mode<synchronous>, transform_indices = @transform_9, window_bounds = array<i64: 256, 64>}, {pipeline_mode = #tpu.pipeline_mode<synchronous>, transform_indices = @transform_10, window_bounds = array<i64: 1, 64>}, {pipeline_mode = #tpu.pipeline_mode<synchronous>, transform_indices = @transform_11, window_bounds = array<i64: 64, 256>}, {pipeline_mode = #tpu.pipeline_mode<synchronous>, transform_indices = @transform_12, window_bounds = array<i64: 1, 256>}, {pipeline_mode = #tpu.pipeline_mode<synchronous>, transform_indices = @transform_13, window_bounds = array<i64: 128, 256>}, {pipeline_mode = #tpu.pipeline_mode<synchronous>, transform_indices = @transform_14, window_bounds = array<i64: 256, 128>}, {transform_indices = @transform_15, window_bounds = array<i64: 1, 16, 8, 128>}]} {
    %cst = arith.constant 0.000000e+00 : f32
    %0 = vector.broadcast %cst : f32 to vector<1x1x10x128xf32>
    %c0 = arith.constant 0 : index
    %c0_0 = arith.constant 0 : index
    %c7 = arith.constant 7 : index
    %c0_1 = arith.constant 0 : index
    %1 = vector.load %arg17[%c0, %c0_0, %c7, %c0_1] : memref<1x18x17x128xf32, #tpu.memory_space<vmem>>, vector<1x1x10x128xf32>
    tpu.vector_store %arg17[%c0, %c0_0, %c7, %c0_1], %0 {strides = array<i32>} : memref<1x18x17x128xf32, #tpu.memory_space<vmem>>, vector<1x1x10x128xf32>,
    %c0_2 = arith.constant 0 : index
    %c17 = arith.constant 17 : index
    %c7_3 = arith.constant 7 : index
    %c0_4 = arith.constant 0 : index
    %2 = vector.load %arg17[%c0_2, %c17, %c7_3, %c0_4] : memref<1x18x17x128xf32, #tpu.memory_space<vmem>>, vector<1x1x10x128xf32>
    tpu.vector_store %arg17[%c0_2, %c17, %c7_3, %c0_4], %0 {strides = array<i32>} : memref<1x18x17x128xf32, #tpu.memory_space<vmem>>, vector<1x1x10x128xf32>,
    %cst_5 = arith.constant 0.000000e+00 : f32
    %3 = vector.broadcast %cst_5 : f32 to vector<1x16x1x128xf32>
    %c0_6 = arith.constant 0 : index
    %c1 = arith.constant 1 : index
    %c7_7 = arith.constant 7 : index
    %c0_8 = arith.constant 0 : index
    %4 = vector.load %arg17[%c0_6, %c1, %c7_7, %c0_8] : memref<1x18x17x128xf32, #tpu.memory_space<vmem>>, vector<1x16x1x128xf32>
    tpu.vector_store %arg17[%c0_6, %c1, %c7_7, %c0_8], %3 {strides = array<i32>} : memref<1x18x17x128xf32, #tpu.memory_space<vmem>>, vector<1x16x1x128xf32>,
    %c0_9 = arith.constant 0 : index
    %c1_10 = arith.constant 1 : index
    %c16 = arith.constant 16 : index
    %c0_11 = arith.constant 0 : index
    %5 = vector.load %arg17[%c0_9, %c1_10, %c16, %c0_11] : memref<1x18x17x128xf32, #tpu.memory_space<vmem>>, vector<1x16x1x128xf32>
    tpu.vector_store %arg17[%c0_9, %c1_10, %c16, %c0_11], %3 {strides = array<i32>} : memref<1x18x17x128xf32, #tpu.memory_space<vmem>>, vector<1x16x1x128xf32>,
    %cst_12 = arith.constant 0.000000e+00 : f32
    %6 = vector.broadcast %cst_12 : f32 to vector<1x1x10x256xf32>
    %c0_13 = arith.constant 0 : index
    %c0_14 = arith.constant 0 : index
    %c7_15 = arith.constant 7 : index
    %c0_16 = arith.constant 0 : index
    %7 = vector.load %arg18[%c0_13, %c0_14, %c7_15, %c0_16] : memref<1x18x17x256xf32, #tpu.memory_space<vmem>>, vector<1x1x10x256xf32>
    tpu.vector_store %arg18[%c0_13, %c0_14, %c7_15, %c0_16], %6 {strides = array<i32>} : memref<1x18x17x256xf32, #tpu.memory_space<vmem>>, vector<1x1x10x256xf32>,
    %c0_17 = arith.constant 0 : index
    %c17_18 = arith.constant 17 : index
    %c7_19 = arith.constant 7 : index
    %c0_20 = arith.constant 0 : index
    %8 = vector.load %arg18[%c0_17, %c17_18, %c7_19, %c0_20] : memref<1x18x17x256xf32, #tpu.memory_space<vmem>>, vector<1x1x10x256xf32>
    tpu.vector_store %arg18[%c0_17, %c17_18, %c7_19, %c0_20], %6 {strides = array<i32>} : memref<1x18x17x256xf32, #tpu.memory_space<vmem>>, vector<1x1x10x256xf32>,
    %cst_21 = arith.constant 0.000000e+00 : f32
    %9 = vector.broadcast %cst_21 : f32 to vector<1x16x1x256xf32>
    %c0_22 = arith.constant 0 : index
    %c1_23 = arith.constant 1 : index
    %c7_24 = arith.constant 7 : index
    %c0_25 = arith.constant 0 : index
    %10 = vector.load %arg18[%c0_22, %c1_23, %c7_24, %c0_25] : memref<1x18x17x256xf32, #tpu.memory_space<vmem>>, vector<1x16x1x256xf32>
    tpu.vector_store %arg18[%c0_22, %c1_23, %c7_24, %c0_25], %9 {strides = array<i32>} : memref<1x18x17x256xf32, #tpu.memory_space<vmem>>, vector<1x16x1x256xf32>,
    %c0_26 = arith.constant 0 : index
    %c1_27 = arith.constant 1 : index
    %c16_28 = arith.constant 16 : index
    %c0_29 = arith.constant 0 : index
    %11 = vector.load %arg18[%c0_26, %c1_27, %c16_28, %c0_29] : memref<1x18x17x256xf32, #tpu.memory_space<vmem>>, vector<1x16x1x256xf32>
    tpu.vector_store %arg18[%c0_26, %c1_27, %c16_28, %c0_29], %9 {strides = array<i32>} : memref<1x18x17x256xf32, #tpu.memory_space<vmem>>, vector<1x16x1x256xf32>,
    %c0_30 = arith.constant 0 : index
    %c0_31 = arith.constant 0 : index
    %c0_32 = arith.constant 0 : index
    %c0_33 = arith.constant 0 : index
    %12 = vector.load %arg1[%c0_30, %c0_31, %c0_32, %c0_33] : memref<1x16x8x128xf32, #tpu.memory_space<vmem>>, vector<1x16x8x128xf32>
    %c0_34 = arith.constant 0 : index
    %c1_35 = arith.constant 1 : index
    %c8 = arith.constant 8 : index
    %c0_36 = arith.constant 0 : index
    %13 = vector.load %arg17[%c0_34, %c1_35, %c8, %c0_36] : memref<1x18x17x128xf32, #tpu.memory_space<vmem>>, vector<1x16x8x128xf32>
    tpu.vector_store %arg17[%c0_34, %c1_35, %c8, %c0_36], %12 {strides = array<i32>} : memref<1x18x17x128xf32, #tpu.memory_space<vmem>>, vector<1x16x8x128xf32>,
    %c0_37 = arith.constant 0 : index
    %c0_38 = arith.constant 0 : index
    %c0_39 = arith.constant 0 : index
    %14 = vector.load %arg2[%c0_37, %c0_38, %c0_39] : memref<3x3x128xf32, #tpu.memory_space<vmem>>, vector<3x3x128xf32>
    %c0_40 = arith.constant 0 : index
    %c0_41 = arith.constant 0 : index
    %15 = vector.load %arg3[%c0_40, %c0_41] : memref<1x128xf32, #tpu.memory_space<vmem>>, vector<1x128xf32>
    %16 = vector.shape_cast %15 : vector<1x128xf32> to vector<1x1x1x128xf32>
    %17 = vector.shape_cast %16 : vector<1x1x1x128xf32> to vector<1x1x1x128xf32>
    %18 = vector.broadcast %17 : vector<1x1x1x128xf32> to vector<1x8x8x128xf32>
    %cst_42 = arith.constant 0.000000e+00 : f32
    %19 = vector.broadcast %cst_42 : f32 to vector<1x128xf32>
    %c0_i32 = arith.constant 0 : i32
    %c8_i32 = arith.constant 8 : i32
    %20 = arith.muli %c0_i32, %c8_i32 : i32
    %21 = tpu.assume_multiple %20, 8 : i32
    %c0_43 = arith.constant 0 : index
    %22 = arith.index_cast %21 : i32 to index
    %c7_44 = arith.constant 7 : index
    %c0_45 = arith.constant 0 : index
    %23 = vector.load %arg17[%c0_43, %22, %c7_44, %c0_45] : memref<1x18x17x128xf32, #tpu.memory_space<vmem>>, vector<1x10x8x128xf32>
    %24 = vector.extract_strided_slice %23 {offsets = [0, 0, 0, 0], sizes = [1, 8, 8, 128], strides = [1, 1, 1, 1]} : vector<1x10x8x128xf32> to vector<1x8x8x128xf32>
    %25 = vector.extract_strided_slice %14 {offsets = [0, 0, 0], sizes = [1, 1, 128], strides = [1, 1, 1]} : vector<3x3x128xf32> to vector<1x1x128xf32>
    %26 = vector.shape_cast %25 : vector<1x1x128xf32> to vector<128xf32>
    %27 = vector.shape_cast %26 : vector<128xf32> to vector<1x1x1x128xf32>
    %28 = vector.broadcast %27 : vector<1x1x1x128xf32> to vector<1x8x8x128xf32>
    %29 = arith.mulf %24, %28 : vector<1x8x8x128xf32>
    %30 = arith.addf %18, %29 : vector<1x8x8x128xf32>
    %31 = vector.extract_strided_slice %23 {offsets = [0, 1, 0, 0], sizes = [1, 8, 8, 128], strides = [1, 1, 1, 1]} : vector<1x10x8x128xf32> to vector<1x8x8x128xf32>
    %32 = vector.extract_strided_slice %14 {offsets = [1, 0, 0], sizes = [1, 1, 128], strides = [1, 1, 1]} : vector<3x3x128xf32> to vector<1x1x128xf32>
    %33 = vector.shape_cast %32 : vector<1x1x128xf32> to vector<128xf32>
    %34 = vector.shape_cast %33 : vector<128xf32> to vector<1x1x1x128xf32>
    %35 = vector.broadcast %34 : vector<1x1x1x128xf32> to vector<1x8x8x128xf32>
    %36 = arith.mulf %31, %35 : vector<1x8x8x128xf32>
    %37 = arith.addf %30, %36 : vector<1x8x8x128xf32>
    %38 = vector.extract_strided_slice %23 {offsets = [0, 2, 0, 0], sizes = [1, 8, 8, 128], strides = [1, 1, 1, 1]} : vector<1x10x8x128xf32> to vector<1x8x8x128xf32>
    %39 = vector.extract_strided_slice %14 {offsets = [2, 0, 0], sizes = [1, 1, 128], strides = [1, 1, 1]} : vector<3x3x128xf32> to vector<1x1x128xf32>
    %40 = vector.shape_cast %39 : vector<1x1x128xf32> to vector<128xf32>
    %41 = vector.shape_cast %40 : vector<128xf32> to vector<1x1x1x128xf32>
    %42 = vector.broadcast %41 : vector<1x1x1x128xf32> to vector<1x8x8x128xf32>
    %43 = arith.mulf %38, %42 : vector<1x8x8x128xf32>
    %44 = arith.addf %37, %43 : vector<1x8x8x128xf32>
    %c0_46 = arith.constant 0 : index
    %45 = arith.index_cast %21 : i32 to index
    %c8_47 = arith.constant 8 : index
    %c0_48 = arith.constant 0 : index
    %46 = vector.load %arg17[%c0_46, %45, %c8_47, %c0_48] : memref<1x18x17x128xf32, #tpu.memory_space<vmem>>, vector<1x10x8x128xf32>
    %47 = vector.extract_strided_slice %46 {offsets = [0, 0, 0, 0], sizes = [1, 8, 8, 128], strides = [1, 1, 1, 1]} : vector<1x10x8x128xf32> to vector<1x8x8x128xf32>
    %48 = vector.extract_strided_slice %14 {offsets = [0, 1, 0], sizes = [1, 1, 128], strides = [1, 1, 1]} : vector<3x3x128xf32> to vector<1x1x128xf32>
    %49 = vector.shape_cast %48 : vector<1x1x128xf32> to vector<128xf32>
    %50 = vector.shape_cast %49 : vector<128xf32> to vector<1x1x1x128xf32>
    %51 = vector.broadcast %50 : vector<1x1x1x128xf32> to vector<1x8x8x128xf32>
    %52 = arith.mulf %47, %51 : vector<1x8x8x128xf32>
    %53 = arith.addf %44, %52 : vector<1x8x8x128xf32>
    %54 = vector.extract_strided_slice %46 {offsets = [0, 1, 0, 0], sizes = [1, 8, 8, 128], strides = [1, 1, 1, 1]} : vector<1x10x8x128xf32> to vector<1x8x8x128xf32>
    %55 = vector.extract_strided_slice %14 {offsets = [1, 1, 0], sizes = [1, 1, 128], strides = [1, 1, 1]} : vector<3x3x128xf32> to vector<1x1x128xf32>
    %56 = vector.shape_cast %55 : vector<1x1x128xf32> to vector<128xf32>
    %57 = vector.shape_cast %56 : vector<128xf32> to vector<1x1x1x128xf32>
    %58 = vector.broadcast %57 : vector<1x1x1x128xf32> to vector<1x8x8x128xf32>
    %59 = arith.mulf %54, %58 : vector<1x8x8x128xf32>
    %60 = arith.addf %53, %59 : vector<1x8x8x128xf32>
    %61 = vector.extract_strided_slice %46 {offsets = [0, 2, 0, 0], sizes = [1, 8, 8, 128], strides = [1, 1, 1, 1]} : vector<1x10x8x128xf32> to vector<1x8x8x128xf32>
    %62 = vector.extract_strided_slice %14 {offsets = [2, 1, 0], sizes = [1, 1, 128], strides = [1, 1, 1]} : vector<3x3x128xf32> to vector<1x1x128xf32>
    %63 = vector.shape_cast %62 : vector<1x1x128xf32> to vector<128xf32>
    %64 = vector.shape_cast %63 : vector<128xf32> to vector<1x1x1x128xf32>
    %65 = vector.broadcast %64 : vector<1x1x1x128xf32> to vector<1x8x8x128xf32>
    %66 = arith.mulf %61, %65 : vector<1x8x8x128xf32>
    %67 = arith.addf %60, %66 : vector<1x8x8x128xf32>
    %c0_49 = arith.constant 0 : index
    %68 = arith.index_cast %21 : i32 to index
    %c9 = arith.constant 9 : index
    %c0_50 = arith.constant 0 : index
    %69 = vector.load %arg17[%c0_49, %68, %c9, %c0_50] : memref<1x18x17x128xf32, #tpu.memory_space<vmem>>, vector<1x10x8x128xf32>
    %70 = vector.extract_strided_slice %69 {offsets = [0, 0, 0, 0], sizes = [1, 8, 8, 128], strides = [1, 1, 1, 1]} : vector<1x10x8x128xf32> to vector<1x8x8x128xf32>
    %71 = vector.extract_strided_slice %14 {offsets = [0, 2, 0], sizes = [1, 1, 128], strides = [1, 1, 1]} : vector<3x3x128xf32> to vector<1x1x128xf32>
    %72 = vector.shape_cast %71 : vector<1x1x128xf32> to vector<128xf32>
    %73 = vector.shape_cast %72 : vector<128xf32> to vector<1x1x1x128xf32>
    %74 = vector.broadcast %73 : vector<1x1x1x128xf32> to vector<1x8x8x128xf32>
    %75 = arith.mulf %70, %74 : vector<1x8x8x128xf32>
    %76 = arith.addf %67, %75 : vector<1x8x8x128xf32>
    %77 = vector.extract_strided_slice %69 {offsets = [0, 1, 0, 0], sizes = [1, 8, 8, 128], strides = [1, 1, 1, 1]} : vector<1x10x8x128xf32> to vector<1x8x8x128xf32>
    %78 = vector.extract_strided_slice %14 {offsets = [1, 2, 0], sizes = [1, 1, 128], strides = [1, 1, 1]} : vector<3x3x128xf32> to vector<1x1x128xf32>
    %79 = vector.shape_cast %78 : vector<1x1x128xf32> to vector<128xf32>
    %80 = vector.shape_cast %79 : vector<128xf32> to vector<1x1x1x128xf32>
    %81 = vector.broadcast %80 : vector<1x1x1x128xf32> to vector<1x8x8x128xf32>
    %82 = arith.mulf %77, %81 : vector<1x8x8x128xf32>
    %83 = arith.addf %76, %82 : vector<1x8x8x128xf32>
    %84 = vector.extract_strided_slice %69 {offsets = [0, 2, 0, 0], sizes = [1, 8, 8, 128], strides = [1, 1, 1, 1]} : vector<1x10x8x128xf32> to vector<1x8x8x128xf32>
    %85 = vector.extract_strided_slice %14 {offsets = [2, 2, 0], sizes = [1, 1, 128], strides = [1, 1, 1]} : vector<3x3x128xf32> to vector<1x1x128xf32>
    %86 = vector.shape_cast %85 : vector<1x1x128xf32> to vector<128xf32>
    %87 = vector.shape_cast %86 : vector<128xf32> to vector<1x1x1x128xf32>
    %88 = vector.broadcast %87 : vector<1x1x1x128xf32> to vector<1x8x8x128xf32>
    %89 = arith.mulf %84, %88 : vector<1x8x8x128xf32>
    %90 = arith.addf %83, %89 : vector<1x8x8x128xf32>
    %cst_51 = arith.constant 3.000000e+00 : f32
    %91 = vector.broadcast %cst_51 : f32 to vector<1x8x8x128xf32>
    %92 = arith.addf %90, %91 : vector<1x8x8x128xf32>
    %cst_52 = arith.constant 0.000000e+00 : f32
    %cst_53 = arith.constant 6.000000e+00 : f32
    %93 = vector.broadcast %cst_52 : f32 to vector<1x8x8x128xf32>
    %94 = arith.maximumf %93, %92 : vector<1x8x8x128xf32>
    %95 = vector.broadcast %cst_53 : f32 to vector<1x8x8x128xf32>
    %96 = arith.minimumf %95, %94 : vector<1x8x8x128xf32>
    %cst_54 = arith.constant 0.166666672 : f32
    %97 = vector.broadcast %cst_54 : f32 to vector<1x8x8x128xf32>
    %98 = arith.mulf %96, %97 : vector<1x8x8x128xf32>
    %99 = arith.mulf %90, %98 : vector<1x8x8x128xf32>
    %c0_55 = arith.constant 0 : index
    %100 = arith.index_cast %21 : i32 to index
    %c0_56 = arith.constant 0 : index
    %c0_57 = arith.constant 0 : index
    %101 = vector.load %arg19[%c0_55, %100, %c0_56, %c0_57] : memref<1x16x8x128xf32, #tpu.memory_space<vmem>>, vector<1x8x8x128xf32>
    tpu.vector_store %arg19[%c0_55, %100, %c0_56, %c0_57], %99 {strides = array<i32>} : memref<1x16x8x128xf32, #tpu.memory_space<vmem>>, vector<1x8x8x128xf32>,
    %cst_58 = arith.constant dense<0.000000e+00> : vector<1x128xf32>
    %102 = vector.multi_reduction <add>, %99, %cst_58 [1, 2] : vector<1x8x8x128xf32> to vector<1x128xf32>
    %103 = arith.addf %19, %102 : vector<1x128xf32>
    %c1_i32 = arith.constant 1 : i32
    %c8_i32_59 = arith.constant 8 : i32
    %104 = arith.muli %c1_i32, %c8_i32_59 : i32
    %105 = tpu.assume_multiple %104, 8 : i32
    %c0_60 = arith.constant 0 : index
    %106 = arith.index_cast %105 : i32 to index
    %c7_61 = arith.constant 7 : index
    %c0_62 = arith.constant 0 : index
    %107 = vector.load %arg17[%c0_60, %106, %c7_61, %c0_62] : memref<1x18x17x128xf32, #tpu.memory_space<vmem>>, vector<1x10x8x128xf32>
    %108 = vector.extract_strided_slice %107 {offsets = [0, 0, 0, 0], sizes = [1, 8, 8, 128], strides = [1, 1, 1, 1]} : vector<1x10x8x128xf32> to vector<1x8x8x128xf32>
    %109 = vector.extract_strided_slice %14 {offsets = [0, 0, 0], sizes = [1, 1, 128], strides = [1, 1, 1]} : vector<3x3x128xf32> to vector<1x1x128xf32>
    %110 = vector.shape_cast %109 : vector<1x1x128xf32> to vector<128xf32>
    %111 = vector.shape_cast %110 : vector<128xf32> to vector<1x1x1x128xf32>
    %112 = vector.broadcast %111 : vector<1x1x1x128xf32> to vector<1x8x8x128xf32>
    %113 = arith.mulf %108, %112 : vector<1x8x8x128xf32>
    %114 = arith.addf %18, %113 : vector<1x8x8x128xf32>
    %115 = vector.extract_strided_slice %107 {offsets = [0, 1, 0, 0], sizes = [1, 8, 8, 128], strides = [1, 1, 1, 1]} : vector<1x10x8x128xf32> to vector<1x8x8x128xf32>
    %116 = vector.extract_strided_slice %14 {offsets = [1, 0, 0], sizes = [1, 1, 128], strides = [1, 1, 1]} : vector<3x3x128xf32> to vector<1x1x128xf32>
    %117 = vector.shape_cast %116 : vector<1x1x128xf32> to vector<128xf32>
    %118 = vector.shape_cast %117 : vector<128xf32> to vector<1x1x1x128xf32>
    %119 = vector.broadcast %118 : vector<1x1x1x128xf32> to vector<1x8x8x128xf32>
    %120 = arith.mulf %115, %119 : vector<1x8x8x128xf32>
    %121 = arith.addf %114, %120 : vector<1x8x8x128xf32>
    %122 = vector.extract_strided_slice %107 {offsets = [0, 2, 0, 0], sizes = [1, 8, 8, 128], strides = [1, 1, 1, 1]} : vector<1x10x8x128xf32> to vector<1x8x8x128xf32>
    %123 = vector.extract_strided_slice %14 {offsets = [2, 0, 0], sizes = [1, 1, 128], strides = [1, 1, 1]} : vector<3x3x128xf32> to vector<1x1x128xf32>
    %124 = vector.shape_cast %123 : vector<1x1x128xf32> to vector<128xf32>
    %125 = vector.shape_cast %124 : vector<128xf32> to vector<1x1x1x128xf32>
    %126 = vector.broadcast %125 : vector<1x1x1x128xf32> to vector<1x8x8x128xf32>
    %127 = arith.mulf %122, %126 : vector<1x8x8x128xf32>
    %128 = arith.addf %121, %127 : vector<1x8x8x128xf32>
    %c0_63 = arith.constant 0 : index
    %129 = arith.index_cast %105 : i32 to index
    %c8_64 = arith.constant 8 : index
    %c0_65 = arith.constant 0 : index
    %130 = vector.load %arg17[%c0_63, %129, %c8_64, %c0_65] : memref<1x18x17x128xf32, #tpu.memory_space<vmem>>, vector<1x10x8x128xf32>
    %131 = vector.extract_strided_slice %130 {offsets = [0, 0, 0, 0], sizes = [1, 8, 8, 128], strides = [1, 1, 1, 1]} : vector<1x10x8x128xf32> to vector<1x8x8x128xf32>
    %132 = vector.extract_strided_slice %14 {offsets = [0, 1, 0], sizes = [1, 1, 128], strides = [1, 1, 1]} : vector<3x3x128xf32> to vector<1x1x128xf32>
    %133 = vector.shape_cast %132 : vector<1x1x128xf32> to vector<128xf32>
    %134 = vector.shape_cast %133 : vector<128xf32> to vector<1x1x1x128xf32>
    %135 = vector.broadcast %134 : vector<1x1x1x128xf32> to vector<1x8x8x128xf32>
    %136 = arith.mulf %131, %135 : vector<1x8x8x128xf32>
    %137 = arith.addf %128, %136 : vector<1x8x8x128xf32>
    %138 = vector.extract_strided_slice %130 {offsets = [0, 1, 0, 0], sizes = [1, 8, 8, 128], strides = [1, 1, 1, 1]} : vector<1x10x8x128xf32> to vector<1x8x8x128xf32>
    %139 = vector.extract_strided_slice %14 {offsets = [1, 1, 0], sizes = [1, 1, 128], strides = [1, 1, 1]} : vector<3x3x128xf32> to vector<1x1x128xf32>
    %140 = vector.shape_cast %139 : vector<1x1x128xf32> to vector<128xf32>
    %141 = vector.shape_cast %140 : vector<128xf32> to vector<1x1x1x128xf32>
    %142 = vector.broadcast %141 : vector<1x1x1x128xf32> to vector<1x8x8x128xf32>
    %143 = arith.mulf %138, %142 : vector<1x8x8x128xf32>
    %144 = arith.addf %137, %143 : vector<1x8x8x128xf32>
    %145 = vector.extract_strided_slice %130 {offsets = [0, 2, 0, 0], sizes = [1, 8, 8, 128], strides = [1, 1, 1, 1]} : vector<1x10x8x128xf32> to vector<1x8x8x128xf32>
    %146 = vector.extract_strided_slice %14 {offsets = [2, 1, 0], sizes = [1, 1, 128], strides = [1, 1, 1]} : vector<3x3x128xf32> to vector<1x1x128xf32>
    %147 = vector.shape_cast %146 : vector<1x1x128xf32> to vector<128xf32>
    %148 = vector.shape_cast %147 : vector<128xf32> to vector<1x1x1x128xf32>
    %149 = vector.broadcast %148 : vector<1x1x1x128xf32> to vector<1x8x8x128xf32>
    %150 = arith.mulf %145, %149 : vector<1x8x8x128xf32>
    %151 = arith.addf %144, %150 : vector<1x8x8x128xf32>
    %c0_66 = arith.constant 0 : index
    %152 = arith.index_cast %105 : i32 to index
    %c9_67 = arith.constant 9 : index
    %c0_68 = arith.constant 0 : index
    %153 = vector.load %arg17[%c0_66, %152, %c9_67, %c0_68] : memref<1x18x17x128xf32, #tpu.memory_space<vmem>>, vector<1x10x8x128xf32>
    %154 = vector.extract_strided_slice %153 {offsets = [0, 0, 0, 0], sizes = [1, 8, 8, 128], strides = [1, 1, 1, 1]} : vector<1x10x8x128xf32> to vector<1x8x8x128xf32>
    %155 = vector.extract_strided_slice %14 {offsets = [0, 2, 0], sizes = [1, 1, 128], strides = [1, 1, 1]} : vector<3x3x128xf32> to vector<1x1x128xf32>
    %156 = vector.shape_cast %155 : vector<1x1x128xf32> to vector<128xf32>
    %157 = vector.shape_cast %156 : vector<128xf32> to vector<1x1x1x128xf32>
    %158 = vector.broadcast %157 : vector<1x1x1x128xf32> to vector<1x8x8x128xf32>
    %159 = arith.mulf %154, %158 : vector<1x8x8x128xf32>
    %160 = arith.addf %151, %159 : vector<1x8x8x128xf32>
    %161 = vector.extract_strided_slice %153 {offsets = [0, 1, 0, 0], sizes = [1, 8, 8, 128], strides = [1, 1, 1, 1]} : vector<1x10x8x128xf32> to vector<1x8x8x128xf32>
    %162 = vector.extract_strided_slice %14 {offsets = [1, 2, 0], sizes = [1, 1, 128], strides = [1, 1, 1]} : vector<3x3x128xf32> to vector<1x1x128xf32>
    %163 = vector.shape_cast %162 : vector<1x1x128xf32> to vector<128xf32>
    %164 = vector.shape_cast %163 : vector<128xf32> to vector<1x1x1x128xf32>
    %165 = vector.broadcast %164 : vector<1x1x1x128xf32> to vector<1x8x8x128xf32>
    %166 = arith.mulf %161, %165 : vector<1x8x8x128xf32>
    %167 = arith.addf %160, %166 : vector<1x8x8x128xf32>
    %168 = vector.extract_strided_slice %153 {offsets = [0, 2, 0, 0], sizes = [1, 8, 8, 128], strides = [1, 1, 1, 1]} : vector<1x10x8x128xf32> to vector<1x8x8x128xf32>
    %169 = vector.extract_strided_slice %14 {offsets = [2, 2, 0], sizes = [1, 1, 128], strides = [1, 1, 1]} : vector<3x3x128xf32> to vector<1x1x128xf32>
    %170 = vector.shape_cast %169 : vector<1x1x128xf32> to vector<128xf32>
    %171 = vector.shape_cast %170 : vector<128xf32> to vector<1x1x1x128xf32>
    %172 = vector.broadcast %171 : vector<1x1x1x128xf32> to vector<1x8x8x128xf32>
    %173 = arith.mulf %168, %172 : vector<1x8x8x128xf32>
    %174 = arith.addf %167, %173 : vector<1x8x8x128xf32>
    %cst_69 = arith.constant 3.000000e+00 : f32
    %175 = vector.broadcast %cst_69 : f32 to vector<1x8x8x128xf32>
    %176 = arith.addf %174, %175 : vector<1x8x8x128xf32>
    %cst_70 = arith.constant 0.000000e+00 : f32
    %cst_71 = arith.constant 6.000000e+00 : f32
    %177 = vector.broadcast %cst_70 : f32 to vector<1x8x8x128xf32>
    %178 = arith.maximumf %177, %176 : vector<1x8x8x128xf32>
    %179 = vector.broadcast %cst_71 : f32 to vector<1x8x8x128xf32>
    %180 = arith.minimumf %179, %178 : vector<1x8x8x128xf32>
    %cst_72 = arith.constant 0.166666672 : f32
    %181 = vector.broadcast %cst_72 : f32 to vector<1x8x8x128xf32>
    %182 = arith.mulf %180, %181 : vector<1x8x8x128xf32>
    %183 = arith.mulf %174, %182 : vector<1x8x8x128xf32>
    %c0_73 = arith.constant 0 : index
    %184 = arith.index_cast %105 : i32 to index
    %c0_74 = arith.constant 0 : index
    %c0_75 = arith.constant 0 : index
    %185 = vector.load %arg19[%c0_73, %184, %c0_74, %c0_75] : memref<1x16x8x128xf32, #tpu.memory_space<vmem>>, vector<1x8x8x128xf32>
    tpu.vector_store %arg19[%c0_73, %184, %c0_74, %c0_75], %183 {strides = array<i32>} : memref<1x16x8x128xf32, #tpu.memory_space<vmem>>, vector<1x8x8x128xf32>,
    %cst_76 = arith.constant dense<0.000000e+00> : vector<1x128xf32>
    %186 = vector.multi_reduction <add>, %183, %cst_76 [1, 2] : vector<1x8x8x128xf32> to vector<1x128xf32>
    %187 = arith.addf %103, %186 : vector<1x128xf32>
    %c2_i32 = arith.constant 2 : i32
    %cst_77 = arith.constant 7.812500e-03 : f32
    %188 = vector.broadcast %cst_77 : f32 to vector<1x128xf32>
    %189 = arith.mulf %187, %188 : vector<1x128xf32>
    %c0_78 = arith.constant 0 : index
    %c0_79 = arith.constant 0 : index
    %190 = vector.load %arg4[%c0_78, %c0_79] : memref<128x32xf32, #tpu.memory_space<vmem>>, vector<128x32xf32>
    %cst_80 = arith.constant dense<0.000000e+00> : vector<1x32xf32>
    %191 = tpu.matmul %189, %190, %cst_80 {dimension_numbers = #tpu.dot_dimension_numbers<[1], [0], [0], [1], [0, 0, 1, 1], [], []>} : vector<1x128xf32>, vector<128x32xf32>, vector<1x32xf32> -> vector<1x32xf32>
    %c0_81 = arith.constant 0 : index
    %c0_82 = arith.constant 0 : index
    %192 = vector.load %arg5[%c0_81, %c0_82] : memref<1x32xf32, #tpu.memory_space<vmem>>, vector<1x32xf32>
    %193 = arith.addf %191, %192 : vector<1x32xf32>
    %cst_83 = arith.constant 0.000000e+00 : f32
    %194 = vector.broadcast %cst_83 : f32 to vector<1x32xf32>
    %195 = arith.maximumf %193, %194 : vector<1x32xf32>
    %c0_84 = arith.constant 0 : index
    %c0_85 = arith.constant 0 : index
    %196 = vector.load %arg6[%c0_84, %c0_85] : memref<32x128xf32, #tpu.memory_space<vmem>>, vector<32x128xf32>
    %cst_86 = arith.constant dense<0.000000e+00> : vector<1x128xf32>
    %197 = tpu.matmul %195, %196, %cst_86 {dimension_numbers = #tpu.dot_dimension_numbers<[1], [0], [0], [1], [0, 0, 1, 1], [], []>} : vector<1x32xf32>, vector<32x128xf32>, vector<1x128xf32> -> vector<1x128xf32>
    %c0_87 = arith.constant 0 : index
    %c0_88 = arith.constant 0 : index
    %198 = vector.load %arg7[%c0_87, %c0_88] : memref<1x128xf32, #tpu.memory_space<vmem>>, vector<1x128xf32>
    %199 = arith.addf %197, %198 : vector<1x128xf32>
    %cst_89 = arith.constant 3.000000e+00 : f32
    %200 = vector.broadcast %cst_89 : f32 to vector<1x128xf32>
    %201 = arith.addf %199, %200 : vector<1x128xf32>
    %cst_90 = arith.constant 0.000000e+00 : f32
    %cst_91 = arith.constant 6.000000e+00 : f32
    %202 = vector.broadcast %cst_90 : f32 to vector<1x128xf32>
    %203 = arith.maximumf %202, %201 : vector<1x128xf32>
    %204 = vector.broadcast %cst_91 : f32 to vector<1x128xf32>
    %205 = arith.minimumf %204, %203 : vector<1x128xf32>
    %cst_92 = arith.constant 0.166666672 : f32
    %206 = vector.broadcast %cst_92 : f32 to vector<1x128xf32>
    %207 = arith.mulf %205, %206 : vector<1x128xf32>
    %208 = vector.shape_cast %207 : vector<1x128xf32> to vector<1x1x1x128xf32>
    %209 = vector.shape_cast %208 : vector<1x1x1x128xf32> to vector<1x1x1x128xf32>
    %210 = vector.broadcast %209 : vector<1x1x1x128xf32> to vector<1x8x8x128xf32>
    %c0_i32_93 = arith.constant 0 : i32
    %c8_i32_94 = arith.constant 8 : i32
    %211 = arith.muli %c0_i32_93, %c8_i32_94 : i32
    %212 = tpu.assume_multiple %211, 8 : i32
    %c0_95 = arith.constant 0 : index
    %213 = arith.index_cast %212 : i32 to index
    %c0_96 = arith.constant 0 : index
    %c0_97 = arith.constant 0 : index
    %214 = vector.load %arg19[%c0_95, %213, %c0_96, %c0_97] : memref<1x16x8x128xf32, #tpu.memory_space<vmem>>, vector<1x8x8x128xf32>
    %215 = arith.mulf %214, %210 : vector<1x8x8x128xf32>
    %216 = vector.shape_cast %215 : vector<1x8x8x128xf32> to vector<64x128xf32>
    %c0_98 = arith.constant 0 : index
    %c0_99 = arith.constant 0 : index
    %217 = vector.load %arg14[%c0_98, %c0_99] : memref<128x256xf32, #tpu.memory_space<vmem>>, vector<128x256xf32>
    %cst_100 = arith.constant dense<0.000000e+00> : vector<64x256xf32>
    %218 = tpu.matmul %216, %217, %cst_100 {dimension_numbers = #tpu.dot_dimension_numbers<[1], [0], [0], [1], [0, 0, 1, 1], [], []>} : vector<64x128xf32>, vector<128x256xf32>, vector<64x256xf32> -> vector<64x256xf32>
    %219 = vector.shape_cast %218 : vector<64x256xf32> to vector<1x8x8x256xf32>
    %c1_i32_101 = arith.constant 1 : i32
    %220 = arith.addi %c1_i32_101, %212 : i32
    %c0_102 = arith.constant 0 : index
    %221 = arith.index_cast %220 : i32 to index
    %c8_103 = arith.constant 8 : index
    %c0_104 = arith.constant 0 : index
    %222 = vector.load %arg18[%c0_102, %221, %c8_103, %c0_104] : memref<1x18x17x256xf32, #tpu.memory_space<vmem>>, vector<1x8x8x256xf32>
    tpu.vector_store %arg18[%c0_102, %221, %c8_103, %c0_104], %219 {strides = array<i32>} : memref<1x18x17x256xf32, #tpu.memory_space<vmem>>, vector<1x8x8x256xf32>,
    %c1_i32_105 = arith.constant 1 : i32
    %c8_i32_106 = arith.constant 8 : i32
    %223 = arith.muli %c1_i32_105, %c8_i32_106 : i32
    %224 = tpu.assume_multiple %223, 8 : i32
    %c0_107 = arith.constant 0 : index
    %225 = arith.index_cast %224 : i32 to index
    %c0_108 = arith.constant 0 : index
    %c0_109 = arith.constant 0 : index
    %226 = vector.load %arg19[%c0_107, %225, %c0_108, %c0_109] : memref<1x16x8x128xf32, #tpu.memory_space<vmem>>, vector<1x8x8x128xf32>
    %227 = arith.mulf %226, %210 : vector<1x8x8x128xf32>
    %228 = vector.shape_cast %227 : vector<1x8x8x128xf32> to vector<64x128xf32>
    %c0_110 = arith.constant 0 : index
    %c0_111 = arith.constant 0 : index
    %229 = vector.load %arg14[%c0_110, %c0_111] : memref<128x256xf32, #tpu.memory_space<vmem>>, vector<128x256xf32>
    %cst_112 = arith.constant dense<0.000000e+00> : vector<64x256xf32>
    %230 = tpu.matmul %228, %229, %cst_112 {dimension_numbers = #tpu.dot_dimension_numbers<[1], [0], [0], [1], [0, 0, 1, 1], [], []>} : vector<64x128xf32>, vector<128x256xf32>, vector<64x256xf32> -> vector<64x256xf32>
    %231 = vector.shape_cast %230 : vector<64x256xf32> to vector<1x8x8x256xf32>
    %c1_i32_113 = arith.constant 1 : i32
    %232 = arith.addi %c1_i32_113, %224 : i32
    %c0_114 = arith.constant 0 : index
    %233 = arith.index_cast %232 : i32 to index
    %c8_115 = arith.constant 8 : index
    %c0_116 = arith.constant 0 : index
    %234 = vector.load %arg18[%c0_114, %233, %c8_115, %c0_116] : memref<1x18x17x256xf32, #tpu.memory_space<vmem>>, vector<1x8x8x256xf32>
    tpu.vector_store %arg18[%c0_114, %233, %c8_115, %c0_116], %231 {strides = array<i32>} : memref<1x18x17x256xf32, #tpu.memory_space<vmem>>, vector<1x8x8x256xf32>,
    %c2_i32_117 = arith.constant 2 : i32
    %c0_118 = arith.constant 0 : index
    %c0_119 = arith.constant 0 : index
    %c0_120 = arith.constant 0 : index
    %235 = vector.load %arg8[%c0_118, %c0_119, %c0_120] : memref<3x3x256xf32, #tpu.memory_space<vmem>>, vector<3x3x256xf32>
    %c0_121 = arith.constant 0 : index
    %c0_122 = arith.constant 0 : index
    %236 = vector.load %arg9[%c0_121, %c0_122] : memref<1x256xf32, #tpu.memory_space<vmem>>, vector<1x256xf32>
    %237 = vector.shape_cast %236 : vector<1x256xf32> to vector<1x1x1x256xf32>
    %238 = vector.shape_cast %237 : vector<1x1x1x256xf32> to vector<1x1x1x256xf32>
    %239 = vector.broadcast %238 : vector<1x1x1x256xf32> to vector<1x8x8x256xf32>
    %cst_123 = arith.constant 0.000000e+00 : f32
    %240 = vector.broadcast %cst_123 : f32 to vector<1x256xf32>
    %c0_i32_124 = arith.constant 0 : i32
    %c8_i32_125 = arith.constant 8 : i32
    %241 = arith.muli %c0_i32_124, %c8_i32_125 : i32
    %242 = tpu.assume_multiple %241, 8 : i32
    %c0_126 = arith.constant 0 : index
    %243 = arith.index_cast %242 : i32 to index
    %c7_127 = arith.constant 7 : index
    %c0_128 = arith.constant 0 : index
    %244 = vector.load %arg18[%c0_126, %243, %c7_127, %c0_128] : memref<1x18x17x256xf32, #tpu.memory_space<vmem>>, vector<1x10x8x256xf32>
    %245 = vector.extract_strided_slice %244 {offsets = [0, 0, 0, 0], sizes = [1, 8, 8, 256], strides = [1, 1, 1, 1]} : vector<1x10x8x256xf32> to vector<1x8x8x256xf32>
    %246 = vector.extract_strided_slice %235 {offsets = [0, 0, 0], sizes = [1, 1, 256], strides = [1, 1, 1]} : vector<3x3x256xf32> to vector<1x1x256xf32>
    %247 = vector.shape_cast %246 : vector<1x1x256xf32> to vector<256xf32>
    %248 = vector.shape_cast %247 : vector<256xf32> to vector<1x1x1x256xf32>
    %249 = vector.broadcast %248 : vector<1x1x1x256xf32> to vector<1x8x8x256xf32>
    %250 = arith.mulf %245, %249 : vector<1x8x8x256xf32>
    %251 = arith.addf %239, %250 : vector<1x8x8x256xf32>
    %252 = vector.extract_strided_slice %244 {offsets = [0, 1, 0, 0], sizes = [1, 8, 8, 256], strides = [1, 1, 1, 1]} : vector<1x10x8x256xf32> to vector<1x8x8x256xf32>
    %253 = vector.extract_strided_slice %235 {offsets = [1, 0, 0], sizes = [1, 1, 256], strides = [1, 1, 1]} : vector<3x3x256xf32> to vector<1x1x256xf32>
    %254 = vector.shape_cast %253 : vector<1x1x256xf32> to vector<256xf32>
    %255 = vector.shape_cast %254 : vector<256xf32> to vector<1x1x1x256xf32>
    %256 = vector.broadcast %255 : vector<1x1x1x256xf32> to vector<1x8x8x256xf32>
    %257 = arith.mulf %252, %256 : vector<1x8x8x256xf32>
    %258 = arith.addf %251, %257 : vector<1x8x8x256xf32>
    %259 = vector.extract_strided_slice %244 {offsets = [0, 2, 0, 0], sizes = [1, 8, 8, 256], strides = [1, 1, 1, 1]} : vector<1x10x8x256xf32> to vector<1x8x8x256xf32>
    %260 = vector.extract_strided_slice %235 {offsets = [2, 0, 0], sizes = [1, 1, 256], strides = [1, 1, 1]} : vector<3x3x256xf32> to vector<1x1x256xf32>
    %261 = vector.shape_cast %260 : vector<1x1x256xf32> to vector<256xf32>
    %262 = vector.shape_cast %261 : vector<256xf32> to vector<1x1x1x256xf32>
    %263 = vector.broadcast %262 : vector<1x1x1x256xf32> to vector<1x8x8x256xf32>
    %264 = arith.mulf %259, %263 : vector<1x8x8x256xf32>
    %265 = arith.addf %258, %264 : vector<1x8x8x256xf32>
    %c0_129 = arith.constant 0 : index
    %266 = arith.index_cast %242 : i32 to index
    %c8_130 = arith.constant 8 : index
    %c0_131 = arith.constant 0 : index
    %267 = vector.load %arg18[%c0_129, %266, %c8_130, %c0_131] : memref<1x18x17x256xf32, #tpu.memory_space<vmem>>, vector<1x10x8x256xf32>
    %268 = vector.extract_strided_slice %267 {offsets = [0, 0, 0, 0], sizes = [1, 8, 8, 256], strides = [1, 1, 1, 1]} : vector<1x10x8x256xf32> to vector<1x8x8x256xf32>
    %269 = vector.extract_strided_slice %235 {offsets = [0, 1, 0], sizes = [1, 1, 256], strides = [1, 1, 1]} : vector<3x3x256xf32> to vector<1x1x256xf32>
    %270 = vector.shape_cast %269 : vector<1x1x256xf32> to vector<256xf32>
    %271 = vector.shape_cast %270 : vector<256xf32> to vector<1x1x1x256xf32>
    %272 = vector.broadcast %271 : vector<1x1x1x256xf32> to vector<1x8x8x256xf32>
    %273 = arith.mulf %268, %272 : vector<1x8x8x256xf32>
    %274 = arith.addf %265, %273 : vector<1x8x8x256xf32>
    %275 = vector.extract_strided_slice %267 {offsets = [0, 1, 0, 0], sizes = [1, 8, 8, 256], strides = [1, 1, 1, 1]} : vector<1x10x8x256xf32> to vector<1x8x8x256xf32>
    %276 = vector.extract_strided_slice %235 {offsets = [1, 1, 0], sizes = [1, 1, 256], strides = [1, 1, 1]} : vector<3x3x256xf32> to vector<1x1x256xf32>
    %277 = vector.shape_cast %276 : vector<1x1x256xf32> to vector<256xf32>
    %278 = vector.shape_cast %277 : vector<256xf32> to vector<1x1x1x256xf32>
    %279 = vector.broadcast %278 : vector<1x1x1x256xf32> to vector<1x8x8x256xf32>
    %280 = arith.mulf %275, %279 : vector<1x8x8x256xf32>
    %281 = arith.addf %274, %280 : vector<1x8x8x256xf32>
    %282 = vector.extract_strided_slice %267 {offsets = [0, 2, 0, 0], sizes = [1, 8, 8, 256], strides = [1, 1, 1, 1]} : vector<1x10x8x256xf32> to vector<1x8x8x256xf32>
    %283 = vector.extract_strided_slice %235 {offsets = [2, 1, 0], sizes = [1, 1, 256], strides = [1, 1, 1]} : vector<3x3x256xf32> to vector<1x1x256xf32>
    %284 = vector.shape_cast %283 : vector<1x1x256xf32> to vector<256xf32>
    %285 = vector.shape_cast %284 : vector<256xf32> to vector<1x1x1x256xf32>
    %286 = vector.broadcast %285 : vector<1x1x1x256xf32> to vector<1x8x8x256xf32>
    %287 = arith.mulf %282, %286 : vector<1x8x8x256xf32>
    %288 = arith.addf %281, %287 : vector<1x8x8x256xf32>
    %c0_132 = arith.constant 0 : index
    %289 = arith.index_cast %242 : i32 to index
    %c9_133 = arith.constant 9 : index
    %c0_134 = arith.constant 0 : index
    %290 = vector.load %arg18[%c0_132, %289, %c9_133, %c0_134] : memref<1x18x17x256xf32, #tpu.memory_space<vmem>>, vector<1x10x8x256xf32>
    %291 = vector.extract_strided_slice %290 {offsets = [0, 0, 0, 0], sizes = [1, 8, 8, 256], strides = [1, 1, 1, 1]} : vector<1x10x8x256xf32> to vector<1x8x8x256xf32>
    %292 = vector.extract_strided_slice %235 {offsets = [0, 2, 0], sizes = [1, 1, 256], strides = [1, 1, 1]} : vector<3x3x256xf32> to vector<1x1x256xf32>
    %293 = vector.shape_cast %292 : vector<1x1x256xf32> to vector<256xf32>
    %294 = vector.shape_cast %293 : vector<256xf32> to vector<1x1x1x256xf32>
    %295 = vector.broadcast %294 : vector<1x1x1x256xf32> to vector<1x8x8x256xf32>
    %296 = arith.mulf %291, %295 : vector<1x8x8x256xf32>
    %297 = arith.addf %288, %296 : vector<1x8x8x256xf32>
    %298 = vector.extract_strided_slice %290 {offsets = [0, 1, 0, 0], sizes = [1, 8, 8, 256], strides = [1, 1, 1, 1]} : vector<1x10x8x256xf32> to vector<1x8x8x256xf32>
    %299 = vector.extract_strided_slice %235 {offsets = [1, 2, 0], sizes = [1, 1, 256], strides = [1, 1, 1]} : vector<3x3x256xf32> to vector<1x1x256xf32>
    %300 = vector.shape_cast %299 : vector<1x1x256xf32> to vector<256xf32>
    %301 = vector.shape_cast %300 : vector<256xf32> to vector<1x1x1x256xf32>
    %302 = vector.broadcast %301 : vector<1x1x1x256xf32> to vector<1x8x8x256xf32>
    %303 = arith.mulf %298, %302 : vector<1x8x8x256xf32>
    %304 = arith.addf %297, %303 : vector<1x8x8x256xf32>
    %305 = vector.extract_strided_slice %290 {offsets = [0, 2, 0, 0], sizes = [1, 8, 8, 256], strides = [1, 1, 1, 1]} : vector<1x10x8x256xf32> to vector<1x8x8x256xf32>
    %306 = vector.extract_strided_slice %235 {offsets = [2, 2, 0], sizes = [1, 1, 256], strides = [1, 1, 1]} : vector<3x3x256xf32> to vector<1x1x256xf32>
    %307 = vector.shape_cast %306 : vector<1x1x256xf32> to vector<256xf32>
    %308 = vector.shape_cast %307 : vector<256xf32> to vector<1x1x1x256xf32>
    %309 = vector.broadcast %308 : vector<1x1x1x256xf32> to vector<1x8x8x256xf32>
    %310 = arith.mulf %305, %309 : vector<1x8x8x256xf32>
    %311 = arith.addf %304, %310 : vector<1x8x8x256xf32>
    %cst_135 = arith.constant 3.000000e+00 : f32
    %312 = vector.broadcast %cst_135 : f32 to vector<1x8x8x256xf32>
    %313 = arith.addf %311, %312 : vector<1x8x8x256xf32>
    %cst_136 = arith.constant 0.000000e+00 : f32
    %cst_137 = arith.constant 6.000000e+00 : f32
    %314 = vector.broadcast %cst_136 : f32 to vector<1x8x8x256xf32>
    %315 = arith.maximumf %314, %313 : vector<1x8x8x256xf32>
    %316 = vector.broadcast %cst_137 : f32 to vector<1x8x8x256xf32>
    %317 = arith.minimumf %316, %315 : vector<1x8x8x256xf32>
    %cst_138 = arith.constant 0.166666672 : f32
    %318 = vector.broadcast %cst_138 : f32 to vector<1x8x8x256xf32>
    %319 = arith.mulf %317, %318 : vector<1x8x8x256xf32>
    %320 = arith.mulf %311, %319 : vector<1x8x8x256xf32>
    %c0_139 = arith.constant 0 : index
    %321 = arith.index_cast %242 : i32 to index
    %c0_140 = arith.constant 0 : index
    %c0_141 = arith.constant 0 : index
    %322 = vector.load %arg20[%c0_139, %321, %c0_140, %c0_141] : memref<1x16x8x256xf32, #tpu.memory_space<vmem>>, vector<1x8x8x256xf32>
    tpu.vector_store %arg20[%c0_139, %321, %c0_140, %c0_141], %320 {strides = array<i32>} : memref<1x16x8x256xf32, #tpu.memory_space<vmem>>, vector<1x8x8x256xf32>,
    %cst_142 = arith.constant dense<0.000000e+00> : vector<1x256xf32>
    %323 = vector.multi_reduction <add>, %320, %cst_142 [1, 2] : vector<1x8x8x256xf32> to vector<1x256xf32>
    %324 = arith.addf %240, %323 : vector<1x256xf32>
    %c1_i32_143 = arith.constant 1 : i32
    %c8_i32_144 = arith.constant 8 : i32
    %325 = arith.muli %c1_i32_143, %c8_i32_144 : i32
    %326 = tpu.assume_multiple %325, 8 : i32
    %c0_145 = arith.constant 0 : index
    %327 = arith.index_cast %326 : i32 to index
    %c7_146 = arith.constant 7 : index
    %c0_147 = arith.constant 0 : index
    %328 = vector.load %arg18[%c0_145, %327, %c7_146, %c0_147] : memref<1x18x17x256xf32, #tpu.memory_space<vmem>>, vector<1x10x8x256xf32>
    %329 = vector.extract_strided_slice %328 {offsets = [0, 0, 0, 0], sizes = [1, 8, 8, 256], strides = [1, 1, 1, 1]} : vector<1x10x8x256xf32> to vector<1x8x8x256xf32>
    %330 = vector.extract_strided_slice %235 {offsets = [0, 0, 0], sizes = [1, 1, 256], strides = [1, 1, 1]} : vector<3x3x256xf32> to vector<1x1x256xf32>
    %331 = vector.shape_cast %330 : vector<1x1x256xf32> to vector<256xf32>
    %332 = vector.shape_cast %331 : vector<256xf32> to vector<1x1x1x256xf32>
    %333 = vector.broadcast %332 : vector<1x1x1x256xf32> to vector<1x8x8x256xf32>
    %334 = arith.mulf %329, %333 : vector<1x8x8x256xf32>
    %335 = arith.addf %239, %334 : vector<1x8x8x256xf32>
    %336 = vector.extract_strided_slice %328 {offsets = [0, 1, 0, 0], sizes = [1, 8, 8, 256], strides = [1, 1, 1, 1]} : vector<1x10x8x256xf32> to vector<1x8x8x256xf32>
    %337 = vector.extract_strided_slice %235 {offsets = [1, 0, 0], sizes = [1, 1, 256], strides = [1, 1, 1]} : vector<3x3x256xf32> to vector<1x1x256xf32>
    %338 = vector.shape_cast %337 : vector<1x1x256xf32> to vector<256xf32>
    %339 = vector.shape_cast %338 : vector<256xf32> to vector<1x1x1x256xf32>
    %340 = vector.broadcast %339 : vector<1x1x1x256xf32> to vector<1x8x8x256xf32>
    %341 = arith.mulf %336, %340 : vector<1x8x8x256xf32>
    %342 = arith.addf %335, %341 : vector<1x8x8x256xf32>
    %343 = vector.extract_strided_slice %328 {offsets = [0, 2, 0, 0], sizes = [1, 8, 8, 256], strides = [1, 1, 1, 1]} : vector<1x10x8x256xf32> to vector<1x8x8x256xf32>
    %344 = vector.extract_strided_slice %235 {offsets = [2, 0, 0], sizes = [1, 1, 256], strides = [1, 1, 1]} : vector<3x3x256xf32> to vector<1x1x256xf32>
    %345 = vector.shape_cast %344 : vector<1x1x256xf32> to vector<256xf32>
    %346 = vector.shape_cast %345 : vector<256xf32> to vector<1x1x1x256xf32>
    %347 = vector.broadcast %346 : vector<1x1x1x256xf32> to vector<1x8x8x256xf32>
    %348 = arith.mulf %343, %347 : vector<1x8x8x256xf32>
    %349 = arith.addf %342, %348 : vector<1x8x8x256xf32>
    %c0_148 = arith.constant 0 : index
    %350 = arith.index_cast %326 : i32 to index
    %c8_149 = arith.constant 8 : index
    %c0_150 = arith.constant 0 : index
    %351 = vector.load %arg18[%c0_148, %350, %c8_149, %c0_150] : memref<1x18x17x256xf32, #tpu.memory_space<vmem>>, vector<1x10x8x256xf32>
    %352 = vector.extract_strided_slice %351 {offsets = [0, 0, 0, 0], sizes = [1, 8, 8, 256], strides = [1, 1, 1, 1]} : vector<1x10x8x256xf32> to vector<1x8x8x256xf32>
    %353 = vector.extract_strided_slice %235 {offsets = [0, 1, 0], sizes = [1, 1, 256], strides = [1, 1, 1]} : vector<3x3x256xf32> to vector<1x1x256xf32>
    %354 = vector.shape_cast %353 : vector<1x1x256xf32> to vector<256xf32>
    %355 = vector.shape_cast %354 : vector<256xf32> to vector<1x1x1x256xf32>
    %356 = vector.broadcast %355 : vector<1x1x1x256xf32> to vector<1x8x8x256xf32>
    %357 = arith.mulf %352, %356 : vector<1x8x8x256xf32>
    %358 = arith.addf %349, %357 : vector<1x8x8x256xf32>
    %359 = vector.extract_strided_slice %351 {offsets = [0, 1, 0, 0], sizes = [1, 8, 8, 256], strides = [1, 1, 1, 1]} : vector<1x10x8x256xf32> to vector<1x8x8x256xf32>
    %360 = vector.extract_strided_slice %235 {offsets = [1, 1, 0], sizes = [1, 1, 256], strides = [1, 1, 1]} : vector<3x3x256xf32> to vector<1x1x256xf32>
    %361 = vector.shape_cast %360 : vector<1x1x256xf32> to vector<256xf32>
    %362 = vector.shape_cast %361 : vector<256xf32> to vector<1x1x1x256xf32>
    %363 = vector.broadcast %362 : vector<1x1x1x256xf32> to vector<1x8x8x256xf32>
    %364 = arith.mulf %359, %363 : vector<1x8x8x256xf32>
    %365 = arith.addf %358, %364 : vector<1x8x8x256xf32>
    %366 = vector.extract_strided_slice %351 {offsets = [0, 2, 0, 0], sizes = [1, 8, 8, 256], strides = [1, 1, 1, 1]} : vector<1x10x8x256xf32> to vector<1x8x8x256xf32>
    %367 = vector.extract_strided_slice %235 {offsets = [2, 1, 0], sizes = [1, 1, 256], strides = [1, 1, 1]} : vector<3x3x256xf32> to vector<1x1x256xf32>
    %368 = vector.shape_cast %367 : vector<1x1x256xf32> to vector<256xf32>
    %369 = vector.shape_cast %368 : vector<256xf32> to vector<1x1x1x256xf32>
    %370 = vector.broadcast %369 : vector<1x1x1x256xf32> to vector<1x8x8x256xf32>
    %371 = arith.mulf %366, %370 : vector<1x8x8x256xf32>
    %372 = arith.addf %365, %371 : vector<1x8x8x256xf32>
    %c0_151 = arith.constant 0 : index
    %373 = arith.index_cast %326 : i32 to index
    %c9_152 = arith.constant 9 : index
    %c0_153 = arith.constant 0 : index
    %374 = vector.load %arg18[%c0_151, %373, %c9_152, %c0_153] : memref<1x18x17x256xf32, #tpu.memory_space<vmem>>, vector<1x10x8x256xf32>
    %375 = vector.extract_strided_slice %374 {offsets = [0, 0, 0, 0], sizes = [1, 8, 8, 256], strides = [1, 1, 1, 1]} : vector<1x10x8x256xf32> to vector<1x8x8x256xf32>
    %376 = vector.extract_strided_slice %235 {offsets = [0, 2, 0], sizes = [1, 1, 256], strides = [1, 1, 1]} : vector<3x3x256xf32> to vector<1x1x256xf32>
    %377 = vector.shape_cast %376 : vector<1x1x256xf32> to vector<256xf32>
    %378 = vector.shape_cast %377 : vector<256xf32> to vector<1x1x1x256xf32>
    %379 = vector.broadcast %378 : vector<1x1x1x256xf32> to vector<1x8x8x256xf32>
    %380 = arith.mulf %375, %379 : vector<1x8x8x256xf32>
    %381 = arith.addf %372, %380 : vector<1x8x8x256xf32>
    %382 = vector.extract_strided_slice %374 {offsets = [0, 1, 0, 0], sizes = [1, 8, 8, 256], strides = [1, 1, 1, 1]} : vector<1x10x8x256xf32> to vector<1x8x8x256xf32>
    %383 = vector.extract_strided_slice %235 {offsets = [1, 2, 0], sizes = [1, 1, 256], strides = [1, 1, 1]} : vector<3x3x256xf32> to vector<1x1x256xf32>
    %384 = vector.shape_cast %383 : vector<1x1x256xf32> to vector<256xf32>
    %385 = vector.shape_cast %384 : vector<256xf32> to vector<1x1x1x256xf32>
    %386 = vector.broadcast %385 : vector<1x1x1x256xf32> to vector<1x8x8x256xf32>
    %387 = arith.mulf %382, %386 : vector<1x8x8x256xf32>
    %388 = arith.addf %381, %387 : vector<1x8x8x256xf32>
    %389 = vector.extract_strided_slice %374 {offsets = [0, 2, 0, 0], sizes = [1, 8, 8, 256], strides = [1, 1, 1, 1]} : vector<1x10x8x256xf32> to vector<1x8x8x256xf32>
    %390 = vector.extract_strided_slice %235 {offsets = [2, 2, 0], sizes = [1, 1, 256], strides = [1, 1, 1]} : vector<3x3x256xf32> to vector<1x1x256xf32>
    %391 = vector.shape_cast %390 : vector<1x1x256xf32> to vector<256xf32>
    %392 = vector.shape_cast %391 : vector<256xf32> to vector<1x1x1x256xf32>
    %393 = vector.broadcast %392 : vector<1x1x1x256xf32> to vector<1x8x8x256xf32>
    %394 = arith.mulf %389, %393 : vector<1x8x8x256xf32>
    %395 = arith.addf %388, %394 : vector<1x8x8x256xf32>
    %cst_154 = arith.constant 3.000000e+00 : f32
    %396 = vector.broadcast %cst_154 : f32 to vector<1x8x8x256xf32>
    %397 = arith.addf %395, %396 : vector<1x8x8x256xf32>
    %cst_155 = arith.constant 0.000000e+00 : f32
    %cst_156 = arith.constant 6.000000e+00 : f32
    %398 = vector.broadcast %cst_155 : f32 to vector<1x8x8x256xf32>
    %399 = arith.maximumf %398, %397 : vector<1x8x8x256xf32>
    %400 = vector.broadcast %cst_156 : f32 to vector<1x8x8x256xf32>
    %401 = arith.minimumf %400, %399 : vector<1x8x8x256xf32>
    %cst_157 = arith.constant 0.166666672 : f32
    %402 = vector.broadcast %cst_157 : f32 to vector<1x8x8x256xf32>
    %403 = arith.mulf %401, %402 : vector<1x8x8x256xf32>
    %404 = arith.mulf %395, %403 : vector<1x8x8x256xf32>
    %c0_158 = arith.constant 0 : index
    %405 = arith.index_cast %326 : i32 to index
    %c0_159 = arith.constant 0 : index
    %c0_160 = arith.constant 0 : index
    %406 = vector.load %arg20[%c0_158, %405, %c0_159, %c0_160] : memref<1x16x8x256xf32, #tpu.memory_space<vmem>>, vector<1x8x8x256xf32>
    tpu.vector_store %arg20[%c0_158, %405, %c0_159, %c0_160], %404 {strides = array<i32>} : memref<1x16x8x256xf32, #tpu.memory_space<vmem>>, vector<1x8x8x256xf32>,
    %cst_161 = arith.constant dense<0.000000e+00> : vector<1x256xf32>
    %407 = vector.multi_reduction <add>, %404, %cst_161 [1, 2] : vector<1x8x8x256xf32> to vector<1x256xf32>
    %408 = arith.addf %324, %407 : vector<1x256xf32>
    %c2_i32_162 = arith.constant 2 : i32
    %cst_163 = arith.constant 7.812500e-03 : f32
    %409 = vector.broadcast %cst_163 : f32 to vector<1x256xf32>
    %410 = arith.mulf %408, %409 : vector<1x256xf32>
    %c0_164 = arith.constant 0 : index
    %c0_165 = arith.constant 0 : index
    %411 = vector.load %arg10[%c0_164, %c0_165] : memref<256x64xf32, #tpu.memory_space<vmem>>, vector<256x64xf32>
    %cst_166 = arith.constant dense<0.000000e+00> : vector<1x64xf32>
    %412 = tpu.matmul %410, %411, %cst_166 {dimension_numbers = #tpu.dot_dimension_numbers<[1], [0], [0], [1], [0, 0, 1, 1], [], []>} : vector<1x256xf32>, vector<256x64xf32>, vector<1x64xf32> -> vector<1x64xf32>
    %c0_167 = arith.constant 0 : index
    %c0_168 = arith.constant 0 : index
    %413 = vector.load %arg11[%c0_167, %c0_168] : memref<1x64xf32, #tpu.memory_space<vmem>>, vector<1x64xf32>
    %414 = arith.addf %412, %413 : vector<1x64xf32>
    %cst_169 = arith.constant 0.000000e+00 : f32
    %415 = vector.broadcast %cst_169 : f32 to vector<1x64xf32>
    %416 = arith.maximumf %414, %415 : vector<1x64xf32>
    %c0_170 = arith.constant 0 : index
    %c0_171 = arith.constant 0 : index
    %417 = vector.load %arg12[%c0_170, %c0_171] : memref<64x256xf32, #tpu.memory_space<vmem>>, vector<64x256xf32>
    %cst_172 = arith.constant dense<0.000000e+00> : vector<1x256xf32>
    %418 = tpu.matmul %416, %417, %cst_172 {dimension_numbers = #tpu.dot_dimension_numbers<[1], [0], [0], [1], [0, 0, 1, 1], [], []>} : vector<1x64xf32>, vector<64x256xf32>, vector<1x256xf32> -> vector<1x256xf32>
    %c0_173 = arith.constant 0 : index
    %c0_174 = arith.constant 0 : index
    %419 = vector.load %arg13[%c0_173, %c0_174] : memref<1x256xf32, #tpu.memory_space<vmem>>, vector<1x256xf32>
    %420 = arith.addf %418, %419 : vector<1x256xf32>
    %cst_175 = arith.constant 3.000000e+00 : f32
    %421 = vector.broadcast %cst_175 : f32 to vector<1x256xf32>
    %422 = arith.addf %420, %421 : vector<1x256xf32>
    %cst_176 = arith.constant 0.000000e+00 : f32
    %cst_177 = arith.constant 6.000000e+00 : f32
    %423 = vector.broadcast %cst_176 : f32 to vector<1x256xf32>
    %424 = arith.maximumf %423, %422 : vector<1x256xf32>
    %425 = vector.broadcast %cst_177 : f32 to vector<1x256xf32>
    %426 = arith.minimumf %425, %424 : vector<1x256xf32>
    %cst_178 = arith.constant 0.166666672 : f32
    %427 = vector.broadcast %cst_178 : f32 to vector<1x256xf32>
    %428 = arith.mulf %426, %427 : vector<1x256xf32>
    %429 = vector.shape_cast %428 : vector<1x256xf32> to vector<1x1x1x256xf32>
    %430 = vector.shape_cast %429 : vector<1x1x1x256xf32> to vector<1x1x1x256xf32>
    %431 = vector.broadcast %430 : vector<1x1x1x256xf32> to vector<1x8x8x256xf32>
    %c0_i32_179 = arith.constant 0 : i32
    %c8_i32_180 = arith.constant 8 : i32
    %432 = arith.muli %c0_i32_179, %c8_i32_180 : i32
    %433 = tpu.assume_multiple %432, 8 : i32
    %c0_181 = arith.constant 0 : index
    %434 = arith.index_cast %433 : i32 to index
    %c0_182 = arith.constant 0 : index
    %c0_183 = arith.constant 0 : index
    %435 = vector.load %arg20[%c0_181, %434, %c0_182, %c0_183] : memref<1x16x8x256xf32, #tpu.memory_space<vmem>>, vector<1x8x8x256xf32>
    %436 = arith.mulf %435, %431 : vector<1x8x8x256xf32>
    %437 = vector.shape_cast %436 : vector<1x8x8x256xf32> to vector<64x256xf32>
    %c0_184 = arith.constant 0 : index
    %c0_185 = arith.constant 0 : index
    %438 = vector.load %arg15[%c0_184, %c0_185] : memref<256x128xf32, #tpu.memory_space<vmem>>, vector<256x128xf32>
    %cst_186 = arith.constant dense<0.000000e+00> : vector<64x128xf32>
    %439 = tpu.matmul %437, %438, %cst_186 {dimension_numbers = #tpu.dot_dimension_numbers<[1], [0], [0], [1], [0, 0, 1, 1], [], []>} : vector<64x256xf32>, vector<256x128xf32>, vector<64x128xf32> -> vector<64x128xf32>
    %440 = vector.shape_cast %439 : vector<64x128xf32> to vector<1x8x8x128xf32>
    %c1_i32_187 = arith.constant 1 : i32
    %441 = arith.addi %c1_i32_187, %433 : i32
    %c0_188 = arith.constant 0 : index
    %442 = arith.index_cast %441 : i32 to index
    %c8_189 = arith.constant 8 : index
    %c0_190 = arith.constant 0 : index
    %443 = vector.load %arg17[%c0_188, %442, %c8_189, %c0_190] : memref<1x18x17x128xf32, #tpu.memory_space<vmem>>, vector<1x8x8x128xf32>
    tpu.vector_store %arg17[%c0_188, %442, %c8_189, %c0_190], %440 {strides = array<i32>} : memref<1x18x17x128xf32, #tpu.memory_space<vmem>>, vector<1x8x8x128xf32>,
    %c1_i32_191 = arith.constant 1 : i32
    %c8_i32_192 = arith.constant 8 : i32
    %444 = arith.muli %c1_i32_191, %c8_i32_192 : i32
    %445 = tpu.assume_multiple %444, 8 : i32
    %c0_193 = arith.constant 0 : index
    %446 = arith.index_cast %445 : i32 to index
    %c0_194 = arith.constant 0 : index
    %c0_195 = arith.constant 0 : index
    %447 = vector.load %arg20[%c0_193, %446, %c0_194, %c0_195] : memref<1x16x8x256xf32, #tpu.memory_space<vmem>>, vector<1x8x8x256xf32>
    %448 = arith.mulf %447, %431 : vector<1x8x8x256xf32>
    %449 = vector.shape_cast %448 : vector<1x8x8x256xf32> to vector<64x256xf32>
    %c0_196 = arith.constant 0 : index
    %c0_197 = arith.constant 0 : index
    %450 = vector.load %arg15[%c0_196, %c0_197] : memref<256x128xf32, #tpu.memory_space<vmem>>, vector<256x128xf32>
    %cst_198 = arith.constant dense<0.000000e+00> : vector<64x128xf32>
    %451 = tpu.matmul %449, %450, %cst_198 {dimension_numbers = #tpu.dot_dimension_numbers<[1], [0], [0], [1], [0, 0, 1, 1], [], []>} : vector<64x256xf32>, vector<256x128xf32>, vector<64x128xf32> -> vector<64x128xf32>
    %452 = vector.shape_cast %451 : vector<64x128xf32> to vector<1x8x8x128xf32>
    %c1_i32_199 = arith.constant 1 : i32
    %453 = arith.addi %c1_i32_199, %445 : i32
    %c0_200 = arith.constant 0 : index
    %454 = arith.index_cast %453 : i32 to index
    %c8_201 = arith.constant 8 : index
    %c0_202 = arith.constant 0 : index
    %455 = vector.load %arg17[%c0_200, %454, %c8_201, %c0_202] : memref<1x18x17x128xf32, #tpu.memory_space<vmem>>, vector<1x8x8x128xf32>
    tpu.vector_store %arg17[%c0_200, %454, %c8_201, %c0_202], %452 {strides = array<i32>} : memref<1x18x17x128xf32, #tpu.memory_space<vmem>>, vector<1x8x8x128xf32>,
    %c2_i32_203 = arith.constant 2 : i32
    %c0_204 = arith.constant 0 : index
    %c0_205 = arith.constant 0 : index
    %c0_206 = arith.constant 0 : index
    %456 = vector.load %arg2[%c0_204, %c0_205, %c0_206] : memref<3x3x128xf32, #tpu.memory_space<vmem>>, vector<3x3x128xf32>
    %c0_207 = arith.constant 0 : index
    %c0_208 = arith.constant 0 : index
    %457 = vector.load %arg3[%c0_207, %c0_208] : memref<1x128xf32, #tpu.memory_space<vmem>>, vector<1x128xf32>
    %458 = vector.shape_cast %457 : vector<1x128xf32> to vector<1x1x1x128xf32>
    %459 = vector.shape_cast %458 : vector<1x1x1x128xf32> to vector<1x1x1x128xf32>
    %460 = vector.broadcast %459 : vector<1x1x1x128xf32> to vector<1x8x8x128xf32>
    %cst_209 = arith.constant 0.000000e+00 : f32
    %461 = vector.broadcast %cst_209 : f32 to vector<1x128xf32>
    %c0_i32_210 = arith.constant 0 : i32
    %c8_i32_211 = arith.constant 8 : i32
    %462 = arith.muli %c0_i32_210, %c8_i32_211 : i32
    %463 = tpu.assume_multiple %462, 8 : i32
    %c0_212 = arith.constant 0 : index
    %464 = arith.index_cast %463 : i32 to index
    %c7_213 = arith.constant 7 : index
    %c0_214 = arith.constant 0 : index
    %465 = vector.load %arg17[%c0_212, %464, %c7_213, %c0_214] : memref<1x18x17x128xf32, #tpu.memory_space<vmem>>, vector<1x10x8x128xf32>
    %466 = vector.extract_strided_slice %465 {offsets = [0, 0, 0, 0], sizes = [1, 8, 8, 128], strides = [1, 1, 1, 1]} : vector<1x10x8x128xf32> to vector<1x8x8x128xf32>
    %467 = vector.extract_strided_slice %456 {offsets = [0, 0, 0], sizes = [1, 1, 128], strides = [1, 1, 1]} : vector<3x3x128xf32> to vector<1x1x128xf32>
    %468 = vector.shape_cast %467 : vector<1x1x128xf32> to vector<128xf32>
    %469 = vector.shape_cast %468 : vector<128xf32> to vector<1x1x1x128xf32>
    %470 = vector.broadcast %469 : vector<1x1x1x128xf32> to vector<1x8x8x128xf32>
    %471 = arith.mulf %466, %470 : vector<1x8x8x128xf32>
    %472 = arith.addf %460, %471 : vector<1x8x8x128xf32>
    %473 = vector.extract_strided_slice %465 {offsets = [0, 1, 0, 0], sizes = [1, 8, 8, 128], strides = [1, 1, 1, 1]} : vector<1x10x8x128xf32> to vector<1x8x8x128xf32>
    %474 = vector.extract_strided_slice %456 {offsets = [1, 0, 0], sizes = [1, 1, 128], strides = [1, 1, 1]} : vector<3x3x128xf32> to vector<1x1x128xf32>
    %475 = vector.shape_cast %474 : vector<1x1x128xf32> to vector<128xf32>
    %476 = vector.shape_cast %475 : vector<128xf32> to vector<1x1x1x128xf32>
    %477 = vector.broadcast %476 : vector<1x1x1x128xf32> to vector<1x8x8x128xf32>
    %478 = arith.mulf %473, %477 : vector<1x8x8x128xf32>
    %479 = arith.addf %472, %478 : vector<1x8x8x128xf32>
    %480 = vector.extract_strided_slice %465 {offsets = [0, 2, 0, 0], sizes = [1, 8, 8, 128], strides = [1, 1, 1, 1]} : vector<1x10x8x128xf32> to vector<1x8x8x128xf32>
    %481 = vector.extract_strided_slice %456 {offsets = [2, 0, 0], sizes = [1, 1, 128], strides = [1, 1, 1]} : vector<3x3x128xf32> to vector<1x1x128xf32>
    %482 = vector.shape_cast %481 : vector<1x1x128xf32> to vector<128xf32>
    %483 = vector.shape_cast %482 : vector<128xf32> to vector<1x1x1x128xf32>
    %484 = vector.broadcast %483 : vector<1x1x1x128xf32> to vector<1x8x8x128xf32>
    %485 = arith.mulf %480, %484 : vector<1x8x8x128xf32>
    %486 = arith.addf %479, %485 : vector<1x8x8x128xf32>
    %c0_215 = arith.constant 0 : index
    %487 = arith.index_cast %463 : i32 to index
    %c8_216 = arith.constant 8 : index
    %c0_217 = arith.constant 0 : index
    %488 = vector.load %arg17[%c0_215, %487, %c8_216, %c0_217] : memref<1x18x17x128xf32, #tpu.memory_space<vmem>>, vector<1x10x8x128xf32>
    %489 = vector.extract_strided_slice %488 {offsets = [0, 0, 0, 0], sizes = [1, 8, 8, 128], strides = [1, 1, 1, 1]} : vector<1x10x8x128xf32> to vector<1x8x8x128xf32>
    %490 = vector.extract_strided_slice %456 {offsets = [0, 1, 0], sizes = [1, 1, 128], strides = [1, 1, 1]} : vector<3x3x128xf32> to vector<1x1x128xf32>
    %491 = vector.shape_cast %490 : vector<1x1x128xf32> to vector<128xf32>
    %492 = vector.shape_cast %491 : vector<128xf32> to vector<1x1x1x128xf32>
    %493 = vector.broadcast %492 : vector<1x1x1x128xf32> to vector<1x8x8x128xf32>
    %494 = arith.mulf %489, %493 : vector<1x8x8x128xf32>
    %495 = arith.addf %486, %494 : vector<1x8x8x128xf32>
    %496 = vector.extract_strided_slice %488 {offsets = [0, 1, 0, 0], sizes = [1, 8, 8, 128], strides = [1, 1, 1, 1]} : vector<1x10x8x128xf32> to vector<1x8x8x128xf32>
    %497 = vector.extract_strided_slice %456 {offsets = [1, 1, 0], sizes = [1, 1, 128], strides = [1, 1, 1]} : vector<3x3x128xf32> to vector<1x1x128xf32>
    %498 = vector.shape_cast %497 : vector<1x1x128xf32> to vector<128xf32>
    %499 = vector.shape_cast %498 : vector<128xf32> to vector<1x1x1x128xf32>
    %500 = vector.broadcast %499 : vector<1x1x1x128xf32> to vector<1x8x8x128xf32>
    %501 = arith.mulf %496, %500 : vector<1x8x8x128xf32>
    %502 = arith.addf %495, %501 : vector<1x8x8x128xf32>
    %503 = vector.extract_strided_slice %488 {offsets = [0, 2, 0, 0], sizes = [1, 8, 8, 128], strides = [1, 1, 1, 1]} : vector<1x10x8x128xf32> to vector<1x8x8x128xf32>
    %504 = vector.extract_strided_slice %456 {offsets = [2, 1, 0], sizes = [1, 1, 128], strides = [1, 1, 1]} : vector<3x3x128xf32> to vector<1x1x128xf32>
    %505 = vector.shape_cast %504 : vector<1x1x128xf32> to vector<128xf32>
    %506 = vector.shape_cast %505 : vector<128xf32> to vector<1x1x1x128xf32>
    %507 = vector.broadcast %506 : vector<1x1x1x128xf32> to vector<1x8x8x128xf32>
    %508 = arith.mulf %503, %507 : vector<1x8x8x128xf32>
    %509 = arith.addf %502, %508 : vector<1x8x8x128xf32>
    %c0_218 = arith.constant 0 : index
    %510 = arith.index_cast %463 : i32 to index
    %c9_219 = arith.constant 9 : index
    %c0_220 = arith.constant 0 : index
    %511 = vector.load %arg17[%c0_218, %510, %c9_219, %c0_220] : memref<1x18x17x128xf32, #tpu.memory_space<vmem>>, vector<1x10x8x128xf32>
    %512 = vector.extract_strided_slice %511 {offsets = [0, 0, 0, 0], sizes = [1, 8, 8, 128], strides = [1, 1, 1, 1]} : vector<1x10x8x128xf32> to vector<1x8x8x128xf32>
    %513 = vector.extract_strided_slice %456 {offsets = [0, 2, 0], sizes = [1, 1, 128], strides = [1, 1, 1]} : vector<3x3x128xf32> to vector<1x1x128xf32>
    %514 = vector.shape_cast %513 : vector<1x1x128xf32> to vector<128xf32>
    %515 = vector.shape_cast %514 : vector<128xf32> to vector<1x1x1x128xf32>
    %516 = vector.broadcast %515 : vector<1x1x1x128xf32> to vector<1x8x8x128xf32>
    %517 = arith.mulf %512, %516 : vector<1x8x8x128xf32>
    %518 = arith.addf %509, %517 : vector<1x8x8x128xf32>
    %519 = vector.extract_strided_slice %511 {offsets = [0, 1, 0, 0], sizes = [1, 8, 8, 128], strides = [1, 1, 1, 1]} : vector<1x10x8x128xf32> to vector<1x8x8x128xf32>
    %520 = vector.extract_strided_slice %456 {offsets = [1, 2, 0], sizes = [1, 1, 128], strides = [1, 1, 1]} : vector<3x3x128xf32> to vector<1x1x128xf32>
    %521 = vector.shape_cast %520 : vector<1x1x128xf32> to vector<128xf32>
    %522 = vector.shape_cast %521 : vector<128xf32> to vector<1x1x1x128xf32>
    %523 = vector.broadcast %522 : vector<1x1x1x128xf32> to vector<1x8x8x128xf32>
    %524 = arith.mulf %519, %523 : vector<1x8x8x128xf32>
    %525 = arith.addf %518, %524 : vector<1x8x8x128xf32>
    %526 = vector.extract_strided_slice %511 {offsets = [0, 2, 0, 0], sizes = [1, 8, 8, 128], strides = [1, 1, 1, 1]} : vector<1x10x8x128xf32> to vector<1x8x8x128xf32>
    %527 = vector.extract_strided_slice %456 {offsets = [2, 2, 0], sizes = [1, 1, 128], strides = [1, 1, 1]} : vector<3x3x128xf32> to vector<1x1x128xf32>
    %528 = vector.shape_cast %527 : vector<1x1x128xf32> to vector<128xf32>
    %529 = vector.shape_cast %528 : vector<128xf32> to vector<1x1x1x128xf32>
    %530 = vector.broadcast %529 : vector<1x1x1x128xf32> to vector<1x8x8x128xf32>
    %531 = arith.mulf %526, %530 : vector<1x8x8x128xf32>
    %532 = arith.addf %525, %531 : vector<1x8x8x128xf32>
    %cst_221 = arith.constant 3.000000e+00 : f32
    %533 = vector.broadcast %cst_221 : f32 to vector<1x8x8x128xf32>
    %534 = arith.addf %532, %533 : vector<1x8x8x128xf32>
    %cst_222 = arith.constant 0.000000e+00 : f32
    %cst_223 = arith.constant 6.000000e+00 : f32
    %535 = vector.broadcast %cst_222 : f32 to vector<1x8x8x128xf32>
    %536 = arith.maximumf %535, %534 : vector<1x8x8x128xf32>
    %537 = vector.broadcast %cst_223 : f32 to vector<1x8x8x128xf32>
    %538 = arith.minimumf %537, %536 : vector<1x8x8x128xf32>
    %cst_224 = arith.constant 0.166666672 : f32
    %539 = vector.broadcast %cst_224 : f32 to vector<1x8x8x128xf32>
    %540 = arith.mulf %538, %539 : vector<1x8x8x128xf32>
    %541 = arith.mulf %532, %540 : vector<1x8x8x128xf32>
    %c0_225 = arith.constant 0 : index
    %542 = arith.index_cast %463 : i32 to index
    %c0_226 = arith.constant 0 : index
    %c0_227 = arith.constant 0 : index
    %543 = vector.load %arg19[%c0_225, %542, %c0_226, %c0_227] : memref<1x16x8x128xf32, #tpu.memory_space<vmem>>, vector<1x8x8x128xf32>
    tpu.vector_store %arg19[%c0_225, %542, %c0_226, %c0_227], %541 {strides = array<i32>} : memref<1x16x8x128xf32, #tpu.memory_space<vmem>>, vector<1x8x8x128xf32>,
    %cst_228 = arith.constant dense<0.000000e+00> : vector<1x128xf32>
    %544 = vector.multi_reduction <add>, %541, %cst_228 [1, 2] : vector<1x8x8x128xf32> to vector<1x128xf32>
    %545 = arith.addf %461, %544 : vector<1x128xf32>
    %c1_i32_229 = arith.constant 1 : i32
    %c8_i32_230 = arith.constant 8 : i32
    %546 = arith.muli %c1_i32_229, %c8_i32_230 : i32
    %547 = tpu.assume_multiple %546, 8 : i32
    %c0_231 = arith.constant 0 : index
    %548 = arith.index_cast %547 : i32 to index
    %c7_232 = arith.constant 7 : index
    %c0_233 = arith.constant 0 : index
    %549 = vector.load %arg17[%c0_231, %548, %c7_232, %c0_233] : memref<1x18x17x128xf32, #tpu.memory_space<vmem>>, vector<1x10x8x128xf32>
    %550 = vector.extract_strided_slice %549 {offsets = [0, 0, 0, 0], sizes = [1, 8, 8, 128], strides = [1, 1, 1, 1]} : vector<1x10x8x128xf32> to vector<1x8x8x128xf32>
    %551 = vector.extract_strided_slice %456 {offsets = [0, 0, 0], sizes = [1, 1, 128], strides = [1, 1, 1]} : vector<3x3x128xf32> to vector<1x1x128xf32>
    %552 = vector.shape_cast %551 : vector<1x1x128xf32> to vector<128xf32>
    %553 = vector.shape_cast %552 : vector<128xf32> to vector<1x1x1x128xf32>
    %554 = vector.broadcast %553 : vector<1x1x1x128xf32> to vector<1x8x8x128xf32>
    %555 = arith.mulf %550, %554 : vector<1x8x8x128xf32>
    %556 = arith.addf %460, %555 : vector<1x8x8x128xf32>
    %557 = vector.extract_strided_slice %549 {offsets = [0, 1, 0, 0], sizes = [1, 8, 8, 128], strides = [1, 1, 1, 1]} : vector<1x10x8x128xf32> to vector<1x8x8x128xf32>
    %558 = vector.extract_strided_slice %456 {offsets = [1, 0, 0], sizes = [1, 1, 128], strides = [1, 1, 1]} : vector<3x3x128xf32> to vector<1x1x128xf32>
    %559 = vector.shape_cast %558 : vector<1x1x128xf32> to vector<128xf32>
    %560 = vector.shape_cast %559 : vector<128xf32> to vector<1x1x1x128xf32>
    %561 = vector.broadcast %560 : vector<1x1x1x128xf32> to vector<1x8x8x128xf32>
    %562 = arith.mulf %557, %561 : vector<1x8x8x128xf32>
    %563 = arith.addf %556, %562 : vector<1x8x8x128xf32>
    %564 = vector.extract_strided_slice %549 {offsets = [0, 2, 0, 0], sizes = [1, 8, 8, 128], strides = [1, 1, 1, 1]} : vector<1x10x8x128xf32> to vector<1x8x8x128xf32>
    %565 = vector.extract_strided_slice %456 {offsets = [2, 0, 0], sizes = [1, 1, 128], strides = [1, 1, 1]} : vector<3x3x128xf32> to vector<1x1x128xf32>
    %566 = vector.shape_cast %565 : vector<1x1x128xf32> to vector<128xf32>
    %567 = vector.shape_cast %566 : vector<128xf32> to vector<1x1x1x128xf32>
    %568 = vector.broadcast %567 : vector<1x1x1x128xf32> to vector<1x8x8x128xf32>
    %569 = arith.mulf %564, %568 : vector<1x8x8x128xf32>
    %570 = arith.addf %563, %569 : vector<1x8x8x128xf32>
    %c0_234 = arith.constant 0 : index
    %571 = arith.index_cast %547 : i32 to index
    %c8_235 = arith.constant 8 : index
    %c0_236 = arith.constant 0 : index
    %572 = vector.load %arg17[%c0_234, %571, %c8_235, %c0_236] : memref<1x18x17x128xf32, #tpu.memory_space<vmem>>, vector<1x10x8x128xf32>
    %573 = vector.extract_strided_slice %572 {offsets = [0, 0, 0, 0], sizes = [1, 8, 8, 128], strides = [1, 1, 1, 1]} : vector<1x10x8x128xf32> to vector<1x8x8x128xf32>
    %574 = vector.extract_strided_slice %456 {offsets = [0, 1, 0], sizes = [1, 1, 128], strides = [1, 1, 1]} : vector<3x3x128xf32> to vector<1x1x128xf32>
    %575 = vector.shape_cast %574 : vector<1x1x128xf32> to vector<128xf32>
    %576 = vector.shape_cast %575 : vector<128xf32> to vector<1x1x1x128xf32>
    %577 = vector.broadcast %576 : vector<1x1x1x128xf32> to vector<1x8x8x128xf32>
    %578 = arith.mulf %573, %577 : vector<1x8x8x128xf32>
    %579 = arith.addf %570, %578 : vector<1x8x8x128xf32>
    %580 = vector.extract_strided_slice %572 {offsets = [0, 1, 0, 0], sizes = [1, 8, 8, 128], strides = [1, 1, 1, 1]} : vector<1x10x8x128xf32> to vector<1x8x8x128xf32>
    %581 = vector.extract_strided_slice %456 {offsets = [1, 1, 0], sizes = [1, 1, 128], strides = [1, 1, 1]} : vector<3x3x128xf32> to vector<1x1x128xf32>
    %582 = vector.shape_cast %581 : vector<1x1x128xf32> to vector<128xf32>
    %583 = vector.shape_cast %582 : vector<128xf32> to vector<1x1x1x128xf32>
    %584 = vector.broadcast %583 : vector<1x1x1x128xf32> to vector<1x8x8x128xf32>
    %585 = arith.mulf %580, %584 : vector<1x8x8x128xf32>
    %586 = arith.addf %579, %585 : vector<1x8x8x128xf32>
    %587 = vector.extract_strided_slice %572 {offsets = [0, 2, 0, 0], sizes = [1, 8, 8, 128], strides = [1, 1, 1, 1]} : vector<1x10x8x128xf32> to vector<1x8x8x128xf32>
    %588 = vector.extract_strided_slice %456 {offsets = [2, 1, 0], sizes = [1, 1, 128], strides = [1, 1, 1]} : vector<3x3x128xf32> to vector<1x1x128xf32>
    %589 = vector.shape_cast %588 : vector<1x1x128xf32> to vector<128xf32>
    %590 = vector.shape_cast %589 : vector<128xf32> to vector<1x1x1x128xf32>
    %591 = vector.broadcast %590 : vector<1x1x1x128xf32> to vector<1x8x8x128xf32>
    %592 = arith.mulf %587, %591 : vector<1x8x8x128xf32>
    %593 = arith.addf %586, %592 : vector<1x8x8x128xf32>
    %c0_237 = arith.constant 0 : index
    %594 = arith.index_cast %547 : i32 to index
    %c9_238 = arith.constant 9 : index
    %c0_239 = arith.constant 0 : index
    %595 = vector.load %arg17[%c0_237, %594, %c9_238, %c0_239] : memref<1x18x17x128xf32, #tpu.memory_space<vmem>>, vector<1x10x8x128xf32>
    %596 = vector.extract_strided_slice %595 {offsets = [0, 0, 0, 0], sizes = [1, 8, 8, 128], strides = [1, 1, 1, 1]} : vector<1x10x8x128xf32> to vector<1x8x8x128xf32>
    %597 = vector.extract_strided_slice %456 {offsets = [0, 2, 0], sizes = [1, 1, 128], strides = [1, 1, 1]} : vector<3x3x128xf32> to vector<1x1x128xf32>
    %598 = vector.shape_cast %597 : vector<1x1x128xf32> to vector<128xf32>
    %599 = vector.shape_cast %598 : vector<128xf32> to vector<1x1x1x128xf32>
    %600 = vector.broadcast %599 : vector<1x1x1x128xf32> to vector<1x8x8x128xf32>
    %601 = arith.mulf %596, %600 : vector<1x8x8x128xf32>
    %602 = arith.addf %593, %601 : vector<1x8x8x128xf32>
    %603 = vector.extract_strided_slice %595 {offsets = [0, 1, 0, 0], sizes = [1, 8, 8, 128], strides = [1, 1, 1, 1]} : vector<1x10x8x128xf32> to vector<1x8x8x128xf32>
    %604 = vector.extract_strided_slice %456 {offsets = [1, 2, 0], sizes = [1, 1, 128], strides = [1, 1, 1]} : vector<3x3x128xf32> to vector<1x1x128xf32>
    %605 = vector.shape_cast %604 : vector<1x1x128xf32> to vector<128xf32>
    %606 = vector.shape_cast %605 : vector<128xf32> to vector<1x1x1x128xf32>
    %607 = vector.broadcast %606 : vector<1x1x1x128xf32> to vector<1x8x8x128xf32>
    %608 = arith.mulf %603, %607 : vector<1x8x8x128xf32>
    %609 = arith.addf %602, %608 : vector<1x8x8x128xf32>
    %610 = vector.extract_strided_slice %595 {offsets = [0, 2, 0, 0], sizes = [1, 8, 8, 128], strides = [1, 1, 1, 1]} : vector<1x10x8x128xf32> to vector<1x8x8x128xf32>
    %611 = vector.extract_strided_slice %456 {offsets = [2, 2, 0], sizes = [1, 1, 128], strides = [1, 1, 1]} : vector<3x3x128xf32> to vector<1x1x128xf32>
    %612 = vector.shape_cast %611 : vector<1x1x128xf32> to vector<128xf32>
    %613 = vector.shape_cast %612 : vector<128xf32> to vector<1x1x1x128xf32>
    %614 = vector.broadcast %613 : vector<1x1x1x128xf32> to vector<1x8x8x128xf32>
    %615 = arith.mulf %610, %614 : vector<1x8x8x128xf32>
    %616 = arith.addf %609, %615 : vector<1x8x8x128xf32>
    %cst_240 = arith.constant 3.000000e+00 : f32
    %617 = vector.broadcast %cst_240 : f32 to vector<1x8x8x128xf32>
    %618 = arith.addf %616, %617 : vector<1x8x8x128xf32>
    %cst_241 = arith.constant 0.000000e+00 : f32
    %cst_242 = arith.constant 6.000000e+00 : f32
    %619 = vector.broadcast %cst_241 : f32 to vector<1x8x8x128xf32>
    %620 = arith.maximumf %619, %618 : vector<1x8x8x128xf32>
    %621 = vector.broadcast %cst_242 : f32 to vector<1x8x8x128xf32>
    %622 = arith.minimumf %621, %620 : vector<1x8x8x128xf32>
    %cst_243 = arith.constant 0.166666672 : f32
    %623 = vector.broadcast %cst_243 : f32 to vector<1x8x8x128xf32>
    %624 = arith.mulf %622, %623 : vector<1x8x8x128xf32>
    %625 = arith.mulf %616, %624 : vector<1x8x8x128xf32>
    %c0_244 = arith.constant 0 : index
    %626 = arith.index_cast %547 : i32 to index
    %c0_245 = arith.constant 0 : index
    %c0_246 = arith.constant 0 : index
    %627 = vector.load %arg19[%c0_244, %626, %c0_245, %c0_246] : memref<1x16x8x128xf32, #tpu.memory_space<vmem>>, vector<1x8x8x128xf32>
    tpu.vector_store %arg19[%c0_244, %626, %c0_245, %c0_246], %625 {strides = array<i32>} : memref<1x16x8x128xf32, #tpu.memory_space<vmem>>, vector<1x8x8x128xf32>,
    %cst_247 = arith.constant dense<0.000000e+00> : vector<1x128xf32>
    %628 = vector.multi_reduction <add>, %625, %cst_247 [1, 2] : vector<1x8x8x128xf32> to vector<1x128xf32>
    %629 = arith.addf %545, %628 : vector<1x128xf32>
    %c2_i32_248 = arith.constant 2 : i32
    %cst_249 = arith.constant 7.812500e-03 : f32
    %630 = vector.broadcast %cst_249 : f32 to vector<1x128xf32>
    %631 = arith.mulf %629, %630 : vector<1x128xf32>
    %c0_250 = arith.constant 0 : index
    %c0_251 = arith.constant 0 : index
    %632 = vector.load %arg4[%c0_250, %c0_251] : memref<128x32xf32, #tpu.memory_space<vmem>>, vector<128x32xf32>
    %cst_252 = arith.constant dense<0.000000e+00> : vector<1x32xf32>
    %633 = tpu.matmul %631, %632, %cst_252 {dimension_numbers = #tpu.dot_dimension_numbers<[1], [0], [0], [1], [0, 0, 1, 1], [], []>} : vector<1x128xf32>, vector<128x32xf32>, vector<1x32xf32> -> vector<1x32xf32>
    %c0_253 = arith.constant 0 : index
    %c0_254 = arith.constant 0 : index
    %634 = vector.load %arg5[%c0_253, %c0_254] : memref<1x32xf32, #tpu.memory_space<vmem>>, vector<1x32xf32>
    %635 = arith.addf %633, %634 : vector<1x32xf32>
    %cst_255 = arith.constant 0.000000e+00 : f32
    %636 = vector.broadcast %cst_255 : f32 to vector<1x32xf32>
    %637 = arith.maximumf %635, %636 : vector<1x32xf32>
    %c0_256 = arith.constant 0 : index
    %c0_257 = arith.constant 0 : index
    %638 = vector.load %arg6[%c0_256, %c0_257] : memref<32x128xf32, #tpu.memory_space<vmem>>, vector<32x128xf32>
    %cst_258 = arith.constant dense<0.000000e+00> : vector<1x128xf32>
    %639 = tpu.matmul %637, %638, %cst_258 {dimension_numbers = #tpu.dot_dimension_numbers<[1], [0], [0], [1], [0, 0, 1, 1], [], []>} : vector<1x32xf32>, vector<32x128xf32>, vector<1x128xf32> -> vector<1x128xf32>
    %c0_259 = arith.constant 0 : index
    %c0_260 = arith.constant 0 : index
    %640 = vector.load %arg7[%c0_259, %c0_260] : memref<1x128xf32, #tpu.memory_space<vmem>>, vector<1x128xf32>
    %641 = arith.addf %639, %640 : vector<1x128xf32>
    %cst_261 = arith.constant 3.000000e+00 : f32
    %642 = vector.broadcast %cst_261 : f32 to vector<1x128xf32>
    %643 = arith.addf %641, %642 : vector<1x128xf32>
    %cst_262 = arith.constant 0.000000e+00 : f32
    %cst_263 = arith.constant 6.000000e+00 : f32
    %644 = vector.broadcast %cst_262 : f32 to vector<1x128xf32>
    %645 = arith.maximumf %644, %643 : vector<1x128xf32>
    %646 = vector.broadcast %cst_263 : f32 to vector<1x128xf32>
    %647 = arith.minimumf %646, %645 : vector<1x128xf32>
    %cst_264 = arith.constant 0.166666672 : f32
    %648 = vector.broadcast %cst_264 : f32 to vector<1x128xf32>
    %649 = arith.mulf %647, %648 : vector<1x128xf32>
    %650 = vector.shape_cast %649 : vector<1x128xf32> to vector<1x1x1x128xf32>
    %651 = vector.shape_cast %650 : vector<1x1x1x128xf32> to vector<1x1x1x128xf32>
    %652 = vector.broadcast %651 : vector<1x1x1x128xf32> to vector<1x8x8x128xf32>
    %c0_i32_265 = arith.constant 0 : i32
    %c8_i32_266 = arith.constant 8 : i32
    %653 = arith.muli %c0_i32_265, %c8_i32_266 : i32
    %654 = tpu.assume_multiple %653, 8 : i32
    %c0_267 = arith.constant 0 : index
    %655 = arith.index_cast %654 : i32 to index
    %c0_268 = arith.constant 0 : index
    %c0_269 = arith.constant 0 : index
    %656 = vector.load %arg19[%c0_267, %655, %c0_268, %c0_269] : memref<1x16x8x128xf32, #tpu.memory_space<vmem>>, vector<1x8x8x128xf32>
    %657 = arith.mulf %656, %652 : vector<1x8x8x128xf32>
    %c0_270 = arith.constant 0 : index
    %658 = arith.index_cast %654 : i32 to index
    %c0_271 = arith.constant 0 : index
    %c0_272 = arith.constant 0 : index
    %659 = vector.load %arg1[%c0_270, %658, %c0_271, %c0_272] : memref<1x16x8x128xf32, #tpu.memory_space<vmem>>, vector<1x8x8x128xf32>
    %660 = arith.addf %657, %659 : vector<1x8x8x128xf32>
    %c0_273 = arith.constant 0 : index
    %661 = arith.index_cast %654 : i32 to index
    %c0_274 = arith.constant 0 : index
    %c0_275 = arith.constant 0 : index
    %662 = vector.load %arg16[%c0_273, %661, %c0_274, %c0_275] : memref<1x16x8x128xf32, #tpu.memory_space<vmem>>, vector<1x8x8x128xf32>
    tpu.vector_store %arg16[%c0_273, %661, %c0_274, %c0_275], %660 {strides = array<i32>} : memref<1x16x8x128xf32, #tpu.memory_space<vmem>>, vector<1x8x8x128xf32>,
    %c1_i32_276 = arith.constant 1 : i32
    %c8_i32_277 = arith.constant 8 : i32
    %663 = arith.muli %c1_i32_276, %c8_i32_277 : i32
    %664 = tpu.assume_multiple %663, 8 : i32
    %c0_278 = arith.constant 0 : index
    %665 = arith.index_cast %664 : i32 to index
    %c0_279 = arith.constant 0 : index
    %c0_280 = arith.constant 0 : index
    %666 = vector.load %arg19[%c0_278, %665, %c0_279, %c0_280] : memref<1x16x8x128xf32, #tpu.memory_space<vmem>>, vector<1x8x8x128xf32>
    %667 = arith.mulf %666, %652 : vector<1x8x8x128xf32>
    %c0_281 = arith.constant 0 : index
    %668 = arith.index_cast %664 : i32 to index
    %c0_282 = arith.constant 0 : index
    %c0_283 = arith.constant 0 : index
    %669 = vector.load %arg1[%c0_281, %668, %c0_282, %c0_283] : memref<1x16x8x128xf32, #tpu.memory_space<vmem>>, vector<1x8x8x128xf32>
    %670 = arith.addf %667, %669 : vector<1x8x8x128xf32>
    %c0_284 = arith.constant 0 : index
    %671 = arith.index_cast %664 : i32 to index
    %c0_285 = arith.constant 0 : index
    %c0_286 = arith.constant 0 : index
    %672 = vector.load %arg16[%c0_284, %671, %c0_285, %c0_286] : memref<1x16x8x128xf32, #tpu.memory_space<vmem>>, vector<1x8x8x128xf32>
    tpu.vector_store %arg16[%c0_284, %671, %c0_285, %c0_286], %670 {strides = array<i32>} : memref<1x16x8x128xf32, #tpu.memory_space<vmem>>, vector<1x8x8x128xf32>,
    %c2_i32_287 = arith.constant 2 : i32
    return
  }
  func.func @transform_0(%arg0: i32) -> (i32, i32, i32, i32) {
    %c0_i32 = arith.constant 0 : i32
    %c0_i32_0 = arith.constant 0 : i32
    %c0_i32_1 = arith.constant 0 : i32
    %c0_i32_2 = arith.constant 0 : i32
    return %arg0, %c0_i32, %c0_i32_0, %c0_i32_1 : i32, i32, i32, i32
  }
  func.func @transform_1(%arg0: i32) -> (i32, i32, i32) {
    %c0_i32 = arith.constant 0 : i32
    %c0_i32_0 = arith.constant 0 : i32
    %c0_i32_1 = arith.constant 0 : i32
    %c0_i32_2 = arith.constant 0 : i32
    return %c0_i32, %c0_i32_0, %c0_i32_1 : i32, i32, i32
  }
  func.func @transform_2(%arg0: i32) -> (i32, i32) {
    %c0_i32 = arith.constant 0 : i32
    %c0_i32_0 = arith.constant 0 : i32
    %c0_i32_1 = arith.constant 0 : i32
    return %c0_i32, %c0_i32_0 : i32, i32
  }
  func.func @transform_3(%arg0: i32) -> (i32, i32) {
    %c0_i32 = arith.constant 0 : i32
    %c0_i32_0 = arith.constant 0 : i32
    %c0_i32_1 = arith.constant 0 : i32
    return %c0_i32, %c0_i32_0 : i32, i32
  }
  func.func @transform_4(%arg0: i32) -> (i32, i32) {
    %c0_i32 = arith.constant 0 : i32
    %c0_i32_0 = arith.constant 0 : i32
    %c0_i32_1 = arith.constant 0 : i32
    return %c0_i32, %c0_i32_0 : i32, i32
  }
  func.func @transform_5(%arg0: i32) -> (i32, i32) {
    %c0_i32 = arith.constant 0 : i32
    %c0_i32_0 = arith.constant 0 : i32
    %c0_i32_1 = arith.constant 0 : i32
    return %c0_i32, %c0_i32_0 : i32, i32
  }
  func.func @transform_6(%arg0: i32) -> (i32, i32) {
    %c0_i32 = arith.constant 0 : i32
    %c0_i32_0 = arith.constant 0 : i32
    %c0_i32_1 = arith.constant 0 : i32
    return %c0_i32, %c0_i32_0 : i32, i32
  }
  func.func @transform_7(%arg0: i32) -> (i32, i32, i32) {
    %c0_i32 = arith.constant 0 : i32
    %c0_i32_0 = arith.constant 0 : i32
    %c0_i32_1 = arith.constant 0 : i32
    %c0_i32_2 = arith.constant 0 : i32
    return %c0_i32, %c0_i32_0, %c0_i32_1 : i32, i32, i32
  }
  func.func @transform_8(%arg0: i32) -> (i32, i32) {
    %c0_i32 = arith.constant 0 : i32
    %c0_i32_0 = arith.constant 0 : i32
    %c0_i32_1 = arith.constant 0 : i32
    return %c0_i32, %c0_i32_0 : i32, i32
  }
  func.func @transform_9(%arg0: i32) -> (i32, i32) {
    %c0_i32 = arith.constant 0 : i32
    %c0_i32_0 = arith.constant 0 : i32
    %c0_i32_1 = arith.constant 0 : i32
    return %c0_i32, %c0_i32_0 : i32, i32
  }
  func.func @transform_10(%arg0: i32) -> (i32, i32) {
    %c0_i32 = arith.constant 0 : i32
    %c0_i32_0 = arith.constant 0 : i32
    %c0_i32_1 = arith.constant 0 : i32
    return %c0_i32, %c0_i32_0 : i32, i32
  }
  func.func @transform_11(%arg0: i32) -> (i32, i32) {
    %c0_i32 = arith.constant 0 : i32
    %c0_i32_0 = arith.constant 0 : i32
    %c0_i32_1 = arith.constant 0 : i32
    return %c0_i32, %c0_i32_0 : i32, i32
  }
  func.func @transform_12(%arg0: i32) -> (i32, i32) {
    %c0_i32 = arith.constant 0 : i32
    %c0_i32_0 = arith.constant 0 : i32
    %c0_i32_1 = arith.constant 0 : i32
    return %c0_i32, %c0_i32_0 : i32, i32
  }
  func.func @transform_13(%arg0: i32) -> (i32, i32) {
    %c0_i32 = arith.constant 0 : i32
    %c0_i32_0 = arith.constant 0 : i32
    %c0_i32_1 = arith.constant 0 : i32
    return %c0_i32, %c0_i32_0 : i32, i32
  }
  func.func @transform_14(%arg0: i32) -> (i32, i32) {
    %c0_i32 = arith.constant 0 : i32
    %c0_i32_0 = arith.constant 0 : i32
    %c0_i32_1 = arith.constant 0 : i32
    return %c0_i32, %c0_i32_0 : i32, i32
  }
  func.func @transform_15(%arg0: i32) -> (i32, i32, i32, i32) {
    %c0_i32 = arith.constant 0 : i32
    %c0_i32_0 = arith.constant 0 : i32
    %c0_i32_1 = arith.constant 0 : i32
    %c0_i32_2 = arith.constant 0 : i32
    return %arg0, %c0_i32, %c0_i32_0, %c0_i32_1 : i32, i32, i32, i32
  }
}

</mosaic_0001>

<llo_original>
// kernel: _lambda_.1
$region0: #{_lambda_.1}
  #allocation0 [shape = 'u32[]', space=smem, size = 0x4, offset = 0x4, fixed_abs, tag = 'smem constant byte address 0x4 - core index']
  #allocation1 [shape = 'u32[144,128]{1,0:T(1,128)}', space=vmem, size = 0x12000, scoped, tag = 'internal scratch']
  #allocation2 [shape = 'f32[1,18,17,128]{3,2,1,0:T(8,128)}', space=vmem, size = 0x36000, scoped, tag = 'scratch operand']
  #allocation3 [shape = 'f32[1,18,17,256]{3,2,1,0:T(8,128)}', space=vmem, size = 0x6c000, scoped, tag = 'scratch operand']
  #allocation4 [shape = 'f32[1,16,8,128]{3,2,1,0:T(8,128)}', space=vmem, size = 0x10000, scoped, tag = 'scratch operand']
  #allocation5 [shape = 'f32[1,16,8,256]{3,2,1,0:T(8,128)}', space=vmem, size = 0x20000, scoped, tag = 'scratch operand']
  %s0 = inlined_call_operand.hbm [shape: f32[2,16,8,128], index: 0, kind: input, shape index: {}]
  %s1 = inlined_call_operand.hbm [shape: f32[3,3,128], index: 1, kind: input, shape index: {}]
  %s2 = inlined_call_operand.hbm [shape: f32[1,128], index: 2, kind: input, shape index: {}]
  %s3 = inlined_call_operand.hbm [shape: f32[128,32], index: 3, kind: input, shape index: {}]
  %s4 = inlined_call_operand.hbm [shape: f32[1,32], index: 4, kind: input, shape index: {}]
  %s5 = inlined_call_operand.hbm [shape: f32[32,128], index: 5, kind: input, shape index: {}]
  %s6 = inlined_call_operand.vmem [shape: f32[1,128], index: 6, kind: input, shape index: {}]
  %s7 = inlined_call_operand.vmem [shape: f32[3,3,256], index: 7, kind: input, shape index: {}]
  %s8 = inlined_call_operand.vmem [shape: f32[1,256], index: 8, kind: input, shape index: {}]
  %s9 = inlined_call_operand.hbm [shape: f32[256,64], index: 9, kind: input, shape index: {}]
  %s10 = inlined_call_operand.vmem [shape: f32[1,64], index: 10, kind: input, shape index: {}]
  %s11 = inlined_call_operand.hbm [shape: f32[64,256], index: 11, kind: input, shape index: {}]
  %s12 = inlined_call_operand.vmem [shape: f32[1,256], index: 12, kind: input, shape index: {}]
  %s13 = inlined_call_operand.hbm [shape: f32[128,256], index: 13, kind: input, shape index: {}]
  %s14 = inlined_call_operand.hbm [shape: f32[256,128], index: 14, kind: input, shape index: {}]
  %s15 = inlined_call_operand.hbm [shape: f32[2,16,8,128], index: 15, kind: output, shape index: {}]
  %s16 = sld [smem:[#allocation0]]
  $region133: #{_lambda_.1} parent=0
    _
  %s18 = ssub.s32 1, %s16
  %s19 = scalar_select 0, %s18, %s16
  $region1: #{_lambda_.1} parent=0
    #allocation6 [shape = 'u8[131072]{0}', space=vmem, size = 0x20000, scoped, tag = 'input window, operand 0']
    #allocation7 [shape = 's32[2]{0}', space=sflag, size = 0x8, scoped, tag = 'scoped memory for _lambda_.1']
    #allocation8 [shape = 's32[2]{0}', space=sflag, size = 0x8, scoped, tag = 'scoped memory for _lambda_.1']
    #allocation9 [shape = 'u8[6144]{0}', space=vmem, size = 0x1800, scoped, tag = 'input window, operand 1, single buffered']
    #allocation10 [shape = 's32[1]{0}', space=sflag, size = 0x4, scoped, tag = 'scoped memory for _lambda_.1']
    #allocation11 [shape = 'u8[512]{0}', space=vmem, size = 0x400, scoped, tag = 'input window, operand 2, single buffered']
    #allocation12 [shape = 'u8[65536]{0}', space=vmem, size = 0x10000, scoped, tag = 'input window, operand 3, single buffered']
    #allocation13 [shape = 's32[1]{0}', space=sflag, size = 0x4, scoped, tag = 'scoped memory for _lambda_.1']
    #allocation14 [shape = 'u8[512]{0}', space=vmem, size = 0x400, scoped, tag = 'input window, operand 4, single buffered']
    #allocation15 [shape = 'u8[16384]{0}', space=vmem, size = 0x4000, scoped, tag = 'input window, operand 5, single buffered']
    #allocation16 [shape = 's32[1]{0}', space=sflag, size = 0x4, scoped, tag = 'scoped memory for _lambda_.1']
    #allocation17 [shape = 'u8[131072]{0}', space=vmem, size = 0x20000, scoped, tag = 'input window, operand 9, single buffered']
    #allocation18 [shape = 'u8[65536]{0}', space=vmem, size = 0x10000, scoped, tag = 'input window, operand 11, single buffered']
    #allocation19 [shape = 's32[1]{0}', space=sflag, size = 0x4, scoped, tag = 'scoped memory for _lambda_.1']
    #allocation20 [shape = 'u8[131072]{0}', space=vmem, size = 0x20000, scoped, tag = 'input window, operand 13, single buffered']
    #allocation21 [shape = 'u8[131072]{0}', space=vmem, size = 0x20000, scoped, tag = 'input window, operand 14, single buffered']
    #allocation22 [shape = 's32[1]{0}', space=sflag, size = 0x4, scoped, tag = 'scoped memory for _lambda_.1']
    #allocation23 [shape = 'u8[131072]{0}', space=vmem, size = 0x20000, scoped, tag = 'output window, operand 0']
    %20 = vsyncpa [#allocation7], 0
    %s21 = scalar_lea.sflag [#allocation7], 1
    %22 = vsyncpa %s21, 0
    %23 = vsyncpa [#allocation10], 0
    %24 = vsyncpa [#allocation13], 0
    %25 = vsyncpa [#allocation16], 0
    %26 = vsyncpa [#allocation19], 0
    %27 = vsyncpa [#allocation22], 0
    %28 = vsyncpa [#allocation8], 0
    %s29 = scalar_lea.sflag [#allocation8], 1
    %30 = vsyncpa %s29, 0
    loop: start=0, step=1, limit=4
    $region2: #{_lambda_.1} parent=1 // loop_pre_header
      _
    $region3: #{_lambda_.1} parent=1 // loop_header
      %s32 = sphi 0, %s36
      %p33 = scmp.ge.s32.totalorder %s32, 4
      %s42 = sphi 0, %s44
      %s45 = sphi 0, %s42
      %s46 = sphi 0, %s45
      %s62 = sphi 0, %s46
      %s66 = sphi 0, %s66
      %s68 = sphi 0, %s66
      %s69 = sphi 0, %s68
      %s83 = sphi 0, %s69
      %s87 = sphi 0, %s87
      %s89 = sphi 0, %s87
      %s90 = sphi 0, %s89
      %s104 = sphi 0, %s90
      %s108 = sphi 0, %s108
      %s110 = sphi 0, %s108
      %s111 = sphi 0, %s110
      %s125 = sphi 0, %s111
      %s129 = sphi 0, %s129
      %s131 = sphi 0, %s129
      %s132 = sphi 0, %s131
      %s146 = sphi 0, %s132
      %s150 = sphi 0, %s150
      %s152 = sphi 0, %s150
      %s153 = sphi 0, %s152
      %s167 = sphi 0, %s153
      %s171 = sphi 0, %s171
      %s173 = sphi 0, %s171
      %s174 = sphi 0, %s173
      %s188 = sphi 0, %s174
      %s192 = sphi 0, %s192
      %s194 = sphi 0, %s192
      %s195 = sphi 0, %s194
      %s209 = sphi 0, %s195
      %s213 = sphi 0, %s213
      %s215 = sphi 0, %s213
      %s216 = sphi 0, %s215
      %s230 = sphi 0, %s216
      %s234 = sphi 0, %s234
      %s236 = sphi 0, %s234
      %s237 = sphi 0, %s236
      %s251 = sphi 0, %s237
      %s255 = sphi 0, %s255
      %s257 = sphi 0, %s255
      %s258 = sphi 0, %s257
      %s272 = sphi 0, %s258
      %s276 = sphi 0, %s276
      %s278 = sphi 0, %s276
      %s279 = sphi 0, %s278
      %s293 = sphi 0, %s279
      %s297 = sphi 0, %s297
      %s299 = sphi 0, %s297
      %s300 = sphi 0, %s299
      %s314 = sphi 0, %s300
      %s318 = sphi 0, %s318
      %s320 = sphi 0, %s318
      %s321 = sphi 0, %s320
      %s335 = sphi 0, %s321
      %s339 = sphi 0, %s339
      %s341 = sphi 0, %s339
      %s342 = sphi 0, %s341
      %s356 = sphi 0, %s342
      %s362 = sphi 0, %s364
      %s365 = sphi 0, %s362
      %s366 = sphi 0, %s365
      %s382 = sphi 0, %s366
    $region4: #{_lambda_.1} parent=1 // loop_header_branch
      %35 = sbr.rel (%p33) target = $region8
    $region5: #{_lambda_.1} parent=1 // loop_body
      %s37 = ssub.s32 %s32, 1
      %s38 = ssub.s32 %s32, 2
      %s39 = sadd.s32 %s32, 1
      %s40 = ssub.s32 %s32, %s39
      %p41 = scmp.eq.s32.totalorder %s40, 0
      %s43 = sadd.s32 %s42, 1
      %s44 = scalar_select %p41, %s42, %s43
      %p47 = pneg %p41
      %p48 = scmp.eq.s32.totalorder %s32, 1
      %p49 = por %p47, %p48
      %p50 = scmp.ne.s32.totalorder %s42, %s45
      %p51 = scmp.eq.s32.totalorder %s32, 0
      %p52 = por %p50, %p51
      %p53 = scmp.ne.s32.totalorder %s42, %s45
      %p54 = scmp.eq.s32.totalorder %s37, 1
      %p55 = por %p53, %p54
      %p56 = scmp.ne.s32.totalorder %s45, %s46
      %p57 = scmp.eq.s32.totalorder %s37, 0
      %p58 = por %p56, %p57
      %p59 = scmp.ne.s32.totalorder %s45, %s46
      %p60 = scmp.eq.s32.totalorder %s38, 1
      %p61 = por %p59, %p60
      %p63 = scmp.ne.s32.totalorder %s46, %s62
      %p64 = scmp.eq.s32.totalorder %s38, 0
      %p65 = por %p63, %p64
      %s67 = sadd.s32 %s66, 1
      %p70 = scmp.eq.s32.totalorder %s32, 1
      %p71 = scmp.ne.s32.totalorder %s66, %s68
      %p72 = scmp.eq.s32.totalorder %s32, 0
      %p73 = por %p71, %p72
      %p74 = scmp.ne.s32.totalorder %s66, %s68
      %p75 = scmp.eq.s32.totalorder %s37, 1
      %p76 = por %p74, %p75
      %p77 = scmp.ne.s32.totalorder %s68, %s69
      %p78 = scmp.eq.s32.totalorder %s37, 0
      %p79 = por %p77, %p78
      %p80 = scmp.ne.s32.totalorder %s68, %s69
      %p81 = scmp.eq.s32.totalorder %s38, 1
      %p82 = por %p80, %p81
      %p84 = scmp.ne.s32.totalorder %s69, %s83
      %p85 = scmp.eq.s32.totalorder %s38, 0
      %p86 = por %p84, %p85
      %s88 = sadd.s32 %s87, 1
      %p91 = scmp.eq.s32.totalorder %s32, 1
      %p92 = scmp.ne.s32.totalorder %s87, %s89
      %p93 = scmp.eq.s32.totalorder %s32, 0
      %p94 = por %p92, %p93
      %p95 = scmp.ne.s32.totalorder %s87, %s89
      %p96 = scmp.eq.s32.totalorder %s37, 1
      %p97 = por %p95, %p96
      %p98 = scmp.ne.s32.totalorder %s89, %s90
      %p99 = scmp.eq.s32.totalorder %s37, 0
      %p100 = por %p98, %p99
      %p101 = scmp.ne.s32.totalorder %s89, %s90
      %p102 = scmp.eq.s32.totalorder %s38, 1
      %p103 = por %p101, %p102
      %p105 = scmp.ne.s32.totalorder %s90, %s104
      %p106 = scmp.eq.s32.totalorder %s38, 0
      %p107 = por %p105, %p106
      %s109 = sadd.s32 %s108, 1
      %p112 = scmp.eq.s32.totalorder %s32, 1
      %p113 = scmp.ne.s32.totalorder %s108, %s110
      %p114 = scmp.eq.s32.totalorder %s32, 0
      %p115 = por %p113, %p114
      %p116 = scmp.ne.s32.totalorder %s108, %s110
      %p117 = scmp.eq.s32.totalorder %s37, 1
      %p118 = por %p116, %p117
      %p119 = scmp.ne.s32.totalorder %s110, %s111
      %p120 = scmp.eq.s32.totalorder %s37, 0
      %p121 = por %p119, %p120
      %p122 = scmp.ne.s32.totalorder %s110, %s111
      %p123 = scmp.eq.s32.totalorder %s38, 1
      %p124 = por %p122, %p123
      %p126 = scmp.ne.s32.totalorder %s111, %s125
      %p127 = scmp.eq.s32.totalorder %s38, 0
      %p128 = por %p126, %p127
      %s130 = sadd.s32 %s129, 1
      %p133 = scmp.eq.s32.totalorder %s32, 1
      %p134 = scmp.ne.s32.totalorder %s129, %s131
      %p135 = scmp.eq.s32.totalorder %s32, 0
      %p136 = por %p134, %p135
      %p137 = scmp.ne.s32.totalorder %s129, %s131
      %p138 = scmp.eq.s32.totalorder %s37, 1
      %p139 = por %p137, %p138
      %p140 = scmp.ne.s32.totalorder %s131, %s132
      %p141 = scmp.eq.s32.totalorder %s37, 0
      %p142 = por %p140, %p141
      %p143 = scmp.ne.s32.totalorder %s131, %s132
      %p144 = scmp.eq.s32.totalorder %s38, 1
      %p145 = por %p143, %p144
      %p147 = scmp.ne.s32.totalorder %s132, %s146
      %p148 = scmp.eq.s32.totalorder %s38, 0
      %p149 = por %p147, %p148
      %s151 = sadd.s32 %s150, 1
      %p154 = scmp.eq.s32.totalorder %s32, 1
      %p155 = scmp.ne.s32.totalorder %s150, %s152
      %p156 = scmp.eq.s32.totalorder %s32, 0
      %p157 = por %p155, %p156
      %p158 = scmp.ne.s32.totalorder %s150, %s152
      %p159 = scmp.eq.s32.totalorder %s37, 1
      %p160 = por %p158, %p159
      %p161 = scmp.ne.s32.totalorder %s152, %s153
      %p162 = scmp.eq.s32.totalorder %s37, 0
      %p163 = por %p161, %p162
      %p164 = scmp.ne.s32.totalorder %s152, %s153
      %p165 = scmp.eq.s32.totalorder %s38, 1
      %p166 = por %p164, %p165
      %p168 = scmp.ne.s32.totalorder %s153, %s167
      %p169 = scmp.eq.s32.totalorder %s38, 0
      %p170 = por %p168, %p169
      %s172 = sadd.s32 %s171, 1
      %p175 = scmp.eq.s32.totalorder %s32, 1
      %p176 = scmp.ne.s32.totalorder %s171, %s173
      %p177 = scmp.eq.s32.totalorder %s32, 0
      %p178 = por %p176, %p177
      %p179 = scmp.ne.s32.totalorder %s171, %s173
      %p180 = scmp.eq.s32.totalorder %s37, 1
      %p181 = por %p179, %p180
      %p182 = scmp.ne.s32.totalorder %s173, %s174
      %p183 = scmp.eq.s32.totalorder %s37, 0
      %p184 = por %p182, %p183
      %p185 = scmp.ne.s32.totalorder %s173, %s174
      %p186 = scmp.eq.s32.totalorder %s38, 1
      %p187 = por %p185, %p186
      %p189 = scmp.ne.s32.totalorder %s174, %s188
      %p190 = scmp.eq.s32.totalorder %s38, 0
      %p191 = por %p189, %p190
      %s193 = sadd.s32 %s192, 1
      %p196 = scmp.eq.s32.totalorder %s32, 1
      %p197 = scmp.ne.s32.totalorder %s192, %s194
      %p198 = scmp.eq.s32.totalorder %s32, 0
      %p199 = por %p197, %p198
      %p200 = scmp.ne.s32.totalorder %s192, %s194
      %p201 = scmp.eq.s32.totalorder %s37, 1
      %p202 = por %p200, %p201
      %p203 = scmp.ne.s32.totalorder %s194, %s195
      %p204 = scmp.eq.s32.totalorder %s37, 0
      %p205 = por %p203, %p204
      %p206 = scmp.ne.s32.totalorder %s194, %s195
      %p207 = scmp.eq.s32.totalorder %s38, 1
      %p208 = por %p206, %p207
      %p210 = scmp.ne.s32.totalorder %s195, %s209
      %p211 = scmp.eq.s32.totalorder %s38, 0
      %p212 = por %p210, %p211
      %s214 = sadd.s32 %s213, 1
      %p217 = scmp.eq.s32.totalorder %s32, 1
      %p218 = scmp.ne.s32.totalorder %s213, %s215
      %p219 = scmp.eq.s32.totalorder %s32, 0
      %p220 = por %p218, %p219
      %p221 = scmp.ne.s32.totalorder %s213, %s215
      %p222 = scmp.eq.s32.totalorder %s37, 1
      %p223 = por %p221, %p222
      %p224 = scmp.ne.s32.totalorder %s215, %s216
      %p225 = scmp.eq.s32.totalorder %s37, 0
      %p226 = por %p224, %p225
      %p227 = scmp.ne.s32.totalorder %s215, %s216
      %p228 = scmp.eq.s32.totalorder %s38, 1
      %p229 = por %p227, %p228
      %p231 = scmp.ne.s32.totalorder %s216, %s230
      %p232 = scmp.eq.s32.totalorder %s38, 0
      %p233 = por %p231, %p232
      %s235 = sadd.s32 %s234, 1
      %p238 = scmp.eq.s32.totalorder %s32, 1
      %p239 = scmp.ne.s32.totalorder %s234, %s236
      %p240 = scmp.eq.s32.totalorder %s32, 0
      %p241 = por %p239, %p240
      %p242 = scmp.ne.s32.totalorder %s234, %s236
      %p243 = scmp.eq.s32.totalorder %s37, 1
      %p244 = por %p242, %p243
      %p245 = scmp.ne.s32.totalorder %s236, %s237
      %p246 = scmp.eq.s32.totalorder %s37, 0
      %p247 = por %p245, %p246
      %p248 = scmp.ne.s32.totalorder %s236, %s237
      %p249 = scmp.eq.s32.totalorder %s38, 1
      %p250 = por %p248, %p249
      %p252 = scmp.ne.s32.totalorder %s237, %s251
      %p253 = scmp.eq.s32.totalorder %s38, 0
      %p254 = por %p252, %p253
      %s256 = sadd.s32 %s255, 1
      %p259 = scmp.eq.s32.totalorder %s32, 1
      %p260 = scmp.ne.s32.totalorder %s255, %s257
      %p261 = scmp.eq.s32.totalorder %s32, 0
      %p262 = por %p260, %p261
      %p263 = scmp.ne.s32.totalorder %s255, %s257
      %p264 = scmp.eq.s32.totalorder %s37, 1
      %p265 = por %p263, %p264
      %p266 = scmp.ne.s32.totalorder %s257, %s258
      %p267 = scmp.eq.s32.totalorder %s37, 0
      %p268 = por %p266, %p267
      %p269 = scmp.ne.s32.totalorder %s257, %s258
      %p270 = scmp.eq.s32.totalorder %s38, 1
      %p271 = por %p269, %p270
      %p273 = scmp.ne.s32.totalorder %s258, %s272
      %p274 = scmp.eq.s32.totalorder %s38, 0
      %p275 = por %p273, %p274
      %s277 = sadd.s32 %s276, 1
      %p280 = scmp.eq.s32.totalorder %s32, 1
      %p281 = scmp.ne.s32.totalorder %s276, %s278
      %p282 = scmp.eq.s32.totalorder %s32, 0
      %p283 = por %p281, %p282
      %p284 = scmp.ne.s32.totalorder %s276, %s278
      %p285 = scmp.eq.s32.totalorder %s37, 1
      %p286 = por %p284, %p285
      %p287 = scmp.ne.s32.totalorder %s278, %s279
      %p288 = scmp.eq.s32.totalorder %s37, 0
      %p289 = por %p287, %p288
      %p290 = scmp.ne.s32.totalorder %s278, %s279
      %p291 = scmp.eq.s32.totalorder %s38, 1
      %p292 = por %p290, %p291
      %p294 = scmp.ne.s32.totalorder %s279, %s293
      %p295 = scmp.eq.s32.totalorder %s38, 0
      %p296 = por %p294, %p295
      %s298 = sadd.s32 %s297, 1
      %p301 = scmp.eq.s32.totalorder %s32, 1
      %p302 = scmp.ne.s32.totalorder %s297, %s299
      %p303 = scmp.eq.s32.totalorder %s32, 0
      %p304 = por %p302, %p303
      %p305 = scmp.ne.s32.totalorder %s297, %s299
      %p306 = scmp.eq.s32.totalorder %s37, 1
      %p307 = por %p305, %p306
      %p308 = scmp.ne.s32.totalorder %s299, %s300
      %p309 = scmp.eq.s32.totalorder %s37, 0
      %p310 = por %p308, %p309
      %p311 = scmp.ne.s32.totalorder %s299, %s300
      %p312 = scmp.eq.s32.totalorder %s38, 1
      %p313 = por %p311, %p312
      %p315 = scmp.ne.s32.totalorder %s300, %s314
      %p316 = scmp.eq.s32.totalorder %s38, 0
      %p317 = por %p315, %p316
      %s319 = sadd.s32 %s318, 1
      %p322 = scmp.eq.s32.totalorder %s32, 1
      %p323 = scmp.ne.s32.totalorder %s318, %s320
      %p324 = scmp.eq.s32.totalorder %s32, 0
      %p325 = por %p323, %p324
      %p326 = scmp.ne.s32.totalorder %s318, %s320
      %p327 = scmp.eq.s32.totalorder %s37, 1
      %p328 = por %p326, %p327
      %p329 = scmp.ne.s32.totalorder %s320, %s321
      %p330 = scmp.eq.s32.totalorder %s37, 0
      %p331 = por %p329, %p330
      %p332 = scmp.ne.s32.totalorder %s320, %s321
      %p333 = scmp.eq.s32.totalorder %s38, 1
      %p334 = por %p332, %p333
      %p336 = scmp.ne.s32.totalorder %s321, %s335
      %p337 = scmp.eq.s32.totalorder %s38, 0
      %p338 = por %p336, %p337
      %s340 = sadd.s32 %s339, 1
      %p343 = scmp.eq.s32.totalorder %s32, 1
      %p344 = scmp.ne.s32.totalorder %s339, %s341
      %p345 = scmp.eq.s32.totalorder %s32, 0
      %p346 = por %p344, %p345
      %p347 = scmp.ne.s32.totalorder %s339, %s341
      %p348 = scmp.eq.s32.totalorder %s37, 1
      %p349 = por %p347, %p348
      %p350 = scmp.ne.s32.totalorder %s341, %s342
      %p351 = scmp.eq.s32.totalorder %s37, 0
      %p352 = por %p350, %p351
      %p353 = scmp.ne.s32.totalorder %s341, %s342
      %p354 = scmp.eq.s32.totalorder %s38, 1
      %p355 = por %p353, %p354
      %p357 = scmp.ne.s32.totalorder %s342, %s356
      %p358 = scmp.eq.s32.totalorder %s38, 0
      %p359 = por %p357, %p358
      %s360 = ssub.s32 %s32, %s39
      %p361 = scmp.eq.s32.totalorder %s360, 0
      %s363 = sadd.s32 %s362, 1
      %s364 = scalar_select %p361, %s362, %s363
      %p367 = pneg %p361
      %p368 = scmp.eq.s32.totalorder %s32, 1
      %p369 = por %p367, %p368
      %p370 = scmp.ne.s32.totalorder %s362, %s365
      %p371 = scmp.eq.s32.totalorder %s32, 0
      %p372 = por %p370, %p371
      %p373 = scmp.ne.s32.totalorder %s362, %s365
      %p374 = scmp.eq.s32.totalorder %s37, 1
      %p375 = por %p373, %p374
      %p376 = scmp.ne.s32.totalorder %s365, %s366
      %p377 = scmp.eq.s32.totalorder %s37, 0
      %p378 = por %p376, %p377
      %p379 = scmp.ne.s32.totalorder %s365, %s366
      %p380 = scmp.eq.s32.totalorder %s38, 1
      %p381 = por %p379, %p380
      %p383 = scmp.ne.s32.totalorder %s366, %s382
      %p384 = scmp.eq.s32.totalorder %s38, 0
      %p385 = por %p383, %p384
      %p386 = scmp.le.s32.totalorder 1, %s32
      %p387 = scmp.lt.s32.totalorder %s32, 3
      %p388 = pnand %p386, %p387
      %p389 = pneg %p388
      // Predicated region
      $region9: #{_lambda_.1} parent=5 // pred_check
        _
      $region10: #{_lambda_.1} parent=5 // pred_check_branch
        %391 = sbr.rel (%p388) target = $region12
      $region11: #{_lambda_.1} parent=5 // pred_region
        %s392 = ssub.s32 %s32, 1
        // Predicated region
        $region13: #{_lambda_.1} parent=11 // pred_check
          %p393 = pneg %p79
        $region14: #{_lambda_.1} parent=11 // pred_check_branch
          %395 = sbr.rel (%p393) target = $region16
        $region15: #{_lambda_.1} parent=11 // pred_region
          %s397 = ssub.s32 192, 192
          %398 = vsyncadd [#allocation10], %s397
          %s399 = sshll.u32 [#allocation9], 4
          %s400 = int_to_ptr.vmem [resolvable:$true] %s399
          %405 = dma.hbm_to_vmem [thread:$0]  %s1, 192, %s400, [#allocation10], 64, 64, 4
        $region16: #{_lambda_.1} parent=11 // pred_fallthru
          _
        // Predicated region
        $region17: #{_lambda_.1} parent=11 // pred_check
          %p406 = pneg %p100
        $region18: #{_lambda_.1} parent=11 // pred_check_branch
          %408 = sbr.rel (%p406) target = $region20
        $region19: #{_lambda_.1} parent=11 // pred_region
          %s410 = ssub.s32 16, 16
          %411 = vsyncadd [#allocation10], %s410
          %s413 = sshll.u32 [#allocation11], 4
          %s414 = int_to_ptr.vmem [resolvable:$true] %s413
          %416 = dma.hbm_to_vmem [thread:$0]  %s2, 16, %s414, [#allocation10]
        $region20: #{_lambda_.1} parent=11 // pred_fallthru
          _
        // Predicated region
        $region21: #{_lambda_.1} parent=11 // pred_check
          %p417 = pneg %p121
        $region22: #{_lambda_.1} parent=11 // pred_check_branch
          %419 = sbr.rel (%p417) target = $region24
        $region23: #{_lambda_.1} parent=11 // pred_region
          %s421 = ssub.s32 2048, 2048
          %422 = vsyncadd [#allocation13], %s421
          %s423 = sshll.u32 [#allocation12], 4
          %s424 = int_to_ptr.vmem [resolvable:$true] %s423
          %429 = dma.hbm_to_vmem [thread:$0]  %s3, 2048, %s424, [#allocation13], 128, 128, 8
        $region24: #{_lambda_.1} parent=11 // pred_fallthru
          _
        // Predicated region
        $region25: #{_lambda_.1} parent=11 // pred_check
          %p430 = pneg %p142
        $region26: #{_lambda_.1} parent=11 // pred_check_branch
          %432 = sbr.rel (%p430) target = $region28
        $region27: #{_lambda_.1} parent=11 // pred_region
          %s434 = ssub.s32 16, 16
          %435 = vsyncadd [#allocation13], %s434
          %s437 = sshll.u32 [#allocation14], 4
          %s438 = int_to_ptr.vmem [resolvable:$true] %s437
          %440 = dma.hbm_to_vmem [thread:$0]  %s4, 16, %s438, [#allocation13]
        $region28: #{_lambda_.1} parent=11 // pred_fallthru
          _
        // Predicated region
        $region29: #{_lambda_.1} parent=11 // pred_check
          %p441 = pneg %p163
        $region30: #{_lambda_.1} parent=11 // pred_check_branch
          %443 = sbr.rel (%p441) target = $region32
        $region31: #{_lambda_.1} parent=11 // pred_region
          %s445 = ssub.s32 512, 512
          %446 = vsyncadd [#allocation16], %s445
          %s447 = sshll.u32 [#allocation15], 4
          %s448 = int_to_ptr.vmem [resolvable:$true] %s447
          %453 = dma.hbm_to_vmem [thread:$0]  %s5, 512, %s448, [#allocation16], 128, 128, 8
        $region32: #{_lambda_.1} parent=11 // pred_fallthru
          _
        // Predicated region
        $region33: #{_lambda_.1} parent=11 // pred_check
          %p454 = pneg %p184
        $region34: #{_lambda_.1} parent=11 // pred_check_branch
          %456 = sbr.rel (%p454) target = $region36
        $region35: #{_lambda_.1} parent=11 // pred_region
          _
        $region36: #{_lambda_.1} parent=11 // pred_fallthru
          _
        // Predicated region
        $region37: #{_lambda_.1} parent=11 // pred_check
          %p457 = pneg %p205
        $region38: #{_lambda_.1} parent=11 // pred_check_branch
          %459 = sbr.rel (%p457) target = $region40
        $region39: #{_lambda_.1} parent=11 // pred_region
          _
        $region40: #{_lambda_.1} parent=11 // pred_fallthru
          _
        // Predicated region
        $region41: #{_lambda_.1} parent=11 // pred_check
          %p460 = pneg %p226
        $region42: #{_lambda_.1} parent=11 // pred_check_branch
          %462 = sbr.rel (%p460) target = $region44
        $region43: #{_lambda_.1} parent=11 // pred_region
          _
        $region44: #{_lambda_.1} parent=11 // pred_fallthru
          _
        // Predicated region
        $region45: #{_lambda_.1} parent=11 // pred_check
          %p463 = pneg %p247
        $region46: #{_lambda_.1} parent=11 // pred_check_branch
          %465 = sbr.rel (%p463) target = $region48
        $region47: #{_lambda_.1} parent=11 // pred_region
          %s467 = ssub.s32 4096, 4096
          %468 = vsyncadd [#allocation16], %s467
          %s469 = sshll.u32 [#allocation17], 4
          %s470 = int_to_ptr.vmem [resolvable:$true] %s469
          %475 = dma.hbm_to_vmem [thread:$0]  %s9, 4096, %s470, [#allocation16], 128, 128, 8
        $region48: #{_lambda_.1} parent=11 // pred_fallthru
          _
        // Predicated region
        $region49: #{_lambda_.1} parent=11 // pred_check
          %p476 = pneg %p268
        $region50: #{_lambda_.1} parent=11 // pred_check_branch
          %478 = sbr.rel (%p476) target = $region52
        $region51: #{_lambda_.1} parent=11 // pred_region
          _
        $region52: #{_lambda_.1} parent=11 // pred_fallthru
          _
        // Predicated region
        $region53: #{_lambda_.1} parent=11 // pred_check
          %p479 = pneg %p289
        $region54: #{_lambda_.1} parent=11 // pred_check_branch
          %481 = sbr.rel (%p479) target = $region56
        $region55: #{_lambda_.1} parent=11 // pred_region
          %s483 = ssub.s32 2048, 2048
          %484 = vsyncadd [#allocation19], %s483
          %s485 = sshll.u32 [#allocation18], 4
          %s486 = int_to_ptr.vmem [resolvable:$true] %s485
          %491 = dma.hbm_to_vmem [thread:$0]  %s11, 2048, %s486, [#allocation19], 256, 256, 16
        $region56: #{_lambda_.1} parent=11 // pred_fallthru
          _
        // Predicated region
        $region57: #{_lambda_.1} parent=11 // pred_check
          %p492 = pneg %p310
        $region58: #{_lambda_.1} parent=11 // pred_check_branch
          %494 = sbr.rel (%p492) target = $region60
        $region59: #{_lambda_.1} parent=11 // pred_region
          _
        $region60: #{_lambda_.1} parent=11 // pred_fallthru
          _
        // Predicated region
        $region61: #{_lambda_.1} parent=11 // pred_check
          %p495 = pneg %p331
        $region62: #{_lambda_.1} parent=11 // pred_check_branch
          %497 = sbr.rel (%p495) target = $region64
        $region63: #{_lambda_.1} parent=11 // pred_region
          %s499 = ssub.s32 4096, 4096
          %500 = vsyncadd [#allocation19], %s499
          %s501 = sshll.u32 [#allocation20], 4
          %s502 = int_to_ptr.vmem [resolvable:$true] %s501
          %507 = dma.hbm_to_vmem [thread:$0]  %s13, 4096, %s502, [#allocation19], 256, 256, 16
        $region64: #{_lambda_.1} parent=11 // pred_fallthru
          _
        // Predicated region
        $region65: #{_lambda_.1} parent=11 // pred_check
          %p508 = pneg %p352
        $region66: #{_lambda_.1} parent=11 // pred_check_branch
          %510 = sbr.rel (%p508) target = $region68
        $region67: #{_lambda_.1} parent=11 // pred_region
          %s512 = ssub.s32 4096, 4096
          %513 = vsyncadd [#allocation22], %s512
          %s514 = sshll.u32 [#allocation21], 4
          %s515 = int_to_ptr.vmem [resolvable:$true] %s514
          %520 = dma.hbm_to_vmem [thread:$0]  %s14, 4096, %s515, [#allocation22], 128, 128, 8
        $region68: #{_lambda_.1} parent=11 // pred_fallthru
          _
      $region12: #{_lambda_.1} parent=5 // pred_fallthru
        _
      %p521 = scmp.lt.s32.totalorder %s32, 2
      // Predicated region
      $region69: #{_lambda_.1} parent=5 // pred_check
        %p522 = pneg %p521
      $region70: #{_lambda_.1} parent=5 // pred_check_branch
        %524 = sbr.rel (%p522) target = $region72
      $region71: #{_lambda_.1} parent=5 // pred_region
        // Predicated region
        $region73: #{_lambda_.1} parent=71 // pred_check
          %p525 = pneg %p52
        $region74: #{_lambda_.1} parent=71 // pred_check_branch
          %527 = sbr.rel (%p525) target = $region76
        $region75: #{_lambda_.1} parent=71 // pred_region
          %s528 = sand.u32 %s42, 1
          %s529 = scalar_lea.sflag [#allocation7], %s528
          %s530 = sand.u32 %s42, 1
          %s531 = smul.addr %s530, 128
          %s532 = scalar_lea.vmem [#allocation6], %s531
          %s534 = ssub.s32 2048, 2048
          %535 = vsyncadd %s529, %s534
          %s536 = smul.addr %s32, 16
          %s537 = smul.addr %s536, 128
          %s538 = scalar_lea.hbm %s0, %s537
          %s539 = sshll.u32 %s532, 4
          %s540 = int_to_ptr.vmem [resolvable:$true] %s539
          %545 = dma.hbm_to_vmem [thread:$0]  %s538, 2048, %s540, %s529, 128, 128, 8
        $region76: #{_lambda_.1} parent=71 // pred_fallthru
          _
      $region72: #{_lambda_.1} parent=5 // pred_fallthru
        _
      %p546 = scmp.le.s32.totalorder 1, %s32
      %p547 = scmp.lt.s32.totalorder %s32, 3
      %p548 = pnand %p546, %p547
      %p549 = pneg %p548
      // Predicated region
      $region77: #{_lambda_.1} parent=5 // pred_check
        _
      $region78: #{_lambda_.1} parent=5 // pred_check_branch
        %551 = sbr.rel (%p548) target = $region80
      $region79: #{_lambda_.1} parent=5 // pred_region
        %s552 = ssub.s32 %s32, 1
        %s553 = sand.u32 %s45, 1
        %s554 = scalar_lea.sflag [#allocation7], %s553
        %s555 = sand.u32 %s45, 1
        %s556 = smul.addr %s555, 128
        %s557 = scalar_lea.vmem [#allocation6], %s556
        // Predicated region
        $region81: #{_lambda_.1} parent=79 // pred_check
          %p558 = pneg %p58
        $region82: #{_lambda_.1} parent=79 // pred_check_branch
          %560 = sbr.rel (%p558) target = $region84
        $region83: #{_lambda_.1} parent=79 // pred_region
          %561 = dma.done %s554, 2048
        $region84: #{_lambda_.1} parent=79 // pred_fallthru
          _
        // Predicated region
        $region85: #{_lambda_.1} parent=79 // pred_check
          %p562 = pneg %p79
        $region86: #{_lambda_.1} parent=79 // pred_check_branch
          %564 = sbr.rel (%p562) target = $region88
        $region87: #{_lambda_.1} parent=79 // pred_region
          %565 = dma.done [#allocation10], 192
        $region88: #{_lambda_.1} parent=79 // pred_fallthru
          _
        // Predicated region
        $region89: #{_lambda_.1} parent=79 // pred_check
          %p566 = pneg %p100
        $region90: #{_lambda_.1} parent=79 // pred_check_branch
          %568 = sbr.rel (%p566) target = $region92
        $region91: #{_lambda_.1} parent=79 // pred_region
          %569 = dma.done [#allocation10], 16
        $region92: #{_lambda_.1} parent=79 // pred_fallthru
          _
        // Predicated region
        $region93: #{_lambda_.1} parent=79 // pred_check
          %p570 = pneg %p121
        $region94: #{_lambda_.1} parent=79 // pred_check_branch
          %572 = sbr.rel (%p570) target = $region96
        $region95: #{_lambda_.1} parent=79 // pred_region
          %573 = dma.done [#allocation13], 2048
        $region96: #{_lambda_.1} parent=79 // pred_fallthru
          _
        // Predicated region
        $region97: #{_lambda_.1} parent=79 // pred_check
          %p574 = pneg %p142
        $region98: #{_lambda_.1} parent=79 // pred_check_branch
          %576 = sbr.rel (%p574) target = $region100
        $region99: #{_lambda_.1} parent=79 // pred_region
          %577 = dma.done [#allocation13], 16
        $region100: #{_lambda_.1} parent=79 // pred_fallthru
          _
        // Predicated region
        $region101: #{_lambda_.1} parent=79 // pred_check
          %p578 = pneg %p163
        $region102: #{_lambda_.1} parent=79 // pred_check_branch
          %580 = sbr.rel (%p578) target = $region104
        $region103: #{_lambda_.1} parent=79 // pred_region
          %581 = dma.done [#allocation16], 512
        $region104: #{_lambda_.1} parent=79 // pred_fallthru
          _
        // Predicated region
        $region105: #{_lambda_.1} parent=79 // pred_check
          %p582 = pneg %p247
        $region106: #{_lambda_.1} parent=79 // pred_check_branch
          %584 = sbr.rel (%p582) target = $region108
        $region107: #{_lambda_.1} parent=79 // pred_region
          %585 = dma.done [#allocation16], 4096
        $region108: #{_lambda_.1} parent=79 // pred_fallthru
          _
        // Predicated region
        $region109: #{_lambda_.1} parent=79 // pred_check
          %p586 = pneg %p289
        $region110: #{_lambda_.1} parent=79 // pred_check_branch
          %588 = sbr.rel (%p586) target = $region112
        $region111: #{_lambda_.1} parent=79 // pred_region
          %589 = dma.done [#allocation19], 2048
        $region112: #{_lambda_.1} parent=79 // pred_fallthru
          _
        // Predicated region
        $region113: #{_lambda_.1} parent=79 // pred_check
          %p590 = pneg %p331
        $region114: #{_lambda_.1} parent=79 // pred_check_branch
          %592 = sbr.rel (%p590) target = $region116
        $region115: #{_lambda_.1} parent=79 // pred_region
          %593 = dma.done [#allocation19], 4096
        $region116: #{_lambda_.1} parent=79 // pred_fallthru
          _
        // Predicated region
        $region117: #{_lambda_.1} parent=79 // pred_check
          %p594 = pneg %p352
        $region118: #{_lambda_.1} parent=79 // pred_check_branch
          %596 = sbr.rel (%p594) target = $region120
        $region119: #{_lambda_.1} parent=79 // pred_region
          %597 = dma.done [#allocation22], 4096
        $region120: #{_lambda_.1} parent=79 // pred_fallthru
          _
        %s598 = sand.u32 %s45, 1
        %s599 = scalar_lea.sflag [#allocation7], %s598
        %s600 = sand.u32 %s45, 1
        %s601 = smul.addr %s600, 128
        %s602 = scalar_lea.vmem [#allocation6], %s601
        %p603 = pneg %p58
        %p604 = pneg %p55
        %p605 = pneg %p79
        %p606 = pneg %p76
        %p607 = pneg %p100
        %p608 = pneg %p97
        %p609 = pneg %p121
        %p610 = pneg %p118
        %p611 = pneg %p142
        %p612 = pneg %p139
        %p613 = pneg %p163
        %p614 = pneg %p160
        %p615 = pneg %p184
        %p616 = pneg %p181
        %p617 = pneg %p205
        %p618 = pneg %p202
        %p619 = pneg %p226
        %p620 = pneg %p223
        %p621 = pneg %p247
        %p622 = pneg %p244
        %p623 = pneg %p268
        %p624 = pneg %p265
        %p625 = pneg %p289
        %p626 = pneg %p286
        %p627 = pneg %p310
        %p628 = pneg %p307
        %p629 = pneg %p331
        %p630 = pneg %p328
        %p631 = pneg %p352
        %p632 = pneg %p349
        %p633 = pneg %p378
        %p634 = pneg %p375
        %s635 = sand.u32 %s365, 1
        %s636 = scalar_lea.sflag [#allocation8], %s635
        %s637 = sand.u32 %s365, 1
        %s638 = smul.addr %s637, 128
        %s639 = scalar_lea.vmem [#allocation23], %s638
        %640 = vst [vmem:[#allocation2 + $0x7] sm:$0xff] 0.0
        %641 = vst [vmem:[#allocation2 + $0xf] sm:$0x3] 0.0
        %s642 = scalar_lea.vmem [#allocation2], 408
        %643 = vst [vmem:[%s642 + $0x7] sm:$0xff] 0.0
        %644 = vst [vmem:[%s642 + $0xf] sm:$0x3] 0.0
        %s645 = scalar_lea.vmem [#allocation2], 24
        %646 = vst [vmem:[%s645 + $0x7] sm:$0x1] 0.0
        %647 = vst [vmem:[%s645 + $0x1f] sm:$0x1] 0.0
        %648 = vst [vmem:[%s645 + $0x37] sm:$0x1] 0.0
        %649 = vst [vmem:[%s645 + $0x4f] sm:$0x1] 0.0
        %650 = vst [vmem:[%s645 + $0x67] sm:$0x1] 0.0
        %651 = vst [vmem:[%s645 + $0x7f] sm:$0x1] 0.0
        %652 = vst [vmem:[%s645 + $0x97] sm:$0x1] 0.0
        %653 = vst [vmem:[%s645 + $0xaf] sm:$0x1] 0.0
        %654 = vst [vmem:[%s645 + $0xc7] sm:$0x1] 0.0
        %655 = vst [vmem:[%s645 + $0xdf] sm:$0x1] 0.0
        %656 = vst [vmem:[%s645 + $0xf7] sm:$0x1] 0.0
        %657 = vst [vmem:[%s645 + $0x10f] sm:$0x1] 0.0
        %658 = vst [vmem:[%s645 + $0x127] sm:$0x1] 0.0
        %659 = vst [vmem:[%s645 + $0x13f] sm:$0x1] 0.0
        %660 = vst [vmem:[%s645 + $0x157] sm:$0x1] 0.0
        %661 = vst [vmem:[%s645 + $0x16f] sm:$0x1] 0.0
        %662 = vst [vmem:[%s645 + $0x10] sm:$0x1] 0.0
        %663 = vst [vmem:[%s645 + $0x28] sm:$0x1] 0.0
        %664 = vst [vmem:[%s645 + $0x40] sm:$0x1] 0.0
        %665 = vst [vmem:[%s645 + $0x58] sm:$0x1] 0.0
        %666 = vst [vmem:[%s645 + $0x70] sm:$0x1] 0.0
        %667 = vst [vmem:[%s645 + $0x88] sm:$0x1] 0.0
        %668 = vst [vmem:[%s645 + $0xa0] sm:$0x1] 0.0
        %669 = vst [vmem:[%s645 + $0xb8] sm:$0x1] 0.0
        %670 = vst [vmem:[%s645 + $0xd0] sm:$0x1] 0.0
        %671 = vst [vmem:[%s645 + $0xe8] sm:$0x1] 0.0
        %672 = vst [vmem:[%s645 + $0x100] sm:$0x1] 0.0
        %673 = vst [vmem:[%s645 + $0x118] sm:$0x1] 0.0
        %674 = vst [vmem:[%s645 + $0x130] sm:$0x1] 0.0
        %675 = vst [vmem:[%s645 + $0x148] sm:$0x1] 0.0
        %676 = vst [vmem:[%s645 + $0x160] sm:$0x1] 0.0
        %677 = vst [vmem:[%s645 + $0x178] sm:$0x1] 0.0
        %678 = vst [vmem:[#allocation3] sm:$0x80] 0.0
        %679 = vst [vmem:[#allocation3 + $0x8] sm:$0x80] 0.0
        %680 = vst [vmem:[#allocation3 + $0x10] sm:$0xff] 0.0
        %681 = vst [vmem:[#allocation3 + $0x18] sm:$0xff] 0.0
        %682 = vst [vmem:[#allocation3 + $0x20] sm:$0x1] 0.0
        %683 = vst [vmem:[#allocation3 + $0x28] sm:$0x1] 0.0
        %s684 = scalar_lea.vmem [#allocation3], 816
        %685 = vst [vmem:[%s684] sm:$0x80] 0.0
        %686 = vst [vmem:[%s684 + $0x8] sm:$0x80] 0.0
        %687 = vst [vmem:[%s684 + $0x10] sm:$0xff] 0.0
        %688 = vst [vmem:[%s684 + $0x18] sm:$0xff] 0.0
        %689 = vst [vmem:[%s684 + $0x20] sm:$0x1] 0.0
        %690 = vst [vmem:[%s684 + $0x28] sm:$0x1] 0.0
        %s691 = scalar_lea.vmem [#allocation3], 48
        %v692 = vlaneseq
        %vm693 = vcmp.ge.s32.totalorder %v692, 0
        %vm694 = vcmp.lt.s32.totalorder %v692, 256
        %vm695 = vmand %vm693, %vm694
        %s696 = scalar_lea.vmem %s691, 7 [#allocation3]
        %697 = vst.msk [vmem:[%s696] ss:$8 sm:$0x3] %vm695, 0.0
        %698 = vst.msk [vmem:[%s696] ss:$8 sm:$0x0] %vm695, 0.0
        %s699 = scalar_lea.vmem %s691, 55 [#allocation3]
        %700 = vst.msk [vmem:[%s699] ss:$8 sm:$0x3] %vm695, 0.0
        %701 = vst.msk [vmem:[%s699] ss:$8 sm:$0x0] %vm695, 0.0
        %s702 = scalar_lea.vmem %s691, 103 [#allocation3]
        %703 = vst.msk [vmem:[%s702] ss:$8 sm:$0x3] %vm695, 0.0
        %704 = vst.msk [vmem:[%s702] ss:$8 sm:$0x0] %vm695, 0.0
        %s705 = scalar_lea.vmem %s691, 151 [#allocation3]
        %706 = vst.msk [vmem:[%s705] ss:$8 sm:$0x3] %vm695, 0.0
        %707 = vst.msk [vmem:[%s705] ss:$8 sm:$0x0] %vm695, 0.0
        %s708 = scalar_lea.vmem %s691, 199 [#allocation3]
        %709 = vst.msk [vmem:[%s708] ss:$8 sm:$0x3] %vm695, 0.0
        %710 = vst.msk [vmem:[%s708] ss:$8 sm:$0x0] %vm695, 0.0
        %s711 = scalar_lea.vmem %s691, 247 [#allocation3]
        %712 = vst.msk [vmem:[%s711] ss:$8 sm:$0x3] %vm695, 0.0
        %713 = vst.msk [vmem:[%s711] ss:$8 sm:$0x0] %vm695, 0.0
        %s714 = scalar_lea.vmem %s691, 295 [#allocation3]
        %715 = vst.msk [vmem:[%s714] ss:$8 sm:$0x3] %vm695, 0.0
        %716 = vst.msk [vmem:[%s714] ss:$8 sm:$0x0] %vm695, 0.0
        %s717 = scalar_lea.vmem %s691, 343 [#allocation3]
        %718 = vst.msk [vmem:[%s717] ss:$8 sm:$0x3] %vm695, 0.0
        %719 = vst.msk [vmem:[%s717] ss:$8 sm:$0x0] %vm695, 0.0
        %s720 = scalar_lea.vmem %s691, 391 [#allocation3]
        %721 = vst.msk [vmem:[%s720] ss:$8 sm:$0x3] %vm695, 0.0
        %722 = vst.msk [vmem:[%s720] ss:$8 sm:$0x0] %vm695, 0.0
        %s723 = scalar_lea.vmem %s691, 439 [#allocation3]
        %724 = vst.msk [vmem:[%s723] ss:$8 sm:$0x3] %vm695, 0.0
        %725 = vst.msk [vmem:[%s723] ss:$8 sm:$0x0] %vm695, 0.0
        %s726 = scalar_lea.vmem %s691, 487 [#allocation3]
        %727 = vst.msk [vmem:[%s726] ss:$8 sm:$0x3] %vm695, 0.0
        %728 = vst.msk [vmem:[%s726] ss:$8 sm:$0x0] %vm695, 0.0
        %s729 = scalar_lea.vmem %s691, 535 [#allocation3]
        %730 = vst.msk [vmem:[%s729] ss:$8 sm:$0x3] %vm695, 0.0
        %731 = vst.msk [vmem:[%s729] ss:$8 sm:$0x0] %vm695, 0.0
        %s732 = scalar_lea.vmem %s691, 583 [#allocation3]
        %733 = vst.msk [vmem:[%s732] ss:$8 sm:$0x3] %vm695, 0.0
        %734 = vst.msk [vmem:[%s732] ss:$8 sm:$0x0] %vm695, 0.0
        %s735 = scalar_lea.vmem %s691, 631 [#allocation3]
        %736 = vst.msk [vmem:[%s735] ss:$8 sm:$0x3] %vm695, 0.0
        %737 = vst.msk [vmem:[%s735] ss:$8 sm:$0x0] %vm695, 0.0
        %s738 = scalar_lea.vmem %s691, 679 [#allocation3]
        %739 = vst.msk [vmem:[%s738] ss:$8 sm:$0x3] %vm695, 0.0
        %740 = vst.msk [vmem:[%s738] ss:$8 sm:$0x0] %vm695, 0.0
        %s741 = scalar_lea.vmem %s691, 727 [#allocation3]
        %742 = vst.msk [vmem:[%s741] ss:$8 sm:$0x3] %vm695, 0.0
        %743 = vst.msk [vmem:[%s741] ss:$8 sm:$0x0] %vm695, 0.0
        %s744 = scalar_lea.vmem %s691, 32 [#allocation3]
        %745 = vst.msk [vmem:[%s744] ss:$8 sm:$0x3] %vm695, 0.0
        %746 = vst.msk [vmem:[%s744] ss:$8 sm:$0x0] %vm695, 0.0
        %s747 = scalar_lea.vmem %s691, 80 [#allocation3]
        %748 = vst.msk [vmem:[%s747] ss:$8 sm:$0x3] %vm695, 0.0
        %749 = vst.msk [vmem:[%s747] ss:$8 sm:$0x0] %vm695, 0.0
        %s750 = scalar_lea.vmem %s691, 128 [#allocation3]
        %751 = vst.msk [vmem:[%s750] ss:$8 sm:$0x3] %vm695, 0.0
        %752 = vst.msk [vmem:[%s750] ss:$8 sm:$0x0] %vm695, 0.0
        %s753 = scalar_lea.vmem %s691, 176 [#allocation3]
        %754 = vst.msk [vmem:[%s753] ss:$8 sm:$0x3] %vm695, 0.0
        %755 = vst.msk [vmem:[%s753] ss:$8 sm:$0x0] %vm695, 0.0
        %s756 = scalar_lea.vmem %s691, 224 [#allocation3]
        %757 = vst.msk [vmem:[%s756] ss:$8 sm:$0x3] %vm695, 0.0
        %758 = vst.msk [vmem:[%s756] ss:$8 sm:$0x0] %vm695, 0.0
        %s759 = scalar_lea.vmem %s691, 272 [#allocation3]
        %760 = vst.msk [vmem:[%s759] ss:$8 sm:$0x3] %vm695, 0.0
        %761 = vst.msk [vmem:[%s759] ss:$8 sm:$0x0] %vm695, 0.0
        %s762 = scalar_lea.vmem %s691, 320 [#allocation3]
        %763 = vst.msk [vmem:[%s762] ss:$8 sm:$0x3] %vm695, 0.0
        %764 = vst.msk [vmem:[%s762] ss:$8 sm:$0x0] %vm695, 0.0
        %s765 = scalar_lea.vmem %s691, 368 [#allocation3]
        %766 = vst.msk [vmem:[%s765] ss:$8 sm:$0x3] %vm695, 0.0
        %767 = vst.msk [vmem:[%s765] ss:$8 sm:$0x0] %vm695, 0.0
        %s768 = scalar_lea.vmem %s691, 416 [#allocation3]
        %769 = vst.msk [vmem:[%s768] ss:$8 sm:$0x3] %vm695, 0.0
        %770 = vst.msk [vmem:[%s768] ss:$8 sm:$0x0] %vm695, 0.0
        %s771 = scalar_lea.vmem %s691, 464 [#allocation3]
        %772 = vst.msk [vmem:[%s771] ss:$8 sm:$0x3] %vm695, 0.0
        %773 = vst.msk [vmem:[%s771] ss:$8 sm:$0x0] %vm695, 0.0
        %s774 = scalar_lea.vmem %s691, 512 [#allocation3]
        %775 = vst.msk [vmem:[%s774] ss:$8 sm:$0x3] %vm695, 0.0
        %776 = vst.msk [vmem:[%s774] ss:$8 sm:$0x0] %vm695, 0.0
        %s777 = scalar_lea.vmem %s691, 560 [#allocation3]
        %778 = vst.msk [vmem:[%s777] ss:$8 sm:$0x3] %vm695, 0.0
        %779 = vst.msk [vmem:[%s777] ss:$8 sm:$0x0] %vm695, 0.0
        %s780 = scalar_lea.vmem %s691, 608 [#allocation3]
        %781 = vst.msk [vmem:[%s780] ss:$8 sm:$0x3] %vm695, 0.0
        %782 = vst.msk [vmem:[%s780] ss:$8 sm:$0x0] %vm695, 0.0
        %s783 = scalar_lea.vmem %s691, 656 [#allocation3]
        %784 = vst.msk [vmem:[%s783] ss:$8 sm:$0x3] %vm695, 0.0
        %785 = vst.msk [vmem:[%s783] ss:$8 sm:$0x0] %vm695, 0.0
        %s786 = scalar_lea.vmem %s691, 704 [#allocation3]
        %787 = vst.msk [vmem:[%s786] ss:$8 sm:$0x3] %vm695, 0.0
        %788 = vst.msk [vmem:[%s786] ss:$8 sm:$0x0] %vm695, 0.0
        %s789 = scalar_lea.vmem %s691, 752 [#allocation3]
        %790 = vst.msk [vmem:[%s789] ss:$8 sm:$0x3] %vm695, 0.0
        %791 = vst.msk [vmem:[%s789] ss:$8 sm:$0x0] %vm695, 0.0
        %v792 = vld [vmem:[%s557] sm:$0xff]
        %v793 = vld [vmem:[%s557 + $0x8] sm:$0xff]
        %v794 = vld [vmem:[%s557 + $0x10] sm:$0xff]
        %v795 = vld [vmem:[%s557 + $0x18] sm:$0xff]
        %v796 = vld [vmem:[%s557 + $0x20] sm:$0xff]
        %v797 = vld [vmem:[%s557 + $0x28] sm:$0xff]
        %v798 = vld [vmem:[%s557 + $0x30] sm:$0xff]
        %v799 = vld [vmem:[%s557 + $0x38] sm:$0xff]
        %v800 = vld [vmem:[%s557 + $0x40] sm:$0xff]
        %v801 = vld [vmem:[%s557 + $0x48] sm:$0xff]
        %v802 = vld [vmem:[%s557 + $0x50] sm:$0xff]
        %v803 = vld [vmem:[%s557 + $0x58] sm:$0xff]
        %v804 = vld [vmem:[%s557 + $0x60] sm:$0xff]
        %v805 = vld [vmem:[%s557 + $0x68] sm:$0xff]
        %v806 = vld [vmem:[%s557 + $0x70] sm:$0xff]
        %v807 = vld [vmem:[%s557 + $0x78] sm:$0xff]
        %808 = vst [vmem:[%s645 + $0x8] sm:$0xff] %v792
        %809 = vst [vmem:[%s645 + $0x20] sm:$0xff] %v793
        %810 = vst [vmem:[%s645 + $0x38] sm:$0xff] %v794
        %811 = vst [vmem:[%s645 + $0x50] sm:$0xff] %v795
        %812 = vst [vmem:[%s645 + $0x68] sm:$0xff] %v796
        %813 = vst [vmem:[%s645 + $0x80] sm:$0xff] %v797
        %814 = vst [vmem:[%s645 + $0x98] sm:$0xff] %v798
        %815 = vst [vmem:[%s645 + $0xb0] sm:$0xff] %v799
        %816 = vst [vmem:[%s645 + $0xc8] sm:$0xff] %v800
        %817 = vst [vmem:[%s645 + $0xe0] sm:$0xff] %v801
        %818 = vst [vmem:[%s645 + $0xf8] sm:$0xff] %v802
        %819 = vst [vmem:[%s645 + $0x110] sm:$0xff] %v803
        %820 = vst [vmem:[%s645 + $0x128] sm:$0xff] %v804
        %821 = vst [vmem:[%s645 + $0x140] sm:$0xff] %v805
        %822 = vst [vmem:[%s645 + $0x158] sm:$0xff] %v806
        %823 = vst [vmem:[%s645 + $0x170] sm:$0xff] %v807
        %v824 = vld [vmem:[#allocation9] sm:$0x7]
        %v825 = vld [vmem:[#allocation9 + $0x4] sm:$0x7]
        %v826 = vld [vmem:[#allocation9 + $0x8] sm:$0x7]
        %v827 = vld [vmem:[#allocation11] sm:$0x1]
        %v829 = vlaneseq
        %v830 = vshrl.u32 %v829, 7
        %v831 = vsub.s32 0, %v830
        %v832 = vrot.slane %v827, %v831
        %s834 = smul.u32 0, 24
        %s835 = scalar_lea.vmem [#allocation2], %s834
        %v836 = vld [vmem:[%s835 + $0x7] sm:$0xff]
        %v837 = vld [vmem:[%s835 + $0x1f] sm:$0xff]
        %v838 = vld [vmem:[%s835 + $0x37] sm:$0xff]
        %v839 = vld [vmem:[%s835 + $0x4f] sm:$0xff]
        %v840 = vld [vmem:[%s835 + $0x67] sm:$0xff]
        %v841 = vld [vmem:[%s835 + $0x7f] sm:$0xff]
        %v842 = vld [vmem:[%s835 + $0x97] sm:$0xff]
        %v843 = vld [vmem:[%s835 + $0xaf] sm:$0xff]
        %v844 = vld [vmem:[%s835 + $0xc7] sm:$0xff]
        %v845 = vld [vmem:[%s835 + $0xdf] sm:$0xff]
        %v846 = vlaneseq
        %v847 = vshrl.u32 %v846, 7
        %v848 = vsub.s32 0, %v847
        %v849 = vrot.slane %v824, %v848
        %v850 = vmul.f32 %v836, %v849
        %v851 = vmul.f32 %v837, %v849
        %v852 = vmul.f32 %v838, %v849
        %v853 = vmul.f32 %v839, %v849
        %v854 = vmul.f32 %v840, %v849
        %v855 = vmul.f32 %v841, %v849
        %v856 = vmul.f32 %v842, %v849
        %v857 = vmul.f32 %v843, %v849
        %v858 = vadd.f32 %v832, %v850
        %v859 = vadd.f32 %v832, %v851
        %v860 = vadd.f32 %v832, %v852
        %v861 = vadd.f32 %v832, %v853
        %v862 = vadd.f32 %v832, %v854
        %v863 = vadd.f32 %v832, %v855
        %v864 = vadd.f32 %v832, %v856
        %v865 = vadd.f32 %v832, %v857
        %v866 = vlaneseq
        %v867 = vshrl.u32 %v866, 7
        %v868 = vsub.s32 0, %v867
        %v869 = vrot.slane %v825, %v868
        %v870 = vmul.f32 %v837, %v869
        %v871 = vmul.f32 %v838, %v869
        %v872 = vmul.f32 %v839, %v869
        %v873 = vmul.f32 %v840, %v869
        %v874 = vmul.f32 %v841, %v869
        %v875 = vmul.f32 %v842, %v869
        %v876 = vmul.f32 %v843, %v869
        %v877 = vmul.f32 %v844, %v869
        %v878 = vadd.f32 %v858, %v870
        %v879 = vadd.f32 %v859, %v871
        %v880 = vadd.f32 %v860, %v872
        %v881 = vadd.f32 %v861, %v873
        %v882 = vadd.f32 %v862, %v874
        %v883 = vadd.f32 %v863, %v875
        %v884 = vadd.f32 %v864, %v876
        %v885 = vadd.f32 %v865, %v877
        %v886 = vlaneseq
        %v887 = vshrl.u32 %v886, 7
        %v888 = vsub.s32 0, %v887
        %v889 = vrot.slane %v826, %v888
        %v890 = vmul.f32 %v838, %v889
        %v891 = vmul.f32 %v839, %v889
        %v892 = vmul.f32 %v840, %v889
        %v893 = vmul.f32 %v841, %v889
        %v894 = vmul.f32 %v842, %v889
        %v895 = vmul.f32 %v843, %v889
        %v896 = vmul.f32 %v844, %v889
        %v897 = vmul.f32 %v845, %v889
        %v898 = vadd.f32 %v878, %v890
        %v899 = vadd.f32 %v879, %v891
        %v900 = vadd.f32 %v880, %v892
        %v901 = vadd.f32 %v881, %v893
        %v902 = vadd.f32 %v882, %v894
        %v903 = vadd.f32 %v883, %v895
        %v904 = vadd.f32 %v884, %v896
        %v905 = vadd.f32 %v885, %v897
        %v906 = vld [vmem:[%s835 + $0x8] sm:$0xff]
        %v907 = vld [vmem:[%s835 + $0x20] sm:$0xff]
        %v908 = vld [vmem:[%s835 + $0x38] sm:$0xff]
        %v909 = vld [vmem:[%s835 + $0x50] sm:$0xff]
        %v910 = vld [vmem:[%s835 + $0x68] sm:$0xff]
        %v911 = vld [vmem:[%s835 + $0x80] sm:$0xff]
        %v912 = vld [vmem:[%s835 + $0x98] sm:$0xff]
        %v913 = vld [vmem:[%s835 + $0xb0] sm:$0xff]
        %v914 = vld [vmem:[%s835 + $0xc8] sm:$0xff]
        %v915 = vld [vmem:[%s835 + $0xe0] sm:$0xff]
        %v916 = vlaneseq
        %v917 = vshrl.u32 %v916, 7
        %v918 = vsub.s32 1, %v917
        %v919 = vrot.slane %v824, %v918
        %v920 = vmul.f32 %v906, %v919
        %v921 = vmul.f32 %v907, %v919
        %v922 = vmul.f32 %v908, %v919
        %v923 = vmul.f32 %v909, %v919
        %v924 = vmul.f32 %v910, %v919
        %v925 = vmul.f32 %v911, %v919
        %v926 = vmul.f32 %v912, %v919
        %v927 = vmul.f32 %v913, %v919
        %v928 = vadd.f32 %v898, %v920
        %v929 = vadd.f32 %v899, %v921
        %v930 = vadd.f32 %v900, %v922
        %v931 = vadd.f32 %v901, %v923
        %v932 = vadd.f32 %v902, %v924
        %v933 = vadd.f32 %v903, %v925
        %v934 = vadd.f32 %v904, %v926
        %v935 = vadd.f32 %v905, %v927
        %v936 = vlaneseq
        %v937 = vshrl.u32 %v936, 7
        %v938 = vsub.s32 1, %v937
        %v939 = vrot.slane %v825, %v938
        %v940 = vmul.f32 %v907, %v939
        %v941 = vmul.f32 %v908, %v939
        %v942 = vmul.f32 %v909, %v939
        %v943 = vmul.f32 %v910, %v939
        %v944 = vmul.f32 %v911, %v939
        %v945 = vmul.f32 %v912, %v939
        %v946 = vmul.f32 %v913, %v939
        %v947 = vmul.f32 %v914, %v939
        %v948 = vadd.f32 %v928, %v940
        %v949 = vadd.f32 %v929, %v941
        %v950 = vadd.f32 %v930, %v942
        %v951 = vadd.f32 %v931, %v943
        %v952 = vadd.f32 %v932, %v944
        %v953 = vadd.f32 %v933, %v945
        %v954 = vadd.f32 %v934, %v946
        %v955 = vadd.f32 %v935, %v947
        %v956 = vlaneseq
        %v957 = vshrl.u32 %v956, 7
        %v958 = vsub.s32 1, %v957
        %v959 = vrot.slane %v826, %v958
        %v960 = vmul.f32 %v908, %v959
        %v961 = vmul.f32 %v909, %v959
        %v962 = vmul.f32 %v910, %v959
        %v963 = vmul.f32 %v911, %v959
        %v964 = vmul.f32 %v912, %v959
        %v965 = vmul.f32 %v913, %v959
        %v966 = vmul.f32 %v914, %v959
        %v967 = vmul.f32 %v915, %v959
        %v968 = vadd.f32 %v948, %v960
        %v969 = vadd.f32 %v949, %v961
        %v970 = vadd.f32 %v950, %v962
        %v971 = vadd.f32 %v951, %v963
        %v972 = vadd.f32 %v952, %v964
        %v973 = vadd.f32 %v953, %v965
        %v974 = vadd.f32 %v954, %v966
        %v975 = vadd.f32 %v955, %v967
        %v976 = vld [vmem:[%s835 + $0x9] sm:$0xff]
        %v977 = vld [vmem:[%s835 + $0x21] sm:$0xff]
        %v978 = vld [vmem:[%s835 + $0x39] sm:$0xff]
        %v979 = vld [vmem:[%s835 + $0x51] sm:$0xff]
        %v980 = vld [vmem:[%s835 + $0x69] sm:$0xff]
        %v981 = vld [vmem:[%s835 + $0x81] sm:$0xff]
        %v982 = vld [vmem:[%s835 + $0x99] sm:$0xff]
        %v983 = vld [vmem:[%s835 + $0xb1] sm:$0xff]
        %v984 = vld [vmem:[%s835 + $0xc9] sm:$0xff]
        %v985 = vld [vmem:[%s835 + $0xe1] sm:$0xff]
        %v986 = vlaneseq
        %v987 = vshrl.u32 %v986, 7
        %v988 = vsub.s32 2, %v987
        %v989 = vrot.slane %v824, %v988
        %v990 = vmul.f32 %v976, %v989
        %v991 = vmul.f32 %v977, %v989
        %v992 = vmul.f32 %v978, %v989
        %v993 = vmul.f32 %v979, %v989
        %v994 = vmul.f32 %v980, %v989
        %v995 = vmul.f32 %v981, %v989
        %v996 = vmul.f32 %v982, %v989
        %v997 = vmul.f32 %v983, %v989
        %v998 = vadd.f32 %v968, %v990
        %v999 = vadd.f32 %v969, %v991
        %v1000 = vadd.f32 %v970, %v992
        %v1001 = vadd.f32 %v971, %v993
        %v1002 = vadd.f32 %v972, %v994
        %v1003 = vadd.f32 %v973, %v995
        %v1004 = vadd.f32 %v974, %v996
        %v1005 = vadd.f32 %v975, %v997
        %v1006 = vlaneseq
        %v1007 = vshrl.u32 %v1006, 7
        %v1008 = vsub.s32 2, %v1007
        %v1009 = vrot.slane %v825, %v1008
        %v1010 = vmul.f32 %v977, %v1009
        %v1011 = vmul.f32 %v978, %v1009
        %v1012 = vmul.f32 %v979, %v1009
        %v1013 = vmul.f32 %v980, %v1009
        %v1014 = vmul.f32 %v981, %v1009
        %v1015 = vmul.f32 %v982, %v1009
        %v1016 = vmul.f32 %v983, %v1009
        %v1017 = vmul.f32 %v984, %v1009
        %v1018 = vadd.f32 %v998, %v1010
        %v1019 = vadd.f32 %v999, %v1011
        %v1020 = vadd.f32 %v1000, %v1012
        %v1021 = vadd.f32 %v1001, %v1013
        %v1022 = vadd.f32 %v1002, %v1014
        %v1023 = vadd.f32 %v1003, %v1015
        %v1024 = vadd.f32 %v1004, %v1016
        %v1025 = vadd.f32 %v1005, %v1017
        %v1026 = vlaneseq
        %v1027 = vshrl.u32 %v1026, 7
        %v1028 = vsub.s32 2, %v1027
        %v1029 = vrot.slane %v826, %v1028
        %v1030 = vmul.f32 %v978, %v1029
        %v1031 = vmul.f32 %v979, %v1029
        %v1032 = vmul.f32 %v980, %v1029
        %v1033 = vmul.f32 %v981, %v1029
        %v1034 = vmul.f32 %v982, %v1029
        %v1035 = vmul.f32 %v983, %v1029
        %v1036 = vmul.f32 %v984, %v1029
        %v1037 = vmul.f32 %v985, %v1029
        %v1038 = vadd.f32 %v1018, %v1030
        %v1039 = vadd.f32 %v1019, %v1031
        %v1040 = vadd.f32 %v1020, %v1032
        %v1041 = vadd.f32 %v1021, %v1033
        %v1042 = vadd.f32 %v1022, %v1034
        %v1043 = vadd.f32 %v1023, %v1035
        %v1044 = vadd.f32 %v1024, %v1036
        %v1045 = vadd.f32 %v1025, %v1037
        %v1046 = vadd.f32 %v1038, 3.0
        %v1047 = vadd.f32 %v1039, 3.0
        %v1048 = vadd.f32 %v1040, 3.0
        %v1049 = vadd.f32 %v1041, 3.0
        %v1050 = vadd.f32 %v1042, 3.0
        %v1051 = vadd.f32 %v1043, 3.0
        %v1052 = vadd.f32 %v1044, 3.0
        %v1053 = vadd.f32 %v1045, 3.0
        %v1054 = vmax.f32 %v1046, 0.0
        %v1055 = vmax.f32 %v1047, 0.0
        %v1056 = vmax.f32 %v1048, 0.0
        %v1057 = vmax.f32 %v1049, 0.0
        %v1058 = vmax.f32 %v1050, 0.0
        %v1059 = vmax.f32 %v1051, 0.0
        %v1060 = vmax.f32 %v1052, 0.0
        %v1061 = vmax.f32 %v1053, 0.0
        %v1062 = vmin.f32 %v1054, 6.0
        %v1063 = vmin.f32 %v1055, 6.0
        %v1064 = vmin.f32 %v1056, 6.0
        %v1065 = vmin.f32 %v1057, 6.0
        %v1066 = vmin.f32 %v1058, 6.0
        %v1067 = vmin.f32 %v1059, 6.0
        %v1068 = vmin.f32 %v1060, 6.0
        %v1069 = vmin.f32 %v1061, 6.0
        %v1070 = vmul.f32 %v1062, 0.16666667
        %v1071 = vmul.f32 %v1063, 0.16666667
        %v1072 = vmul.f32 %v1064, 0.16666667
        %v1073 = vmul.f32 %v1065, 0.16666667
        %v1074 = vmul.f32 %v1066, 0.16666667
        %v1075 = vmul.f32 %v1067, 0.16666667
        %v1076 = vmul.f32 %v1068, 0.16666667
        %v1077 = vmul.f32 %v1069, 0.16666667
        %v1078 = vmul.f32 %v1038, %v1070
        %v1079 = vmul.f32 %v1039, %v1071
        %v1080 = vmul.f32 %v1040, %v1072
        %v1081 = vmul.f32 %v1041, %v1073
        %v1082 = vmul.f32 %v1042, %v1074
        %v1083 = vmul.f32 %v1043, %v1075
        %v1084 = vmul.f32 %v1044, %v1076
        %v1085 = vmul.f32 %v1045, %v1077
        %s1086 = smul.u32 0, 8
        %s1087 = scalar_lea.vmem [#allocation4], %s1086
        %1088 = vst [vmem:[%s1087] sm:$0xff] %v1078
        %1089 = vst [vmem:[%s1087 + $0x8] sm:$0xff] %v1079
        %1090 = vst [vmem:[%s1087 + $0x10] sm:$0xff] %v1080
        %1091 = vst [vmem:[%s1087 + $0x18] sm:$0xff] %v1081
        %1092 = vst [vmem:[%s1087 + $0x20] sm:$0xff] %v1082
        %1093 = vst [vmem:[%s1087 + $0x28] sm:$0xff] %v1083
        %1094 = vst [vmem:[%s1087 + $0x30] sm:$0xff] %v1084
        %1095 = vst [vmem:[%s1087 + $0x38] sm:$0xff] %v1085
        %v1096 = vadd.f32 %v1078, %v1079
        %v1097 = vadd.f32 %v1096, %v1080
        %v1098 = vadd.f32 %v1097, %v1081
        %v1099 = vadd.f32 %v1098, %v1082
        %v1100 = vadd.f32 %v1099, %v1083
        %v1101 = vadd.f32 %v1100, %v1084
        %v1102 = vadd.f32 %v1101, %v1085
        %v1103 = vrot.slane %v1102, 4
        %v1104 = vadd.f32 %v1102, %v1103
        %v1105 = vrot.slane %v1104, 2
        %v1106 = vadd.f32 %v1104, %v1105
        %v1107 = vrot.slane %v1106, 1
        %v1108 = vadd.f32 %v1106, %v1107
        %v1109 = vadd.f32 %v1108, 0.0
        %s1110 = smul.u32 8, 24
        %s1111 = scalar_lea.vmem [#allocation2], %s1110
        %v1112 = vld [vmem:[%s1111 + $0x7] sm:$0xff]
        %v1113 = vld [vmem:[%s1111 + $0x1f] sm:$0xff]
        %v1114 = vld [vmem:[%s1111 + $0x37] sm:$0xff]
        %v1115 = vld [vmem:[%s1111 + $0x4f] sm:$0xff]
        %v1116 = vld [vmem:[%s1111 + $0x67] sm:$0xff]
        %v1117 = vld [vmem:[%s1111 + $0x7f] sm:$0xff]
        %v1118 = vld [vmem:[%s1111 + $0x97] sm:$0xff]
        %v1119 = vld [vmem:[%s1111 + $0xaf] sm:$0xff]
        %v1120 = vld [vmem:[%s1111 + $0xc7] sm:$0xff]
        %v1121 = vld [vmem:[%s1111 + $0xdf] sm:$0xff]
        %v1122 = vmul.f32 %v1112, %v849
        %v1123 = vmul.f32 %v1113, %v849
        %v1124 = vmul.f32 %v1114, %v849
        %v1125 = vmul.f32 %v1115, %v849
        %v1126 = vmul.f32 %v1116, %v849
        %v1127 = vmul.f32 %v1117, %v849
        %v1128 = vmul.f32 %v1118, %v849
        %v1129 = vmul.f32 %v1119, %v849
        %v1130 = vadd.f32 %v832, %v1122
        %v1131 = vadd.f32 %v832, %v1123
        %v1132 = vadd.f32 %v832, %v1124
        %v1133 = vadd.f32 %v832, %v1125
        %v1134 = vadd.f32 %v832, %v1126
        %v1135 = vadd.f32 %v832, %v1127
        %v1136 = vadd.f32 %v832, %v1128
        %v1137 = vadd.f32 %v832, %v1129
        %v1138 = vmul.f32 %v1113, %v869
        %v1139 = vmul.f32 %v1114, %v869
        %v1140 = vmul.f32 %v1115, %v869
        %v1141 = vmul.f32 %v1116, %v869
        %v1142 = vmul.f32 %v1117, %v869
        %v1143 = vmul.f32 %v1118, %v869
        %v1144 = vmul.f32 %v1119, %v869
        %v1145 = vmul.f32 %v1120, %v869
        %v1146 = vadd.f32 %v1130, %v1138
        %v1147 = vadd.f32 %v1131, %v1139
        %v1148 = vadd.f32 %v1132, %v1140
        %v1149 = vadd.f32 %v1133, %v1141
        %v1150 = vadd.f32 %v1134, %v1142
        %v1151 = vadd.f32 %v1135, %v1143
        %v1152 = vadd.f32 %v1136, %v1144
        %v1153 = vadd.f32 %v1137, %v1145
        %v1154 = vmul.f32 %v1114, %v889
        %v1155 = vmul.f32 %v1115, %v889
        %v1156 = vmul.f32 %v1116, %v889
        %v1157 = vmul.f32 %v1117, %v889
        %v1158 = vmul.f32 %v1118, %v889
        %v1159 = vmul.f32 %v1119, %v889
        %v1160 = vmul.f32 %v1120, %v889
        %v1161 = vmul.f32 %v1121, %v889
        %v1162 = vadd.f32 %v1146, %v1154
        %v1163 = vadd.f32 %v1147, %v1155
        %v1164 = vadd.f32 %v1148, %v1156
        %v1165 = vadd.f32 %v1149, %v1157
        %v1166 = vadd.f32 %v1150, %v1158
        %v1167 = vadd.f32 %v1151, %v1159
        %v1168 = vadd.f32 %v1152, %v1160
        %v1169 = vadd.f32 %v1153, %v1161
        %v1170 = vld [vmem:[%s1111 + $0x8] sm:$0xff]
        %v1171 = vld [vmem:[%s1111 + $0x20] sm:$0xff]
        %v1172 = vld [vmem:[%s1111 + $0x38] sm:$0xff]
        %v1173 = vld [vmem:[%s1111 + $0x50] sm:$0xff]
        %v1174 = vld [vmem:[%s1111 + $0x68] sm:$0xff]
        %v1175 = vld [vmem:[%s1111 + $0x80] sm:$0xff]
        %v1176 = vld [vmem:[%s1111 + $0x98] sm:$0xff]
        %v1177 = vld [vmem:[%s1111 + $0xb0] sm:$0xff]
        %v1178 = vld [vmem:[%s1111 + $0xc8] sm:$0xff]
        %v1179 = vld [vmem:[%s1111 + $0xe0] sm:$0xff]
        %v1180 = vmul.f32 %v1170, %v919
        %v1181 = vmul.f32 %v1171, %v919
        %v1182 = vmul.f32 %v1172, %v919
        %v1183 = vmul.f32 %v1173, %v919
        %v1184 = vmul.f32 %v1174, %v919
        %v1185 = vmul.f32 %v1175, %v919
        %v1186 = vmul.f32 %v1176, %v919
        %v1187 = vmul.f32 %v1177, %v919
        %v1188 = vadd.f32 %v1162, %v1180
        %v1189 = vadd.f32 %v1163, %v1181
        %v1190 = vadd.f32 %v1164, %v1182
        %v1191 = vadd.f32 %v1165, %v1183
        %v1192 = vadd.f32 %v1166, %v1184
        %v1193 = vadd.f32 %v1167, %v1185
        %v1194 = vadd.f32 %v1168, %v1186
        %v1195 = vadd.f32 %v1169, %v1187
        %v1196 = vmul.f32 %v1171, %v939
        %v1197 = vmul.f32 %v1172, %v939
        %v1198 = vmul.f32 %v1173, %v939
        %v1199 = vmul.f32 %v1174, %v939
        %v1200 = vmul.f32 %v1175, %v939
        %v1201 = vmul.f32 %v1176, %v939
        %v1202 = vmul.f32 %v1177, %v939
        %v1203 = vmul.f32 %v1178, %v939
        %v1204 = vadd.f32 %v1188, %v1196
        %v1205 = vadd.f32 %v1189, %v1197
        %v1206 = vadd.f32 %v1190, %v1198
        %v1207 = vadd.f32 %v1191, %v1199
        %v1208 = vadd.f32 %v1192, %v1200
        %v1209 = vadd.f32 %v1193, %v1201
        %v1210 = vadd.f32 %v1194, %v1202
        %v1211 = vadd.f32 %v1195, %v1203
        %v1212 = vmul.f32 %v1172, %v959
        %v1213 = vmul.f32 %v1173, %v959
        %v1214 = vmul.f32 %v1174, %v959
        %v1215 = vmul.f32 %v1175, %v959
        %v1216 = vmul.f32 %v1176, %v959
        %v1217 = vmul.f32 %v1177, %v959
        %v1218 = vmul.f32 %v1178, %v959
        %v1219 = vmul.f32 %v1179, %v959
        %v1220 = vadd.f32 %v1204, %v1212
        %v1221 = vadd.f32 %v1205, %v1213
        %v1222 = vadd.f32 %v1206, %v1214
        %v1223 = vadd.f32 %v1207, %v1215
        %v1224 = vadd.f32 %v1208, %v1216
        %v1225 = vadd.f32 %v1209, %v1217
        %v1226 = vadd.f32 %v1210, %v1218
        %v1227 = vadd.f32 %v1211, %v1219
        %v1228 = vld [vmem:[%s1111 + $0x9] sm:$0xff]
        %v1229 = vld [vmem:[%s1111 + $0x21] sm:$0xff]
        %v1230 = vld [vmem:[%s1111 + $0x39] sm:$0xff]
        %v1231 = vld [vmem:[%s1111 + $0x51] sm:$0xff]
        %v1232 = vld [vmem:[%s1111 + $0x69] sm:$0xff]
        %v1233 = vld [vmem:[%s1111 + $0x81] sm:$0xff]
        %v1234 = vld [vmem:[%s1111 + $0x99] sm:$0xff]
        %v1235 = vld [vmem:[%s1111 + $0xb1] sm:$0xff]
        %v1236 = vld [vmem:[%s1111 + $0xc9] sm:$0xff]
        %v1237 = vld [vmem:[%s1111 + $0xe1] sm:$0xff]
        %v1238 = vmul.f32 %v1228, %v989
        %v1239 = vmul.f32 %v1229, %v989
        %v1240 = vmul.f32 %v1230, %v989
        %v1241 = vmul.f32 %v1231, %v989
        %v1242 = vmul.f32 %v1232, %v989
        %v1243 = vmul.f32 %v1233, %v989
        %v1244 = vmul.f32 %v1234, %v989
        %v1245 = vmul.f32 %v1235, %v989
        %v1246 = vadd.f32 %v1220, %v1238
        %v1247 = vadd.f32 %v1221, %v1239
        %v1248 = vadd.f32 %v1222, %v1240
        %v1249 = vadd.f32 %v1223, %v1241
        %v1250 = vadd.f32 %v1224, %v1242
        %v1251 = vadd.f32 %v1225, %v1243
        %v1252 = vadd.f32 %v1226, %v1244
        %v1253 = vadd.f32 %v1227, %v1245
        %v1254 = vmul.f32 %v1229, %v1009
        %v1255 = vmul.f32 %v1230, %v1009
        %v1256 = vmul.f32 %v1231, %v1009
        %v1257 = vmul.f32 %v1232, %v1009
        %v1258 = vmul.f32 %v1233, %v1009
        %v1259 = vmul.f32 %v1234, %v1009
        %v1260 = vmul.f32 %v1235, %v1009
        %v1261 = vmul.f32 %v1236, %v1009
        %v1262 = vadd.f32 %v1246, %v1254
        %v1263 = vadd.f32 %v1247, %v1255
        %v1264 = vadd.f32 %v1248, %v1256
        %v1265 = vadd.f32 %v1249, %v1257
        %v1266 = vadd.f32 %v1250, %v1258
        %v1267 = vadd.f32 %v1251, %v1259
        %v1268 = vadd.f32 %v1252, %v1260
        %v1269 = vadd.f32 %v1253, %v1261
        %v1270 = vmul.f32 %v1230, %v1029
        %v1271 = vmul.f32 %v1231, %v1029
        %v1272 = vmul.f32 %v1232, %v1029
        %v1273 = vmul.f32 %v1233, %v1029
        %v1274 = vmul.f32 %v1234, %v1029
        %v1275 = vmul.f32 %v1235, %v1029
        %v1276 = vmul.f32 %v1236, %v1029
        %v1277 = vmul.f32 %v1237, %v1029
        %v1278 = vadd.f32 %v1262, %v1270
        %v1279 = vadd.f32 %v1263, %v1271
        %v1280 = vadd.f32 %v1264, %v1272
        %v1281 = vadd.f32 %v1265, %v1273
        %v1282 = vadd.f32 %v1266, %v1274
        %v1283 = vadd.f32 %v1267, %v1275
        %v1284 = vadd.f32 %v1268, %v1276
        %v1285 = vadd.f32 %v1269, %v1277
        %v1286 = vadd.f32 %v1278, 3.0
        %v1287 = vadd.f32 %v1279, 3.0
        %v1288 = vadd.f32 %v1280, 3.0
        %v1289 = vadd.f32 %v1281, 3.0
        %v1290 = vadd.f32 %v1282, 3.0
        %v1291 = vadd.f32 %v1283, 3.0
        %v1292 = vadd.f32 %v1284, 3.0
        %v1293 = vadd.f32 %v1285, 3.0
        %v1294 = vmax.f32 %v1286, 0.0
        %v1295 = vmax.f32 %v1287, 0.0
        %v1296 = vmax.f32 %v1288, 0.0
        %v1297 = vmax.f32 %v1289, 0.0
        %v1298 = vmax.f32 %v1290, 0.0
        %v1299 = vmax.f32 %v1291, 0.0
        %v1300 = vmax.f32 %v1292, 0.0
        %v1301 = vmax.f32 %v1293, 0.0
        %v1302 = vmin.f32 %v1294, 6.0
        %v1303 = vmin.f32 %v1295, 6.0
        %v1304 = vmin.f32 %v1296, 6.0
        %v1305 = vmin.f32 %v1297, 6.0
        %v1306 = vmin.f32 %v1298, 6.0
        %v1307 = vmin.f32 %v1299, 6.0
        %v1308 = vmin.f32 %v1300, 6.0
        %v1309 = vmin.f32 %v1301, 6.0
        %v1310 = vmul.f32 %v1302, 0.16666667
        %v1311 = vmul.f32 %v1303, 0.16666667
        %v1312 = vmul.f32 %v1304, 0.16666667
        %v1313 = vmul.f32 %v1305, 0.16666667
        %v1314 = vmul.f32 %v1306, 0.16666667
        %v1315 = vmul.f32 %v1307, 0.16666667
        %v1316 = vmul.f32 %v1308, 0.16666667
        %v1317 = vmul.f32 %v1309, 0.16666667
        %v1318 = vmul.f32 %v1278, %v1310
        %v1319 = vmul.f32 %v1279, %v1311
        %v1320 = vmul.f32 %v1280, %v1312
        %v1321 = vmul.f32 %v1281, %v1313
        %v1322 = vmul.f32 %v1282, %v1314
        %v1323 = vmul.f32 %v1283, %v1315
        %v1324 = vmul.f32 %v1284, %v1316
        %v1325 = vmul.f32 %v1285, %v1317
        %s1326 = smul.u32 8, 8
        %s1327 = scalar_lea.vmem [#allocation4], %s1326
        %1328 = vst [vmem:[%s1327] sm:$0xff] %v1318
        %1329 = vst [vmem:[%s1327 + $0x8] sm:$0xff] %v1319
        %1330 = vst [vmem:[%s1327 + $0x10] sm:$0xff] %v1320
        %1331 = vst [vmem:[%s1327 + $0x18] sm:$0xff] %v1321
        %1332 = vst [vmem:[%s1327 + $0x20] sm:$0xff] %v1322
        %1333 = vst [vmem:[%s1327 + $0x28] sm:$0xff] %v1323
        %1334 = vst [vmem:[%s1327 + $0x30] sm:$0xff] %v1324
        %1335 = vst [vmem:[%s1327 + $0x38] sm:$0xff] %v1325
        %v1336 = vadd.f32 %v1318, %v1319
        %v1337 = vadd.f32 %v1336, %v1320
        %v1338 = vadd.f32 %v1337, %v1321
        %v1339 = vadd.f32 %v1338, %v1322
        %v1340 = vadd.f32 %v1339, %v1323
        %v1341 = vadd.f32 %v1340, %v1324
        %v1342 = vadd.f32 %v1341, %v1325
        %v1343 = vrot.slane %v1342, 4
        %v1344 = vadd.f32 %v1342, %v1343
        %v1345 = vrot.slane %v1344, 2
        %v1346 = vadd.f32 %v1344, %v1345
        %v1347 = vrot.slane %v1346, 1
        %v1348 = vadd.f32 %v1346, %v1347
        %v1349 = vadd.f32 %v1109, %v1348
        %v1350 = vmul.f32 %v1349, 0.0078125
        %v1351 = vld [vmem:[#allocation12] sm:$0xff]
        %v1352 = vld [vmem:[#allocation12 + $0x8] sm:$0xff]
        %v1353 = vld [vmem:[#allocation12 + $0x10] sm:$0xff]
        %v1354 = vld [vmem:[#allocation12 + $0x18] sm:$0xff]
        %v1355 = vld [vmem:[#allocation12 + $0x20] sm:$0xff]
        %v1356 = vld [vmem:[#allocation12 + $0x28] sm:$0xff]
        %v1357 = vld [vmem:[#allocation12 + $0x30] sm:$0xff]
        %v1358 = vld [vmem:[#allocation12 + $0x38] sm:$0xff]
        %v1359 = vld [vmem:[#allocation12 + $0x40] sm:$0xff]
        %v1360 = vld [vmem:[#allocation12 + $0x48] sm:$0xff]
        %v1361 = vld [vmem:[#allocation12 + $0x50] sm:$0xff]
        %v1362 = vld [vmem:[#allocation12 + $0x58] sm:$0xff]
        %v1363 = vld [vmem:[#allocation12 + $0x60] sm:$0xff]
        %v1364 = vld [vmem:[#allocation12 + $0x68] sm:$0xff]
        %v1365 = vld [vmem:[#allocation12 + $0x70] sm:$0xff]
        %v1366 = vld [vmem:[#allocation12 + $0x78] sm:$0xff]
        %v1367 = vld [vmem:[#allocation14] sm:$0x1]
        %1368 = vmatprep.subr.mxu0 0.0
        %1369 = vmatpush1.msra.mxu0 %v1351
        %1370 = vmatprep.subr.mxu0 0.0
        %1371 = vmatpush1.msra.mxu0 %v1352
        %1372 = vmatprep.subr.mxu0 0.0
        %1373 = vmatpush1.msra.mxu0 %v1353
        %1374 = vmatprep.subr.mxu0 0.0
        %1375 = vmatpush1.msra.mxu0 %v1354
        %1376 = vmatprep.subr.mxu0 0.0
        %1377 = vmatpush1.msra.mxu0 %v1355
        %1378 = vmatprep.subr.mxu0 0.0
        %1379 = vmatpush1.msra.mxu0 %v1356
        %1380 = vmatprep.subr.mxu0 0.0
        %1381 = vmatpush1.msra.mxu0 %v1357
        %1382 = vmatprep.subr.mxu0 0.0
        %1383 = vmatpush1.msra.mxu0 %v1358
        %1384 = vmatprep.subr.mxu0 0.0
        %1385 = vmatpush1.msra.mxu0 %v1359
        %1386 = vmatprep.subr.mxu0 0.0
        %1387 = vmatpush1.msra.mxu0 %v1360
        %1388 = vmatprep.subr.mxu0 0.0
        %1389 = vmatpush1.msra.mxu0 %v1361
        %1390 = vmatprep.subr.mxu0 0.0
        %1391 = vmatpush1.msra.mxu0 %v1362
        %1392 = vmatprep.subr.mxu0 0.0
        %1393 = vmatpush1.msra.mxu0 %v1363
        %1394 = vmatprep.subr.mxu0 0.0
        %1395 = vmatpush1.msra.mxu0 %v1364
        %1396 = vmatprep.subr.mxu0 0.0
        %1397 = vmatpush1.msra.mxu0 %v1365
        %1398 = vmatprep.subr.mxu0 0.0
        %1399 = vmatpush1.msra.mxu0 %v1366
        %1400 = vmatprep.subr.mxu0 0.0
        %1401 = vmatpush1.msra.mxu0 0.0
        %1402 = vmatprep.subr.mxu0 0.0
        %1403 = vmatpush1.msra.mxu0 0.0
        %1404 = vmatprep.subr.mxu0 0.0
        %1405 = vmatpush1.msra.mxu0 0.0
        %1406 = vmatprep.subr.mxu0 0.0
        %1407 = vmatpush1.msra.mxu0 0.0
        %1408 = vmatprep.subr.mxu0 0.0
        %1409 = vmatpush1.msra.mxu0 0.0
        %1410 = vmatprep.subr.mxu0 0.0
        %1411 = vmatpush1.msra.mxu0 0.0
        %1412 = vmatprep.subr.mxu0 0.0
        %1413 = vmatpush1.msra.mxu0 0.0
        %1414 = vmatprep.subr.mxu0 0.0
        %1415 = vmatpush1.msra.mxu0 0.0
        %1416 = vmatprep.subr.mxu0 0.0
        %1417 = vmatpush1.msra.mxu0 0.0
        %1418 = vmatprep.subr.mxu0 0.0
        %1419 = vmatpush1.msra.mxu0 0.0
        %1420 = vmatprep.subr.mxu0 0.0
        %1421 = vmatpush1.msra.mxu0 0.0
        %1422 = vmatprep.subr.mxu0 0.0
        %1423 = vmatpush1.msra.mxu0 0.0
        %1424 = vmatprep.subr.mxu0 0.0
        %1425 = vmatpush1.msra.mxu0 0.0
        %1426 = vmatprep.subr.mxu0 0.0
        %1427 = vmatpush1.msra.mxu0 0.0
        %1428 = vmatprep.subr.mxu0 0.0
        %1429 = vmatpush1.msra.mxu0 0.0
        %1430 = vmatprep.subr.mxu0 0.0
        %1431 = vmatpush1.msra.mxu0 0.0
        %1432 = vmatprep.mubr.f32.mxu0 0.0
        %1433 = vmatmul.mubr.f32.gmra.mrb[0].mxu0 %v1350
        %v1434 = vpop.f32.mrb[0].mxu0
        %v1435 = vadd.f32 %v1367, %v1434
        %v1436 = vpop.f32.mrb[0].mxu0
        %1437 = vdwg.mxu0
        %v1438 = vmax.f32 %v1435, 0.0
        %v1439 = vld [vmem:[#allocation15] sm:$0xff]
        %v1440 = vld [vmem:[#allocation15 + $0x8] sm:$0xff]
        %v1441 = vld [vmem:[#allocation15 + $0x10] sm:$0xff]
        %v1442 = vld [vmem:[#allocation15 + $0x18] sm:$0xff]
        %v1443 = vld [vmem:[%s6] sm:$0x1]
        %vm1444 = vcmask 261120
        %v1446 = vsel %vm1444, %v1438, 0
        %1448 = vmatprep.subr.mxu0 0.0
        %1449 = vmatpush1.msra.mxu0 %v1439
        %1450 = vmatprep.subr.mxu0 0.0
        %1451 = vmatpush1.msra.mxu0 %v1440
        %1452 = vmatprep.subr.mxu0 0.0
        %1453 = vmatpush1.msra.mxu0 %v1441
        %1454 = vmatprep.subr.mxu0 0.0
        %1455 = vmatpush1.msra.mxu0 %v1442
        %1456 = vmatprep.subr.mxu0 0.0
        %1457 = vmatpush1.msra.mxu0 0.0
        %1458 = vmatprep.subr.mxu0 0.0
        %1459 = vmatpush1.msra.mxu0 0.0
        %1460 = vmatprep.subr.mxu0 0.0
        %1461 = vmatpush1.msra.mxu0 0.0
        %1462 = vmatprep.subr.mxu0 0.0
        %1463 = vmatpush1.msra.mxu0 0.0
        %1464 = vmatprep.subr.mxu0 0.0
        %1465 = vmatpush1.msra.mxu0 0.0
        %1466 = vmatprep.subr.mxu0 0.0
        %1467 = vmatpush1.msra.mxu0 0.0
        %1468 = vmatprep.subr.mxu0 0.0
        %1469 = vmatpush1.msra.mxu0 0.0
        %1470 = vmatprep.subr.mxu0 0.0
        %1471 = vmatpush1.msra.mxu0 0.0
        %1472 = vmatprep.subr.mxu0 0.0
        %1473 = vmatpush1.msra.mxu0 0.0
        %1474 = vmatprep.subr.mxu0 0.0
        %1475 = vmatpush1.msra.mxu0 0.0
        %1476 = vmatprep.subr.mxu0 0.0
        %1477 = vmatpush1.msra.mxu0 0.0
        %1478 = vmatprep.subr.mxu0 0.0
        %1479 = vmatpush1.msra.mxu0 0.0
        %1480 = vmatprep.subr.mxu0 0.0
        %1481 = vmatpush1.msra.mxu0 0.0
        %1482 = vmatprep.subr.mxu0 0.0
        %1483 = vmatpush1.msra.mxu0 0.0
        %1484 = vmatprep.subr.mxu0 0.0
        %1485 = vmatpush1.msra.mxu0 0.0
        %1486 = vmatprep.subr.mxu0 0.0
        %1487 = vmatpush1.msra.mxu0 0.0
        %1488 = vmatprep.subr.mxu0 0.0
        %1489 = vmatpush1.msra.mxu0 0.0
        %1490 = vmatprep.subr.mxu0 0.0
        %1491 = vmatpush1.msra.mxu0 0.0
        %1492 = vmatprep.subr.mxu0 0.0
        %1493 = vmatpush1.msra.mxu0 0.0
        %1494 = vmatprep.subr.mxu0 0.0
        %1495 = vmatpush1.msra.mxu0 0.0
        %1496 = vmatprep.subr.mxu0 0.0
        %1497 = vmatpush1.msra.mxu0 0.0
        %1498 = vmatprep.subr.mxu0 0.0
        %1499 = vmatpush1.msra.mxu0 0.0
        %1500 = vmatprep.subr.mxu0 0.0
        %1501 = vmatpush1.msra.mxu0 0.0
        %1502 = vmatprep.subr.mxu0 0.0
        %1503 = vmatpush1.msra.mxu0 0.0
        %1504 = vmatprep.subr.mxu0 0.0
        %1505 = vmatpush1.msra.mxu0 0.0
        %1506 = vmatprep.subr.mxu0 0.0
        %1507 = vmatpush1.msra.mxu0 0.0
        %1508 = vmatprep.subr.mxu0 0.0
        %1509 = vmatpush1.msra.mxu0 0.0
        %1510 = vmatprep.subr.mxu0 0.0
        %1511 = vmatpush1.msra.mxu0 0.0
        %1512 = vmatprep.mubr.f32.mxu0 0.0
        %1513 = vmatmul.mubr.f32.gmra.mrb[0].mxu0 %v1446
        %v1514 = vpop.f32.mrb[0].mxu0
        %v1515 = vadd.f32 %v1443, %v1514
        %v1516 = vpop.f32.mrb[0].mxu0
        %1517 = vdwg.mxu0
        %v1518 = vadd.f32 %v1515, 3.0
        %v1519 = vmax.f32 %v1518, 0.0
        %v1520 = vmin.f32 %v1519, 6.0
        %v1521 = vmul.f32 %v1520, 0.16666667
        %v1522 = vlaneseq
        %v1523 = vshrl.u32 %v1522, 7
        %v1524 = vsub.s32 0, %v1523
        %v1525 = vrot.slane %v1521, %v1524
        %v1526 = vld [vmem:[%s1087] sm:$0xff]
        %v1527 = vld [vmem:[%s1087 + $0x8] sm:$0xff]
        %v1528 = vld [vmem:[%s1087 + $0x10] sm:$0xff]
        %v1529 = vld [vmem:[%s1087 + $0x18] sm:$0xff]
        %v1530 = vld [vmem:[%s1087 + $0x20] sm:$0xff]
        %v1531 = vld [vmem:[%s1087 + $0x28] sm:$0xff]
        %v1532 = vld [vmem:[%s1087 + $0x30] sm:$0xff]
        %v1533 = vld [vmem:[%s1087 + $0x38] sm:$0xff]
        %v1534 = vmul.f32 %v1526, %v1525
        %v1535 = vmul.f32 %v1527, %v1525
        %v1536 = vmul.f32 %v1528, %v1525
        %v1537 = vmul.f32 %v1529, %v1525
        %v1538 = vmul.f32 %v1530, %v1525
        %v1539 = vmul.f32 %v1531, %v1525
        %v1540 = vmul.f32 %v1532, %v1525
        %v1541 = vmul.f32 %v1533, %v1525
        %v1542 = vld [vmem:[#allocation20] sm:$0xff]
        %v1543 = vld [vmem:[#allocation20 + $0x8] sm:$0xff]
        %v1544 = vld [vmem:[#allocation20 + $0x10] sm:$0xff]
        %v1545 = vld [vmem:[#allocation20 + $0x18] sm:$0xff]
        %v1546 = vld [vmem:[#allocation20 + $0x20] sm:$0xff]
        %v1547 = vld [vmem:[#allocation20 + $0x28] sm:$0xff]
        %v1548 = vld [vmem:[#allocation20 + $0x30] sm:$0xff]
        %v1549 = vld [vmem:[#allocation20 + $0x38] sm:$0xff]
        %v1550 = vld [vmem:[#allocation20 + $0x40] sm:$0xff]
        %v1551 = vld [vmem:[#allocation20 + $0x48] sm:$0xff]
        %v1552 = vld [vmem:[#allocation20 + $0x50] sm:$0xff]
        %v1553 = vld [vmem:[#allocation20 + $0x58] sm:$0xff]
        %v1554 = vld [vmem:[#allocation20 + $0x60] sm:$0xff]
        %v1555 = vld [vmem:[#allocation20 + $0x68] sm:$0xff]
        %v1556 = vld [vmem:[#allocation20 + $0x70] sm:$0xff]
        %v1557 = vld [vmem:[#allocation20 + $0x78] sm:$0xff]
        %v1558 = vld [vmem:[#allocation20 + $0x80] sm:$0xff]
        %v1559 = vld [vmem:[#allocation20 + $0x88] sm:$0xff]
        %v1560 = vld [vmem:[#allocation20 + $0x90] sm:$0xff]
        %v1561 = vld [vmem:[#allocation20 + $0x98] sm:$0xff]
        %v1562 = vld [vmem:[#allocation20 + $0xa0] sm:$0xff]
        %v1563 = vld [vmem:[#allocation20 + $0xa8] sm:$0xff]
        %v1564 = vld [vmem:[#allocation20 + $0xb0] sm:$0xff]
        %v1565 = vld [vmem:[#allocation20 + $0xb8] sm:$0xff]
        %v1566 = vld [vmem:[#allocation20 + $0xc0] sm:$0xff]
        %v1567 = vld [vmem:[#allocation20 + $0xc8] sm:$0xff]
        %v1568 = vld [vmem:[#allocation20 + $0xd0] sm:$0xff]
        %v1569 = vld [vmem:[#allocation20 + $0xd8] sm:$0xff]
        %v1570 = vld [vmem:[#allocation20 + $0xe0] sm:$0xff]
        %v1571 = vld [vmem:[#allocation20 + $0xe8] sm:$0xff]
        %v1572 = vld [vmem:[#allocation20 + $0xf0] sm:$0xff]
        %v1573 = vld [vmem:[#allocation20 + $0xf8] sm:$0xff]
        %1574 = vmatprep.subr.mxu0 %v1543
        %1575 = vmatpush1.msra.mxu0 %v1542
        %1576 = vmatprep.subr.mxu0 %v1545
        %1577 = vmatpush1.msra.mxu0 %v1544
        %1578 = vmatprep.subr.mxu0 %v1547
        %1579 = vmatpush1.msra.mxu0 %v1546
        %1580 = vmatprep.subr.mxu0 %v1549
        %1581 = vmatpush1.msra.mxu0 %v1548
        %1582 = vmatprep.subr.mxu0 %v1551
        %1583 = vmatpush1.msra.mxu0 %v1550
        %1584 = vmatprep.subr.mxu0 %v1553
        %1585 = vmatpush1.msra.mxu0 %v1552
        %1586 = vmatprep.subr.mxu0 %v1555
        %1587 = vmatpush1.msra.mxu0 %v1554
        %1588 = vmatprep.subr.mxu0 %v1557
        %1589 = vmatpush1.msra.mxu0 %v1556
        %1590 = vmatprep.subr.mxu0 %v1559
        %1591 = vmatpush1.msra.mxu0 %v1558
        %1592 = vmatprep.subr.mxu0 %v1561
        %1593 = vmatpush1.msra.mxu0 %v1560
        %1594 = vmatprep.subr.mxu0 %v1563
        %1595 = vmatpush1.msra.mxu0 %v1562
        %1596 = vmatprep.subr.mxu0 %v1565
        %1597 = vmatpush1.msra.mxu0 %v1564
        %1598 = vmatprep.subr.mxu0 %v1567
        %1599 = vmatpush1.msra.mxu0 %v1566
        %1600 = vmatprep.subr.mxu0 %v1569
        %1601 = vmatpush1.msra.mxu0 %v1568
        %1602 = vmatprep.subr.mxu0 %v1571
        %1603 = vmatpush1.msra.mxu0 %v1570
        %1604 = vmatprep.subr.mxu0 %v1573
        %1605 = vmatpush1.msra.mxu0 %v1572
        %1606 = vmatprep.subr.mxu0 0.0
        %1607 = vmatpush1.msra.mxu0 0.0
        %1608 = vmatprep.subr.mxu0 0.0
        %1609 = vmatpush1.msra.mxu0 0.0
        %1610 = vmatprep.subr.mxu0 0.0
        %1611 = vmatpush1.msra.mxu0 0.0
        %1612 = vmatprep.subr.mxu0 0.0
        %1613 = vmatpush1.msra.mxu0 0.0
        %1614 = vmatprep.subr.mxu0 0.0
        %1615 = vmatpush1.msra.mxu0 0.0
        %1616 = vmatprep.subr.mxu0 0.0
        %1617 = vmatpush1.msra.mxu0 0.0
        %1618 = vmatprep.subr.mxu0 0.0
        %1619 = vmatpush1.msra.mxu0 0.0
        %1620 = vmatprep.subr.mxu0 0.0
        %1621 = vmatpush1.msra.mxu0 0.0
        %1622 = vmatprep.subr.mxu0 0.0
        %1623 = vmatpush1.msra.mxu0 0.0
        %1624 = vmatprep.subr.mxu0 0.0
        %1625 = vmatpush1.msra.mxu0 0.0
        %1626 = vmatprep.subr.mxu0 0.0
        %1627 = vmatpush1.msra.mxu0 0.0
        %1628 = vmatprep.subr.mxu0 0.0
        %1629 = vmatpush1.msra.mxu0 0.0
        %1630 = vmatprep.subr.mxu0 0.0
        %1631 = vmatpush1.msra.mxu0 0.0
        %1632 = vmatprep.subr.mxu0 0.0
        %1633 = vmatpush1.msra.mxu0 0.0
        %1634 = vmatprep.subr.mxu0 0.0
        %1635 = vmatpush1.msra.mxu0 0.0
        %1636 = vmatprep.subr.mxu0 0.0
        %1637 = vmatpush1.msra.mxu0 0.0
        %1638 = vmatprep.mubr.f32.mxu0 0.0
        %1639 = vmatmul.mubr.f32.gmra.mrb[0].mxu0 %v1534
        %v1640 = vpop.f32.mrb[0].mxu0
        %v1641 = vadd.f32 0.0, %v1640
        %v1642 = vpop.f32.mrb[0].mxu0
        %v1643 = vadd.f32 0.0, %v1642
        %1644 = vmatprep.mubr.f32.mxu0 0.0
        %1645 = vmatmul.mubr.f32.gmra.mrb[0].mxu0 %v1535
        %v1646 = vpop.f32.mrb[0].mxu0
        %v1647 = vadd.f32 0.0, %v1646
        %v1648 = vpop.f32.mrb[0].mxu0
        %v1649 = vadd.f32 0.0, %v1648
        %1650 = vmatprep.mubr.f32.mxu0 0.0
        %1651 = vmatmul.mubr.f32.gmra.mrb[0].mxu0 %v1536
        %v1652 = vpop.f32.mrb[0].mxu0
        %v1653 = vadd.f32 0.0, %v1652
        %v1654 = vpop.f32.mrb[0].mxu0
        %v1655 = vadd.f32 0.0, %v1654
        %1656 = vmatprep.mubr.f32.mxu0 0.0
        %1657 = vmatmul.mubr.f32.gmra.mrb[0].mxu0 %v1537
        %v1658 = vpop.f32.mrb[0].mxu0
        %v1659 = vadd.f32 0.0, %v1658
        %v1660 = vpop.f32.mrb[0].mxu0
        %v1661 = vadd.f32 0.0, %v1660
        %1662 = vmatprep.mubr.f32.mxu0 0.0
        %1663 = vmatmul.mubr.f32.gmra.mrb[0].mxu0 %v1538
        %v1664 = vpop.f32.mrb[0].mxu0
        %v1665 = vadd.f32 0.0, %v1664
        %v1666 = vpop.f32.mrb[0].mxu0
        %v1667 = vadd.f32 0.0, %v1666
        %1668 = vmatprep.mubr.f32.mxu0 0.0
        %1669 = vmatmul.mubr.f32.gmra.mrb[0].mxu0 %v1539
        %v1670 = vpop.f32.mrb[0].mxu0
        %v1671 = vadd.f32 0.0, %v1670
        %v1672 = vpop.f32.mrb[0].mxu0
        %v1673 = vadd.f32 0.0, %v1672
        %1674 = vmatprep.mubr.f32.mxu0 0.0
        %1675 = vmatmul.mubr.f32.gmra.mrb[0].mxu0 %v1540
        %v1676 = vpop.f32.mrb[0].mxu0
        %v1677 = vadd.f32 0.0, %v1676
        %v1678 = vpop.f32.mrb[0].mxu0
        %v1679 = vadd.f32 0.0, %v1678
        %1680 = vmatprep.mubr.f32.mxu0 0.0
        %1681 = vmatmul.mubr.f32.gmra.mrb[0].mxu0 %v1541
        %v1682 = vpop.f32.mrb[0].mxu0
        %v1683 = vadd.f32 0.0, %v1682
        %v1684 = vpop.f32.mrb[0].mxu0
        %v1685 = vadd.f32 0.0, %v1684
        %1686 = vdwg.mxu0
        %s1687 = sadd.s32 0, 1
        %s1688 = smul.u32 %s1687, 6
        %s1689 = smul.addr %s1688, 8
        %s1690 = scalar_lea.vmem [#allocation3], %s1689
        %1691 = vst [vmem:[%s1690 + $0x10] sm:$0xff] %v1641
        %1692 = vst [vmem:[%s1690 + $0x18] sm:$0xff] %v1643
        %1693 = vst [vmem:[%s1690 + $0x40] sm:$0xff] %v1647
        %1694 = vst [vmem:[%s1690 + $0x48] sm:$0xff] %v1649
        %1695 = vst [vmem:[%s1690 + $0x70] sm:$0xff] %v1653
        %1696 = vst [vmem:[%s1690 + $0x78] sm:$0xff] %v1655
        %1697 = vst [vmem:[%s1690 + $0xa0] sm:$0xff] %v1659
        %1698 = vst [vmem:[%s1690 + $0xa8] sm:$0xff] %v1661
        %1699 = vst [vmem:[%s1690 + $0xd0] sm:$0xff] %v1665
        %1700 = vst [vmem:[%s1690 + $0xd8] sm:$0xff] %v1667
        %1701 = vst [vmem:[%s1690 + $0x100] sm:$0xff] %v1671
        %1702 = vst [vmem:[%s1690 + $0x108] sm:$0xff] %v1673
        %1703 = vst [vmem:[%s1690 + $0x130] sm:$0xff] %v1677
        %1704 = vst [vmem:[%s1690 + $0x138] sm:$0xff] %v1679
        %1705 = vst [vmem:[%s1690 + $0x160] sm:$0xff] %v1683
        %1706 = vst [vmem:[%s1690 + $0x168] sm:$0xff] %v1685
        %v1707 = vld [vmem:[%s1327] sm:$0xff]
        %v1708 = vld [vmem:[%s1327 + $0x8] sm:$0xff]
        %v1709 = vld [vmem:[%s1327 + $0x10] sm:$0xff]
        %v1710 = vld [vmem:[%s1327 + $0x18] sm:$0xff]
        %v1711 = vld [vmem:[%s1327 + $0x20] sm:$0xff]
        %v1712 = vld [vmem:[%s1327 + $0x28] sm:$0xff]
        %v1713 = vld [vmem:[%s1327 + $0x30] sm:$0xff]
        %v1714 = vld [vmem:[%s1327 + $0x38] sm:$0xff]
        %v1715 = vmul.f32 %v1707, %v1525
        %v1716 = vmul.f32 %v1708, %v1525
        %v1717 = vmul.f32 %v1709, %v1525
        %v1718 = vmul.f32 %v1710, %v1525
        %v1719 = vmul.f32 %v1711, %v1525
        %v1720 = vmul.f32 %v1712, %v1525
        %v1721 = vmul.f32 %v1713, %v1525
        %v1722 = vmul.f32 %v1714, %v1525
        %v1723 = vld [vmem:[#allocation20] sm:$0xff]
        %v1724 = vld [vmem:[#allocation20 + $0x8] sm:$0xff]
        %v1725 = vld [vmem:[#allocation20 + $0x10] sm:$0xff]
        %v1726 = vld [vmem:[#allocation20 + $0x18] sm:$0xff]
        %v1727 = vld [vmem:[#allocation20 + $0x20] sm:$0xff]
        %v1728 = vld [vmem:[#allocation20 + $0x28] sm:$0xff]
        %v1729 = vld [vmem:[#allocation20 + $0x30] sm:$0xff]
        %v1730 = vld [vmem:[#allocation20 + $0x38] sm:$0xff]
        %v1731 = vld [vmem:[#allocation20 + $0x40] sm:$0xff]
        %v1732 = vld [vmem:[#allocation20 + $0x48] sm:$0xff]
        %v1733 = vld [vmem:[#allocation20 + $0x50] sm:$0xff]
        %v1734 = vld [vmem:[#allocation20 + $0x58] sm:$0xff]
        %v1735 = vld [vmem:[#allocation20 + $0x60] sm:$0xff]
        %v1736 = vld [vmem:[#allocation20 + $0x68] sm:$0xff]
        %v1737 = vld [vmem:[#allocation20 + $0x70] sm:$0xff]
        %v1738 = vld [vmem:[#allocation20 + $0x78] sm:$0xff]
        %v1739 = vld [vmem:[#allocation20 + $0x80] sm:$0xff]
        %v1740 = vld [vmem:[#allocation20 + $0x88] sm:$0xff]
        %v1741 = vld [vmem:[#allocation20 + $0x90] sm:$0xff]
        %v1742 = vld [vmem:[#allocation20 + $0x98] sm:$0xff]
        %v1743 = vld [vmem:[#allocation20 + $0xa0] sm:$0xff]
        %v1744 = vld [vmem:[#allocation20 + $0xa8] sm:$0xff]
        %v1745 = vld [vmem:[#allocation20 + $0xb0] sm:$0xff]
        %v1746 = vld [vmem:[#allocation20 + $0xb8] sm:$0xff]
        %v1747 = vld [vmem:[#allocation20 + $0xc0] sm:$0xff]
        %v1748 = vld [vmem:[#allocation20 + $0xc8] sm:$0xff]
        %v1749 = vld [vmem:[#allocation20 + $0xd0] sm:$0xff]
        %v1750 = vld [vmem:[#allocation20 + $0xd8] sm:$0xff]
        %v1751 = vld [vmem:[#allocation20 + $0xe0] sm:$0xff]
        %v1752 = vld [vmem:[#allocation20 + $0xe8] sm:$0xff]
        %v1753 = vld [vmem:[#allocation20 + $0xf0] sm:$0xff]
        %v1754 = vld [vmem:[#allocation20 + $0xf8] sm:$0xff]
        %1755 = vmatprep.subr.mxu0 %v1724
        %1756 = vmatpush1.msra.mxu0 %v1723
        %1757 = vmatprep.subr.mxu0 %v1726
        %1758 = vmatpush1.msra.mxu0 %v1725
        %1759 = vmatprep.subr.mxu0 %v1728
        %1760 = vmatpush1.msra.mxu0 %v1727
        %1761 = vmatprep.subr.mxu0 %v1730
        %1762 = vmatpush1.msra.mxu0 %v1729
        %1763 = vmatprep.subr.mxu0 %v1732
        %1764 = vmatpush1.msra.mxu0 %v1731
        %1765 = vmatprep.subr.mxu0 %v1734
        %1766 = vmatpush1.msra.mxu0 %v1733
        %1767 = vmatprep.subr.mxu0 %v1736
        %1768 = vmatpush1.msra.mxu0 %v1735
        %1769 = vmatprep.subr.mxu0 %v1738
        %1770 = vmatpush1.msra.mxu0 %v1737
        %1771 = vmatprep.subr.mxu0 %v1740
        %1772 = vmatpush1.msra.mxu0 %v1739
        %1773 = vmatprep.subr.mxu0 %v1742
        %1774 = vmatpush1.msra.mxu0 %v1741
        %1775 = vmatprep.subr.mxu0 %v1744
        %1776 = vmatpush1.msra.mxu0 %v1743
        %1777 = vmatprep.subr.mxu0 %v1746
        %1778 = vmatpush1.msra.mxu0 %v1745
        %1779 = vmatprep.subr.mxu0 %v1748
        %1780 = vmatpush1.msra.mxu0 %v1747
        %1781 = vmatprep.subr.mxu0 %v1750
        %1782 = vmatpush1.msra.mxu0 %v1749
        %1783 = vmatprep.subr.mxu0 %v1752
        %1784 = vmatpush1.msra.mxu0 %v1751
        %1785 = vmatprep.subr.mxu0 %v1754
        %1786 = vmatpush1.msra.mxu0 %v1753
        %1787 = vmatprep.subr.mxu0 0.0
        %1788 = vmatpush1.msra.mxu0 0.0
        %1789 = vmatprep.subr.mxu0 0.0
        %1790 = vmatpush1.msra.mxu0 0.0
        %1791 = vmatprep.subr.mxu0 0.0
        %1792 = vmatpush1.msra.mxu0 0.0
        %1793 = vmatprep.subr.mxu0 0.0
        %1794 = vmatpush1.msra.mxu0 0.0
        %1795 = vmatprep.subr.mxu0 0.0
        %1796 = vmatpush1.msra.mxu0 0.0
        %1797 = vmatprep.subr.mxu0 0.0
        %1798 = vmatpush1.msra.mxu0 0.0
        %1799 = vmatprep.subr.mxu0 0.0
        %1800 = vmatpush1.msra.mxu0 0.0
        %1801 = vmatprep.subr.mxu0 0.0
        %1802 = vmatpush1.msra.mxu0 0.0
        %1803 = vmatprep.subr.mxu0 0.0
        %1804 = vmatpush1.msra.mxu0 0.0
        %1805 = vmatprep.subr.mxu0 0.0
        %1806 = vmatpush1.msra.mxu0 0.0
        %1807 = vmatprep.subr.mxu0 0.0
        %1808 = vmatpush1.msra.mxu0 0.0
        %1809 = vmatprep.subr.mxu0 0.0
        %1810 = vmatpush1.msra.mxu0 0.0
        %1811 = vmatprep.subr.mxu0 0.0
        %1812 = vmatpush1.msra.mxu0 0.0
        %1813 = vmatprep.subr.mxu0 0.0
        %1814 = vmatpush1.msra.mxu0 0.0
        %1815 = vmatprep.subr.mxu0 0.0
        %1816 = vmatpush1.msra.mxu0 0.0
        %1817 = vmatprep.subr.mxu0 0.0
        %1818 = vmatpush1.msra.mxu0 0.0
        %1819 = vmatprep.mubr.f32.mxu0 0.0
        %1820 = vmatmul.mubr.f32.gmra.mrb[0].mxu0 %v1715
        %v1821 = vpop.f32.mrb[0].mxu0
        %v1822 = vadd.f32 0.0, %v1821
        %v1823 = vpop.f32.mrb[0].mxu0
        %v1824 = vadd.f32 0.0, %v1823
        %1825 = vmatprep.mubr.f32.mxu0 0.0
        %1826 = vmatmul.mubr.f32.gmra.mrb[0].mxu0 %v1716
        %v1827 = vpop.f32.mrb[0].mxu0
        %v1828 = vadd.f32 0.0, %v1827
        %v1829 = vpop.f32.mrb[0].mxu0
        %v1830 = vadd.f32 0.0, %v1829
        %1831 = vmatprep.mubr.f32.mxu0 0.0
        %1832 = vmatmul.mubr.f32.gmra.mrb[0].mxu0 %v1717
        %v1833 = vpop.f32.mrb[0].mxu0
        %v1834 = vadd.f32 0.0, %v1833
        %v1835 = vpop.f32.mrb[0].mxu0
        %v1836 = vadd.f32 0.0, %v1835
        %1837 = vmatprep.mubr.f32.mxu0 0.0
        %1838 = vmatmul.mubr.f32.gmra.mrb[0].mxu0 %v1718
        %v1839 = vpop.f32.mrb[0].mxu0
        %v1840 = vadd.f32 0.0, %v1839
        %v1841 = vpop.f32.mrb[0].mxu0
        %v1842 = vadd.f32 0.0, %v1841
        %1843 = vmatprep.mubr.f32.mxu0 0.0
        %1844 = vmatmul.mubr.f32.gmra.mrb[0].mxu0 %v1719
        %v1845 = vpop.f32.mrb[0].mxu0
        %v1846 = vadd.f32 0.0, %v1845
        %v1847 = vpop.f32.mrb[0].mxu0
        %v1848 = vadd.f32 0.0, %v1847
        %1849 = vmatprep.mubr.f32.mxu0 0.0
        %1850 = vmatmul.mubr.f32.gmra.mrb[0].mxu0 %v1720
        %v1851 = vpop.f32.mrb[0].mxu0
        %v1852 = vadd.f32 0.0, %v1851
        %v1853 = vpop.f32.mrb[0].mxu0
        %v1854 = vadd.f32 0.0, %v1853
        %1855 = vmatprep.mubr.f32.mxu0 0.0
        %1856 = vmatmul.mubr.f32.gmra.mrb[0].mxu0 %v1721
        %v1857 = vpop.f32.mrb[0].mxu0
        %v1858 = vadd.f32 0.0, %v1857
        %v1859 = vpop.f32.mrb[0].mxu0
        %v1860 = vadd.f32 0.0, %v1859
        %1861 = vmatprep.mubr.f32.mxu0 0.0
        %1862 = vmatmul.mubr.f32.gmra.mrb[0].mxu0 %v1722
        %v1863 = vpop.f32.mrb[0].mxu0
        %v1864 = vadd.f32 0.0, %v1863
        %v1865 = vpop.f32.mrb[0].mxu0
        %v1866 = vadd.f32 0.0, %v1865
        %1867 = vdwg.mxu0
        %s1868 = sadd.s32 8, 1
        %s1869 = smul.u32 %s1868, 6
        %s1870 = smul.addr %s1869, 8
        %s1871 = scalar_lea.vmem [#allocation3], %s1870
        %1872 = vst [vmem:[%s1871 + $0x10] sm:$0xff] %v1822
        %1873 = vst [vmem:[%s1871 + $0x18] sm:$0xff] %v1824
        %1874 = vst [vmem:[%s1871 + $0x40] sm:$0xff] %v1828
        %1875 = vst [vmem:[%s1871 + $0x48] sm:$0xff] %v1830
        %1876 = vst [vmem:[%s1871 + $0x70] sm:$0xff] %v1834
        %1877 = vst [vmem:[%s1871 + $0x78] sm:$0xff] %v1836
        %1878 = vst [vmem:[%s1871 + $0xa0] sm:$0xff] %v1840
        %1879 = vst [vmem:[%s1871 + $0xa8] sm:$0xff] %v1842
        %1880 = vst [vmem:[%s1871 + $0xd0] sm:$0xff] %v1846
        %1881 = vst [vmem:[%s1871 + $0xd8] sm:$0xff] %v1848
        %1882 = vst [vmem:[%s1871 + $0x100] sm:$0xff] %v1852
        %1883 = vst [vmem:[%s1871 + $0x108] sm:$0xff] %v1854
        %1884 = vst [vmem:[%s1871 + $0x130] sm:$0xff] %v1858
        %1885 = vst [vmem:[%s1871 + $0x138] sm:$0xff] %v1860
        %1886 = vst [vmem:[%s1871 + $0x160] sm:$0xff] %v1864
        %1887 = vst [vmem:[%s1871 + $0x168] sm:$0xff] %v1866
        %v1888 = vld [vmem:[%s7] sm:$0x77]
        %v1889 = vld [vmem:[%s7 + $0x8] sm:$0x77]
        %v1890 = vld [vmem:[%s7 + $0x10] sm:$0x77]
        %v1891 = vld [vmem:[%s8] sm:$0x3]
        %v1893 = vlaneseq
        %v1894 = vshrl.u32 %v1893, 7
        %v1895 = vsub.s32 0, %v1894
        %v1896 = vrot.slane %v1891, %v1895
        %v1897 = vlaneseq
        %v1898 = vshrl.u32 %v1897, 7
        %v1899 = vsub.s32 1, %v1898
        %v1900 = vrot.slane %v1891, %v1899
        %s1903 = smul.u32 0, 6
        %s1904 = smul.addr %s1903, 8
        %s1905 = scalar_lea.vmem [#allocation3], %s1904
        %v1906 = vld [vmem:[%s1905] sm:$0x80]
        %v1907 = vld [vmem:[%s1905 + $0x8] sm:$0x80]
        %v1908 = vld [vmem:[%s1905 + $0x10] sm:$0x7f]
        %v1909 = vld [vmem:[%s1905 + $0x18] sm:$0x7f]
        %v1910 = vld [vmem:[%s1905 + $0x30] sm:$0x80]
        %v1911 = vld [vmem:[%s1905 + $0x38] sm:$0x80]
        %v1912 = vld [vmem:[%s1905 + $0x40] sm:$0x7f]
        %v1913 = vld [vmem:[%s1905 + $0x48] sm:$0x7f]
        %v1914 = vld [vmem:[%s1905 + $0x60] sm:$0x80]
        %v1915 = vld [vmem:[%s1905 + $0x68] sm:$0x80]
        %v1916 = vld [vmem:[%s1905 + $0x70] sm:$0x7f]
        %v1917 = vld [vmem:[%s1905 + $0x78] sm:$0x7f]
        %v1918 = vld [vmem:[%s1905 + $0x90] sm:$0x80]
        %v1919 = vld [vmem:[%s1905 + $0x98] sm:$0x80]
        %v1920 = vld [vmem:[%s1905 + $0xa0] sm:$0x7f]
        %v1921 = vld [vmem:[%s1905 + $0xa8] sm:$0x7f]
        %v1922 = vld [vmem:[%s1905 + $0xc0] sm:$0x80]
        %v1923 = vld [vmem:[%s1905 + $0xc8] sm:$0x80]
        %v1924 = vld [vmem:[%s1905 + $0xd0] sm:$0x7f]
        %v1925 = vld [vmem:[%s1905 + $0xd8] sm:$0x7f]
        %v1926 = vld [vmem:[%s1905 + $0xf0] sm:$0x80]
        %v1927 = vld [vmem:[%s1905 + $0xf8] sm:$0x80]
        %v1928 = vld [vmem:[%s1905 + $0x100] sm:$0x7f]
        %v1929 = vld [vmem:[%s1905 + $0x108] sm:$0x7f]
        %v1930 = vld [vmem:[%s1905 + $0x120] sm:$0x80]
        %v1931 = vld [vmem:[%s1905 + $0x128] sm:$0x80]
        %v1932 = vld [vmem:[%s1905 + $0x130] sm:$0x7f]
        %v1933 = vld [vmem:[%s1905 + $0x138] sm:$0x7f]
        %v1934 = vld [vmem:[%s1905 + $0x150] sm:$0x80]
        %v1935 = vld [vmem:[%s1905 + $0x158] sm:$0x80]
        %v1936 = vld [vmem:[%s1905 + $0x160] sm:$0x7f]
        %v1937 = vld [vmem:[%s1905 + $0x168] sm:$0x7f]
        %v1938 = vld [vmem:[%s1905 + $0x180] sm:$0x80]
        %v1939 = vld [vmem:[%s1905 + $0x188] sm:$0x80]
        %v1940 = vld [vmem:[%s1905 + $0x190] sm:$0x7f]
        %v1941 = vld [vmem:[%s1905 + $0x198] sm:$0x7f]
        %v1942 = vld [vmem:[%s1905 + $0x1b0] sm:$0x80]
        %v1943 = vld [vmem:[%s1905 + $0x1b8] sm:$0x80]
        %v1944 = vld [vmem:[%s1905 + $0x1c0] sm:$0x7f]
        %v1945 = vld [vmem:[%s1905 + $0x1c8] sm:$0x7f]
        %v1947 = vlaneseq
        %v1948 = vshrl.u32 %v1947, 7
        %v1949 = vsub.s32 0, %v1948
        %v1950 = vrot.slane %v1888, %v1949
        %v1951 = vlaneseq
        %v1952 = vshrl.u32 %v1951, 7
        %v1953 = vsub.s32 4, %v1952
        %v1954 = vrot.slane %v1888, %v1953
        %v1957 = vlaneseq
        %v1958 = vshrl.u32 %v1957, 7
        %v1959 = vsub.s32 0, %v1958
        %v1960 = vrot.slane %v1950, %v1959
        %v1961 = vlaneseq
        %v1962 = vshrl.u32 %v1961, 7
        %v1963 = vsub.s32 0, %v1962
        %v1964 = vrot.slane %v1954, %v1963
        %v1965 = vmul.f32 %v1906, %v1960
        %v1966 = vmul.f32 %v1907, %v1964
        %v1967 = vmul.f32 %v1908, %v1960
        %v1968 = vmul.f32 %v1909, %v1964
        %v1969 = vmul.f32 %v1910, %v1960
        %v1970 = vmul.f32 %v1911, %v1964
        %v1971 = vmul.f32 %v1912, %v1960
        %v1972 = vmul.f32 %v1913, %v1964
        %v1973 = vmul.f32 %v1914, %v1960
        %v1974 = vmul.f32 %v1915, %v1964
        %v1975 = vmul.f32 %v1916, %v1960
        %v1976 = vmul.f32 %v1917, %v1964
        %v1977 = vmul.f32 %v1918, %v1960
        %v1978 = vmul.f32 %v1919, %v1964
        %v1979 = vmul.f32 %v1920, %v1960
        %v1980 = vmul.f32 %v1921, %v1964
        %v1981 = vmul.f32 %v1922, %v1960
        %v1982 = vmul.f32 %v1923, %v1964
        %v1983 = vmul.f32 %v1924, %v1960
        %v1984 = vmul.f32 %v1925, %v1964
        %v1985 = vmul.f32 %v1926, %v1960
        %v1986 = vmul.f32 %v1927, %v1964
        %v1987 = vmul.f32 %v1928, %v1960
        %v1988 = vmul.f32 %v1929, %v1964
        %v1989 = vmul.f32 %v1930, %v1960
        %v1990 = vmul.f32 %v1931, %v1964
        %v1991 = vmul.f32 %v1932, %v1960
        %v1992 = vmul.f32 %v1933, %v1964
        %v1993 = vmul.f32 %v1934, %v1960
        %v1994 = vmul.f32 %v1935, %v1964
        %v1995 = vmul.f32 %v1936, %v1960
        %v1996 = vmul.f32 %v1937, %v1964
        %v1997 = vadd.f32 %v1896, %v1965
        %v1998 = vadd.f32 %v1900, %v1966
        %v1999 = vadd.f32 %v1896, %v1967
        %v2000 = vadd.f32 %v1900, %v1968
        %v2001 = vadd.f32 %v1896, %v1969
        %v2002 = vadd.f32 %v1900, %v1970
        %v2003 = vadd.f32 %v1896, %v1971
        %v2004 = vadd.f32 %v1900, %v1972
        %v2005 = vadd.f32 %v1896, %v1973
        %v2006 = vadd.f32 %v1900, %v1974
        %v2007 = vadd.f32 %v1896, %v1975
        %v2008 = vadd.f32 %v1900, %v1976
        %v2009 = vadd.f32 %v1896, %v1977
        %v2010 = vadd.f32 %v1900, %v1978
        %v2011 = vadd.f32 %v1896, %v1979
        %v2012 = vadd.f32 %v1900, %v1980
        %v2013 = vadd.f32 %v1896, %v1981
        %v2014 = vadd.f32 %v1900, %v1982
        %v2015 = vadd.f32 %v1896, %v1983
        %v2016 = vadd.f32 %v1900, %v1984
        %v2017 = vadd.f32 %v1896, %v1985
        %v2018 = vadd.f32 %v1900, %v1986
        %v2019 = vadd.f32 %v1896, %v1987
        %v2020 = vadd.f32 %v1900, %v1988
        %v2021 = vadd.f32 %v1896, %v1989
        %v2022 = vadd.f32 %v1900, %v1990
        %v2023 = vadd.f32 %v1896, %v1991
        %v2024 = vadd.f32 %v1900, %v1992
        %v2025 = vadd.f32 %v1896, %v1993
        %v2026 = vadd.f32 %v1900, %v1994
        %v2027 = vadd.f32 %v1896, %v1995
        %v2028 = vadd.f32 %v1900, %v1996
        %v2030 = vlaneseq
        %v2031 = vshrl.u32 %v2030, 7
        %v2032 = vsub.s32 0, %v2031
        %v2033 = vrot.slane %v1889, %v2032
        %v2034 = vlaneseq
        %v2035 = vshrl.u32 %v2034, 7
        %v2036 = vsub.s32 4, %v2035
        %v2037 = vrot.slane %v1889, %v2036
        %v2040 = vlaneseq
        %v2041 = vshrl.u32 %v2040, 7
        %v2042 = vsub.s32 0, %v2041
        %v2043 = vrot.slane %v2033, %v2042
        %v2044 = vlaneseq
        %v2045 = vshrl.u32 %v2044, 7
        %v2046 = vsub.s32 0, %v2045
        %v2047 = vrot.slane %v2037, %v2046
        %v2048 = vmul.f32 %v1910, %v2043
        %v2049 = vmul.f32 %v1911, %v2047
        %v2050 = vmul.f32 %v1912, %v2043
        %v2051 = vmul.f32 %v1913, %v2047
        %v2052 = vmul.f32 %v1914, %v2043
        %v2053 = vmul.f32 %v1915, %v2047
        %v2054 = vmul.f32 %v1916, %v2043
        %v2055 = vmul.f32 %v1917, %v2047
        %v2056 = vmul.f32 %v1918, %v2043
        %v2057 = vmul.f32 %v1919, %v2047
        %v2058 = vmul.f32 %v1920, %v2043
        %v2059 = vmul.f32 %v1921, %v2047
        %v2060 = vmul.f32 %v1922, %v2043
        %v2061 = vmul.f32 %v1923, %v2047
        %v2062 = vmul.f32 %v1924, %v2043
        %v2063 = vmul.f32 %v1925, %v2047
        %v2064 = vmul.f32 %v1926, %v2043
        %v2065 = vmul.f32 %v1927, %v2047
        %v2066 = vmul.f32 %v1928, %v2043
        %v2067 = vmul.f32 %v1929, %v2047
        %v2068 = vmul.f32 %v1930, %v2043
        %v2069 = vmul.f32 %v1931, %v2047
        %v2070 = vmul.f32 %v1932, %v2043
        %v2071 = vmul.f32 %v1933, %v2047
        %v2072 = vmul.f32 %v1934, %v2043
        %v2073 = vmul.f32 %v1935, %v2047
        %v2074 = vmul.f32 %v1936, %v2043
        %v2075 = vmul.f32 %v1937, %v2047
        %v2076 = vmul.f32 %v1938, %v2043
        %v2077 = vmul.f32 %v1939, %v2047
        %v2078 = vmul.f32 %v1940, %v2043
        %v2079 = vmul.f32 %v1941, %v2047
        %v2080 = vadd.f32 %v1997, %v2048
        %v2081 = vadd.f32 %v1998, %v2049
        %v2082 = vadd.f32 %v1999, %v2050
        %v2083 = vadd.f32 %v2000, %v2051
        %v2084 = vadd.f32 %v2001, %v2052
        %v2085 = vadd.f32 %v2002, %v2053
        %v2086 = vadd.f32 %v2003, %v2054
        %v2087 = vadd.f32 %v2004, %v2055
        %v2088 = vadd.f32 %v2005, %v2056
        %v2089 = vadd.f32 %v2006, %v2057
        %v2090 = vadd.f32 %v2007, %v2058
        %v2091 = vadd.f32 %v2008, %v2059
        %v2092 = vadd.f32 %v2009, %v2060
        %v2093 = vadd.f32 %v2010, %v2061
        %v2094 = vadd.f32 %v2011, %v2062
        %v2095 = vadd.f32 %v2012, %v2063
        %v2096 = vadd.f32 %v2013, %v2064
        %v2097 = vadd.f32 %v2014, %v2065
        %v2098 = vadd.f32 %v2015, %v2066
        %v2099 = vadd.f32 %v2016, %v2067
        %v2100 = vadd.f32 %v2017, %v2068
        %v2101 = vadd.f32 %v2018, %v2069
        %v2102 = vadd.f32 %v2019, %v2070
        %v2103 = vadd.f32 %v2020, %v2071
        %v2104 = vadd.f32 %v2021, %v2072
        %v2105 = vadd.f32 %v2022, %v2073
        %v2106 = vadd.f32 %v2023, %v2074
        %v2107 = vadd.f32 %v2024, %v2075
        %v2108 = vadd.f32 %v2025, %v2076
        %v2109 = vadd.f32 %v2026, %v2077
        %v2110 = vadd.f32 %v2027, %v2078
        %v2111 = vadd.f32 %v2028, %v2079
        %v2113 = vlaneseq
        %v2114 = vshrl.u32 %v2113, 7
        %v2115 = vsub.s32 0, %v2114
        %v2116 = vrot.slane %v1890, %v2115
        %v2117 = vlaneseq
        %v2118 = vshrl.u32 %v2117, 7
        %v2119 = vsub.s32 4, %v2118
        %v2120 = vrot.slane %v1890, %v2119
        %v2123 = vlaneseq
        %v2124 = vshrl.u32 %v2123, 7
        %v2125 = vsub.s32 0, %v2124
        %v2126 = vrot.slane %v2116, %v2125
        %v2127 = vlaneseq
        %v2128 = vshrl.u32 %v2127, 7
        %v2129 = vsub.s32 0, %v2128
        %v2130 = vrot.slane %v2120, %v2129
        %v2131 = vmul.f32 %v1914, %v2126
        %v2132 = vmul.f32 %v1915, %v2130
        %v2133 = vmul.f32 %v1916, %v2126
        %v2134 = vmul.f32 %v1917, %v2130
        %v2135 = vmul.f32 %v1918, %v2126
        %v2136 = vmul.f32 %v1919, %v2130
        %v2137 = vmul.f32 %v1920, %v2126
        %v2138 = vmul.f32 %v1921, %v2130
        %v2139 = vmul.f32 %v1922, %v2126
        %v2140 = vmul.f32 %v1923, %v2130
        %v2141 = vmul.f32 %v1924, %v2126
        %v2142 = vmul.f32 %v1925, %v2130
        %v2143 = vmul.f32 %v1926, %v2126
        %v2144 = vmul.f32 %v1927, %v2130
        %v2145 = vmul.f32 %v1928, %v2126
        %v2146 = vmul.f32 %v1929, %v2130
        %v2147 = vmul.f32 %v1930, %v2126
        %v2148 = vmul.f32 %v1931, %v2130
        %v2149 = vmul.f32 %v1932, %v2126
        %v2150 = vmul.f32 %v1933, %v2130
        %v2151 = vmul.f32 %v1934, %v2126
        %v2152 = vmul.f32 %v1935, %v2130
        %v2153 = vmul.f32 %v1936, %v2126
        %v2154 = vmul.f32 %v1937, %v2130
        %v2155 = vmul.f32 %v1938, %v2126
        %v2156 = vmul.f32 %v1939, %v2130
        %v2157 = vmul.f32 %v1940, %v2126
        %v2158 = vmul.f32 %v1941, %v2130
        %v2159 = vmul.f32 %v1942, %v2126
        %v2160 = vmul.f32 %v1943, %v2130
        %v2161 = vmul.f32 %v1944, %v2126
        %v2162 = vmul.f32 %v1945, %v2130
        %v2163 = vadd.f32 %v2080, %v2131
        %v2164 = vadd.f32 %v2081, %v2132
        %v2165 = vadd.f32 %v2082, %v2133
        %v2166 = vadd.f32 %v2083, %v2134
        %v2167 = vadd.f32 %v2084, %v2135
        %v2168 = vadd.f32 %v2085, %v2136
        %v2169 = vadd.f32 %v2086, %v2137
        %v2170 = vadd.f32 %v2087, %v2138
        %v2171 = vadd.f32 %v2088, %v2139
        %v2172 = vadd.f32 %v2089, %v2140
        %v2173 = vadd.f32 %v2090, %v2141
        %v2174 = vadd.f32 %v2091, %v2142
        %v2175 = vadd.f32 %v2092, %v2143
        %v2176 = vadd.f32 %v2093, %v2144
        %v2177 = vadd.f32 %v2094, %v2145
        %v2178 = vadd.f32 %v2095, %v2146
        %v2179 = vadd.f32 %v2096, %v2147
        %v2180 = vadd.f32 %v2097, %v2148
        %v2181 = vadd.f32 %v2098, %v2149
        %v2182 = vadd.f32 %v2099, %v2150
        %v2183 = vadd.f32 %v2100, %v2151
        %v2184 = vadd.f32 %v2101, %v2152
        %v2185 = vadd.f32 %v2102, %v2153
        %v2186 = vadd.f32 %v2103, %v2154
        %v2187 = vadd.f32 %v2104, %v2155
        %v2188 = vadd.f32 %v2105, %v2156
        %v2189 = vadd.f32 %v2106, %v2157
        %v2190 = vadd.f32 %v2107, %v2158
        %v2191 = vadd.f32 %v2108, %v2159
        %v2192 = vadd.f32 %v2109, %v2160
        %v2193 = vadd.f32 %v2110, %v2161
        %v2194 = vadd.f32 %v2111, %v2162
        %v2195 = vld [vmem:[%s1905 + $0x10] sm:$0xff]
        %v2196 = vld [vmem:[%s1905 + $0x18] sm:$0xff]
        %v2197 = vld [vmem:[%s1905 + $0x40] sm:$0xff]
        %v2198 = vld [vmem:[%s1905 + $0x48] sm:$0xff]
        %v2199 = vld [vmem:[%s1905 + $0x70] sm:$0xff]
        %v2200 = vld [vmem:[%s1905 + $0x78] sm:$0xff]
        %v2201 = vld [vmem:[%s1905 + $0xa0] sm:$0xff]
        %v2202 = vld [vmem:[%s1905 + $0xa8] sm:$0xff]
        %v2203 = vld [vmem:[%s1905 + $0xd0] sm:$0xff]
        %v2204 = vld [vmem:[%s1905 + $0xd8] sm:$0xff]
        %v2205 = vld [vmem:[%s1905 + $0x100] sm:$0xff]
        %v2206 = vld [vmem:[%s1905 + $0x108] sm:$0xff]
        %v2207 = vld [vmem:[%s1905 + $0x130] sm:$0xff]
        %v2208 = vld [vmem:[%s1905 + $0x138] sm:$0xff]
        %v2209 = vld [vmem:[%s1905 + $0x160] sm:$0xff]
        %v2210 = vld [vmem:[%s1905 + $0x168] sm:$0xff]
        %v2211 = vld [vmem:[%s1905 + $0x190] sm:$0xff]
        %v2212 = vld [vmem:[%s1905 + $0x198] sm:$0xff]
        %v2213 = vld [vmem:[%s1905 + $0x1c0] sm:$0xff]
        %v2214 = vld [vmem:[%s1905 + $0x1c8] sm:$0xff]
        %v2215 = vlaneseq
        %v2216 = vshrl.u32 %v2215, 7
        %v2217 = vsub.s32 1, %v2216
        %v2218 = vrot.slane %v1888, %v2217
        %v2219 = vlaneseq
        %v2220 = vshrl.u32 %v2219, 7
        %v2221 = vsub.s32 5, %v2220
        %v2222 = vrot.slane %v1888, %v2221
        %v2225 = vlaneseq
        %v2226 = vshrl.u32 %v2225, 7
        %v2227 = vsub.s32 1, %v2226
        %v2228 = vrot.slane %v2218, %v2227
        %v2229 = vlaneseq
        %v2230 = vshrl.u32 %v2229, 7
        %v2231 = vsub.s32 1, %v2230
        %v2232 = vrot.slane %v2222, %v2231
        %v2233 = vmul.f32 %v2195, %v2228
        %v2234 = vmul.f32 %v2196, %v2232
        %v2235 = vmul.f32 %v2197, %v2228
        %v2236 = vmul.f32 %v2198, %v2232
        %v2237 = vmul.f32 %v2199, %v2228
        %v2238 = vmul.f32 %v2200, %v2232
        %v2239 = vmul.f32 %v2201, %v2228
        %v2240 = vmul.f32 %v2202, %v2232
        %v2241 = vmul.f32 %v2203, %v2228
        %v2242 = vmul.f32 %v2204, %v2232
        %v2243 = vmul.f32 %v2205, %v2228
        %v2244 = vmul.f32 %v2206, %v2232
        %v2245 = vmul.f32 %v2207, %v2228
        %v2246 = vmul.f32 %v2208, %v2232
        %v2247 = vmul.f32 %v2209, %v2228
        %v2248 = vmul.f32 %v2210, %v2232
        %v2265 = vrot.slane %v2233, 1
        %v2266 = vrot.slane %v2234, 1
        %v2267 = vrot.slane %v2235, 1
        %v2268 = vrot.slane %v2236, 1
        %v2269 = vrot.slane %v2237, 1
        %v2270 = vrot.slane %v2238, 1
        %v2271 = vrot.slane %v2239, 1
        %v2272 = vrot.slane %v2240, 1
        %v2273 = vrot.slane %v2241, 1
        %v2274 = vrot.slane %v2242, 1
        %v2275 = vrot.slane %v2243, 1
        %v2276 = vrot.slane %v2244, 1
        %v2277 = vrot.slane %v2245, 1
        %v2278 = vrot.slane %v2246, 1
        %v2279 = vrot.slane %v2247, 1
        %v2280 = vrot.slane %v2248, 1
        %v2297 = vadd.f32 %v2163, %v2265
        %v2298 = vadd.f32 %v2164, %v2266
        %v2299 = vadd.f32 %v2165, %v2265
        %v2300 = vadd.f32 %v2166, %v2266
        %v2301 = vadd.f32 %v2167, %v2267
        %v2302 = vadd.f32 %v2168, %v2268
        %v2303 = vadd.f32 %v2169, %v2267
        %v2304 = vadd.f32 %v2170, %v2268
        %v2305 = vadd.f32 %v2171, %v2269
        %v2306 = vadd.f32 %v2172, %v2270
        %v2307 = vadd.f32 %v2173, %v2269
        %v2308 = vadd.f32 %v2174, %v2270
        %v2309 = vadd.f32 %v2175, %v2271
        %v2310 = vadd.f32 %v2176, %v2272
        %v2311 = vadd.f32 %v2177, %v2271
        %v2312 = vadd.f32 %v2178, %v2272
        %v2313 = vadd.f32 %v2179, %v2273
        %v2314 = vadd.f32 %v2180, %v2274
        %v2315 = vadd.f32 %v2181, %v2273
        %v2316 = vadd.f32 %v2182, %v2274
        %v2317 = vadd.f32 %v2183, %v2275
        %v2318 = vadd.f32 %v2184, %v2276
        %v2319 = vadd.f32 %v2185, %v2275
        %v2320 = vadd.f32 %v2186, %v2276
        %v2321 = vadd.f32 %v2187, %v2277
        %v2322 = vadd.f32 %v2188, %v2278
        %v2323 = vadd.f32 %v2189, %v2277
        %v2324 = vadd.f32 %v2190, %v2278
        %v2325 = vadd.f32 %v2191, %v2279
        %v2326 = vadd.f32 %v2192, %v2280
        %v2327 = vadd.f32 %v2193, %v2279
        %v2328 = vadd.f32 %v2194, %v2280
        %v2329 = vlaneseq
        %v2330 = vshrl.u32 %v2329, 7
        %v2331 = vsub.s32 1, %v2330
        %v2332 = vrot.slane %v1889, %v2331
        %v2333 = vlaneseq
        %v2334 = vshrl.u32 %v2333, 7
        %v2335 = vsub.s32 5, %v2334
        %v2336 = vrot.slane %v1889, %v2335
        %v2339 = vlaneseq
        %v2340 = vshrl.u32 %v2339, 7
        %v2341 = vsub.s32 1, %v2340
        %v2342 = vrot.slane %v2332, %v2341
        %v2343 = vlaneseq
        %v2344 = vshrl.u32 %v2343, 7
        %v2345 = vsub.s32 1, %v2344
        %v2346 = vrot.slane %v2336, %v2345
        %v2347 = vmul.f32 %v2197, %v2342
        %v2348 = vmul.f32 %v2198, %v2346
        %v2349 = vmul.f32 %v2199, %v2342
        %v2350 = vmul.f32 %v2200, %v2346
        %v2351 = vmul.f32 %v2201, %v2342
        %v2352 = vmul.f32 %v2202, %v2346
        %v2353 = vmul.f32 %v2203, %v2342
        %v2354 = vmul.f32 %v2204, %v2346
        %v2355 = vmul.f32 %v2205, %v2342
        %v2356 = vmul.f32 %v2206, %v2346
        %v2357 = vmul.f32 %v2207, %v2342
        %v2358 = vmul.f32 %v2208, %v2346
        %v2359 = vmul.f32 %v2209, %v2342
        %v2360 = vmul.f32 %v2210, %v2346
        %v2361 = vmul.f32 %v2211, %v2342
        %v2362 = vmul.f32 %v2212, %v2346
        %v2379 = vrot.slane %v2347, 1
        %v2380 = vrot.slane %v2348, 1
        %v2381 = vrot.slane %v2349, 1
        %v2382 = vrot.slane %v2350, 1
        %v2383 = vrot.slane %v2351, 1
        %v2384 = vrot.slane %v2352, 1
        %v2385 = vrot.slane %v2353, 1
        %v2386 = vrot.slane %v2354, 1
        %v2387 = vrot.slane %v2355, 1
        %v2388 = vrot.slane %v2356, 1
        %v2389 = vrot.slane %v2357, 1
        %v2390 = vrot.slane %v2358, 1
        %v2391 = vrot.slane %v2359, 1
        %v2392 = vrot.slane %v2360, 1
        %v2393 = vrot.slane %v2361, 1
        %v2394 = vrot.slane %v2362, 1
        %v2411 = vadd.f32 %v2297, %v2379
        %v2412 = vadd.f32 %v2298, %v2380
        %v2413 = vadd.f32 %v2299, %v2379
        %v2414 = vadd.f32 %v2300, %v2380
        %v2415 = vadd.f32 %v2301, %v2381
        %v2416 = vadd.f32 %v2302, %v2382
        %v2417 = vadd.f32 %v2303, %v2381
        %v2418 = vadd.f32 %v2304, %v2382
        %v2419 = vadd.f32 %v2305, %v2383
        %v2420 = vadd.f32 %v2306, %v2384
        %v2421 = vadd.f32 %v2307, %v2383
        %v2422 = vadd.f32 %v2308, %v2384
        %v2423 = vadd.f32 %v2309, %v2385
        %v2424 = vadd.f32 %v2310, %v2386
        %v2425 = vadd.f32 %v2311, %v2385
        %v2426 = vadd.f32 %v2312, %v2386
        %v2427 = vadd.f32 %v2313, %v2387
        %v2428 = vadd.f32 %v2314, %v2388
        %v2429 = vadd.f32 %v2315, %v2387
        %v2430 = vadd.f32 %v2316, %v2388
        %v2431 = vadd.f32 %v2317, %v2389
        %v2432 = vadd.f32 %v2318, %v2390
        %v2433 = vadd.f32 %v2319, %v2389
        %v2434 = vadd.f32 %v2320, %v2390
        %v2435 = vadd.f32 %v2321, %v2391
        %v2436 = vadd.f32 %v2322, %v2392
        %v2437 = vadd.f32 %v2323, %v2391
        %v2438 = vadd.f32 %v2324, %v2392
        %v2439 = vadd.f32 %v2325, %v2393
        %v2440 = vadd.f32 %v2326, %v2394
        %v2441 = vadd.f32 %v2327, %v2393
        %v2442 = vadd.f32 %v2328, %v2394
        %v2443 = vlaneseq
        %v2444 = vshrl.u32 %v2443, 7
        %v2445 = vsub.s32 1, %v2444
        %v2446 = vrot.slane %v1890, %v2445
        %v2447 = vlaneseq
        %v2448 = vshrl.u32 %v2447, 7
        %v2449 = vsub.s32 5, %v2448
        %v2450 = vrot.slane %v1890, %v2449
        %v2453 = vlaneseq
        %v2454 = vshrl.u32 %v2453, 7
        %v2455 = vsub.s32 1, %v2454
        %v2456 = vrot.slane %v2446, %v2455
        %v2457 = vlaneseq
        %v2458 = vshrl.u32 %v2457, 7
        %v2459 = vsub.s32 1, %v2458
        %v2460 = vrot.slane %v2450, %v2459
        %v2461 = vmul.f32 %v2199, %v2456
        %v2462 = vmul.f32 %v2200, %v2460
        %v2463 = vmul.f32 %v2201, %v2456
        %v2464 = vmul.f32 %v2202, %v2460
        %v2465 = vmul.f32 %v2203, %v2456
        %v2466 = vmul.f32 %v2204, %v2460
        %v2467 = vmul.f32 %v2205, %v2456
        %v2468 = vmul.f32 %v2206, %v2460
        %v2469 = vmul.f32 %v2207, %v2456
        %v2470 = vmul.f32 %v2208, %v2460
        %v2471 = vmul.f32 %v2209, %v2456
        %v2472 = vmul.f32 %v2210, %v2460
        %v2473 = vmul.f32 %v2211, %v2456
        %v2474 = vmul.f32 %v2212, %v2460
        %v2475 = vmul.f32 %v2213, %v2456
        %v2476 = vmul.f32 %v2214, %v2460
        %v2493 = vrot.slane %v2461, 1
        %v2494 = vrot.slane %v2462, 1
        %v2495 = vrot.slane %v2463, 1
        %v2496 = vrot.slane %v2464, 1
        %v2497 = vrot.slane %v2465, 1
        %v2498 = vrot.slane %v2466, 1
        %v2499 = vrot.slane %v2467, 1
        %v2500 = vrot.slane %v2468, 1
        %v2501 = vrot.slane %v2469, 1
        %v2502 = vrot.slane %v2470, 1
        %v2503 = vrot.slane %v2471, 1
        %v2504 = vrot.slane %v2472, 1
        %v2505 = vrot.slane %v2473, 1
        %v2506 = vrot.slane %v2474, 1
        %v2507 = vrot.slane %v2475, 1
        %v2508 = vrot.slane %v2476, 1
        %v2525 = vadd.f32 %v2411, %v2493
        %v2526 = vadd.f32 %v2412, %v2494
        %v2527 = vadd.f32 %v2413, %v2493
        %v2528 = vadd.f32 %v2414, %v2494
        %v2529 = vadd.f32 %v2415, %v2495
        %v2530 = vadd.f32 %v2416, %v2496
        %v2531 = vadd.f32 %v2417, %v2495
        %v2532 = vadd.f32 %v2418, %v2496
        %v2533 = vadd.f32 %v2419, %v2497
        %v2534 = vadd.f32 %v2420, %v2498
        %v2535 = vadd.f32 %v2421, %v2497
        %v2536 = vadd.f32 %v2422, %v2498
        %v2537 = vadd.f32 %v2423, %v2499
        %v2538 = vadd.f32 %v2424, %v2500
        %v2539 = vadd.f32 %v2425, %v2499
        %v2540 = vadd.f32 %v2426, %v2500
        %v2541 = vadd.f32 %v2427, %v2501
        %v2542 = vadd.f32 %v2428, %v2502
        %v2543 = vadd.f32 %v2429, %v2501
        %v2544 = vadd.f32 %v2430, %v2502
        %v2545 = vadd.f32 %v2431, %v2503
        %v2546 = vadd.f32 %v2432, %v2504
        %v2547 = vadd.f32 %v2433, %v2503
        %v2548 = vadd.f32 %v2434, %v2504
        %v2549 = vadd.f32 %v2435, %v2505
        %v2550 = vadd.f32 %v2436, %v2506
        %v2551 = vadd.f32 %v2437, %v2505
        %v2552 = vadd.f32 %v2438, %v2506
        %v2553 = vadd.f32 %v2439, %v2507
        %v2554 = vadd.f32 %v2440, %v2508
        %v2555 = vadd.f32 %v2441, %v2507
        %v2556 = vadd.f32 %v2442, %v2508
        %v2557 = vld [vmem:[%s1905 + $0x10] sm:$0xfe]
        %v2558 = vld [vmem:[%s1905 + $0x18] sm:$0xfe]
        %v2559 = vld [vmem:[%s1905 + $0x20] sm:$0x1]
        %v2560 = vld [vmem:[%s1905 + $0x28] sm:$0x1]
        %v2561 = vld [vmem:[%s1905 + $0x40] sm:$0xfe]
        %v2562 = vld [vmem:[%s1905 + $0x48] sm:$0xfe]
        %v2563 = vld [vmem:[%s1905 + $0x50] sm:$0x1]
        %v2564 = vld [vmem:[%s1905 + $0x58] sm:$0x1]
        %v2565 = vld [vmem:[%s1905 + $0x70] sm:$0xfe]
        %v2566 = vld [vmem:[%s1905 + $0x78] sm:$0xfe]
        %v2567 = vld [vmem:[%s1905 + $0x80] sm:$0x1]
        %v2568 = vld [vmem:[%s1905 + $0x88] sm:$0x1]
        %v2569 = vld [vmem:[%s1905 + $0xa0] sm:$0xfe]
        %v2570 = vld [vmem:[%s1905 + $0xa8] sm:$0xfe]
        %v2571 = vld [vmem:[%s1905 + $0xb0] sm:$0x1]
        %v2572 = vld [vmem:[%s1905 + $0xb8] sm:$0x1]
        %v2573 = vld [vmem:[%s1905 + $0xd0] sm:$0xfe]
        %v2574 = vld [vmem:[%s1905 + $0xd8] sm:$0xfe]
        %v2575 = vld [vmem:[%s1905 + $0xe0] sm:$0x1]
        %v2576 = vld [vmem:[%s1905 + $0xe8] sm:$0x1]
        %v2577 = vld [vmem:[%s1905 + $0x100] sm:$0xfe]
        %v2578 = vld [vmem:[%s1905 + $0x108] sm:$0xfe]
        %v2579 = vld [vmem:[%s1905 + $0x110] sm:$0x1]
        %v2580 = vld [vmem:[%s1905 + $0x118] sm:$0x1]
        %v2581 = vld [vmem:[%s1905 + $0x130] sm:$0xfe]
        %v2582 = vld [vmem:[%s1905 + $0x138] sm:$0xfe]
        %v2583 = vld [vmem:[%s1905 + $0x140] sm:$0x1]
        %v2584 = vld [vmem:[%s1905 + $0x148] sm:$0x1]
        %v2585 = vld [vmem:[%s1905 + $0x160] sm:$0xfe]
        %v2586 = vld [vmem:[%s1905 + $0x168] sm:$0xfe]
        %v2587 = vld [vmem:[%s1905 + $0x170] sm:$0x1]
        %v2588 = vld [vmem:[%s1905 + $0x178] sm:$0x1]
        %v2589 = vld [vmem:[%s1905 + $0x190] sm:$0xfe]
        %v2590 = vld [vmem:[%s1905 + $0x198] sm:$0xfe]
        %v2591 = vld [vmem:[%s1905 + $0x1a0] sm:$0x1]
        %v2592 = vld [vmem:[%s1905 + $0x1a8] sm:$0x1]
        %v2593 = vld [vmem:[%s1905 + $0x1c0] sm:$0xfe]
        %v2594 = vld [vmem:[%s1905 + $0x1c8] sm:$0xfe]
        %v2595 = vld [vmem:[%s1905 + $0x1d0] sm:$0x1]
        %v2596 = vld [vmem:[%s1905 + $0x1d8] sm:$0x1]
        %v2597 = vlaneseq
        %v2598 = vshrl.u32 %v2597, 7
        %v2599 = vsub.s32 2, %v2598
        %v2600 = vrot.slane %v1888, %v2599
        %v2601 = vlaneseq
        %v2602 = vshrl.u32 %v2601, 7
        %v2603 = vsub.s32 6, %v2602
        %v2604 = vrot.slane %v1888, %v2603
        %v2607 = vlaneseq
        %v2608 = vshrl.u32 %v2607, 7
        %v2609 = vsub.s32 2, %v2608
        %v2610 = vrot.slane %v2600, %v2609
        %v2611 = vlaneseq
        %v2612 = vshrl.u32 %v2611, 7
        %v2613 = vsub.s32 2, %v2612
        %v2614 = vrot.slane %v2604, %v2613
        %v2615 = vmul.f32 %v2557, %v2610
        %v2616 = vmul.f32 %v2558, %v2614
        %v2617 = vmul.f32 %v2559, %v2610
        %v2618 = vmul.f32 %v2560, %v2614
        %v2619 = vmul.f32 %v2561, %v2610
        %v2620 = vmul.f32 %v2562, %v2614
        %v2621 = vmul.f32 %v2563, %v2610
        %v2622 = vmul.f32 %v2564, %v2614
        %v2623 = vmul.f32 %v2565, %v2610
        %v2624 = vmul.f32 %v2566, %v2614
        %v2625 = vmul.f32 %v2567, %v2610
        %v2626 = vmul.f32 %v2568, %v2614
        %v2627 = vmul.f32 %v2569, %v2610
        %v2628 = vmul.f32 %v2570, %v2614
        %v2629 = vmul.f32 %v2571, %v2610
        %v2630 = vmul.f32 %v2572, %v2614
        %v2631 = vmul.f32 %v2573, %v2610
        %v2632 = vmul.f32 %v2574, %v2614
        %v2633 = vmul.f32 %v2575, %v2610
        %v2634 = vmul.f32 %v2576, %v2614
        %v2635 = vmul.f32 %v2577, %v2610
        %v2636 = vmul.f32 %v2578, %v2614
        %v2637 = vmul.f32 %v2579, %v2610
        %v2638 = vmul.f32 %v2580, %v2614
        %v2639 = vmul.f32 %v2581, %v2610
        %v2640 = vmul.f32 %v2582, %v2614
        %v2641 = vmul.f32 %v2583, %v2610
        %v2642 = vmul.f32 %v2584, %v2614
        %v2643 = vmul.f32 %v2585, %v2610
        %v2644 = vmul.f32 %v2586, %v2614
        %v2645 = vmul.f32 %v2587, %v2610
        %v2646 = vmul.f32 %v2588, %v2614
        %vm2679 = vcmask 1045504
        %v2680 = vrot.slane %v2615, 2
        %v2681 = vrot.slane %v2616, 2
        %v2682 = vrot.slane %v2617, 2
        %v2683 = vsel %vm2679, %v2680, %v2682
        %v2684 = vrot.slane %v2618, 2
        %v2685 = vsel %vm2679, %v2681, %v2684
        %v2686 = vrot.slane %v2619, 2
        %v2687 = vrot.slane %v2620, 2
        %v2688 = vrot.slane %v2621, 2
        %v2689 = vsel %vm2679, %v2686, %v2688
        %v2690 = vrot.slane %v2622, 2
        %v2691 = vsel %vm2679, %v2687, %v2690
        %v2692 = vrot.slane %v2623, 2
        %v2693 = vrot.slane %v2624, 2
        %v2694 = vrot.slane %v2625, 2
        %v2695 = vsel %vm2679, %v2692, %v2694
        %v2696 = vrot.slane %v2626, 2
        %v2697 = vsel %vm2679, %v2693, %v2696
        %v2698 = vrot.slane %v2627, 2
        %v2699 = vrot.slane %v2628, 2
        %v2700 = vrot.slane %v2629, 2
        %v2701 = vsel %vm2679, %v2698, %v2700
        %v2702 = vrot.slane %v2630, 2
        %v2703 = vsel %vm2679, %v2699, %v2702
        %v2704 = vrot.slane %v2631, 2
        %v2705 = vrot.slane %v2632, 2
        %v2706 = vrot.slane %v2633, 2
        %v2707 = vsel %vm2679, %v2704, %v2706
        %v2708 = vrot.slane %v2634, 2
        %v2709 = vsel %vm2679, %v2705, %v2708
        %v2710 = vrot.slane %v2635, 2
        %v2711 = vrot.slane %v2636, 2
        %v2712 = vrot.slane %v2637, 2
        %v2713 = vsel %vm2679, %v2710, %v2712
        %v2714 = vrot.slane %v2638, 2
        %v2715 = vsel %vm2679, %v2711, %v2714
        %v2716 = vrot.slane %v2639, 2
        %v2717 = vrot.slane %v2640, 2
        %v2718 = vrot.slane %v2641, 2
        %v2719 = vsel %vm2679, %v2716, %v2718
        %v2720 = vrot.slane %v2642, 2
        %v2721 = vsel %vm2679, %v2717, %v2720
        %v2722 = vrot.slane %v2643, 2
        %v2723 = vrot.slane %v2644, 2
        %v2724 = vrot.slane %v2645, 2
        %v2725 = vsel %vm2679, %v2722, %v2724
        %v2726 = vrot.slane %v2646, 2
        %v2727 = vsel %vm2679, %v2723, %v2726
        %v2760 = vadd.f32 %v2525, %v2680
        %v2761 = vadd.f32 %v2526, %v2681
        %v2762 = vadd.f32 %v2527, %v2683
        %v2763 = vadd.f32 %v2528, %v2685
        %v2764 = vadd.f32 %v2529, %v2686
        %v2765 = vadd.f32 %v2530, %v2687
        %v2766 = vadd.f32 %v2531, %v2689
        %v2767 = vadd.f32 %v2532, %v2691
        %v2768 = vadd.f32 %v2533, %v2692
        %v2769 = vadd.f32 %v2534, %v2693
        %v2770 = vadd.f32 %v2535, %v2695
        %v2771 = vadd.f32 %v2536, %v2697
        %v2772 = vadd.f32 %v2537, %v2698
        %v2773 = vadd.f32 %v2538, %v2699
        %v2774 = vadd.f32 %v2539, %v2701
        %v2775 = vadd.f32 %v2540, %v2703
        %v2776 = vadd.f32 %v2541, %v2704
        %v2777 = vadd.f32 %v2542, %v2705
        %v2778 = vadd.f32 %v2543, %v2707
        %v2779 = vadd.f32 %v2544, %v2709
        %v2780 = vadd.f32 %v2545, %v2710
        %v2781 = vadd.f32 %v2546, %v2711
        %v2782 = vadd.f32 %v2547, %v2713
        %v2783 = vadd.f32 %v2548, %v2715
        %v2784 = vadd.f32 %v2549, %v2716
        %v2785 = vadd.f32 %v2550, %v2717
        %v2786 = vadd.f32 %v2551, %v2719
        %v2787 = vadd.f32 %v2552, %v2721
        %v2788 = vadd.f32 %v2553, %v2722
        %v2789 = vadd.f32 %v2554, %v2723
        %v2790 = vadd.f32 %v2555, %v2725
        %v2791 = vadd.f32 %v2556, %v2727
        %v2792 = vlaneseq
        %v2793 = vshrl.u32 %v2792, 7
        %v2794 = vsub.s32 2, %v2793
        %v2795 = vrot.slane %v1889, %v2794
        %v2796 = vlaneseq
        %v2797 = vshrl.u32 %v2796, 7
        %v2798 = vsub.s32 6, %v2797
        %v2799 = vrot.slane %v1889, %v2798
        %v2802 = vlaneseq
        %v2803 = vshrl.u32 %v2802, 7
        %v2804 = vsub.s32 2, %v2803
        %v2805 = vrot.slane %v2795, %v2804
        %v2806 = vlaneseq
        %v2807 = vshrl.u32 %v2806, 7
        %v2808 = vsub.s32 2, %v2807
        %v2809 = vrot.slane %v2799, %v2808
        %v2810 = vmul.f32 %v2561, %v2805
        %v2811 = vmul.f32 %v2562, %v2809
        %v2812 = vmul.f32 %v2563, %v2805
        %v2813 = vmul.f32 %v2564, %v2809
        %v2814 = vmul.f32 %v2565, %v2805
        %v2815 = vmul.f32 %v2566, %v2809
        %v2816 = vmul.f32 %v2567, %v2805
        %v2817 = vmul.f32 %v2568, %v2809
        %v2818 = vmul.f32 %v2569, %v2805
        %v2819 = vmul.f32 %v2570, %v2809
        %v2820 = vmul.f32 %v2571, %v2805
        %v2821 = vmul.f32 %v2572, %v2809
        %v2822 = vmul.f32 %v2573, %v2805
        %v2823 = vmul.f32 %v2574, %v2809
        %v2824 = vmul.f32 %v2575, %v2805
        %v2825 = vmul.f32 %v2576, %v2809
        %v2826 = vmul.f32 %v2577, %v2805
        %v2827 = vmul.f32 %v2578, %v2809
        %v2828 = vmul.f32 %v2579, %v2805
        %v2829 = vmul.f32 %v2580, %v2809
        %v2830 = vmul.f32 %v2581, %v2805
        %v2831 = vmul.f32 %v2582, %v2809
        %v2832 = vmul.f32 %v2583, %v2805
        %v2833 = vmul.f32 %v2584, %v2809
        %v2834 = vmul.f32 %v2585, %v2805
        %v2835 = vmul.f32 %v2586, %v2809
        %v2836 = vmul.f32 %v2587, %v2805
        %v2837 = vmul.f32 %v2588, %v2809
        %v2838 = vmul.f32 %v2589, %v2805
        %v2839 = vmul.f32 %v2590, %v2809
        %v2840 = vmul.f32 %v2591, %v2805
        %v2841 = vmul.f32 %v2592, %v2809
        %v2874 = vrot.slane %v2810, 2
        %v2875 = vrot.slane %v2811, 2
        %v2876 = vrot.slane %v2812, 2
        %v2877 = vsel %vm2679, %v2874, %v2876
        %v2878 = vrot.slane %v2813, 2
        %v2879 = vsel %vm2679, %v2875, %v2878
        %v2880 = vrot.slane %v2814, 2
        %v2881 = vrot.slane %v2815, 2
        %v2882 = vrot.slane %v2816, 2
        %v2883 = vsel %vm2679, %v2880, %v2882
        %v2884 = vrot.slane %v2817, 2
        %v2885 = vsel %vm2679, %v2881, %v2884
        %v2886 = vrot.slane %v2818, 2
        %v2887 = vrot.slane %v2819, 2
        %v2888 = vrot.slane %v2820, 2
        %v2889 = vsel %vm2679, %v2886, %v2888
        %v2890 = vrot.slane %v2821, 2
        %v2891 = vsel %vm2679, %v2887, %v2890
        %v2892 = vrot.slane %v2822, 2
        %v2893 = vrot.slane %v2823, 2
        %v2894 = vrot.slane %v2824, 2
        %v2895 = vsel %vm2679, %v2892, %v2894
        %v2896 = vrot.slane %v2825, 2
        %v2897 = vsel %vm2679, %v2893, %v2896
        %v2898 = vrot.slane %v2826, 2
        %v2899 = vrot.slane %v2827, 2
        %v2900 = vrot.slane %v2828, 2
        %v2901 = vsel %vm2679, %v2898, %v2900
        %v2902 = vrot.slane %v2829, 2
        %v2903 = vsel %vm2679, %v2899, %v2902
        %v2904 = vrot.slane %v2830, 2
        %v2905 = vrot.slane %v2831, 2
        %v2906 = vrot.slane %v2832, 2
        %v2907 = vsel %vm2679, %v2904, %v2906
        %v2908 = vrot.slane %v2833, 2
        %v2909 = vsel %vm2679, %v2905, %v2908
        %v2910 = vrot.slane %v2834, 2
        %v2911 = vrot.slane %v2835, 2
        %v2912 = vrot.slane %v2836, 2
        %v2913 = vsel %vm2679, %v2910, %v2912
        %v2914 = vrot.slane %v2837, 2
        %v2915 = vsel %vm2679, %v2911, %v2914
        %v2916 = vrot.slane %v2838, 2
        %v2917 = vrot.slane %v2839, 2
        %v2918 = vrot.slane %v2840, 2
        %v2919 = vsel %vm2679, %v2916, %v2918
        %v2920 = vrot.slane %v2841, 2
        %v2921 = vsel %vm2679, %v2917, %v2920
        %v2954 = vadd.f32 %v2760, %v2874
        %v2955 = vadd.f32 %v2761, %v2875
        %v2956 = vadd.f32 %v2762, %v2877
        %v2957 = vadd.f32 %v2763, %v2879
        %v2958 = vadd.f32 %v2764, %v2880
        %v2959 = vadd.f32 %v2765, %v2881
        %v2960 = vadd.f32 %v2766, %v2883
        %v2961 = vadd.f32 %v2767, %v2885
        %v2962 = vadd.f32 %v2768, %v2886
        %v2963 = vadd.f32 %v2769, %v2887
        %v2964 = vadd.f32 %v2770, %v2889
        %v2965 = vadd.f32 %v2771, %v2891
        %v2966 = vadd.f32 %v2772, %v2892
        %v2967 = vadd.f32 %v2773, %v2893
        %v2968 = vadd.f32 %v2774, %v2895
        %v2969 = vadd.f32 %v2775, %v2897
        %v2970 = vadd.f32 %v2776, %v2898
        %v2971 = vadd.f32 %v2777, %v2899
        %v2972 = vadd.f32 %v2778, %v2901
        %v2973 = vadd.f32 %v2779, %v2903
        %v2974 = vadd.f32 %v2780, %v2904
        %v2975 = vadd.f32 %v2781, %v2905
        %v2976 = vadd.f32 %v2782, %v2907
        %v2977 = vadd.f32 %v2783, %v2909
        %v2978 = vadd.f32 %v2784, %v2910
        %v2979 = vadd.f32 %v2785, %v2911
        %v2980 = vadd.f32 %v2786, %v2913
        %v2981 = vadd.f32 %v2787, %v2915
        %v2982 = vadd.f32 %v2788, %v2916
        %v2983 = vadd.f32 %v2789, %v2917
        %v2984 = vadd.f32 %v2790, %v2919
        %v2985 = vadd.f32 %v2791, %v2921
        %v2986 = vlaneseq
        %v2987 = vshrl.u32 %v2986, 7
        %v2988 = vsub.s32 2, %v2987
        %v2989 = vrot.slane %v1890, %v2988
        %v2990 = vlaneseq
        %v2991 = vshrl.u32 %v2990, 7
        %v2992 = vsub.s32 6, %v2991
        %v2993 = vrot.slane %v1890, %v2992
        %v2996 = vlaneseq
        %v2997 = vshrl.u32 %v2996, 7
        %v2998 = vsub.s32 2, %v2997
        %v2999 = vrot.slane %v2989, %v2998
        %v3000 = vlaneseq
        %v3001 = vshrl.u32 %v3000, 7
        %v3002 = vsub.s32 2, %v3001
        %v3003 = vrot.slane %v2993, %v3002
        %v3004 = vmul.f32 %v2565, %v2999
        %v3005 = vmul.f32 %v2566, %v3003
        %v3006 = vmul.f32 %v2567, %v2999
        %v3007 = vmul.f32 %v2568, %v3003
        %v3008 = vmul.f32 %v2569, %v2999
        %v3009 = vmul.f32 %v2570, %v3003
        %v3010 = vmul.f32 %v2571, %v2999
        %v3011 = vmul.f32 %v2572, %v3003
        %v3012 = vmul.f32 %v2573, %v2999
        %v3013 = vmul.f32 %v2574, %v3003
        %v3014 = vmul.f32 %v2575, %v2999
        %v3015 = vmul.f32 %v2576, %v3003
        %v3016 = vmul.f32 %v2577, %v2999
        %v3017 = vmul.f32 %v2578, %v3003
        %v3018 = vmul.f32 %v2579, %v2999
        %v3019 = vmul.f32 %v2580, %v3003
        %v3020 = vmul.f32 %v2581, %v2999
        %v3021 = vmul.f32 %v2582, %v3003
        %v3022 = vmul.f32 %v2583, %v2999
        %v3023 = vmul.f32 %v2584, %v3003
        %v3024 = vmul.f32 %v2585, %v2999
        %v3025 = vmul.f32 %v2586, %v3003
        %v3026 = vmul.f32 %v2587, %v2999
        %v3027 = vmul.f32 %v2588, %v3003
        %v3028 = vmul.f32 %v2589, %v2999
        %v3029 = vmul.f32 %v2590, %v3003
        %v3030 = vmul.f32 %v2591, %v2999
        %v3031 = vmul.f32 %v2592, %v3003
        %v3032 = vmul.f32 %v2593, %v2999
        %v3033 = vmul.f32 %v2594, %v3003
        %v3034 = vmul.f32 %v2595, %v2999
        %v3035 = vmul.f32 %v2596, %v3003
        %v3068 = vrot.slane %v3004, 2
        %v3069 = vrot.slane %v3005, 2
        %v3070 = vrot.slane %v3006, 2
        %v3071 = vsel %vm2679, %v3068, %v3070
        %v3072 = vrot.slane %v3007, 2
        %v3073 = vsel %vm2679, %v3069, %v3072
        %v3074 = vrot.slane %v3008, 2
        %v3075 = vrot.slane %v3009, 2
        %v3076 = vrot.slane %v3010, 2
        %v3077 = vsel %vm2679, %v3074, %v3076
        %v3078 = vrot.slane %v3011, 2
        %v3079 = vsel %vm2679, %v3075, %v3078
        %v3080 = vrot.slane %v3012, 2
        %v3081 = vrot.slane %v3013, 2
        %v3082 = vrot.slane %v3014, 2
        %v3083 = vsel %vm2679, %v3080, %v3082
        %v3084 = vrot.slane %v3015, 2
        %v3085 = vsel %vm2679, %v3081, %v3084
        %v3086 = vrot.slane %v3016, 2
        %v3087 = vrot.slane %v3017, 2
        %v3088 = vrot.slane %v3018, 2
        %v3089 = vsel %vm2679, %v3086, %v3088
        %v3090 = vrot.slane %v3019, 2
        %v3091 = vsel %vm2679, %v3087, %v3090
        %v3092 = vrot.slane %v3020, 2
        %v3093 = vrot.slane %v3021, 2
        %v3094 = vrot.slane %v3022, 2
        %v3095 = vsel %vm2679, %v3092, %v3094
        %v3096 = vrot.slane %v3023, 2
        %v3097 = vsel %vm2679, %v3093, %v3096
        %v3098 = vrot.slane %v3024, 2
        %v3099 = vrot.slane %v3025, 2
        %v3100 = vrot.slane %v3026, 2
        %v3101 = vsel %vm2679, %v3098, %v3100
        %v3102 = vrot.slane %v3027, 2
        %v3103 = vsel %vm2679, %v3099, %v3102
        %v3104 = vrot.slane %v3028, 2
        %v3105 = vrot.slane %v3029, 2
        %v3106 = vrot.slane %v3030, 2
        %v3107 = vsel %vm2679, %v3104, %v3106
        %v3108 = vrot.slane %v3031, 2
        %v3109 = vsel %vm2679, %v3105, %v3108
        %v3110 = vrot.slane %v3032, 2
        %v3111 = vrot.slane %v3033, 2
        %v3112 = vrot.slane %v3034, 2
        %v3113 = vsel %vm2679, %v3110, %v3112
        %v3114 = vrot.slane %v3035, 2
        %v3115 = vsel %vm2679, %v3111, %v3114
        %v3148 = vadd.f32 %v2954, %v3068
        %v3149 = vadd.f32 %v2955, %v3069
        %v3150 = vadd.f32 %v2956, %v3071
        %v3151 = vadd.f32 %v2957, %v3073
        %v3152 = vadd.f32 %v2958, %v3074
        %v3153 = vadd.f32 %v2959, %v3075
        %v3154 = vadd.f32 %v2960, %v3077
        %v3155 = vadd.f32 %v2961, %v3079
        %v3156 = vadd.f32 %v2962, %v3080
        %v3157 = vadd.f32 %v2963, %v3081
        %v3158 = vadd.f32 %v2964, %v3083
        %v3159 = vadd.f32 %v2965, %v3085
        %v3160 = vadd.f32 %v2966, %v3086
        %v3161 = vadd.f32 %v2967, %v3087
        %v3162 = vadd.f32 %v2968, %v3089
        %v3163 = vadd.f32 %v2969, %v3091
        %v3164 = vadd.f32 %v2970, %v3092
        %v3165 = vadd.f32 %v2971, %v3093
        %v3166 = vadd.f32 %v2972, %v3095
        %v3167 = vadd.f32 %v2973, %v3097
        %v3168 = vadd.f32 %v2974, %v3098
        %v3169 = vadd.f32 %v2975, %v3099
        %v3170 = vadd.f32 %v2976, %v3101
        %v3171 = vadd.f32 %v2977, %v3103
        %v3172 = vadd.f32 %v2978, %v3104
        %v3173 = vadd.f32 %v2979, %v3105
        %v3174 = vadd.f32 %v2980, %v3107
        %v3175 = vadd.f32 %v2981, %v3109
        %v3176 = vadd.f32 %v2982, %v3110
        %v3177 = vadd.f32 %v2983, %v3111
        %v3178 = vadd.f32 %v2984, %v3113
        %v3179 = vadd.f32 %v2985, %v3115
        %v3180 = vadd.f32 %v3148, 3.0
        %v3181 = vadd.f32 %v3149, 3.0
        %v3182 = vadd.f32 %v3150, 3.0
        %v3183 = vadd.f32 %v3151, 3.0
        %v3184 = vadd.f32 %v3152, 3.0
        %v3185 = vadd.f32 %v3153, 3.0
        %v3186 = vadd.f32 %v3154, 3.0
        %v3187 = vadd.f32 %v3155, 3.0
        %v3188 = vadd.f32 %v3156, 3.0
        %v3189 = vadd.f32 %v3157, 3.0
        %v3190 = vadd.f32 %v3158, 3.0
        %v3191 = vadd.f32 %v3159, 3.0
        %v3192 = vadd.f32 %v3160, 3.0
        %v3193 = vadd.f32 %v3161, 3.0
        %v3194 = vadd.f32 %v3162, 3.0
        %v3195 = vadd.f32 %v3163, 3.0
        %v3196 = vadd.f32 %v3164, 3.0
        %v3197 = vadd.f32 %v3165, 3.0
        %v3198 = vadd.f32 %v3166, 3.0
        %v3199 = vadd.f32 %v3167, 3.0
        %v3200 = vadd.f32 %v3168, 3.0
        %v3201 = vadd.f32 %v3169, 3.0
        %v3202 = vadd.f32 %v3170, 3.0
        %v3203 = vadd.f32 %v3171, 3.0
        %v3204 = vadd.f32 %v3172, 3.0
        %v3205 = vadd.f32 %v3173, 3.0
        %v3206 = vadd.f32 %v3174, 3.0
        %v3207 = vadd.f32 %v3175, 3.0
        %v3208 = vadd.f32 %v3176, 3.0
        %v3209 = vadd.f32 %v3177, 3.0
        %v3210 = vadd.f32 %v3178, 3.0
        %v3211 = vadd.f32 %v3179, 3.0
        %v3212 = vmax.f32 %v3180, 0.0
        %v3213 = vmax.f32 %v3181, 0.0
        %v3214 = vmax.f32 %v3182, 0.0
        %v3215 = vmax.f32 %v3183, 0.0
        %v3216 = vmax.f32 %v3184, 0.0
        %v3217 = vmax.f32 %v3185, 0.0
        %v3218 = vmax.f32 %v3186, 0.0
        %v3219 = vmax.f32 %v3187, 0.0
        %v3220 = vmax.f32 %v3188, 0.0
        %v3221 = vmax.f32 %v3189, 0.0
        %v3222 = vmax.f32 %v3190, 0.0
        %v3223 = vmax.f32 %v3191, 0.0
        %v3224 = vmax.f32 %v3192, 0.0
        %v3225 = vmax.f32 %v3193, 0.0
        %v3226 = vmax.f32 %v3194, 0.0
        %v3227 = vmax.f32 %v3195, 0.0
        %v3228 = vmax.f32 %v3196, 0.0
        %v3229 = vmax.f32 %v3197, 0.0
        %v3230 = vmax.f32 %v3198, 0.0
        %v3231 = vmax.f32 %v3199, 0.0
        %v3232 = vmax.f32 %v3200, 0.0
        %v3233 = vmax.f32 %v3201, 0.0
        %v3234 = vmax.f32 %v3202, 0.0
        %v3235 = vmax.f32 %v3203, 0.0
        %v3236 = vmax.f32 %v3204, 0.0
        %v3237 = vmax.f32 %v3205, 0.0
        %v3238 = vmax.f32 %v3206, 0.0
        %v3239 = vmax.f32 %v3207, 0.0
        %v3240 = vmax.f32 %v3208, 0.0
        %v3241 = vmax.f32 %v3209, 0.0
        %v3242 = vmax.f32 %v3210, 0.0
        %v3243 = vmax.f32 %v3211, 0.0
        %v3244 = vmin.f32 %v3212, 6.0
        %v3245 = vmin.f32 %v3213, 6.0
        %v3246 = vmin.f32 %v3214, 6.0
        %v3247 = vmin.f32 %v3215, 6.0
        %v3248 = vmin.f32 %v3216, 6.0
        %v3249 = vmin.f32 %v3217, 6.0
        %v3250 = vmin.f32 %v3218, 6.0
        %v3251 = vmin.f32 %v3219, 6.0
        %v3252 = vmin.f32 %v3220, 6.0
        %v3253 = vmin.f32 %v3221, 6.0
        %v3254 = vmin.f32 %v3222, 6.0
        %v3255 = vmin.f32 %v3223, 6.0
        %v3256 = vmin.f32 %v3224, 6.0
        %v3257 = vmin.f32 %v3225, 6.0
        %v3258 = vmin.f32 %v3226, 6.0
        %v3259 = vmin.f32 %v3227, 6.0
        %v3260 = vmin.f32 %v3228, 6.0
        %v3261 = vmin.f32 %v3229, 6.0
        %v3262 = vmin.f32 %v3230, 6.0
        %v3263 = vmin.f32 %v3231, 6.0
        %v3264 = vmin.f32 %v3232, 6.0
        %v3265 = vmin.f32 %v3233, 6.0
        %v3266 = vmin.f32 %v3234, 6.0
        %v3267 = vmin.f32 %v3235, 6.0
        %v3268 = vmin.f32 %v3236, 6.0
        %v3269 = vmin.f32 %v3237, 6.0
        %v3270 = vmin.f32 %v3238, 6.0
        %v3271 = vmin.f32 %v3239, 6.0
        %v3272 = vmin.f32 %v3240, 6.0
        %v3273 = vmin.f32 %v3241, 6.0
        %v3274 = vmin.f32 %v3242, 6.0
        %v3275 = vmin.f32 %v3243, 6.0
        %v3276 = vmul.f32 %v3244, 0.16666667
        %v3277 = vmul.f32 %v3245, 0.16666667
        %v3278 = vmul.f32 %v3246, 0.16666667
        %v3279 = vmul.f32 %v3247, 0.16666667
        %v3280 = vmul.f32 %v3248, 0.16666667
        %v3281 = vmul.f32 %v3249, 0.16666667
        %v3282 = vmul.f32 %v3250, 0.16666667
        %v3283 = vmul.f32 %v3251, 0.16666667
        %v3284 = vmul.f32 %v3252, 0.16666667
        %v3285 = vmul.f32 %v3253, 0.16666667
        %v3286 = vmul.f32 %v3254, 0.16666667
        %v3287 = vmul.f32 %v3255, 0.16666667
        %v3288 = vmul.f32 %v3256, 0.16666667
        %v3289 = vmul.f32 %v3257, 0.16666667
        %v3290 = vmul.f32 %v3258, 0.16666667
        %v3291 = vmul.f32 %v3259, 0.16666667
        %v3292 = vmul.f32 %v3260, 0.16666667
        %v3293 = vmul.f32 %v3261, 0.16666667
        %v3294 = vmul.f32 %v3262, 0.16666667
        %v3295 = vmul.f32 %v3263, 0.16666667
        %v3296 = vmul.f32 %v3264, 0.16666667
        %v3297 = vmul.f32 %v3265, 0.16666667
        %v3298 = vmul.f32 %v3266, 0.16666667
        %v3299 = vmul.f32 %v3267, 0.16666667
        %v3300 = vmul.f32 %v3268, 0.16666667
        %v3301 = vmul.f32 %v3269, 0.16666667
        %v3302 = vmul.f32 %v3270, 0.16666667
        %v3303 = vmul.f32 %v3271, 0.16666667
        %v3304 = vmul.f32 %v3272, 0.16666667
        %v3305 = vmul.f32 %v3273, 0.16666667
        %v3306 = vmul.f32 %v3274, 0.16666667
        %v3307 = vmul.f32 %v3275, 0.16666667
        %v3308 = vmul.f32 %v3148, %v3276
        %v3309 = vmul.f32 %v3149, %v3277
        %v3310 = vmul.f32 %v3150, %v3278
        %v3311 = vmul.f32 %v3151, %v3279
        %v3312 = vmul.f32 %v3152, %v3280
        %v3313 = vmul.f32 %v3153, %v3281
        %v3314 = vmul.f32 %v3154, %v3282
        %v3315 = vmul.f32 %v3155, %v3283
        %v3316 = vmul.f32 %v3156, %v3284
        %v3317 = vmul.f32 %v3157, %v3285
        %v3318 = vmul.f32 %v3158, %v3286
        %v3319 = vmul.f32 %v3159, %v3287
        %v3320 = vmul.f32 %v3160, %v3288
        %v3321 = vmul.f32 %v3161, %v3289
        %v3322 = vmul.f32 %v3162, %v3290
        %v3323 = vmul.f32 %v3163, %v3291
        %v3324 = vmul.f32 %v3164, %v3292
        %v3325 = vmul.f32 %v3165, %v3293
        %v3326 = vmul.f32 %v3166, %v3294
        %v3327 = vmul.f32 %v3167, %v3295
        %v3328 = vmul.f32 %v3168, %v3296
        %v3329 = vmul.f32 %v3169, %v3297
        %v3330 = vmul.f32 %v3170, %v3298
        %v3331 = vmul.f32 %v3171, %v3299
        %v3332 = vmul.f32 %v3172, %v3300
        %v3333 = vmul.f32 %v3173, %v3301
        %v3334 = vmul.f32 %v3174, %v3302
        %v3335 = vmul.f32 %v3175, %v3303
        %v3336 = vmul.f32 %v3176, %v3304
        %v3337 = vmul.f32 %v3177, %v3305
        %v3338 = vmul.f32 %v3178, %v3306
        %v3339 = vmul.f32 %v3179, %v3307
        %vm3372 = vcmask 1040384
        %v3373 = vrot.slane %v3308, 7
        %v3374 = vrot.slane %v3310, 7
        %v3375 = vsel %vm3372, %v3373, %v3374
        %v3376 = vrot.slane %v3309, 7
        %v3377 = vrot.slane %v3311, 7
        %v3378 = vsel %vm3372, %v3376, %v3377
        %v3379 = vrot.slane %v3312, 7
        %v3380 = vrot.slane %v3314, 7
        %v3381 = vsel %vm3372, %v3379, %v3380
        %v3382 = vrot.slane %v3313, 7
        %v3383 = vrot.slane %v3315, 7
        %v3384 = vsel %vm3372, %v3382, %v3383
        %v3385 = vrot.slane %v3316, 7
        %v3386 = vrot.slane %v3318, 7
        %v3387 = vsel %vm3372, %v3385, %v3386
        %v3388 = vrot.slane %v3317, 7
        %v3389 = vrot.slane %v3319, 7
        %v3390 = vsel %vm3372, %v3388, %v3389
        %v3391 = vrot.slane %v3320, 7
        %v3392 = vrot.slane %v3322, 7
        %v3393 = vsel %vm3372, %v3391, %v3392
        %v3394 = vrot.slane %v3321, 7
        %v3395 = vrot.slane %v3323, 7
        %v3396 = vsel %vm3372, %v3394, %v3395
        %v3397 = vrot.slane %v3324, 7
        %v3398 = vrot.slane %v3326, 7
        %v3399 = vsel %vm3372, %v3397, %v3398
        %v3400 = vrot.slane %v3325, 7
        %v3401 = vrot.slane %v3327, 7
        %v3402 = vsel %vm3372, %v3400, %v3401
        %v3403 = vrot.slane %v3328, 7
        %v3404 = vrot.slane %v3330, 7
        %v3405 = vsel %vm3372, %v3403, %v3404
        %v3406 = vrot.slane %v3329, 7
        %v3407 = vrot.slane %v3331, 7
        %v3408 = vsel %vm3372, %v3406, %v3407
        %v3409 = vrot.slane %v3332, 7
        %v3410 = vrot.slane %v3334, 7
        %v3411 = vsel %vm3372, %v3409, %v3410
        %v3412 = vrot.slane %v3333, 7
        %v3413 = vrot.slane %v3335, 7
        %v3414 = vsel %vm3372, %v3412, %v3413
        %v3415 = vrot.slane %v3336, 7
        %v3416 = vrot.slane %v3338, 7
        %v3417 = vsel %vm3372, %v3415, %v3416
        %v3418 = vrot.slane %v3337, 7
        %v3419 = vrot.slane %v3339, 7
        %v3420 = vsel %vm3372, %v3418, %v3419
        %s3437 = smul.u32 0, 2
        %s3438 = smul.addr %s3437, 8
        %s3439 = scalar_lea.vmem [#allocation5], %s3438
        %3440 = vst [vmem:[%s3439] sm:$0xff] %v3375
        %3441 = vst [vmem:[%s3439 + $0x8] sm:$0xff] %v3378
        %3442 = vst [vmem:[%s3439 + $0x10] sm:$0xff] %v3381
        %3443 = vst [vmem:[%s3439 + $0x18] sm:$0xff] %v3384
        %3444 = vst [vmem:[%s3439 + $0x20] sm:$0xff] %v3387
        %3445 = vst [vmem:[%s3439 + $0x28] sm:$0xff] %v3390
        %3446 = vst [vmem:[%s3439 + $0x30] sm:$0xff] %v3393
        %3447 = vst [vmem:[%s3439 + $0x38] sm:$0xff] %v3396
        %3448 = vst [vmem:[%s3439 + $0x40] sm:$0xff] %v3399
        %3449 = vst [vmem:[%s3439 + $0x48] sm:$0xff] %v3402
        %3450 = vst [vmem:[%s3439 + $0x50] sm:$0xff] %v3405
        %3451 = vst [vmem:[%s3439 + $0x58] sm:$0xff] %v3408
        %3452 = vst [vmem:[%s3439 + $0x60] sm:$0xff] %v3411
        %3453 = vst [vmem:[%s3439 + $0x68] sm:$0xff] %v3414
        %3454 = vst [vmem:[%s3439 + $0x70] sm:$0xff] %v3417
        %3455 = vst [vmem:[%s3439 + $0x78] sm:$0xff] %v3420
        %v3456 = vadd.f32 %v3375, %v3381
        %v3457 = vadd.f32 %v3456, %v3387
        %v3458 = vadd.f32 %v3457, %v3393
        %v3459 = vadd.f32 %v3458, %v3399
        %v3460 = vadd.f32 %v3459, %v3405
        %v3461 = vadd.f32 %v3460, %v3411
        %v3462 = vadd.f32 %v3461, %v3417
        %v3463 = vrot.slane %v3462, 4
        %v3464 = vadd.f32 %v3462, %v3463
        %v3465 = vrot.slane %v3464, 2
        %v3466 = vadd.f32 %v3464, %v3465
        %v3467 = vrot.slane %v3466, 1
        %v3468 = vadd.f32 %v3466, %v3467
        %v3469 = vadd.f32 %v3378, %v3384
        %v3470 = vadd.f32 %v3469, %v3390
        %v3471 = vadd.f32 %v3470, %v3396
        %v3472 = vadd.f32 %v3471, %v3402
        %v3473 = vadd.f32 %v3472, %v3408
        %v3474 = vadd.f32 %v3473, %v3414
        %v3475 = vadd.f32 %v3474, %v3420
        %v3476 = vrot.slane %v3475, 4
        %v3477 = vadd.f32 %v3475, %v3476
        %v3478 = vrot.slane %v3477, 2
        %v3479 = vadd.f32 %v3477, %v3478
        %v3480 = vrot.slane %v3479, 1
        %v3481 = vadd.f32 %v3479, %v3480
        %v3482 = vadd.f32 %v3468, 0.0
        %v3483 = vadd.f32 %v3481, 0.0
        %s3484 = smul.u32 8, 6
        %s3485 = smul.addr %s3484, 8
        %s3486 = scalar_lea.vmem [#allocation3], %s3485
        %v3487 = vld [vmem:[%s3486] sm:$0x80]
        %v3488 = vld [vmem:[%s3486 + $0x8] sm:$0x80]
        %v3489 = vld [vmem:[%s3486 + $0x10] sm:$0x7f]
        %v3490 = vld [vmem:[%s3486 + $0x18] sm:$0x7f]
        %v3491 = vld [vmem:[%s3486 + $0x30] sm:$0x80]
        %v3492 = vld [vmem:[%s3486 + $0x38] sm:$0x80]
        %v3493 = vld [vmem:[%s3486 + $0x40] sm:$0x7f]
        %v3494 = vld [vmem:[%s3486 + $0x48] sm:$0x7f]
        %v3495 = vld [vmem:[%s3486 + $0x60] sm:$0x80]
        %v3496 = vld [vmem:[%s3486 + $0x68] sm:$0x80]
        %v3497 = vld [vmem:[%s3486 + $0x70] sm:$0x7f]
        %v3498 = vld [vmem:[%s3486 + $0x78] sm:$0x7f]
        %v3499 = vld [vmem:[%s3486 + $0x90] sm:$0x80]
        %v3500 = vld [vmem:[%s3486 + $0x98] sm:$0x80]
        %v3501 = vld [vmem:[%s3486 + $0xa0] sm:$0x7f]
        %v3502 = vld [vmem:[%s3486 + $0xa8] sm:$0x7f]
        %v3503 = vld [vmem:[%s3486 + $0xc0] sm:$0x80]
        %v3504 = vld [vmem:[%s3486 + $0xc8] sm:$0x80]
        %v3505 = vld [vmem:[%s3486 + $0xd0] sm:$0x7f]
        %v3506 = vld [vmem:[%s3486 + $0xd8] sm:$0x7f]
        %v3507 = vld [vmem:[%s3486 + $0xf0] sm:$0x80]
        %v3508 = vld [vmem:[%s3486 + $0xf8] sm:$0x80]
        %v3509 = vld [vmem:[%s3486 + $0x100] sm:$0x7f]
        %v3510 = vld [vmem:[%s3486 + $0x108] sm:$0x7f]
        %v3511 = vld [vmem:[%s3486 + $0x120] sm:$0x80]
        %v3512 = vld [vmem:[%s3486 + $0x128] sm:$0x80]
        %v3513 = vld [vmem:[%s3486 + $0x130] sm:$0x7f]
        %v3514 = vld [vmem:[%s3486 + $0x138] sm:$0x7f]
        %v3515 = vld [vmem:[%s3486 + $0x150] sm:$0x80]
        %v3516 = vld [vmem:[%s3486 + $0x158] sm:$0x80]
        %v3517 = vld [vmem:[%s3486 + $0x160] sm:$0x7f]
        %v3518 = vld [vmem:[%s3486 + $0x168] sm:$0x7f]
        %v3519 = vld [vmem:[%s3486 + $0x180] sm:$0x80]
        %v3520 = vld [vmem:[%s3486 + $0x188] sm:$0x80]
        %v3521 = vld [vmem:[%s3486 + $0x190] sm:$0x7f]
        %v3522 = vld [vmem:[%s3486 + $0x198] sm:$0x7f]
        %v3523 = vld [vmem:[%s3486 + $0x1b0] sm:$0x80]
        %v3524 = vld [vmem:[%s3486 + $0x1b8] sm:$0x80]
        %v3525 = vld [vmem:[%s3486 + $0x1c0] sm:$0x7f]
        %v3526 = vld [vmem:[%s3486 + $0x1c8] sm:$0x7f]
        %v3527 = vmul.f32 %v3487, %v1960
        %v3528 = vmul.f32 %v3488, %v1964
        %v3529 = vmul.f32 %v3489, %v1960
        %v3530 = vmul.f32 %v3490, %v1964
        %v3531 = vmul.f32 %v3491, %v1960
        %v3532 = vmul.f32 %v3492, %v1964
        %v3533 = vmul.f32 %v3493, %v1960
        %v3534 = vmul.f32 %v3494, %v1964
        %v3535 = vmul.f32 %v3495, %v1960
        %v3536 = vmul.f32 %v3496, %v1964
        %v3537 = vmul.f32 %v3497, %v1960
        %v3538 = vmul.f32 %v3498, %v1964
        %v3539 = vmul.f32 %v3499, %v1960
        %v3540 = vmul.f32 %v3500, %v1964
        %v3541 = vmul.f32 %v3501, %v1960
        %v3542 = vmul.f32 %v3502, %v1964
        %v3543 = vmul.f32 %v3503, %v1960
        %v3544 = vmul.f32 %v3504, %v1964
        %v3545 = vmul.f32 %v3505, %v1960
        %v3546 = vmul.f32 %v3506, %v1964
        %v3547 = vmul.f32 %v3507, %v1960
        %v3548 = vmul.f32 %v3508, %v1964
        %v3549 = vmul.f32 %v3509, %v1960
        %v3550 = vmul.f32 %v3510, %v1964
        %v3551 = vmul.f32 %v3511, %v1960
        %v3552 = vmul.f32 %v3512, %v1964
        %v3553 = vmul.f32 %v3513, %v1960
        %v3554 = vmul.f32 %v3514, %v1964
        %v3555 = vmul.f32 %v3515, %v1960
        %v3556 = vmul.f32 %v3516, %v1964
        %v3557 = vmul.f32 %v3517, %v1960
        %v3558 = vmul.f32 %v3518, %v1964
        %v3559 = vadd.f32 %v1896, %v3527
        %v3560 = vadd.f32 %v1900, %v3528
        %v3561 = vadd.f32 %v1896, %v3529
        %v3562 = vadd.f32 %v1900, %v3530
        %v3563 = vadd.f32 %v1896, %v3531
        %v3564 = vadd.f32 %v1900, %v3532
        %v3565 = vadd.f32 %v1896, %v3533
        %v3566 = vadd.f32 %v1900, %v3534
        %v3567 = vadd.f32 %v1896, %v3535
        %v3568 = vadd.f32 %v1900, %v3536
        %v3569 = vadd.f32 %v1896, %v3537
        %v3570 = vadd.f32 %v1900, %v3538
        %v3571 = vadd.f32 %v1896, %v3539
        %v3572 = vadd.f32 %v1900, %v3540
        %v3573 = vadd.f32 %v1896, %v3541
        %v3574 = vadd.f32 %v1900, %v3542
        %v3575 = vadd.f32 %v1896, %v3543
        %v3576 = vadd.f32 %v1900, %v3544
        %v3577 = vadd.f32 %v1896, %v3545
        %v3578 = vadd.f32 %v1900, %v3546
        %v3579 = vadd.f32 %v1896, %v3547
        %v3580 = vadd.f32 %v1900, %v3548
        %v3581 = vadd.f32 %v1896, %v3549
        %v3582 = vadd.f32 %v1900, %v3550
        %v3583 = vadd.f32 %v1896, %v3551
        %v3584 = vadd.f32 %v1900, %v3552
        %v3585 = vadd.f32 %v1896, %v3553
        %v3586 = vadd.f32 %v1900, %v3554
        %v3587 = vadd.f32 %v1896, %v3555
        %v3588 = vadd.f32 %v1900, %v3556
        %v3589 = vadd.f32 %v1896, %v3557
        %v3590 = vadd.f32 %v1900, %v3558
        %v3591 = vmul.f32 %v3491, %v2043
        %v3592 = vmul.f32 %v3492, %v2047
        %v3593 = vmul.f32 %v3493, %v2043
        %v3594 = vmul.f32 %v3494, %v2047
        %v3595 = vmul.f32 %v3495, %v2043
        %v3596 = vmul.f32 %v3496, %v2047
        %v3597 = vmul.f32 %v3497, %v2043
        %v3598 = vmul.f32 %v3498, %v2047
        %v3599 = vmul.f32 %v3499, %v2043
        %v3600 = vmul.f32 %v3500, %v2047
        %v3601 = vmul.f32 %v3501, %v2043
        %v3602 = vmul.f32 %v3502, %v2047
        %v3603 = vmul.f32 %v3503, %v2043
        %v3604 = vmul.f32 %v3504, %v2047
        %v3605 = vmul.f32 %v3505, %v2043
        %v3606 = vmul.f32 %v3506, %v2047
        %v3607 = vmul.f32 %v3507, %v2043
        %v3608 = vmul.f32 %v3508, %v2047
        %v3609 = vmul.f32 %v3509, %v2043
        %v3610 = vmul.f32 %v3510, %v2047
        %v3611 = vmul.f32 %v3511, %v2043
        %v3612 = vmul.f32 %v3512, %v2047
        %v3613 = vmul.f32 %v3513, %v2043
        %v3614 = vmul.f32 %v3514, %v2047
        %v3615 = vmul.f32 %v3515, %v2043
        %v3616 = vmul.f32 %v3516, %v2047
        %v3617 = vmul.f32 %v3517, %v2043
        %v3618 = vmul.f32 %v3518, %v2047
        %v3619 = vmul.f32 %v3519, %v2043
        %v3620 = vmul.f32 %v3520, %v2047
        %v3621 = vmul.f32 %v3521, %v2043
        %v3622 = vmul.f32 %v3522, %v2047
        %v3623 = vadd.f32 %v3559, %v3591
        %v3624 = vadd.f32 %v3560, %v3592
        %v3625 = vadd.f32 %v3561, %v3593
        %v3626 = vadd.f32 %v3562, %v3594
        %v3627 = vadd.f32 %v3563, %v3595
        %v3628 = vadd.f32 %v3564, %v3596
        %v3629 = vadd.f32 %v3565, %v3597
        %v3630 = vadd.f32 %v3566, %v3598
        %v3631 = vadd.f32 %v3567, %v3599
        %v3632 = vadd.f32 %v3568, %v3600
        %v3633 = vadd.f32 %v3569, %v3601
        %v3634 = vadd.f32 %v3570, %v3602
        %v3635 = vadd.f32 %v3571, %v3603
        %v3636 = vadd.f32 %v3572, %v3604
        %v3637 = vadd.f32 %v3573, %v3605
        %v3638 = vadd.f32 %v3574, %v3606
        %v3639 = vadd.f32 %v3575, %v3607
        %v3640 = vadd.f32 %v3576, %v3608
        %v3641 = vadd.f32 %v3577, %v3609
        %v3642 = vadd.f32 %v3578, %v3610
        %v3643 = vadd.f32 %v3579, %v3611
        %v3644 = vadd.f32 %v3580, %v3612
        %v3645 = vadd.f32 %v3581, %v3613
        %v3646 = vadd.f32 %v3582, %v3614
        %v3647 = vadd.f32 %v3583, %v3615
        %v3648 = vadd.f32 %v3584, %v3616
        %v3649 = vadd.f32 %v3585, %v3617
        %v3650 = vadd.f32 %v3586, %v3618
        %v3651 = vadd.f32 %v3587, %v3619
        %v3652 = vadd.f32 %v3588, %v3620
        %v3653 = vadd.f32 %v3589, %v3621
        %v3654 = vadd.f32 %v3590, %v3622
        %v3655 = vmul.f32 %v3495, %v2126
        %v3656 = vmul.f32 %v3496, %v2130
        %v3657 = vmul.f32 %v3497, %v2126
        %v3658 = vmul.f32 %v3498, %v2130
        %v3659 = vmul.f32 %v3499, %v2126
        %v3660 = vmul.f32 %v3500, %v2130
        %v3661 = vmul.f32 %v3501, %v2126
        %v3662 = vmul.f32 %v3502, %v2130
        %v3663 = vmul.f32 %v3503, %v2126
        %v3664 = vmul.f32 %v3504, %v2130
        %v3665 = vmul.f32 %v3505, %v2126
        %v3666 = vmul.f32 %v3506, %v2130
        %v3667 = vmul.f32 %v3507, %v2126
        %v3668 = vmul.f32 %v3508, %v2130
        %v3669 = vmul.f32 %v3509, %v2126
        %v3670 = vmul.f32 %v3510, %v2130
        %v3671 = vmul.f32 %v3511, %v2126
        %v3672 = vmul.f32 %v3512, %v2130
        %v3673 = vmul.f32 %v3513, %v2126
        %v3674 = vmul.f32 %v3514, %v2130
        %v3675 = vmul.f32 %v3515, %v2126
        %v3676 = vmul.f32 %v3516, %v2130
        %v3677 = vmul.f32 %v3517, %v2126
        %v3678 = vmul.f32 %v3518, %v2130
        %v3679 = vmul.f32 %v3519, %v2126
        %v3680 = vmul.f32 %v3520, %v2130
        %v3681 = vmul.f32 %v3521, %v2126
        %v3682 = vmul.f32 %v3522, %v2130
        %v3683 = vmul.f32 %v3523, %v2126
        %v3684 = vmul.f32 %v3524, %v2130
        %v3685 = vmul.f32 %v3525, %v2126
        %v3686 = vmul.f32 %v3526, %v2130
        %v3687 = vadd.f32 %v3623, %v3655
        %v3688 = vadd.f32 %v3624, %v3656
        %v3689 = vadd.f32 %v3625, %v3657
        %v3690 = vadd.f32 %v3626, %v3658
        %v3691 = vadd.f32 %v3627, %v3659
        %v3692 = vadd.f32 %v3628, %v3660
        %v3693 = vadd.f32 %v3629, %v3661
        %v3694 = vadd.f32 %v3630, %v3662
        %v3695 = vadd.f32 %v3631, %v3663
        %v3696 = vadd.f32 %v3632, %v3664
        %v3697 = vadd.f32 %v3633, %v3665
        %v3698 = vadd.f32 %v3634, %v3666
        %v3699 = vadd.f32 %v3635, %v3667
        %v3700 = vadd.f32 %v3636, %v3668
        %v3701 = vadd.f32 %v3637, %v3669
        %v3702 = vadd.f32 %v3638, %v3670
        %v3703 = vadd.f32 %v3639, %v3671
        %v3704 = vadd.f32 %v3640, %v3672
        %v3705 = vadd.f32 %v3641, %v3673
        %v3706 = vadd.f32 %v3642, %v3674
        %v3707 = vadd.f32 %v3643, %v3675
        %v3708 = vadd.f32 %v3644, %v3676
        %v3709 = vadd.f32 %v3645, %v3677
        %v3710 = vadd.f32 %v3646, %v3678
        %v3711 = vadd.f32 %v3647, %v3679
        %v3712 = vadd.f32 %v3648, %v3680
        %v3713 = vadd.f32 %v3649, %v3681
        %v3714 = vadd.f32 %v3650, %v3682
        %v3715 = vadd.f32 %v3651, %v3683
        %v3716 = vadd.f32 %v3652, %v3684
        %v3717 = vadd.f32 %v3653, %v3685
        %v3718 = vadd.f32 %v3654, %v3686
        %v3719 = vld [vmem:[%s3486 + $0x10] sm:$0xff]
        %v3720 = vld [vmem:[%s3486 + $0x18] sm:$0xff]
        %v3721 = vld [vmem:[%s3486 + $0x40] sm:$0xff]
        %v3722 = vld [vmem:[%s3486 + $0x48] sm:$0xff]
        %v3723 = vld [vmem:[%s3486 + $0x70] sm:$0xff]
        %v3724 = vld [vmem:[%s3486 + $0x78] sm:$0xff]
        %v3725 = vld [vmem:[%s3486 + $0xa0] sm:$0xff]
        %v3726 = vld [vmem:[%s3486 + $0xa8] sm:$0xff]
        %v3727 = vld [vmem:[%s3486 + $0xd0] sm:$0xff]
        %v3728 = vld [vmem:[%s3486 + $0xd8] sm:$0xff]
        %v3729 = vld [vmem:[%s3486 + $0x100] sm:$0xff]
        %v3730 = vld [vmem:[%s3486 + $0x108] sm:$0xff]
        %v3731 = vld [vmem:[%s3486 + $0x130] sm:$0xff]
        %v3732 = vld [vmem:[%s3486 + $0x138] sm:$0xff]
        %v3733 = vld [vmem:[%s3486 + $0x160] sm:$0xff]
        %v3734 = vld [vmem:[%s3486 + $0x168] sm:$0xff]
        %v3735 = vld [vmem:[%s3486 + $0x190] sm:$0xff]
        %v3736 = vld [vmem:[%s3486 + $0x198] sm:$0xff]
        %v3737 = vld [vmem:[%s3486 + $0x1c0] sm:$0xff]
        %v3738 = vld [vmem:[%s3486 + $0x1c8] sm:$0xff]
        %v3739 = vmul.f32 %v3719, %v2228
        %v3740 = vmul.f32 %v3720, %v2232
        %v3741 = vmul.f32 %v3721, %v2228
        %v3742 = vmul.f32 %v3722, %v2232
        %v3743 = vmul.f32 %v3723, %v2228
        %v3744 = vmul.f32 %v3724, %v2232
        %v3745 = vmul.f32 %v3725, %v2228
        %v3746 = vmul.f32 %v3726, %v2232
        %v3747 = vmul.f32 %v3727, %v2228
        %v3748 = vmul.f32 %v3728, %v2232
        %v3749 = vmul.f32 %v3729, %v2228
        %v3750 = vmul.f32 %v3730, %v2232
        %v3751 = vmul.f32 %v3731, %v2228
        %v3752 = vmul.f32 %v3732, %v2232
        %v3753 = vmul.f32 %v3733, %v2228
        %v3754 = vmul.f32 %v3734, %v2232
        %v3771 = vrot.slane %v3739, 1
        %v3772 = vrot.slane %v3740, 1
        %v3773 = vrot.slane %v3741, 1
        %v3774 = vrot.slane %v3742, 1
        %v3775 = vrot.slane %v3743, 1
        %v3776 = vrot.slane %v3744, 1
        %v3777 = vrot.slane %v3745, 1
        %v3778 = vrot.slane %v3746, 1
        %v3779 = vrot.slane %v3747, 1
        %v3780 = vrot.slane %v3748, 1
        %v3781 = vrot.slane %v3749, 1
        %v3782 = vrot.slane %v3750, 1
        %v3783 = vrot.slane %v3751, 1
        %v3784 = vrot.slane %v3752, 1
        %v3785 = vrot.slane %v3753, 1
        %v3786 = vrot.slane %v3754, 1
        %v3803 = vadd.f32 %v3687, %v3771
        %v3804 = vadd.f32 %v3688, %v3772
        %v3805 = vadd.f32 %v3689, %v3771
        %v3806 = vadd.f32 %v3690, %v3772
        %v3807 = vadd.f32 %v3691, %v3773
        %v3808 = vadd.f32 %v3692, %v3774
        %v3809 = vadd.f32 %v3693, %v3773
        %v3810 = vadd.f32 %v3694, %v3774
        %v3811 = vadd.f32 %v3695, %v3775
        %v3812 = vadd.f32 %v3696, %v3776
        %v3813 = vadd.f32 %v3697, %v3775
        %v3814 = vadd.f32 %v3698, %v3776
        %v3815 = vadd.f32 %v3699, %v3777
        %v3816 = vadd.f32 %v3700, %v3778
        %v3817 = vadd.f32 %v3701, %v3777
        %v3818 = vadd.f32 %v3702, %v3778
        %v3819 = vadd.f32 %v3703, %v3779
        %v3820 = vadd.f32 %v3704, %v3780
        %v3821 = vadd.f32 %v3705, %v3779
        %v3822 = vadd.f32 %v3706, %v3780
        %v3823 = vadd.f32 %v3707, %v3781
        %v3824 = vadd.f32 %v3708, %v3782
        %v3825 = vadd.f32 %v3709, %v3781
        %v3826 = vadd.f32 %v3710, %v3782
        %v3827 = vadd.f32 %v3711, %v3783
        %v3828 = vadd.f32 %v3712, %v3784
        %v3829 = vadd.f32 %v3713, %v3783
        %v3830 = vadd.f32 %v3714, %v3784
        %v3831 = vadd.f32 %v3715, %v3785
        %v3832 = vadd.f32 %v3716, %v3786
        %v3833 = vadd.f32 %v3717, %v3785
        %v3834 = vadd.f32 %v3718, %v3786
        %v3835 = vmul.f32 %v3721, %v2342
        %v3836 = vmul.f32 %v3722, %v2346
        %v3837 = vmul.f32 %v3723, %v2342
        %v3838 = vmul.f32 %v3724, %v2346
        %v3839 = vmul.f32 %v3725, %v2342
        %v3840 = vmul.f32 %v3726, %v2346
        %v3841 = vmul.f32 %v3727, %v2342
        %v3842 = vmul.f32 %v3728, %v2346
        %v3843 = vmul.f32 %v3729, %v2342
        %v3844 = vmul.f32 %v3730, %v2346
        %v3845 = vmul.f32 %v3731, %v2342
        %v3846 = vmul.f32 %v3732, %v2346
        %v3847 = vmul.f32 %v3733, %v2342
        %v3848 = vmul.f32 %v3734, %v2346
        %v3849 = vmul.f32 %v3735, %v2342
        %v3850 = vmul.f32 %v3736, %v2346
        %v3867 = vrot.slane %v3835, 1
        %v3868 = vrot.slane %v3836, 1
        %v3869 = vrot.slane %v3837, 1
        %v3870 = vrot.slane %v3838, 1
        %v3871 = vrot.slane %v3839, 1
        %v3872 = vrot.slane %v3840, 1
        %v3873 = vrot.slane %v3841, 1
        %v3874 = vrot.slane %v3842, 1
        %v3875 = vrot.slane %v3843, 1
        %v3876 = vrot.slane %v3844, 1
        %v3877 = vrot.slane %v3845, 1
        %v3878 = vrot.slane %v3846, 1
        %v3879 = vrot.slane %v3847, 1
        %v3880 = vrot.slane %v3848, 1
        %v3881 = vrot.slane %v3849, 1
        %v3882 = vrot.slane %v3850, 1
        %v3899 = vadd.f32 %v3803, %v3867
        %v3900 = vadd.f32 %v3804, %v3868
        %v3901 = vadd.f32 %v3805, %v3867
        %v3902 = vadd.f32 %v3806, %v3868
        %v3903 = vadd.f32 %v3807, %v3869
        %v3904 = vadd.f32 %v3808, %v3870
        %v3905 = vadd.f32 %v3809, %v3869
        %v3906 = vadd.f32 %v3810, %v3870
        %v3907 = vadd.f32 %v3811, %v3871
        %v3908 = vadd.f32 %v3812, %v3872
        %v3909 = vadd.f32 %v3813, %v3871
        %v3910 = vadd.f32 %v3814, %v3872
        %v3911 = vadd.f32 %v3815, %v3873
        %v3912 = vadd.f32 %v3816, %v3874
        %v3913 = vadd.f32 %v3817, %v3873
        %v3914 = vadd.f32 %v3818, %v3874
        %v3915 = vadd.f32 %v3819, %v3875
        %v3916 = vadd.f32 %v3820, %v3876
        %v3917 = vadd.f32 %v3821, %v3875
        %v3918 = vadd.f32 %v3822, %v3876
        %v3919 = vadd.f32 %v3823, %v3877
        %v3920 = vadd.f32 %v3824, %v3878
        %v3921 = vadd.f32 %v3825, %v3877
        %v3922 = vadd.f32 %v3826, %v3878
        %v3923 = vadd.f32 %v3827, %v3879
        %v3924 = vadd.f32 %v3828, %v3880
        %v3925 = vadd.f32 %v3829, %v3879
        %v3926 = vadd.f32 %v3830, %v3880
        %v3927 = vadd.f32 %v3831, %v3881
        %v3928 = vadd.f32 %v3832, %v3882
        %v3929 = vadd.f32 %v3833, %v3881
        %v3930 = vadd.f32 %v3834, %v3882
        %v3931 = vmul.f32 %v3723, %v2456
        %v3932 = vmul.f32 %v3724, %v2460
        %v3933 = vmul.f32 %v3725, %v2456
        %v3934 = vmul.f32 %v3726, %v2460
        %v3935 = vmul.f32 %v3727, %v2456
        %v3936 = vmul.f32 %v3728, %v2460
        %v3937 = vmul.f32 %v3729, %v2456
        %v3938 = vmul.f32 %v3730, %v2460
        %v3939 = vmul.f32 %v3731, %v2456
        %v3940 = vmul.f32 %v3732, %v2460
        %v3941 = vmul.f32 %v3733, %v2456
        %v3942 = vmul.f32 %v3734, %v2460
        %v3943 = vmul.f32 %v3735, %v2456
        %v3944 = vmul.f32 %v3736, %v2460
        %v3945 = vmul.f32 %v3737, %v2456
        %v3946 = vmul.f32 %v3738, %v2460
        %v3963 = vrot.slane %v3931, 1
        %v3964 = vrot.slane %v3932, 1
        %v3965 = vrot.slane %v3933, 1
        %v3966 = vrot.slane %v3934, 1
        %v3967 = vrot.slane %v3935, 1
        %v3968 = vrot.slane %v3936, 1
        %v3969 = vrot.slane %v3937, 1
        %v3970 = vrot.slane %v3938, 1
        %v3971 = vrot.slane %v3939, 1
        %v3972 = vrot.slane %v3940, 1
        %v3973 = vrot.slane %v3941, 1
        %v3974 = vrot.slane %v3942, 1
        %v3975 = vrot.slane %v3943, 1
        %v3976 = vrot.slane %v3944, 1
        %v3977 = vrot.slane %v3945, 1
        %v3978 = vrot.slane %v3946, 1
        %v3995 = vadd.f32 %v3899, %v3963
        %v3996 = vadd.f32 %v3900, %v3964
        %v3997 = vadd.f32 %v3901, %v3963
        %v3998 = vadd.f32 %v3902, %v3964
        %v3999 = vadd.f32 %v3903, %v3965
        %v4000 = vadd.f32 %v3904, %v3966
        %v4001 = vadd.f32 %v3905, %v3965
        %v4002 = vadd.f32 %v3906, %v3966
        %v4003 = vadd.f32 %v3907, %v3967
        %v4004 = vadd.f32 %v3908, %v3968
        %v4005 = vadd.f32 %v3909, %v3967
        %v4006 = vadd.f32 %v3910, %v3968
        %v4007 = vadd.f32 %v3911, %v3969
        %v4008 = vadd.f32 %v3912, %v3970
        %v4009 = vadd.f32 %v3913, %v3969
        %v4010 = vadd.f32 %v3914, %v3970
        %v4011 = vadd.f32 %v3915, %v3971
        %v4012 = vadd.f32 %v3916, %v3972
        %v4013 = vadd.f32 %v3917, %v3971
        %v4014 = vadd.f32 %v3918, %v3972
        %v4015 = vadd.f32 %v3919, %v3973
        %v4016 = vadd.f32 %v3920, %v3974
        %v4017 = vadd.f32 %v3921, %v3973
        %v4018 = vadd.f32 %v3922, %v3974
        %v4019 = vadd.f32 %v3923, %v3975
        %v4020 = vadd.f32 %v3924, %v3976
        %v4021 = vadd.f32 %v3925, %v3975
        %v4022 = vadd.f32 %v3926, %v3976
        %v4023 = vadd.f32 %v3927, %v3977
        %v4024 = vadd.f32 %v3928, %v3978
        %v4025 = vadd.f32 %v3929, %v3977
        %v4026 = vadd.f32 %v3930, %v3978
        %v4027 = vld [vmem:[%s3486 + $0x10] sm:$0xfe]
        %v4028 = vld [vmem:[%s3486 + $0x18] sm:$0xfe]
        %v4029 = vld [vmem:[%s3486 + $0x20] sm:$0x1]
        %v4030 = vld [vmem:[%s3486 + $0x28] sm:$0x1]
        %v4031 = vld [vmem:[%s3486 + $0x40] sm:$0xfe]
        %v4032 = vld [vmem:[%s3486 + $0x48] sm:$0xfe]
        %v4033 = vld [vmem:[%s3486 + $0x50] sm:$0x1]
        %v4034 = vld [vmem:[%s3486 + $0x58] sm:$0x1]
        %v4035 = vld [vmem:[%s3486 + $0x70] sm:$0xfe]
        %v4036 = vld [vmem:[%s3486 + $0x78] sm:$0xfe]
        %v4037 = vld [vmem:[%s3486 + $0x80] sm:$0x1]
        %v4038 = vld [vmem:[%s3486 + $0x88] sm:$0x1]
        %v4039 = vld [vmem:[%s3486 + $0xa0] sm:$0xfe]
        %v4040 = vld [vmem:[%s3486 + $0xa8] sm:$0xfe]
        %v4041 = vld [vmem:[%s3486 + $0xb0] sm:$0x1]
        %v4042 = vld [vmem:[%s3486 + $0xb8] sm:$0x1]
        %v4043 = vld [vmem:[%s3486 + $0xd0] sm:$0xfe]
        %v4044 = vld [vmem:[%s3486 + $0xd8] sm:$0xfe]
        %v4045 = vld [vmem:[%s3486 + $0xe0] sm:$0x1]
        %v4046 = vld [vmem:[%s3486 + $0xe8] sm:$0x1]
        %v4047 = vld [vmem:[%s3486 + $0x100] sm:$0xfe]
        %v4048 = vld [vmem:[%s3486 + $0x108] sm:$0xfe]
        %v4049 = vld [vmem:[%s3486 + $0x110] sm:$0x1]
        %v4050 = vld [vmem:[%s3486 + $0x118] sm:$0x1]
        %v4051 = vld [vmem:[%s3486 + $0x130] sm:$0xfe]
        %v4052 = vld [vmem:[%s3486 + $0x138] sm:$0xfe]
        %v4053 = vld [vmem:[%s3486 + $0x140] sm:$0x1]
        %v4054 = vld [vmem:[%s3486 + $0x148] sm:$0x1]
        %v4055 = vld [vmem:[%s3486 + $0x160] sm:$0xfe]
        %v4056 = vld [vmem:[%s3486 + $0x168] sm:$0xfe]
        %v4057 = vld [vmem:[%s3486 + $0x170] sm:$0x1]
        %v4058 = vld [vmem:[%s3486 + $0x178] sm:$0x1]
        %v4059 = vld [vmem:[%s3486 + $0x190] sm:$0xfe]
        %v4060 = vld [vmem:[%s3486 + $0x198] sm:$0xfe]
        %v4061 = vld [vmem:[%s3486 + $0x1a0] sm:$0x1]
        %v4062 = vld [vmem:[%s3486 + $0x1a8] sm:$0x1]
        %v4063 = vld [vmem:[%s3486 + $0x1c0] sm:$0xfe]
        %v4064 = vld [vmem:[%s3486 + $0x1c8] sm:$0xfe]
        %v4065 = vld [vmem:[%s3486 + $0x1d0] sm:$0x1]
        %v4066 = vld [vmem:[%s3486 + $0x1d8] sm:$0x1]
        %v4067 = vmul.f32 %v4027, %v2610
        %v4068 = vmul.f32 %v4028, %v2614
        %v4069 = vmul.f32 %v4029, %v2610
        %v4070 = vmul.f32 %v4030, %v2614
        %v4071 = vmul.f32 %v4031, %v2610
        %v4072 = vmul.f32 %v4032, %v2614
        %v4073 = vmul.f32 %v4033, %v2610
        %v4074 = vmul.f32 %v4034, %v2614
        %v4075 = vmul.f32 %v4035, %v2610
        %v4076 = vmul.f32 %v4036, %v2614
        %v4077 = vmul.f32 %v4037, %v2610
        %v4078 = vmul.f32 %v4038, %v2614
        %v4079 = vmul.f32 %v4039, %v2610
        %v4080 = vmul.f32 %v4040, %v2614
        %v4081 = vmul.f32 %v4041, %v2610
        %v4082 = vmul.f32 %v4042, %v2614
        %v4083 = vmul.f32 %v4043, %v2610
        %v4084 = vmul.f32 %v4044, %v2614
        %v4085 = vmul.f32 %v4045, %v2610
        %v4086 = vmul.f32 %v4046, %v2614
        %v4087 = vmul.f32 %v4047, %v2610
        %v4088 = vmul.f32 %v4048, %v2614
        %v4089 = vmul.f32 %v4049, %v2610
        %v4090 = vmul.f32 %v4050, %v2614
        %v4091 = vmul.f32 %v4051, %v2610
        %v4092 = vmul.f32 %v4052, %v2614
        %v4093 = vmul.f32 %v4053, %v2610
        %v4094 = vmul.f32 %v4054, %v2614
        %v4095 = vmul.f32 %v4055, %v2610
        %v4096 = vmul.f32 %v4056, %v2614
        %v4097 = vmul.f32 %v4057, %v2610
        %v4098 = vmul.f32 %v4058, %v2614
        %v4131 = vrot.slane %v4067, 2
        %v4132 = vrot.slane %v4068, 2
        %v4133 = vrot.slane %v4069, 2
        %v4134 = vsel %vm2679, %v4131, %v4133
        %v4135 = vrot.slane %v4070, 2
        %v4136 = vsel %vm2679, %v4132, %v4135
        %v4137 = vrot.slane %v4071, 2
        %v4138 = vrot.slane %v4072, 2
        %v4139 = vrot.slane %v4073, 2
        %v4140 = vsel %vm2679, %v4137, %v4139
        %v4141 = vrot.slane %v4074, 2
        %v4142 = vsel %vm2679, %v4138, %v4141
        %v4143 = vrot.slane %v4075, 2
        %v4144 = vrot.slane %v4076, 2
        %v4145 = vrot.slane %v4077, 2
        %v4146 = vsel %vm2679, %v4143, %v4145
        %v4147 = vrot.slane %v4078, 2
        %v4148 = vsel %vm2679, %v4144, %v4147
        %v4149 = vrot.slane %v4079, 2
        %v4150 = vrot.slane %v4080, 2
        %v4151 = vrot.slane %v4081, 2
        %v4152 = vsel %vm2679, %v4149, %v4151
        %v4153 = vrot.slane %v4082, 2
        %v4154 = vsel %vm2679, %v4150, %v4153
        %v4155 = vrot.slane %v4083, 2
        %v4156 = vrot.slane %v4084, 2
        %v4157 = vrot.slane %v4085, 2
        %v4158 = vsel %vm2679, %v4155, %v4157
        %v4159 = vrot.slane %v4086, 2
        %v4160 = vsel %vm2679, %v4156, %v4159
        %v4161 = vrot.slane %v4087, 2
        %v4162 = vrot.slane %v4088, 2
        %v4163 = vrot.slane %v4089, 2
        %v4164 = vsel %vm2679, %v4161, %v4163
        %v4165 = vrot.slane %v4090, 2
        %v4166 = vsel %vm2679, %v4162, %v4165
        %v4167 = vrot.slane %v4091, 2
        %v4168 = vrot.slane %v4092, 2
        %v4169 = vrot.slane %v4093, 2
        %v4170 = vsel %vm2679, %v4167, %v4169
        %v4171 = vrot.slane %v4094, 2
        %v4172 = vsel %vm2679, %v4168, %v4171
        %v4173 = vrot.slane %v4095, 2
        %v4174 = vrot.slane %v4096, 2
        %v4175 = vrot.slane %v4097, 2
        %v4176 = vsel %vm2679, %v4173, %v4175
        %v4177 = vrot.slane %v4098, 2
        %v4178 = vsel %vm2679, %v4174, %v4177
        %v4211 = vadd.f32 %v3995, %v4131
        %v4212 = vadd.f32 %v3996, %v4132
        %v4213 = vadd.f32 %v3997, %v4134
        %v4214 = vadd.f32 %v3998, %v4136
        %v4215 = vadd.f32 %v3999, %v4137
        %v4216 = vadd.f32 %v4000, %v4138
        %v4217 = vadd.f32 %v4001, %v4140
        %v4218 = vadd.f32 %v4002, %v4142
        %v4219 = vadd.f32 %v4003, %v4143
        %v4220 = vadd.f32 %v4004, %v4144
        %v4221 = vadd.f32 %v4005, %v4146
        %v4222 = vadd.f32 %v4006, %v4148
        %v4223 = vadd.f32 %v4007, %v4149
        %v4224 = vadd.f32 %v4008, %v4150
        %v4225 = vadd.f32 %v4009, %v4152
        %v4226 = vadd.f32 %v4010, %v4154
        %v4227 = vadd.f32 %v4011, %v4155
        %v4228 = vadd.f32 %v4012, %v4156
        %v4229 = vadd.f32 %v4013, %v4158
        %v4230 = vadd.f32 %v4014, %v4160
        %v4231 = vadd.f32 %v4015, %v4161
        %v4232 = vadd.f32 %v4016, %v4162
        %v4233 = vadd.f32 %v4017, %v4164
        %v4234 = vadd.f32 %v4018, %v4166
        %v4235 = vadd.f32 %v4019, %v4167
        %v4236 = vadd.f32 %v4020, %v4168
        %v4237 = vadd.f32 %v4021, %v4170
        %v4238 = vadd.f32 %v4022, %v4172
        %v4239 = vadd.f32 %v4023, %v4173
        %v4240 = vadd.f32 %v4024, %v4174
        %v4241 = vadd.f32 %v4025, %v4176
        %v4242 = vadd.f32 %v4026, %v4178
        %v4243 = vmul.f32 %v4031, %v2805
        %v4244 = vmul.f32 %v4032, %v2809
        %v4245 = vmul.f32 %v4033, %v2805
        %v4246 = vmul.f32 %v4034, %v2809
        %v4247 = vmul.f32 %v4035, %v2805
        %v4248 = vmul.f32 %v4036, %v2809
        %v4249 = vmul.f32 %v4037, %v2805
        %v4250 = vmul.f32 %v4038, %v2809
        %v4251 = vmul.f32 %v4039, %v2805
        %v4252 = vmul.f32 %v4040, %v2809
        %v4253 = vmul.f32 %v4041, %v2805
        %v4254 = vmul.f32 %v4042, %v2809
        %v4255 = vmul.f32 %v4043, %v2805
        %v4256 = vmul.f32 %v4044, %v2809
        %v4257 = vmul.f32 %v4045, %v2805
        %v4258 = vmul.f32 %v4046, %v2809
        %v4259 = vmul.f32 %v4047, %v2805
        %v4260 = vmul.f32 %v4048, %v2809
        %v4261 = vmul.f32 %v4049, %v2805
        %v4262 = vmul.f32 %v4050, %v2809
        %v4263 = vmul.f32 %v4051, %v2805
        %v4264 = vmul.f32 %v4052, %v2809
        %v4265 = vmul.f32 %v4053, %v2805
        %v4266 = vmul.f32 %v4054, %v2809
        %v4267 = vmul.f32 %v4055, %v2805
        %v4268 = vmul.f32 %v4056, %v2809
        %v4269 = vmul.f32 %v4057, %v2805
        %v4270 = vmul.f32 %v4058, %v2809
        %v4271 = vmul.f32 %v4059, %v2805
        %v4272 = vmul.f32 %v4060, %v2809
        %v4273 = vmul.f32 %v4061, %v2805
        %v4274 = vmul.f32 %v4062, %v2809
        %v4307 = vrot.slane %v4243, 2
        %v4308 = vrot.slane %v4244, 2
        %v4309 = vrot.slane %v4245, 2
        %v4310 = vsel %vm2679, %v4307, %v4309
        %v4311 = vrot.slane %v4246, 2
        %v4312 = vsel %vm2679, %v4308, %v4311
        %v4313 = vrot.slane %v4247, 2
        %v4314 = vrot.slane %v4248, 2
        %v4315 = vrot.slane %v4249, 2
        %v4316 = vsel %vm2679, %v4313, %v4315
        %v4317 = vrot.slane %v4250, 2
        %v4318 = vsel %vm2679, %v4314, %v4317
        %v4319 = vrot.slane %v4251, 2
        %v4320 = vrot.slane %v4252, 2
        %v4321 = vrot.slane %v4253, 2
        %v4322 = vsel %vm2679, %v4319, %v4321
        %v4323 = vrot.slane %v4254, 2
        %v4324 = vsel %vm2679, %v4320, %v4323
        %v4325 = vrot.slane %v4255, 2
        %v4326 = vrot.slane %v4256, 2
        %v4327 = vrot.slane %v4257, 2
        %v4328 = vsel %vm2679, %v4325, %v4327
        %v4329 = vrot.slane %v4258, 2
        %v4330 = vsel %vm2679, %v4326, %v4329
        %v4331 = vrot.slane %v4259, 2
        %v4332 = vrot.slane %v4260, 2
        %v4333 = vrot.slane %v4261, 2
        %v4334 = vsel %vm2679, %v4331, %v4333
        %v4335 = vrot.slane %v4262, 2
        %v4336 = vsel %vm2679, %v4332, %v4335
        %v4337 = vrot.slane %v4263, 2
        %v4338 = vrot.slane %v4264, 2
        %v4339 = vrot.slane %v4265, 2
        %v4340 = vsel %vm2679, %v4337, %v4339
        %v4341 = vrot.slane %v4266, 2
        %v4342 = vsel %vm2679, %v4338, %v4341
        %v4343 = vrot.slane %v4267, 2
        %v4344 = vrot.slane %v4268, 2
        %v4345 = vrot.slane %v4269, 2
        %v4346 = vsel %vm2679, %v4343, %v4345
        %v4347 = vrot.slane %v4270, 2
        %v4348 = vsel %vm2679, %v4344, %v4347
        %v4349 = vrot.slane %v4271, 2
        %v4350 = vrot.slane %v4272, 2
        %v4351 = vrot.slane %v4273, 2
        %v4352 = vsel %vm2679, %v4349, %v4351
        %v4353 = vrot.slane %v4274, 2
        %v4354 = vsel %vm2679, %v4350, %v4353
        %v4387 = vadd.f32 %v4211, %v4307
        %v4388 = vadd.f32 %v4212, %v4308
        %v4389 = vadd.f32 %v4213, %v4310
        %v4390 = vadd.f32 %v4214, %v4312
        %v4391 = vadd.f32 %v4215, %v4313
        %v4392 = vadd.f32 %v4216, %v4314
        %v4393 = vadd.f32 %v4217, %v4316
        %v4394 = vadd.f32 %v4218, %v4318
        %v4395 = vadd.f32 %v4219, %v4319
        %v4396 = vadd.f32 %v4220, %v4320
        %v4397 = vadd.f32 %v4221, %v4322
        %v4398 = vadd.f32 %v4222, %v4324
        %v4399 = vadd.f32 %v4223, %v4325
        %v4400 = vadd.f32 %v4224, %v4326
        %v4401 = vadd.f32 %v4225, %v4328
        %v4402 = vadd.f32 %v4226, %v4330
        %v4403 = vadd.f32 %v4227, %v4331
        %v4404 = vadd.f32 %v4228, %v4332
        %v4405 = vadd.f32 %v4229, %v4334
        %v4406 = vadd.f32 %v4230, %v4336
        %v4407 = vadd.f32 %v4231, %v4337
        %v4408 = vadd.f32 %v4232, %v4338
        %v4409 = vadd.f32 %v4233, %v4340
        %v4410 = vadd.f32 %v4234, %v4342
        %v4411 = vadd.f32 %v4235, %v4343
        %v4412 = vadd.f32 %v4236, %v4344
        %v4413 = vadd.f32 %v4237, %v4346
        %v4414 = vadd.f32 %v4238, %v4348
        %v4415 = vadd.f32 %v4239, %v4349
        %v4416 = vadd.f32 %v4240, %v4350
        %v4417 = vadd.f32 %v4241, %v4352
        %v4418 = vadd.f32 %v4242, %v4354
        %v4419 = vmul.f32 %v4035, %v2999
        %v4420 = vmul.f32 %v4036, %v3003
        %v4421 = vmul.f32 %v4037, %v2999
        %v4422 = vmul.f32 %v4038, %v3003
        %v4423 = vmul.f32 %v4039, %v2999
        %v4424 = vmul.f32 %v4040, %v3003
        %v4425 = vmul.f32 %v4041, %v2999
        %v4426 = vmul.f32 %v4042, %v3003
        %v4427 = vmul.f32 %v4043, %v2999
        %v4428 = vmul.f32 %v4044, %v3003
        %v4429 = vmul.f32 %v4045, %v2999
        %v4430 = vmul.f32 %v4046, %v3003
        %v4431 = vmul.f32 %v4047, %v2999
        %v4432 = vmul.f32 %v4048, %v3003
        %v4433 = vmul.f32 %v4049, %v2999
        %v4434 = vmul.f32 %v4050, %v3003
        %v4435 = vmul.f32 %v4051, %v2999
        %v4436 = vmul.f32 %v4052, %v3003
        %v4437 = vmul.f32 %v4053, %v2999
        %v4438 = vmul.f32 %v4054, %v3003
        %v4439 = vmul.f32 %v4055, %v2999
        %v4440 = vmul.f32 %v4056, %v3003
        %v4441 = vmul.f32 %v4057, %v2999
        %v4442 = vmul.f32 %v4058, %v3003
        %v4443 = vmul.f32 %v4059, %v2999
        %v4444 = vmul.f32 %v4060, %v3003
        %v4445 = vmul.f32 %v4061, %v2999
        %v4446 = vmul.f32 %v4062, %v3003
        %v4447 = vmul.f32 %v4063, %v2999
        %v4448 = vmul.f32 %v4064, %v3003
        %v4449 = vmul.f32 %v4065, %v2999
        %v4450 = vmul.f32 %v4066, %v3003
        %v4483 = vrot.slane %v4419, 2
        %v4484 = vrot.slane %v4420, 2
        %v4485 = vrot.slane %v4421, 2
        %v4486 = vsel %vm2679, %v4483, %v4485
        %v4487 = vrot.slane %v4422, 2
        %v4488 = vsel %vm2679, %v4484, %v4487
        %v4489 = vrot.slane %v4423, 2
        %v4490 = vrot.slane %v4424, 2
        %v4491 = vrot.slane %v4425, 2
        %v4492 = vsel %vm2679, %v4489, %v4491
        %v4493 = vrot.slane %v4426, 2
        %v4494 = vsel %vm2679, %v4490, %v4493
        %v4495 = vrot.slane %v4427, 2
        %v4496 = vrot.slane %v4428, 2
        %v4497 = vrot.slane %v4429, 2
        %v4498 = vsel %vm2679, %v4495, %v4497
        %v4499 = vrot.slane %v4430, 2
        %v4500 = vsel %vm2679, %v4496, %v4499
        %v4501 = vrot.slane %v4431, 2
        %v4502 = vrot.slane %v4432, 2
        %v4503 = vrot.slane %v4433, 2
        %v4504 = vsel %vm2679, %v4501, %v4503
        %v4505 = vrot.slane %v4434, 2
        %v4506 = vsel %vm2679, %v4502, %v4505
        %v4507 = vrot.slane %v4435, 2
        %v4508 = vrot.slane %v4436, 2
        %v4509 = vrot.slane %v4437, 2
        %v4510 = vsel %vm2679, %v4507, %v4509
        %v4511 = vrot.slane %v4438, 2
        %v4512 = vsel %vm2679, %v4508, %v4511
        %v4513 = vrot.slane %v4439, 2
        %v4514 = vrot.slane %v4440, 2
        %v4515 = vrot.slane %v4441, 2
        %v4516 = vsel %vm2679, %v4513, %v4515
        %v4517 = vrot.slane %v4442, 2
        %v4518 = vsel %vm2679, %v4514, %v4517
        %v4519 = vrot.slane %v4443, 2
        %v4520 = vrot.slane %v4444, 2
        %v4521 = vrot.slane %v4445, 2
        %v4522 = vsel %vm2679, %v4519, %v4521
        %v4523 = vrot.slane %v4446, 2
        %v4524 = vsel %vm2679, %v4520, %v4523
        %v4525 = vrot.slane %v4447, 2
        %v4526 = vrot.slane %v4448, 2
        %v4527 = vrot.slane %v4449, 2
        %v4528 = vsel %vm2679, %v4525, %v4527
        %v4529 = vrot.slane %v4450, 2
        %v4530 = vsel %vm2679, %v4526, %v4529
        %v4563 = vadd.f32 %v4387, %v4483
        %v4564 = vadd.f32 %v4388, %v4484
        %v4565 = vadd.f32 %v4389, %v4486
        %v4566 = vadd.f32 %v4390, %v4488
        %v4567 = vadd.f32 %v4391, %v4489
        %v4568 = vadd.f32 %v4392, %v4490
        %v4569 = vadd.f32 %v4393, %v4492
        %v4570 = vadd.f32 %v4394, %v4494
        %v4571 = vadd.f32 %v4395, %v4495
        %v4572 = vadd.f32 %v4396, %v4496
        %v4573 = vadd.f32 %v4397, %v4498
        %v4574 = vadd.f32 %v4398, %v4500
        %v4575 = vadd.f32 %v4399, %v4501
        %v4576 = vadd.f32 %v4400, %v4502
        %v4577 = vadd.f32 %v4401, %v4504
        %v4578 = vadd.f32 %v4402, %v4506
        %v4579 = vadd.f32 %v4403, %v4507
        %v4580 = vadd.f32 %v4404, %v4508
        %v4581 = vadd.f32 %v4405, %v4510
        %v4582 = vadd.f32 %v4406, %v4512
        %v4583 = vadd.f32 %v4407, %v4513
        %v4584 = vadd.f32 %v4408, %v4514
        %v4585 = vadd.f32 %v4409, %v4516
        %v4586 = vadd.f32 %v4410, %v4518
        %v4587 = vadd.f32 %v4411, %v4519
        %v4588 = vadd.f32 %v4412, %v4520
        %v4589 = vadd.f32 %v4413, %v4522
        %v4590 = vadd.f32 %v4414, %v4524
        %v4591 = vadd.f32 %v4415, %v4525
        %v4592 = vadd.f32 %v4416, %v4526
        %v4593 = vadd.f32 %v4417, %v4528
        %v4594 = vadd.f32 %v4418, %v4530
        %v4595 = vadd.f32 %v4563, 3.0
        %v4596 = vadd.f32 %v4564, 3.0
        %v4597 = vadd.f32 %v4565, 3.0
        %v4598 = vadd.f32 %v4566, 3.0
        %v4599 = vadd.f32 %v4567, 3.0
        %v4600 = vadd.f32 %v4568, 3.0
        %v4601 = vadd.f32 %v4569, 3.0
        %v4602 = vadd.f32 %v4570, 3.0
        %v4603 = vadd.f32 %v4571, 3.0
        %v4604 = vadd.f32 %v4572, 3.0
        %v4605 = vadd.f32 %v4573, 3.0
        %v4606 = vadd.f32 %v4574, 3.0
        %v4607 = vadd.f32 %v4575, 3.0
        %v4608 = vadd.f32 %v4576, 3.0
        %v4609 = vadd.f32 %v4577, 3.0
        %v4610 = vadd.f32 %v4578, 3.0
        %v4611 = vadd.f32 %v4579, 3.0
        %v4612 = vadd.f32 %v4580, 3.0
        %v4613 = vadd.f32 %v4581, 3.0
        %v4614 = vadd.f32 %v4582, 3.0
        %v4615 = vadd.f32 %v4583, 3.0
        %v4616 = vadd.f32 %v4584, 3.0
        %v4617 = vadd.f32 %v4585, 3.0
        %v4618 = vadd.f32 %v4586, 3.0
        %v4619 = vadd.f32 %v4587, 3.0
        %v4620 = vadd.f32 %v4588, 3.0
        %v4621 = vadd.f32 %v4589, 3.0
        %v4622 = vadd.f32 %v4590, 3.0
        %v4623 = vadd.f32 %v4591, 3.0
        %v4624 = vadd.f32 %v4592, 3.0
        %v4625 = vadd.f32 %v4593, 3.0
        %v4626 = vadd.f32 %v4594, 3.0
        %v4627 = vmax.f32 %v4595, 0.0
        %v4628 = vmax.f32 %v4596, 0.0
        %v4629 = vmax.f32 %v4597, 0.0
        %v4630 = vmax.f32 %v4598, 0.0
        %v4631 = vmax.f32 %v4599, 0.0
        %v4632 = vmax.f32 %v4600, 0.0
        %v4633 = vmax.f32 %v4601, 0.0
        %v4634 = vmax.f32 %v4602, 0.0
        %v4635 = vmax.f32 %v4603, 0.0
        %v4636 = vmax.f32 %v4604, 0.0
        %v4637 = vmax.f32 %v4605, 0.0
        %v4638 = vmax.f32 %v4606, 0.0
        %v4639 = vmax.f32 %v4607, 0.0
        %v4640 = vmax.f32 %v4608, 0.0
        %v4641 = vmax.f32 %v4609, 0.0
        %v4642 = vmax.f32 %v4610, 0.0
        %v4643 = vmax.f32 %v4611, 0.0
        %v4644 = vmax.f32 %v4612, 0.0
        %v4645 = vmax.f32 %v4613, 0.0
        %v4646 = vmax.f32 %v4614, 0.0
        %v4647 = vmax.f32 %v4615, 0.0
        %v4648 = vmax.f32 %v4616, 0.0
        %v4649 = vmax.f32 %v4617, 0.0
        %v4650 = vmax.f32 %v4618, 0.0
        %v4651 = vmax.f32 %v4619, 0.0
        %v4652 = vmax.f32 %v4620, 0.0
        %v4653 = vmax.f32 %v4621, 0.0
        %v4654 = vmax.f32 %v4622, 0.0
        %v4655 = vmax.f32 %v4623, 0.0
        %v4656 = vmax.f32 %v4624, 0.0
        %v4657 = vmax.f32 %v4625, 0.0
        %v4658 = vmax.f32 %v4626, 0.0
        %v4659 = vmin.f32 %v4627, 6.0
        %v4660 = vmin.f32 %v4628, 6.0
        %v4661 = vmin.f32 %v4629, 6.0
        %v4662 = vmin.f32 %v4630, 6.0
        %v4663 = vmin.f32 %v4631, 6.0
        %v4664 = vmin.f32 %v4632, 6.0
        %v4665 = vmin.f32 %v4633, 6.0
        %v4666 = vmin.f32 %v4634, 6.0
        %v4667 = vmin.f32 %v4635, 6.0
        %v4668 = vmin.f32 %v4636, 6.0
        %v4669 = vmin.f32 %v4637, 6.0
        %v4670 = vmin.f32 %v4638, 6.0
        %v4671 = vmin.f32 %v4639, 6.0
        %v4672 = vmin.f32 %v4640, 6.0
        %v4673 = vmin.f32 %v4641, 6.0
        %v4674 = vmin.f32 %v4642, 6.0
        %v4675 = vmin.f32 %v4643, 6.0
        %v4676 = vmin.f32 %v4644, 6.0
        %v4677 = vmin.f32 %v4645, 6.0
        %v4678 = vmin.f32 %v4646, 6.0
        %v4679 = vmin.f32 %v4647, 6.0
        %v4680 = vmin.f32 %v4648, 6.0
        %v4681 = vmin.f32 %v4649, 6.0
        %v4682 = vmin.f32 %v4650, 6.0
        %v4683 = vmin.f32 %v4651, 6.0
        %v4684 = vmin.f32 %v4652, 6.0
        %v4685 = vmin.f32 %v4653, 6.0
        %v4686 = vmin.f32 %v4654, 6.0
        %v4687 = vmin.f32 %v4655, 6.0
        %v4688 = vmin.f32 %v4656, 6.0
        %v4689 = vmin.f32 %v4657, 6.0
        %v4690 = vmin.f32 %v4658, 6.0
        %v4691 = vmul.f32 %v4659, 0.16666667
        %v4692 = vmul.f32 %v4660, 0.16666667
        %v4693 = vmul.f32 %v4661, 0.16666667
        %v4694 = vmul.f32 %v4662, 0.16666667
        %v4695 = vmul.f32 %v4663, 0.16666667
        %v4696 = vmul.f32 %v4664, 0.16666667
        %v4697 = vmul.f32 %v4665, 0.16666667
        %v4698 = vmul.f32 %v4666, 0.16666667
        %v4699 = vmul.f32 %v4667, 0.16666667
        %v4700 = vmul.f32 %v4668, 0.16666667
        %v4701 = vmul.f32 %v4669, 0.16666667
        %v4702 = vmul.f32 %v4670, 0.16666667
        %v4703 = vmul.f32 %v4671, 0.16666667
        %v4704 = vmul.f32 %v4672, 0.16666667
        %v4705 = vmul.f32 %v4673, 0.16666667
        %v4706 = vmul.f32 %v4674, 0.16666667
        %v4707 = vmul.f32 %v4675, 0.16666667
        %v4708 = vmul.f32 %v4676, 0.16666667
        %v4709 = vmul.f32 %v4677, 0.16666667
        %v4710 = vmul.f32 %v4678, 0.16666667
        %v4711 = vmul.f32 %v4679, 0.16666667
        %v4712 = vmul.f32 %v4680, 0.16666667
        %v4713 = vmul.f32 %v4681, 0.16666667
        %v4714 = vmul.f32 %v4682, 0.16666667
        %v4715 = vmul.f32 %v4683, 0.16666667
        %v4716 = vmul.f32 %v4684, 0.16666667
        %v4717 = vmul.f32 %v4685, 0.16666667
        %v4718 = vmul.f32 %v4686, 0.16666667
        %v4719 = vmul.f32 %v4687, 0.16666667
        %v4720 = vmul.f32 %v4688, 0.16666667
        %v4721 = vmul.f32 %v4689, 0.16666667
        %v4722 = vmul.f32 %v4690, 0.16666667
        %v4723 = vmul.f32 %v4563, %v4691
        %v4724 = vmul.f32 %v4564, %v4692
        %v4725 = vmul.f32 %v4565, %v4693
        %v4726 = vmul.f32 %v4566, %v4694
        %v4727 = vmul.f32 %v4567, %v4695
        %v4728 = vmul.f32 %v4568, %v4696
        %v4729 = vmul.f32 %v4569, %v4697
        %v4730 = vmul.f32 %v4570, %v4698
        %v4731 = vmul.f32 %v4571, %v4699
        %v4732 = vmul.f32 %v4572, %v4700
        %v4733 = vmul.f32 %v4573, %v4701
        %v4734 = vmul.f32 %v4574, %v4702
        %v4735 = vmul.f32 %v4575, %v4703
        %v4736 = vmul.f32 %v4576, %v4704
        %v4737 = vmul.f32 %v4577, %v4705
        %v4738 = vmul.f32 %v4578, %v4706
        %v4739 = vmul.f32 %v4579, %v4707
        %v4740 = vmul.f32 %v4580, %v4708
        %v4741 = vmul.f32 %v4581, %v4709
        %v4742 = vmul.f32 %v4582, %v4710
        %v4743 = vmul.f32 %v4583, %v4711
        %v4744 = vmul.f32 %v4584, %v4712
        %v4745 = vmul.f32 %v4585, %v4713
        %v4746 = vmul.f32 %v4586, %v4714
        %v4747 = vmul.f32 %v4587, %v4715
        %v4748 = vmul.f32 %v4588, %v4716
        %v4749 = vmul.f32 %v4589, %v4717
        %v4750 = vmul.f32 %v4590, %v4718
        %v4751 = vmul.f32 %v4591, %v4719
        %v4752 = vmul.f32 %v4592, %v4720
        %v4753 = vmul.f32 %v4593, %v4721
        %v4754 = vmul.f32 %v4594, %v4722
        %v4787 = vrot.slane %v4723, 7
        %v4788 = vrot.slane %v4725, 7
        %v4789 = vsel %vm3372, %v4787, %v4788
        %v4790 = vrot.slane %v4724, 7
        %v4791 = vrot.slane %v4726, 7
        %v4792 = vsel %vm3372, %v4790, %v4791
        %v4793 = vrot.slane %v4727, 7
        %v4794 = vrot.slane %v4729, 7
        %v4795 = vsel %vm3372, %v4793, %v4794
        %v4796 = vrot.slane %v4728, 7
        %v4797 = vrot.slane %v4730, 7
        %v4798 = vsel %vm3372, %v4796, %v4797
        %v4799 = vrot.slane %v4731, 7
        %v4800 = vrot.slane %v4733, 7
        %v4801 = vsel %vm3372, %v4799, %v4800
        %v4802 = vrot.slane %v4732, 7
        %v4803 = vrot.slane %v4734, 7
        %v4804 = vsel %vm3372, %v4802, %v4803
        %v4805 = vrot.slane %v4735, 7
        %v4806 = vrot.slane %v4737, 7
        %v4807 = vsel %vm3372, %v4805, %v4806
        %v4808 = vrot.slane %v4736, 7
        %v4809 = vrot.slane %v4738, 7
        %v4810 = vsel %vm3372, %v4808, %v4809
        %v4811 = vrot.slane %v4739, 7
        %v4812 = vrot.slane %v4741, 7
        %v4813 = vsel %vm3372, %v4811, %v4812
        %v4814 = vrot.slane %v4740, 7
        %v4815 = vrot.slane %v4742, 7
        %v4816 = vsel %vm3372, %v4814, %v4815
        %v4817 = vrot.slane %v4743, 7
        %v4818 = vrot.slane %v4745, 7
        %v4819 = vsel %vm3372, %v4817, %v4818
        %v4820 = vrot.slane %v4744, 7
        %v4821 = vrot.slane %v4746, 7
        %v4822 = vsel %vm3372, %v4820, %v4821
        %v4823 = vrot.slane %v4747, 7
        %v4824 = vrot.slane %v4749, 7
        %v4825 = vsel %vm3372, %v4823, %v4824
        %v4826 = vrot.slane %v4748, 7
        %v4827 = vrot.slane %v4750, 7
        %v4828 = vsel %vm3372, %v4826, %v4827
        %v4829 = vrot.slane %v4751, 7
        %v4830 = vrot.slane %v4753, 7
        %v4831 = vsel %vm3372, %v4829, %v4830
        %v4832 = vrot.slane %v4752, 7
        %v4833 = vrot.slane %v4754, 7
        %v4834 = vsel %vm3372, %v4832, %v4833
        %s4851 = smul.u32 8, 2
        %s4852 = smul.addr %s4851, 8
        %s4853 = scalar_lea.vmem [#allocation5], %s4852
        %4854 = vst [vmem:[%s4853] sm:$0xff] %v4789
        %4855 = vst [vmem:[%s4853 + $0x8] sm:$0xff] %v4792
        %4856 = vst [vmem:[%s4853 + $0x10] sm:$0xff] %v4795
        %4857 = vst [vmem:[%s4853 + $0x18] sm:$0xff] %v4798
        %4858 = vst [vmem:[%s4853 + $0x20] sm:$0xff] %v4801
        %4859 = vst [vmem:[%s4853 + $0x28] sm:$0xff] %v4804
        %4860 = vst [vmem:[%s4853 + $0x30] sm:$0xff] %v4807
        %4861 = vst [vmem:[%s4853 + $0x38] sm:$0xff] %v4810
        %4862 = vst [vmem:[%s4853 + $0x40] sm:$0xff] %v4813
        %4863 = vst [vmem:[%s4853 + $0x48] sm:$0xff] %v4816
        %4864 = vst [vmem:[%s4853 + $0x50] sm:$0xff] %v4819
        %4865 = vst [vmem:[%s4853 + $0x58] sm:$0xff] %v4822
        %4866 = vst [vmem:[%s4853 + $0x60] sm:$0xff] %v4825
        %4867 = vst [vmem:[%s4853 + $0x68] sm:$0xff] %v4828
        %4868 = vst [vmem:[%s4853 + $0x70] sm:$0xff] %v4831
        %4869 = vst [vmem:[%s4853 + $0x78] sm:$0xff] %v4834
        %v4870 = vadd.f32 %v4789, %v4795
        %v4871 = vadd.f32 %v4870, %v4801
        %v4872 = vadd.f32 %v4871, %v4807
        %v4873 = vadd.f32 %v4872, %v4813
        %v4874 = vadd.f32 %v4873, %v4819
        %v4875 = vadd.f32 %v4874, %v4825
        %v4876 = vadd.f32 %v4875, %v4831
        %v4877 = vrot.slane %v4876, 4
        %v4878 = vadd.f32 %v4876, %v4877
        %v4879 = vrot.slane %v4878, 2
        %v4880 = vadd.f32 %v4878, %v4879
        %v4881 = vrot.slane %v4880, 1
        %v4882 = vadd.f32 %v4880, %v4881
        %v4883 = vadd.f32 %v4792, %v4798
        %v4884 = vadd.f32 %v4883, %v4804
        %v4885 = vadd.f32 %v4884, %v4810
        %v4886 = vadd.f32 %v4885, %v4816
        %v4887 = vadd.f32 %v4886, %v4822
        %v4888 = vadd.f32 %v4887, %v4828
        %v4889 = vadd.f32 %v4888, %v4834
        %v4890 = vrot.slane %v4889, 4
        %v4891 = vadd.f32 %v4889, %v4890
        %v4892 = vrot.slane %v4891, 2
        %v4893 = vadd.f32 %v4891, %v4892
        %v4894 = vrot.slane %v4893, 1
        %v4895 = vadd.f32 %v4893, %v4894
        %v4896 = vadd.f32 %v3482, %v4882
        %v4897 = vadd.f32 %v3483, %v4895
        %v4898 = vmul.f32 %v4896, 0.0078125
        %v4899 = vmul.f32 %v4897, 0.0078125
        %v4900 = vld [vmem:[#allocation17] sm:$0xff]
        %v4901 = vld [vmem:[#allocation17 + $0x8] sm:$0xff]
        %v4902 = vld [vmem:[#allocation17 + $0x10] sm:$0xff]
        %v4903 = vld [vmem:[#allocation17 + $0x18] sm:$0xff]
        %v4904 = vld [vmem:[#allocation17 + $0x20] sm:$0xff]
        %v4905 = vld [vmem:[#allocation17 + $0x28] sm:$0xff]
        %v4906 = vld [vmem:[#allocation17 + $0x30] sm:$0xff]
        %v4907 = vld [vmem:[#allocation17 + $0x38] sm:$0xff]
        %v4908 = vld [vmem:[#allocation17 + $0x40] sm:$0xff]
        %v4909 = vld [vmem:[#allocation17 + $0x48] sm:$0xff]
        %v4910 = vld [vmem:[#allocation17 + $0x50] sm:$0xff]
        %v4911 = vld [vmem:[#allocation17 + $0x58] sm:$0xff]
        %v4912 = vld [vmem:[#allocation17 + $0x60] sm:$0xff]
        %v4913 = vld [vmem:[#allocation17 + $0x68] sm:$0xff]
        %v4914 = vld [vmem:[#allocation17 + $0x70] sm:$0xff]
        %v4915 = vld [vmem:[#allocation17 + $0x78] sm:$0xff]
        %v4916 = vld [vmem:[#allocation17 + $0x80] sm:$0xff]
        %v4917 = vld [vmem:[#allocation17 + $0x88] sm:$0xff]
        %v4918 = vld [vmem:[#allocation17 + $0x90] sm:$0xff]
        %v4919 = vld [vmem:[#allocation17 + $0x98] sm:$0xff]
        %v4920 = vld [vmem:[#allocation17 + $0xa0] sm:$0xff]
        %v4921 = vld [vmem:[#allocation17 + $0xa8] sm:$0xff]
        %v4922 = vld [vmem:[#allocation17 + $0xb0] sm:$0xff]
        %v4923 = vld [vmem:[#allocation17 + $0xb8] sm:$0xff]
        %v4924 = vld [vmem:[#allocation17 + $0xc0] sm:$0xff]
        %v4925 = vld [vmem:[#allocation17 + $0xc8] sm:$0xff]
        %v4926 = vld [vmem:[#allocation17 + $0xd0] sm:$0xff]
        %v4927 = vld [vmem:[#allocation17 + $0xd8] sm:$0xff]
        %v4928 = vld [vmem:[#allocation17 + $0xe0] sm:$0xff]
        %v4929 = vld [vmem:[#allocation17 + $0xe8] sm:$0xff]
        %v4930 = vld [vmem:[#allocation17 + $0xf0] sm:$0xff]
        %v4931 = vld [vmem:[#allocation17 + $0xf8] sm:$0xff]
        %v4932 = vld [vmem:[%s10] sm:$0x1]
        %4933 = vmatprep.subr.mxu0 0.0
        %4934 = vmatpush1.msra.mxu0 %v4900
        %4935 = vmatprep.subr.mxu0 0.0
        %4936 = vmatpush1.msra.mxu0 %v4901
        %4937 = vmatprep.subr.mxu0 0.0
        %4938 = vmatpush1.msra.mxu0 %v4902
        %4939 = vmatprep.subr.mxu0 0.0
        %4940 = vmatpush1.msra.mxu0 %v4903
        %4941 = vmatprep.subr.mxu0 0.0
        %4942 = vmatpush1.msra.mxu0 %v4904
        %4943 = vmatprep.subr.mxu0 0.0
        %4944 = vmatpush1.msra.mxu0 %v4905
        %4945 = vmatprep.subr.mxu0 0.0
        %4946 = vmatpush1.msra.mxu0 %v4906
        %4947 = vmatprep.subr.mxu0 0.0
        %4948 = vmatpush1.msra.mxu0 %v4907
        %4949 = vmatprep.subr.mxu0 0.0
        %4950 = vmatpush1.msra.mxu0 %v4908
        %4951 = vmatprep.subr.mxu0 0.0
        %4952 = vmatpush1.msra.mxu0 %v4909
        %4953 = vmatprep.subr.mxu0 0.0
        %4954 = vmatpush1.msra.mxu0 %v4910
        %4955 = vmatprep.subr.mxu0 0.0
        %4956 = vmatpush1.msra.mxu0 %v4911
        %4957 = vmatprep.subr.mxu0 0.0
        %4958 = vmatpush1.msra.mxu0 %v4912
        %4959 = vmatprep.subr.mxu0 0.0
        %4960 = vmatpush1.msra.mxu0 %v4913
        %4961 = vmatprep.subr.mxu0 0.0
        %4962 = vmatpush1.msra.mxu0 %v4914
        %4963 = vmatprep.subr.mxu0 0.0
        %4964 = vmatpush1.msra.mxu0 %v4915
        %4965 = vmatprep.subr.mxu0 0.0
        %4966 = vmatpush1.msra.mxu0 %v4916
        %4967 = vmatprep.subr.mxu0 0.0
        %4968 = vmatpush1.msra.mxu0 %v4917
        %4969 = vmatprep.subr.mxu0 0.0
        %4970 = vmatpush1.msra.mxu0 %v4918
        %4971 = vmatprep.subr.mxu0 0.0
        %4972 = vmatpush1.msra.mxu0 %v4919
        %4973 = vmatprep.subr.mxu0 0.0
        %4974 = vmatpush1.msra.mxu0 %v4920
        %4975 = vmatprep.subr.mxu0 0.0
        %4976 = vmatpush1.msra.mxu0 %v4921
        %4977 = vmatprep.subr.mxu0 0.0
        %4978 = vmatpush1.msra.mxu0 %v4922
        %4979 = vmatprep.subr.mxu0 0.0
        %4980 = vmatpush1.msra.mxu0 %v4923
        %4981 = vmatprep.subr.mxu0 0.0
        %4982 = vmatpush1.msra.mxu0 %v4924
        %4983 = vmatprep.subr.mxu0 0.0
        %4984 = vmatpush1.msra.mxu0 %v4925
        %4985 = vmatprep.subr.mxu0 0.0
        %4986 = vmatpush1.msra.mxu0 %v4926
        %4987 = vmatprep.subr.mxu0 0.0
        %4988 = vmatpush1.msra.mxu0 %v4927
        %4989 = vmatprep.subr.mxu0 0.0
        %4990 = vmatpush1.msra.mxu0 %v4928
        %4991 = vmatprep.subr.mxu0 0.0
        %4992 = vmatpush1.msra.mxu0 %v4929
        %4993 = vmatprep.subr.mxu0 0.0
        %4994 = vmatpush1.msra.mxu0 %v4930
        %4995 = vmatprep.subr.mxu0 0.0
        %4996 = vmatpush1.msra.mxu0 %v4931
        %4997 = vmatprep.mubr.f32.mxu0 %v4899
        %4998 = vmatmul.mubr.f32.gmra.mrb[0].mxu0 %v4898
        %v4999 = vpop.f32.mrb[0].mxu0
        %v5000 = vadd.f32 %v4932, %v4999
        %v5001 = vpop.f32.mrb[0].mxu0
        %5002 = vdwg.mxu0
        %v5003 = vmax.f32 %v5000, 0.0
        %v5004 = vld [vmem:[#allocation18] sm:$0xff]
        %v5005 = vld [vmem:[#allocation18 + $0x8] sm:$0xff]
        %v5006 = vld [vmem:[#allocation18 + $0x10] sm:$0xff]
        %v5007 = vld [vmem:[#allocation18 + $0x18] sm:$0xff]
        %v5008 = vld [vmem:[#allocation18 + $0x20] sm:$0xff]
        %v5009 = vld [vmem:[#allocation18 + $0x28] sm:$0xff]
        %v5010 = vld [vmem:[#allocation18 + $0x30] sm:$0xff]
        %v5011 = vld [vmem:[#allocation18 + $0x38] sm:$0xff]
        %v5012 = vld [vmem:[#allocation18 + $0x40] sm:$0xff]
        %v5013 = vld [vmem:[#allocation18 + $0x48] sm:$0xff]
        %v5014 = vld [vmem:[#allocation18 + $0x50] sm:$0xff]
        %v5015 = vld [vmem:[#allocation18 + $0x58] sm:$0xff]
        %v5016 = vld [vmem:[#allocation18 + $0x60] sm:$0xff]
        %v5017 = vld [vmem:[#allocation18 + $0x68] sm:$0xff]
        %v5018 = vld [vmem:[#allocation18 + $0x70] sm:$0xff]
        %v5019 = vld [vmem:[#allocation18 + $0x78] sm:$0xff]
        %v5020 = vld [vmem:[%s12] sm:$0x3]
        %v5022 = vlaneseq
        %v5023 = vshrl.u32 %v5022, 7
        %v5024 = vsub.s32 0, %v5023
        %v5025 = vrot.slane %v5020, %v5024
        %v5026 = vlaneseq
        %v5027 = vshrl.u32 %v5026, 7
        %v5028 = vsub.s32 1, %v5027
        %v5029 = vrot.slane %v5020, %v5028
        %vm5032 = vcmask 523264
        %v5034 = vsel %vm5032, %v5003, 0
        %5036 = vmatprep.subr.mxu0 %v5005
        %5037 = vmatpush1.msra.mxu0 %v5004
        %5038 = vmatprep.subr.mxu0 %v5007
        %5039 = vmatpush1.msra.mxu0 %v5006
        %5040 = vmatprep.subr.mxu0 %v5009
        %5041 = vmatpush1.msra.mxu0 %v5008
        %5042 = vmatprep.subr.mxu0 %v5011
        %5043 = vmatpush1.msra.mxu0 %v5010
        %5044 = vmatprep.subr.mxu0 %v5013
        %5045 = vmatpush1.msra.mxu0 %v5012
        %5046 = vmatprep.subr.mxu0 %v5015
        %5047 = vmatpush1.msra.mxu0 %v5014
        %5048 = vmatprep.subr.mxu0 %v5017
        %5049 = vmatpush1.msra.mxu0 %v5016
        %5050 = vmatprep.subr.mxu0 %v5019
        %5051 = vmatpush1.msra.mxu0 %v5018
        %5052 = vmatprep.subr.mxu0 0.0
        %5053 = vmatpush1.msra.mxu0 0.0
        %5054 = vmatprep.subr.mxu0 0.0
        %5055 = vmatpush1.msra.mxu0 0.0
        %5056 = vmatprep.subr.mxu0 0.0
        %5057 = vmatpush1.msra.mxu0 0.0
        %5058 = vmatprep.subr.mxu0 0.0
        %5059 = vmatpush1.msra.mxu0 0.0
        %5060 = vmatprep.subr.mxu0 0.0
        %5061 = vmatpush1.msra.mxu0 0.0
        %5062 = vmatprep.subr.mxu0 0.0
        %5063 = vmatpush1.msra.mxu0 0.0
        %5064 = vmatprep.subr.mxu0 0.0
        %5065 = vmatpush1.msra.mxu0 0.0
        %5066 = vmatprep.subr.mxu0 0.0
        %5067 = vmatpush1.msra.mxu0 0.0
        %5068 = vmatprep.subr.mxu0 0.0
        %5069 = vmatpush1.msra.mxu0 0.0
        %5070 = vmatprep.subr.mxu0 0.0
        %5071 = vmatpush1.msra.mxu0 0.0
        %5072 = vmatprep.subr.mxu0 0.0
        %5073 = vmatpush1.msra.mxu0 0.0
        %5074 = vmatprep.subr.mxu0 0.0
        %5075 = vmatpush1.msra.mxu0 0.0
        %5076 = vmatprep.subr.mxu0 0.0
        %5077 = vmatpush1.msra.mxu0 0.0
        %5078 = vmatprep.subr.mxu0 0.0
        %5079 = vmatpush1.msra.mxu0 0.0
        %5080 = vmatprep.subr.mxu0 0.0
        %5081 = vmatpush1.msra.mxu0 0.0
        %5082 = vmatprep.subr.mxu0 0.0
        %5083 = vmatpush1.msra.mxu0 0.0
        %5084 = vmatprep.subr.mxu0 0.0
        %5085 = vmatpush1.msra.mxu0 0.0
        %5086 = vmatprep.subr.mxu0 0.0
        %5087 = vmatpush1.msra.mxu0 0.0
        %5088 = vmatprep.subr.mxu0 0.0
        %5089 = vmatpush1.msra.mxu0 0.0
        %5090 = vmatprep.subr.mxu0 0.0
        %5091 = vmatpush1.msra.mxu0 0.0
        %5092 = vmatprep.subr.mxu0 0.0
        %5093 = vmatpush1.msra.mxu0 0.0
        %5094 = vmatprep.subr.mxu0 0.0
        %5095 = vmatpush1.msra.mxu0 0.0
        %5096 = vmatprep.subr.mxu0 0.0
        %5097 = vmatpush1.msra.mxu0 0.0
        %5098 = vmatprep.subr.mxu0 0.0
        %5099 = vmatpush1.msra.mxu0 0.0
        %5100 = vmatprep.mubr.f32.mxu0 0.0
        %5101 = vmatmul.mubr.f32.gmra.mrb[0].mxu0 %v5034
        %v5102 = vpop.f32.mrb[0].mxu0
        %v5103 = vadd.f32 %v5025, %v5102
        %v5104 = vpop.f32.mrb[0].mxu0
        %v5105 = vadd.f32 %v5029, %v5104
        %5106 = vdwg.mxu0
        %v5107 = vadd.f32 %v5103, 3.0
        %v5108 = vadd.f32 %v5105, 3.0
        %v5109 = vmax.f32 %v5107, 0.0
        %v5110 = vmax.f32 %v5108, 0.0
        %v5111 = vmin.f32 %v5109, 6.0
        %v5112 = vmin.f32 %v5110, 6.0
        %v5113 = vmul.f32 %v5111, 0.16666667
        %v5114 = vmul.f32 %v5112, 0.16666667
        %v5115 = vlaneseq
        %v5116 = vshrl.u32 %v5115, 7
        %v5117 = vsub.s32 0, %v5116
        %v5118 = vrot.slane %v5113, %v5117
        %v5119 = vlaneseq
        %v5120 = vshrl.u32 %v5119, 7
        %v5121 = vsub.s32 0, %v5120
        %v5122 = vrot.slane %v5114, %v5121
        %v5123 = vld [vmem:[%s3439] sm:$0xff]
        %v5124 = vld [vmem:[%s3439 + $0x8] sm:$0xff]
        %v5125 = vld [vmem:[%s3439 + $0x10] sm:$0xff]
        %v5126 = vld [vmem:[%s3439 + $0x18] sm:$0xff]
        %v5127 = vld [vmem:[%s3439 + $0x20] sm:$0xff]
        %v5128 = vld [vmem:[%s3439 + $0x28] sm:$0xff]
        %v5129 = vld [vmem:[%s3439 + $0x30] sm:$0xff]
        %v5130 = vld [vmem:[%s3439 + $0x38] sm:$0xff]
        %v5131 = vld [vmem:[%s3439 + $0x40] sm:$0xff]
        %v5132 = vld [vmem:[%s3439 + $0x48] sm:$0xff]
        %v5133 = vld [vmem:[%s3439 + $0x50] sm:$0xff]
        %v5134 = vld [vmem:[%s3439 + $0x58] sm:$0xff]
        %v5135 = vld [vmem:[%s3439 + $0x60] sm:$0xff]
        %v5136 = vld [vmem:[%s3439 + $0x68] sm:$0xff]
        %v5137 = vld [vmem:[%s3439 + $0x70] sm:$0xff]
        %v5138 = vld [vmem:[%s3439 + $0x78] sm:$0xff]
        %v5139 = vmul.f32 %v5123, %v5118
        %v5140 = vmul.f32 %v5124, %v5122
        %v5141 = vmul.f32 %v5125, %v5118
        %v5142 = vmul.f32 %v5126, %v5122
        %v5143 = vmul.f32 %v5127, %v5118
        %v5144 = vmul.f32 %v5128, %v5122
        %v5145 = vmul.f32 %v5129, %v5118
        %v5146 = vmul.f32 %v5130, %v5122
        %v5147 = vmul.f32 %v5131, %v5118
        %v5148 = vmul.f32 %v5132, %v5122
        %v5149 = vmul.f32 %v5133, %v5118
        %v5150 = vmul.f32 %v5134, %v5122
        %v5151 = vmul.f32 %v5135, %v5118
        %v5152 = vmul.f32 %v5136, %v5122
        %v5153 = vmul.f32 %v5137, %v5118
        %v5154 = vmul.f32 %v5138, %v5122
        %v5155 = vld [vmem:[#allocation21] sm:$0xff]
        %v5156 = vld [vmem:[#allocation21 + $0x8] sm:$0xff]
        %v5157 = vld [vmem:[#allocation21 + $0x10] sm:$0xff]
        %v5158 = vld [vmem:[#allocation21 + $0x18] sm:$0xff]
        %v5159 = vld [vmem:[#allocation21 + $0x20] sm:$0xff]
        %v5160 = vld [vmem:[#allocation21 + $0x28] sm:$0xff]
        %v5161 = vld [vmem:[#allocation21 + $0x30] sm:$0xff]
        %v5162 = vld [vmem:[#allocation21 + $0x38] sm:$0xff]
        %v5163 = vld [vmem:[#allocation21 + $0x40] sm:$0xff]
        %v5164 = vld [vmem:[#allocation21 + $0x48] sm:$0xff]
        %v5165 = vld [vmem:[#allocation21 + $0x50] sm:$0xff]
        %v5166 = vld [vmem:[#allocation21 + $0x58] sm:$0xff]
        %v5167 = vld [vmem:[#allocation21 + $0x60] sm:$0xff]
        %v5168 = vld [vmem:[#allocation21 + $0x68] sm:$0xff]
        %v5169 = vld [vmem:[#allocation21 + $0x70] sm:$0xff]
        %v5170 = vld [vmem:[#allocation21 + $0x78] sm:$0xff]
        %v5171 = vld [vmem:[#allocation21 + $0x80] sm:$0xff]
        %v5172 = vld [vmem:[#allocation21 + $0x88] sm:$0xff]
        %v5173 = vld [vmem:[#allocation21 + $0x90] sm:$0xff]
        %v5174 = vld [vmem:[#allocation21 + $0x98] sm:$0xff]
        %v5175 = vld [vmem:[#allocation21 + $0xa0] sm:$0xff]
        %v5176 = vld [vmem:[#allocation21 + $0xa8] sm:$0xff]
        %v5177 = vld [vmem:[#allocation21 + $0xb0] sm:$0xff]
        %v5178 = vld [vmem:[#allocation21 + $0xb8] sm:$0xff]
        %v5179 = vld [vmem:[#allocation21 + $0xc0] sm:$0xff]
        %v5180 = vld [vmem:[#allocation21 + $0xc8] sm:$0xff]
        %v5181 = vld [vmem:[#allocation21 + $0xd0] sm:$0xff]
        %v5182 = vld [vmem:[#allocation21 + $0xd8] sm:$0xff]
        %v5183 = vld [vmem:[#allocation21 + $0xe0] sm:$0xff]
        %v5184 = vld [vmem:[#allocation21 + $0xe8] sm:$0xff]
        %v5185 = vld [vmem:[#allocation21 + $0xf0] sm:$0xff]
        %v5186 = vld [vmem:[#allocation21 + $0xf8] sm:$0xff]
        %5187 = vmatprep.subr.mxu0 0.0
        %5188 = vmatpush1.msra.mxu0 %v5155
        %5189 = vmatprep.subr.mxu0 0.0
        %5190 = vmatpush1.msra.mxu0 %v5156
        %5191 = vmatprep.subr.mxu0 0.0
        %5192 = vmatpush1.msra.mxu0 %v5157
        %5193 = vmatprep.subr.mxu0 0.0
        %5194 = vmatpush1.msra.mxu0 %v5158
        %5195 = vmatprep.subr.mxu0 0.0
        %5196 = vmatpush1.msra.mxu0 %v5159
        %5197 = vmatprep.subr.mxu0 0.0
        %5198 = vmatpush1.msra.mxu0 %v5160
        %5199 = vmatprep.subr.mxu0 0.0
        %5200 = vmatpush1.msra.mxu0 %v5161
        %5201 = vmatprep.subr.mxu0 0.0
        %5202 = vmatpush1.msra.mxu0 %v5162
        %5203 = vmatprep.subr.mxu0 0.0
        %5204 = vmatpush1.msra.mxu0 %v5163
        %5205 = vmatprep.subr.mxu0 0.0
        %5206 = vmatpush1.msra.mxu0 %v5164
        %5207 = vmatprep.subr.mxu0 0.0
        %5208 = vmatpush1.msra.mxu0 %v5165
        %5209 = vmatprep.subr.mxu0 0.0
        %5210 = vmatpush1.msra.mxu0 %v5166
        %5211 = vmatprep.subr.mxu0 0.0
        %5212 = vmatpush1.msra.mxu0 %v5167
        %5213 = vmatprep.subr.mxu0 0.0
        %5214 = vmatpush1.msra.mxu0 %v5168
        %5215 = vmatprep.subr.mxu0 0.0
        %5216 = vmatpush1.msra.mxu0 %v5169
        %5217 = vmatprep.subr.mxu0 0.0
        %5218 = vmatpush1.msra.mxu0 %v5170
        %5219 = vmatprep.subr.mxu0 0.0
        %5220 = vmatpush1.msra.mxu0 %v5171
        %5221 = vmatprep.subr.mxu0 0.0
        %5222 = vmatpush1.msra.mxu0 %v5172
        %5223 = vmatprep.subr.mxu0 0.0
        %5224 = vmatpush1.msra.mxu0 %v5173
        %5225 = vmatprep.subr.mxu0 0.0
        %5226 = vmatpush1.msra.mxu0 %v5174
        %5227 = vmatprep.subr.mxu0 0.0
        %5228 = vmatpush1.msra.mxu0 %v5175
        %5229 = vmatprep.subr.mxu0 0.0
        %5230 = vmatpush1.msra.mxu0 %v5176
        %5231 = vmatprep.subr.mxu0 0.0
        %5232 = vmatpush1.msra.mxu0 %v5177
        %5233 = vmatprep.subr.mxu0 0.0
        %5234 = vmatpush1.msra.mxu0 %v5178
        %5235 = vmatprep.subr.mxu0 0.0
        %5236 = vmatpush1.msra.mxu0 %v5179
        %5237 = vmatprep.subr.mxu0 0.0
        %5238 = vmatpush1.msra.mxu0 %v5180
        %5239 = vmatprep.subr.mxu0 0.0
        %5240 = vmatpush1.msra.mxu0 %v5181
        %5241 = vmatprep.subr.mxu0 0.0
        %5242 = vmatpush1.msra.mxu0 %v5182
        %5243 = vmatprep.subr.mxu0 0.0
        %5244 = vmatpush1.msra.mxu0 %v5183
        %5245 = vmatprep.subr.mxu0 0.0
        %5246 = vmatpush1.msra.mxu0 %v5184
        %5247 = vmatprep.subr.mxu0 0.0
        %5248 = vmatpush1.msra.mxu0 %v5185
        %5249 = vmatprep.subr.mxu0 0.0
        %5250 = vmatpush1.msra.mxu0 %v5186
        %5251 = vmatprep.mubr.f32.mxu0 %v5140
        %5252 = vmatmul.mubr.f32.gmra.mrb[0].mxu0 %v5139
        %v5253 = vpop.f32.mrb[0].mxu0
        %v5254 = vadd.f32 0.0, %v5253
        %v5255 = vpop.f32.mrb[0].mxu0
        %5256 = vmatprep.mubr.f32.mxu0 %v5142
        %5257 = vmatmul.mubr.f32.gmra.mrb[0].mxu0 %v5141
        %v5258 = vpop.f32.mrb[0].mxu0
        %v5259 = vadd.f32 0.0, %v5258
        %v5260 = vpop.f32.mrb[0].mxu0
        %5261 = vmatprep.mubr.f32.mxu0 %v5144
        %5262 = vmatmul.mubr.f32.gmra.mrb[0].mxu0 %v5143
        %v5263 = vpop.f32.mrb[0].mxu0
        %v5264 = vadd.f32 0.0, %v5263
        %v5265 = vpop.f32.mrb[0].mxu0
        %5266 = vmatprep.mubr.f32.mxu0 %v5146
        %5267 = vmatmul.mubr.f32.gmra.mrb[0].mxu0 %v5145
        %v5268 = vpop.f32.mrb[0].mxu0
        %v5269 = vadd.f32 0.0, %v5268
        %v5270 = vpop.f32.mrb[0].mxu0
        %5271 = vmatprep.mubr.f32.mxu0 %v5148
        %5272 = vmatmul.mubr.f32.gmra.mrb[0].mxu0 %v5147
        %v5273 = vpop.f32.mrb[0].mxu0
        %v5274 = vadd.f32 0.0, %v5273
        %v5275 = vpop.f32.mrb[0].mxu0
        %5276 = vmatprep.mubr.f32.mxu0 %v5150
        %5277 = vmatmul.mubr.f32.gmra.mrb[0].mxu0 %v5149
        %v5278 = vpop.f32.mrb[0].mxu0
        %v5279 = vadd.f32 0.0, %v5278
        %v5280 = vpop.f32.mrb[0].mxu0
        %5281 = vmatprep.mubr.f32.mxu0 %v5152
        %5282 = vmatmul.mubr.f32.gmra.mrb[0].mxu0 %v5151
        %v5283 = vpop.f32.mrb[0].mxu0
        %v5284 = vadd.f32 0.0, %v5283
        %v5285 = vpop.f32.mrb[0].mxu0
        %5286 = vmatprep.mubr.f32.mxu0 %v5154
        %5287 = vmatmul.mubr.f32.gmra.mrb[0].mxu0 %v5153
        %v5288 = vpop.f32.mrb[0].mxu0
        %v5289 = vadd.f32 0.0, %v5288
        %v5290 = vpop.f32.mrb[0].mxu0
        %5291 = vdwg.mxu0
        %s5292 = smul.u32 %s1687, 24
        %s5293 = scalar_lea.vmem [#allocation2], %s5292
        %5294 = vst [vmem:[%s5293 + $0x8] sm:$0xff] %v5254
        %5295 = vst [vmem:[%s5293 + $0x20] sm:$0xff] %v5259
        %5296 = vst [vmem:[%s5293 + $0x38] sm:$0xff] %v5264
        %5297 = vst [vmem:[%s5293 + $0x50] sm:$0xff] %v5269
        %5298 = vst [vmem:[%s5293 + $0x68] sm:$0xff] %v5274
        %5299 = vst [vmem:[%s5293 + $0x80] sm:$0xff] %v5279
        %5300 = vst [vmem:[%s5293 + $0x98] sm:$0xff] %v5284
        %5301 = vst [vmem:[%s5293 + $0xb0] sm:$0xff] %v5289
        %v5302 = vld [vmem:[%s4853] sm:$0xff]
        %v5303 = vld [vmem:[%s4853 + $0x8] sm:$0xff]
        %v5304 = vld [vmem:[%s4853 + $0x10] sm:$0xff]
        %v5305 = vld [vmem:[%s4853 + $0x18] sm:$0xff]
        %v5306 = vld [vmem:[%s4853 + $0x20] sm:$0xff]
        %v5307 = vld [vmem:[%s4853 + $0x28] sm:$0xff]
        %v5308 = vld [vmem:[%s4853 + $0x30] sm:$0xff]
        %v5309 = vld [vmem:[%s4853 + $0x38] sm:$0xff]
        %v5310 = vld [vmem:[%s4853 + $0x40] sm:$0xff]
        %v5311 = vld [vmem:[%s4853 + $0x48] sm:$0xff]
        %v5312 = vld [vmem:[%s4853 + $0x50] sm:$0xff]
        %v5313 = vld [vmem:[%s4853 + $0x58] sm:$0xff]
        %v5314 = vld [vmem:[%s4853 + $0x60] sm:$0xff]
        %v5315 = vld [vmem:[%s4853 + $0x68] sm:$0xff]
        %v5316 = vld [vmem:[%s4853 + $0x70] sm:$0xff]
        %v5317 = vld [vmem:[%s4853 + $0x78] sm:$0xff]
        %v5318 = vmul.f32 %v5302, %v5118
        %v5319 = vmul.f32 %v5303, %v5122
        %v5320 = vmul.f32 %v5304, %v5118
        %v5321 = vmul.f32 %v5305, %v5122
        %v5322 = vmul.f32 %v5306, %v5118
        %v5323 = vmul.f32 %v5307, %v5122
        %v5324 = vmul.f32 %v5308, %v5118
        %v5325 = vmul.f32 %v5309, %v5122
        %v5326 = vmul.f32 %v5310, %v5118
        %v5327 = vmul.f32 %v5311, %v5122
        %v5328 = vmul.f32 %v5312, %v5118
        %v5329 = vmul.f32 %v5313, %v5122
        %v5330 = vmul.f32 %v5314, %v5118
        %v5331 = vmul.f32 %v5315, %v5122
        %v5332 = vmul.f32 %v5316, %v5118
        %v5333 = vmul.f32 %v5317, %v5122
        %v5334 = vld [vmem:[#allocation21] sm:$0xff]
        %v5335 = vld [vmem:[#allocation21 + $0x8] sm:$0xff]
        %v5336 = vld [vmem:[#allocation21 + $0x10] sm:$0xff]
        %v5337 = vld [vmem:[#allocation21 + $0x18] sm:$0xff]
        %v5338 = vld [vmem:[#allocation21 + $0x20] sm:$0xff]
        %v5339 = vld [vmem:[#allocation21 + $0x28] sm:$0xff]
        %v5340 = vld [vmem:[#allocation21 + $0x30] sm:$0xff]
        %v5341 = vld [vmem:[#allocation21 + $0x38] sm:$0xff]
        %v5342 = vld [vmem:[#allocation21 + $0x40] sm:$0xff]
        %v5343 = vld [vmem:[#allocation21 + $0x48] sm:$0xff]
        %v5344 = vld [vmem:[#allocation21 + $0x50] sm:$0xff]
        %v5345 = vld [vmem:[#allocation21 + $0x58] sm:$0xff]
        %v5346 = vld [vmem:[#allocation21 + $0x60] sm:$0xff]
        %v5347 = vld [vmem:[#allocation21 + $0x68] sm:$0xff]
        %v5348 = vld [vmem:[#allocation21 + $0x70] sm:$0xff]
        %v5349 = vld [vmem:[#allocation21 + $0x78] sm:$0xff]
        %v5350 = vld [vmem:[#allocation21 + $0x80] sm:$0xff]
        %v5351 = vld [vmem:[#allocation21 + $0x88] sm:$0xff]
        %v5352 = vld [vmem:[#allocation21 + $0x90] sm:$0xff]
        %v5353 = vld [vmem:[#allocation21 + $0x98] sm:$0xff]
        %v5354 = vld [vmem:[#allocation21 + $0xa0] sm:$0xff]
        %v5355 = vld [vmem:[#allocation21 + $0xa8] sm:$0xff]
        %v5356 = vld [vmem:[#allocation21 + $0xb0] sm:$0xff]
        %v5357 = vld [vmem:[#allocation21 + $0xb8] sm:$0xff]
        %v5358 = vld [vmem:[#allocation21 + $0xc0] sm:$0xff]
        %v5359 = vld [vmem:[#allocation21 + $0xc8] sm:$0xff]
        %v5360 = vld [vmem:[#allocation21 + $0xd0] sm:$0xff]
        %v5361 = vld [vmem:[#allocation21 + $0xd8] sm:$0xff]
        %v5362 = vld [vmem:[#allocation21 + $0xe0] sm:$0xff]
        %v5363 = vld [vmem:[#allocation21 + $0xe8] sm:$0xff]
        %v5364 = vld [vmem:[#allocation21 + $0xf0] sm:$0xff]
        %v5365 = vld [vmem:[#allocation21 + $0xf8] sm:$0xff]
        %5366 = vmatprep.subr.mxu0 0.0
        %5367 = vmatpush1.msra.mxu0 %v5334
        %5368 = vmatprep.subr.mxu0 0.0
        %5369 = vmatpush1.msra.mxu0 %v5335
        %5370 = vmatprep.subr.mxu0 0.0
        %5371 = vmatpush1.msra.mxu0 %v5336
        %5372 = vmatprep.subr.mxu0 0.0
        %5373 = vmatpush1.msra.mxu0 %v5337
        %5374 = vmatprep.subr.mxu0 0.0
        %5375 = vmatpush1.msra.mxu0 %v5338
        %5376 = vmatprep.subr.mxu0 0.0
        %5377 = vmatpush1.msra.mxu0 %v5339
        %5378 = vmatprep.subr.mxu0 0.0
        %5379 = vmatpush1.msra.mxu0 %v5340
        %5380 = vmatprep.subr.mxu0 0.0
        %5381 = vmatpush1.msra.mxu0 %v5341
        %5382 = vmatprep.subr.mxu0 0.0
        %5383 = vmatpush1.msra.mxu0 %v5342
        %5384 = vmatprep.subr.mxu0 0.0
        %5385 = vmatpush1.msra.mxu0 %v5343
        %5386 = vmatprep.subr.mxu0 0.0
        %5387 = vmatpush1.msra.mxu0 %v5344
        %5388 = vmatprep.subr.mxu0 0.0
        %5389 = vmatpush1.msra.mxu0 %v5345
        %5390 = vmatprep.subr.mxu0 0.0
        %5391 = vmatpush1.msra.mxu0 %v5346
        %5392 = vmatprep.subr.mxu0 0.0
        %5393 = vmatpush1.msra.mxu0 %v5347
        %5394 = vmatprep.subr.mxu0 0.0
        %5395 = vmatpush1.msra.mxu0 %v5348
        %5396 = vmatprep.subr.mxu0 0.0
        %5397 = vmatpush1.msra.mxu0 %v5349
        %5398 = vmatprep.subr.mxu0 0.0
        %5399 = vmatpush1.msra.mxu0 %v5350
        %5400 = vmatprep.subr.mxu0 0.0
        %5401 = vmatpush1.msra.mxu0 %v5351
        %5402 = vmatprep.subr.mxu0 0.0
        %5403 = vmatpush1.msra.mxu0 %v5352
        %5404 = vmatprep.subr.mxu0 0.0
        %5405 = vmatpush1.msra.mxu0 %v5353
        %5406 = vmatprep.subr.mxu0 0.0
        %5407 = vmatpush1.msra.mxu0 %v5354
        %5408 = vmatprep.subr.mxu0 0.0
        %5409 = vmatpush1.msra.mxu0 %v5355
        %5410 = vmatprep.subr.mxu0 0.0
        %5411 = vmatpush1.msra.mxu0 %v5356
        %5412 = vmatprep.subr.mxu0 0.0
        %5413 = vmatpush1.msra.mxu0 %v5357
        %5414 = vmatprep.subr.mxu0 0.0
        %5415 = vmatpush1.msra.mxu0 %v5358
        %5416 = vmatprep.subr.mxu0 0.0
        %5417 = vmatpush1.msra.mxu0 %v5359
        %5418 = vmatprep.subr.mxu0 0.0
        %5419 = vmatpush1.msra.mxu0 %v5360
        %5420 = vmatprep.subr.mxu0 0.0
        %5421 = vmatpush1.msra.mxu0 %v5361
        %5422 = vmatprep.subr.mxu0 0.0
        %5423 = vmatpush1.msra.mxu0 %v5362
        %5424 = vmatprep.subr.mxu0 0.0
        %5425 = vmatpush1.msra.mxu0 %v5363
        %5426 = vmatprep.subr.mxu0 0.0
        %5427 = vmatpush1.msra.mxu0 %v5364
        %5428 = vmatprep.subr.mxu0 0.0
        %5429 = vmatpush1.msra.mxu0 %v5365
        %5430 = vmatprep.mubr.f32.mxu0 %v5319
        %5431 = vmatmul.mubr.f32.gmra.mrb[0].mxu0 %v5318
        %v5432 = vpop.f32.mrb[0].mxu0
        %v5433 = vadd.f32 0.0, %v5432
        %v5434 = vpop.f32.mrb[0].mxu0
        %5435 = vmatprep.mubr.f32.mxu0 %v5321
        %5436 = vmatmul.mubr.f32.gmra.mrb[0].mxu0 %v5320
        %v5437 = vpop.f32.mrb[0].mxu0
        %v5438 = vadd.f32 0.0, %v5437
        %v5439 = vpop.f32.mrb[0].mxu0
        %5440 = vmatprep.mubr.f32.mxu0 %v5323
        %5441 = vmatmul.mubr.f32.gmra.mrb[0].mxu0 %v5322
        %v5442 = vpop.f32.mrb[0].mxu0
        %v5443 = vadd.f32 0.0, %v5442
        %v5444 = vpop.f32.mrb[0].mxu0
        %5445 = vmatprep.mubr.f32.mxu0 %v5325
        %5446 = vmatmul.mubr.f32.gmra.mrb[0].mxu0 %v5324
        %v5447 = vpop.f32.mrb[0].mxu0
        %v5448 = vadd.f32 0.0, %v5447
        %v5449 = vpop.f32.mrb[0].mxu0
        %5450 = vmatprep.mubr.f32.mxu0 %v5327
        %5451 = vmatmul.mubr.f32.gmra.mrb[0].mxu0 %v5326
        %v5452 = vpop.f32.mrb[0].mxu0
        %v5453 = vadd.f32 0.0, %v5452
        %v5454 = vpop.f32.mrb[0].mxu0
        %5455 = vmatprep.mubr.f32.mxu0 %v5329
        %5456 = vmatmul.mubr.f32.gmra.mrb[0].mxu0 %v5328
        %v5457 = vpop.f32.mrb[0].mxu0
        %v5458 = vadd.f32 0.0, %v5457
        %v5459 = vpop.f32.mrb[0].mxu0
        %5460 = vmatprep.mubr.f32.mxu0 %v5331
        %5461 = vmatmul.mubr.f32.gmra.mrb[0].mxu0 %v5330
        %v5462 = vpop.f32.mrb[0].mxu0
        %v5463 = vadd.f32 0.0, %v5462
        %v5464 = vpop.f32.mrb[0].mxu0
        %5465 = vmatprep.mubr.f32.mxu0 %v5333
        %5466 = vmatmul.mubr.f32.gmra.mrb[0].mxu0 %v5332
        %v5467 = vpop.f32.mrb[0].mxu0
        %v5468 = vadd.f32 0.0, %v5467
        %v5469 = vpop.f32.mrb[0].mxu0
        %5470 = vdwg.mxu0
        %s5471 = smul.u32 %s1868, 24
        %s5472 = scalar_lea.vmem [#allocation2], %s5471
        %5473 = vst [vmem:[%s5472 + $0x8] sm:$0xff] %v5433
        %5474 = vst [vmem:[%s5472 + $0x20] sm:$0xff] %v5438
        %5475 = vst [vmem:[%s5472 + $0x38] sm:$0xff] %v5443
        %5476 = vst [vmem:[%s5472 + $0x50] sm:$0xff] %v5448
        %5477 = vst [vmem:[%s5472 + $0x68] sm:$0xff] %v5453
        %5478 = vst [vmem:[%s5472 + $0x80] sm:$0xff] %v5458
        %5479 = vst [vmem:[%s5472 + $0x98] sm:$0xff] %v5463
        %5480 = vst [vmem:[%s5472 + $0xb0] sm:$0xff] %v5468
        %v5481 = vld [vmem:[#allocation9] sm:$0x7]
        %v5482 = vld [vmem:[#allocation9 + $0x4] sm:$0x7]
        %v5483 = vld [vmem:[#allocation9 + $0x8] sm:$0x7]
        %v5484 = vld [vmem:[#allocation11] sm:$0x1]
        %v5486 = vlaneseq
        %v5487 = vshrl.u32 %v5486, 7
        %v5488 = vsub.s32 0, %v5487
        %v5489 = vrot.slane %v5484, %v5488
        %v5491 = vld [vmem:[%s835 + $0x7] sm:$0xff]
        %v5492 = vld [vmem:[%s835 + $0x1f] sm:$0xff]
        %v5493 = vld [vmem:[%s835 + $0x37] sm:$0xff]
        %v5494 = vld [vmem:[%s835 + $0x4f] sm:$0xff]
        %v5495 = vld [vmem:[%s835 + $0x67] sm:$0xff]
        %v5496 = vld [vmem:[%s835 + $0x7f] sm:$0xff]
        %v5497 = vld [vmem:[%s835 + $0x97] sm:$0xff]
        %v5498 = vld [vmem:[%s835 + $0xaf] sm:$0xff]
        %v5499 = vld [vmem:[%s835 + $0xc7] sm:$0xff]
        %v5500 = vld [vmem:[%s835 + $0xdf] sm:$0xff]
        %v5501 = vlaneseq
        %v5502 = vshrl.u32 %v5501, 7
        %v5503 = vsub.s32 0, %v5502
        %v5504 = vrot.slane %v5481, %v5503
        %v5505 = vmul.f32 %v5491, %v5504
        %v5506 = vmul.f32 %v5492, %v5504
        %v5507 = vmul.f32 %v5493, %v5504
        %v5508 = vmul.f32 %v5494, %v5504
        %v5509 = vmul.f32 %v5495, %v5504
        %v5510 = vmul.f32 %v5496, %v5504
        %v5511 = vmul.f32 %v5497, %v5504
        %v5512 = vmul.f32 %v5498, %v5504
        %v5513 = vadd.f32 %v5489, %v5505
        %v5514 = vadd.f32 %v5489, %v5506
        %v5515 = vadd.f32 %v5489, %v5507
        %v5516 = vadd.f32 %v5489, %v5508
        %v5517 = vadd.f32 %v5489, %v5509
        %v5518 = vadd.f32 %v5489, %v5510
        %v5519 = vadd.f32 %v5489, %v5511
        %v5520 = vadd.f32 %v5489, %v5512
        %v5521 = vlaneseq
        %v5522 = vshrl.u32 %v5521, 7
        %v5523 = vsub.s32 0, %v5522
        %v5524 = vrot.slane %v5482, %v5523
        %v5525 = vmul.f32 %v5492, %v5524
        %v5526 = vmul.f32 %v5493, %v5524
        %v5527 = vmul.f32 %v5494, %v5524
        %v5528 = vmul.f32 %v5495, %v5524
        %v5529 = vmul.f32 %v5496, %v5524
        %v5530 = vmul.f32 %v5497, %v5524
        %v5531 = vmul.f32 %v5498, %v5524
        %v5532 = vmul.f32 %v5499, %v5524
        %v5533 = vadd.f32 %v5513, %v5525
        %v5534 = vadd.f32 %v5514, %v5526
        %v5535 = vadd.f32 %v5515, %v5527
        %v5536 = vadd.f32 %v5516, %v5528
        %v5537 = vadd.f32 %v5517, %v5529
        %v5538 = vadd.f32 %v5518, %v5530
        %v5539 = vadd.f32 %v5519, %v5531
        %v5540 = vadd.f32 %v5520, %v5532
        %v5541 = vlaneseq
        %v5542 = vshrl.u32 %v5541, 7
        %v5543 = vsub.s32 0, %v5542
        %v5544 = vrot.slane %v5483, %v5543
        %v5545 = vmul.f32 %v5493, %v5544
        %v5546 = vmul.f32 %v5494, %v5544
        %v5547 = vmul.f32 %v5495, %v5544
        %v5548 = vmul.f32 %v5496, %v5544
        %v5549 = vmul.f32 %v5497, %v5544
        %v5550 = vmul.f32 %v5498, %v5544
        %v5551 = vmul.f32 %v5499, %v5544
        %v5552 = vmul.f32 %v5500, %v5544
        %v5553 = vadd.f32 %v5533, %v5545
        %v5554 = vadd.f32 %v5534, %v5546
        %v5555 = vadd.f32 %v5535, %v5547
        %v5556 = vadd.f32 %v5536, %v5548
        %v5557 = vadd.f32 %v5537, %v5549
        %v5558 = vadd.f32 %v5538, %v5550
        %v5559 = vadd.f32 %v5539, %v5551
        %v5560 = vadd.f32 %v5540, %v5552
        %v5561 = vld [vmem:[%s835 + $0x8] sm:$0xff]
        %v5562 = vld [vmem:[%s835 + $0x20] sm:$0xff]
        %v5563 = vld [vmem:[%s835 + $0x38] sm:$0xff]
        %v5564 = vld [vmem:[%s835 + $0x50] sm:$0xff]
        %v5565 = vld [vmem:[%s835 + $0x68] sm:$0xff]
        %v5566 = vld [vmem:[%s835 + $0x80] sm:$0xff]
        %v5567 = vld [vmem:[%s835 + $0x98] sm:$0xff]
        %v5568 = vld [vmem:[%s835 + $0xb0] sm:$0xff]
        %v5569 = vld [vmem:[%s835 + $0xc8] sm:$0xff]
        %v5570 = vld [vmem:[%s835 + $0xe0] sm:$0xff]
        %v5571 = vlaneseq
        %v5572 = vshrl.u32 %v5571, 7
        %v5573 = vsub.s32 1, %v5572
        %v5574 = vrot.slane %v5481, %v5573
        %v5575 = vmul.f32 %v5561, %v5574
        %v5576 = vmul.f32 %v5562, %v5574
        %v5577 = vmul.f32 %v5563, %v5574
        %v5578 = vmul.f32 %v5564, %v5574
        %v5579 = vmul.f32 %v5565, %v5574
        %v5580 = vmul.f32 %v5566, %v5574
        %v5581 = vmul.f32 %v5567, %v5574
        %v5582 = vmul.f32 %v5568, %v5574
        %v5583 = vadd.f32 %v5553, %v5575
        %v5584 = vadd.f32 %v5554, %v5576
        %v5585 = vadd.f32 %v5555, %v5577
        %v5586 = vadd.f32 %v5556, %v5578
        %v5587 = vadd.f32 %v5557, %v5579
        %v5588 = vadd.f32 %v5558, %v5580
        %v5589 = vadd.f32 %v5559, %v5581
        %v5590 = vadd.f32 %v5560, %v5582
        %v5591 = vlaneseq
        %v5592 = vshrl.u32 %v5591, 7
        %v5593 = vsub.s32 1, %v5592
        %v5594 = vrot.slane %v5482, %v5593
        %v5595 = vmul.f32 %v5562, %v5594
        %v5596 = vmul.f32 %v5563, %v5594
        %v5597 = vmul.f32 %v5564, %v5594
        %v5598 = vmul.f32 %v5565, %v5594
        %v5599 = vmul.f32 %v5566, %v5594
        %v5600 = vmul.f32 %v5567, %v5594
        %v5601 = vmul.f32 %v5568, %v5594
        %v5602 = vmul.f32 %v5569, %v5594
        %v5603 = vadd.f32 %v5583, %v5595
        %v5604 = vadd.f32 %v5584, %v5596
        %v5605 = vadd.f32 %v5585, %v5597
        %v5606 = vadd.f32 %v5586, %v5598
        %v5607 = vadd.f32 %v5587, %v5599
        %v5608 = vadd.f32 %v5588, %v5600
        %v5609 = vadd.f32 %v5589, %v5601
        %v5610 = vadd.f32 %v5590, %v5602
        %v5611 = vlaneseq
        %v5612 = vshrl.u32 %v5611, 7
        %v5613 = vsub.s32 1, %v5612
        %v5614 = vrot.slane %v5483, %v5613
        %v5615 = vmul.f32 %v5563, %v5614
        %v5616 = vmul.f32 %v5564, %v5614
        %v5617 = vmul.f32 %v5565, %v5614
        %v5618 = vmul.f32 %v5566, %v5614
        %v5619 = vmul.f32 %v5567, %v5614
        %v5620 = vmul.f32 %v5568, %v5614
        %v5621 = vmul.f32 %v5569, %v5614
        %v5622 = vmul.f32 %v5570, %v5614
        %v5623 = vadd.f32 %v5603, %v5615
        %v5624 = vadd.f32 %v5604, %v5616
        %v5625 = vadd.f32 %v5605, %v5617
        %v5626 = vadd.f32 %v5606, %v5618
        %v5627 = vadd.f32 %v5607, %v5619
        %v5628 = vadd.f32 %v5608, %v5620
        %v5629 = vadd.f32 %v5609, %v5621
        %v5630 = vadd.f32 %v5610, %v5622
        %v5631 = vld [vmem:[%s835 + $0x9] sm:$0xff]
        %v5632 = vld [vmem:[%s835 + $0x21] sm:$0xff]
        %v5633 = vld [vmem:[%s835 + $0x39] sm:$0xff]
        %v5634 = vld [vmem:[%s835 + $0x51] sm:$0xff]
        %v5635 = vld [vmem:[%s835 + $0x69] sm:$0xff]
        %v5636 = vld [vmem:[%s835 + $0x81] sm:$0xff]
        %v5637 = vld [vmem:[%s835 + $0x99] sm:$0xff]
        %v5638 = vld [vmem:[%s835 + $0xb1] sm:$0xff]
        %v5639 = vld [vmem:[%s835 + $0xc9] sm:$0xff]
        %v5640 = vld [vmem:[%s835 + $0xe1] sm:$0xff]
        %v5641 = vlaneseq
        %v5642 = vshrl.u32 %v5641, 7
        %v5643 = vsub.s32 2, %v5642
        %v5644 = vrot.slane %v5481, %v5643
        %v5645 = vmul.f32 %v5631, %v5644
        %v5646 = vmul.f32 %v5632, %v5644
        %v5647 = vmul.f32 %v5633, %v5644
        %v5648 = vmul.f32 %v5634, %v5644
        %v5649 = vmul.f32 %v5635, %v5644
        %v5650 = vmul.f32 %v5636, %v5644
        %v5651 = vmul.f32 %v5637, %v5644
        %v5652 = vmul.f32 %v5638, %v5644
        %v5653 = vadd.f32 %v5623, %v5645
        %v5654 = vadd.f32 %v5624, %v5646
        %v5655 = vadd.f32 %v5625, %v5647
        %v5656 = vadd.f32 %v5626, %v5648
        %v5657 = vadd.f32 %v5627, %v5649
        %v5658 = vadd.f32 %v5628, %v5650
        %v5659 = vadd.f32 %v5629, %v5651
        %v5660 = vadd.f32 %v5630, %v5652
        %v5661 = vlaneseq
        %v5662 = vshrl.u32 %v5661, 7
        %v5663 = vsub.s32 2, %v5662
        %v5664 = vrot.slane %v5482, %v5663
        %v5665 = vmul.f32 %v5632, %v5664
        %v5666 = vmul.f32 %v5633, %v5664
        %v5667 = vmul.f32 %v5634, %v5664
        %v5668 = vmul.f32 %v5635, %v5664
        %v5669 = vmul.f32 %v5636, %v5664
        %v5670 = vmul.f32 %v5637, %v5664
        %v5671 = vmul.f32 %v5638, %v5664
        %v5672 = vmul.f32 %v5639, %v5664
        %v5673 = vadd.f32 %v5653, %v5665
        %v5674 = vadd.f32 %v5654, %v5666
        %v5675 = vadd.f32 %v5655, %v5667
        %v5676 = vadd.f32 %v5656, %v5668
        %v5677 = vadd.f32 %v5657, %v5669
        %v5678 = vadd.f32 %v5658, %v5670
        %v5679 = vadd.f32 %v5659, %v5671
        %v5680 = vadd.f32 %v5660, %v5672
        %v5681 = vlaneseq
        %v5682 = vshrl.u32 %v5681, 7
        %v5683 = vsub.s32 2, %v5682
        %v5684 = vrot.slane %v5483, %v5683
        %v5685 = vmul.f32 %v5633, %v5684
        %v5686 = vmul.f32 %v5634, %v5684
        %v5687 = vmul.f32 %v5635, %v5684
        %v5688 = vmul.f32 %v5636, %v5684
        %v5689 = vmul.f32 %v5637, %v5684
        %v5690 = vmul.f32 %v5638, %v5684
        %v5691 = vmul.f32 %v5639, %v5684
        %v5692 = vmul.f32 %v5640, %v5684
        %v5693 = vadd.f32 %v5673, %v5685
        %v5694 = vadd.f32 %v5674, %v5686
        %v5695 = vadd.f32 %v5675, %v5687
        %v5696 = vadd.f32 %v5676, %v5688
        %v5697 = vadd.f32 %v5677, %v5689
        %v5698 = vadd.f32 %v5678, %v5690
        %v5699 = vadd.f32 %v5679, %v5691
        %v5700 = vadd.f32 %v5680, %v5692
        %v5701 = vadd.f32 %v5693, 3.0
        %v5702 = vadd.f32 %v5694, 3.0
        %v5703 = vadd.f32 %v5695, 3.0
        %v5704 = vadd.f32 %v5696, 3.0
        %v5705 = vadd.f32 %v5697, 3.0
        %v5706 = vadd.f32 %v5698, 3.0
        %v5707 = vadd.f32 %v5699, 3.0
        %v5708 = vadd.f32 %v5700, 3.0
        %v5709 = vmax.f32 %v5701, 0.0
        %v5710 = vmax.f32 %v5702, 0.0
        %v5711 = vmax.f32 %v5703, 0.0
        %v5712 = vmax.f32 %v5704, 0.0
        %v5713 = vmax.f32 %v5705, 0.0
        %v5714 = vmax.f32 %v5706, 0.0
        %v5715 = vmax.f32 %v5707, 0.0
        %v5716 = vmax.f32 %v5708, 0.0
        %v5717 = vmin.f32 %v5709, 6.0
        %v5718 = vmin.f32 %v5710, 6.0
        %v5719 = vmin.f32 %v5711, 6.0
        %v5720 = vmin.f32 %v5712, 6.0
        %v5721 = vmin.f32 %v5713, 6.0
        %v5722 = vmin.f32 %v5714, 6.0
        %v5723 = vmin.f32 %v5715, 6.0
        %v5724 = vmin.f32 %v5716, 6.0
        %v5725 = vmul.f32 %v5717, 0.16666667
        %v5726 = vmul.f32 %v5718, 0.16666667
        %v5727 = vmul.f32 %v5719, 0.16666667
        %v5728 = vmul.f32 %v5720, 0.16666667
        %v5729 = vmul.f32 %v5721, 0.16666667
        %v5730 = vmul.f32 %v5722, 0.16666667
        %v5731 = vmul.f32 %v5723, 0.16666667
        %v5732 = vmul.f32 %v5724, 0.16666667
        %v5733 = vmul.f32 %v5693, %v5725
        %v5734 = vmul.f32 %v5694, %v5726
        %v5735 = vmul.f32 %v5695, %v5727
        %v5736 = vmul.f32 %v5696, %v5728
        %v5737 = vmul.f32 %v5697, %v5729
        %v5738 = vmul.f32 %v5698, %v5730
        %v5739 = vmul.f32 %v5699, %v5731
        %v5740 = vmul.f32 %v5700, %v5732
        %5741 = vst [vmem:[%s1087] sm:$0xff] %v5733
        %5742 = vst [vmem:[%s1087 + $0x8] sm:$0xff] %v5734
        %5743 = vst [vmem:[%s1087 + $0x10] sm:$0xff] %v5735
        %5744 = vst [vmem:[%s1087 + $0x18] sm:$0xff] %v5736
        %5745 = vst [vmem:[%s1087 + $0x20] sm:$0xff] %v5737
        %5746 = vst [vmem:[%s1087 + $0x28] sm:$0xff] %v5738
        %5747 = vst [vmem:[%s1087 + $0x30] sm:$0xff] %v5739
        %5748 = vst [vmem:[%s1087 + $0x38] sm:$0xff] %v5740
        %v5749 = vadd.f32 %v5733, %v5734
        %v5750 = vadd.f32 %v5749, %v5735
        %v5751 = vadd.f32 %v5750, %v5736
        %v5752 = vadd.f32 %v5751, %v5737
        %v5753 = vadd.f32 %v5752, %v5738
        %v5754 = vadd.f32 %v5753, %v5739
        %v5755 = vadd.f32 %v5754, %v5740
        %v5756 = vrot.slane %v5755, 4
        %v5757 = vadd.f32 %v5755, %v5756
        %v5758 = vrot.slane %v5757, 2
        %v5759 = vadd.f32 %v5757, %v5758
        %v5760 = vrot.slane %v5759, 1
        %v5761 = vadd.f32 %v5759, %v5760
        %v5762 = vadd.f32 %v5761, 0.0
        %v5763 = vld [vmem:[%s1111 + $0x7] sm:$0xff]
        %v5764 = vld [vmem:[%s1111 + $0x1f] sm:$0xff]
        %v5765 = vld [vmem:[%s1111 + $0x37] sm:$0xff]
        %v5766 = vld [vmem:[%s1111 + $0x4f] sm:$0xff]
        %v5767 = vld [vmem:[%s1111 + $0x67] sm:$0xff]
        %v5768 = vld [vmem:[%s1111 + $0x7f] sm:$0xff]
        %v5769 = vld [vmem:[%s1111 + $0x97] sm:$0xff]
        %v5770 = vld [vmem:[%s1111 + $0xaf] sm:$0xff]
        %v5771 = vld [vmem:[%s1111 + $0xc7] sm:$0xff]
        %v5772 = vld [vmem:[%s1111 + $0xdf] sm:$0xff]
        %v5773 = vmul.f32 %v5763, %v5504
        %v5774 = vmul.f32 %v5764, %v5504
        %v5775 = vmul.f32 %v5765, %v5504
        %v5776 = vmul.f32 %v5766, %v5504
        %v5777 = vmul.f32 %v5767, %v5504
        %v5778 = vmul.f32 %v5768, %v5504
        %v5779 = vmul.f32 %v5769, %v5504
        %v5780 = vmul.f32 %v5770, %v5504
        %v5781 = vadd.f32 %v5489, %v5773
        %v5782 = vadd.f32 %v5489, %v5774
        %v5783 = vadd.f32 %v5489, %v5775
        %v5784 = vadd.f32 %v5489, %v5776
        %v5785 = vadd.f32 %v5489, %v5777
        %v5786 = vadd.f32 %v5489, %v5778
        %v5787 = vadd.f32 %v5489, %v5779
        %v5788 = vadd.f32 %v5489, %v5780
        %v5789 = vmul.f32 %v5764, %v5524
        %v5790 = vmul.f32 %v5765, %v5524
        %v5791 = vmul.f32 %v5766, %v5524
        %v5792 = vmul.f32 %v5767, %v5524
        %v5793 = vmul.f32 %v5768, %v5524
        %v5794 = vmul.f32 %v5769, %v5524
        %v5795 = vmul.f32 %v5770, %v5524
        %v5796 = vmul.f32 %v5771, %v5524
        %v5797 = vadd.f32 %v5781, %v5789
        %v5798 = vadd.f32 %v5782, %v5790
        %v5799 = vadd.f32 %v5783, %v5791
        %v5800 = vadd.f32 %v5784, %v5792
        %v5801 = vadd.f32 %v5785, %v5793
        %v5802 = vadd.f32 %v5786, %v5794
        %v5803 = vadd.f32 %v5787, %v5795
        %v5804 = vadd.f32 %v5788, %v5796
        %v5805 = vmul.f32 %v5765, %v5544
        %v5806 = vmul.f32 %v5766, %v5544
        %v5807 = vmul.f32 %v5767, %v5544
        %v5808 = vmul.f32 %v5768, %v5544
        %v5809 = vmul.f32 %v5769, %v5544
        %v5810 = vmul.f32 %v5770, %v5544
        %v5811 = vmul.f32 %v5771, %v5544
        %v5812 = vmul.f32 %v5772, %v5544
        %v5813 = vadd.f32 %v5797, %v5805
        %v5814 = vadd.f32 %v5798, %v5806
        %v5815 = vadd.f32 %v5799, %v5807
        %v5816 = vadd.f32 %v5800, %v5808
        %v5817 = vadd.f32 %v5801, %v5809
        %v5818 = vadd.f32 %v5802, %v5810
        %v5819 = vadd.f32 %v5803, %v5811
        %v5820 = vadd.f32 %v5804, %v5812
        %v5821 = vld [vmem:[%s1111 + $0x8] sm:$0xff]
        %v5822 = vld [vmem:[%s1111 + $0x20] sm:$0xff]
        %v5823 = vld [vmem:[%s1111 + $0x38] sm:$0xff]
        %v5824 = vld [vmem:[%s1111 + $0x50] sm:$0xff]
        %v5825 = vld [vmem:[%s1111 + $0x68] sm:$0xff]
        %v5826 = vld [vmem:[%s1111 + $0x80] sm:$0xff]
        %v5827 = vld [vmem:[%s1111 + $0x98] sm:$0xff]
        %v5828 = vld [vmem:[%s1111 + $0xb0] sm:$0xff]
        %v5829 = vld [vmem:[%s1111 + $0xc8] sm:$0xff]
        %v5830 = vld [vmem:[%s1111 + $0xe0] sm:$0xff]
        %v5831 = vmul.f32 %v5821, %v5574
        %v5832 = vmul.f32 %v5822, %v5574
        %v5833 = vmul.f32 %v5823, %v5574
        %v5834 = vmul.f32 %v5824, %v5574
        %v5835 = vmul.f32 %v5825, %v5574
        %v5836 = vmul.f32 %v5826, %v5574
        %v5837 = vmul.f32 %v5827, %v5574
        %v5838 = vmul.f32 %v5828, %v5574
        %v5839 = vadd.f32 %v5813, %v5831
        %v5840 = vadd.f32 %v5814, %v5832
        %v5841 = vadd.f32 %v5815, %v5833
        %v5842 = vadd.f32 %v5816, %v5834
        %v5843 = vadd.f32 %v5817, %v5835
        %v5844 = vadd.f32 %v5818, %v5836
        %v5845 = vadd.f32 %v5819, %v5837
        %v5846 = vadd.f32 %v5820, %v5838
        %v5847 = vmul.f32 %v5822, %v5594
        %v5848 = vmul.f32 %v5823, %v5594
        %v5849 = vmul.f32 %v5824, %v5594
        %v5850 = vmul.f32 %v5825, %v5594
        %v5851 = vmul.f32 %v5826, %v5594
        %v5852 = vmul.f32 %v5827, %v5594
        %v5853 = vmul.f32 %v5828, %v5594
        %v5854 = vmul.f32 %v5829, %v5594
        %v5855 = vadd.f32 %v5839, %v5847
        %v5856 = vadd.f32 %v5840, %v5848
        %v5857 = vadd.f32 %v5841, %v5849
        %v5858 = vadd.f32 %v5842, %v5850
        %v5859 = vadd.f32 %v5843, %v5851
        %v5860 = vadd.f32 %v5844, %v5852
        %v5861 = vadd.f32 %v5845, %v5853
        %v5862 = vadd.f32 %v5846, %v5854
        %v5863 = vmul.f32 %v5823, %v5614
        %v5864 = vmul.f32 %v5824, %v5614
        %v5865 = vmul.f32 %v5825, %v5614
        %v5866 = vmul.f32 %v5826, %v5614
        %v5867 = vmul.f32 %v5827, %v5614
        %v5868 = vmul.f32 %v5828, %v5614
        %v5869 = vmul.f32 %v5829, %v5614
        %v5870 = vmul.f32 %v5830, %v5614
        %v5871 = vadd.f32 %v5855, %v5863
        %v5872 = vadd.f32 %v5856, %v5864
        %v5873 = vadd.f32 %v5857, %v5865
        %v5874 = vadd.f32 %v5858, %v5866
        %v5875 = vadd.f32 %v5859, %v5867
        %v5876 = vadd.f32 %v5860, %v5868
        %v5877 = vadd.f32 %v5861, %v5869
        %v5878 = vadd.f32 %v5862, %v5870
        %v5879 = vld [vmem:[%s1111 + $0x9] sm:$0xff]
        %v5880 = vld [vmem:[%s1111 + $0x21] sm:$0xff]
        %v5881 = vld [vmem:[%s1111 + $0x39] sm:$0xff]
        %v5882 = vld [vmem:[%s1111 + $0x51] sm:$0xff]
        %v5883 = vld [vmem:[%s1111 + $0x69] sm:$0xff]
        %v5884 = vld [vmem:[%s1111 + $0x81] sm:$0xff]
        %v5885 = vld [vmem:[%s1111 + $0x99] sm:$0xff]
        %v5886 = vld [vmem:[%s1111 + $0xb1] sm:$0xff]
        %v5887 = vld [vmem:[%s1111 + $0xc9] sm:$0xff]
        %v5888 = vld [vmem:[%s1111 + $0xe1] sm:$0xff]
        %v5889 = vmul.f32 %v5879, %v5644
        %v5890 = vmul.f32 %v5880, %v5644
        %v5891 = vmul.f32 %v5881, %v5644
        %v5892 = vmul.f32 %v5882, %v5644
        %v5893 = vmul.f32 %v5883, %v5644
        %v5894 = vmul.f32 %v5884, %v5644
        %v5895 = vmul.f32 %v5885, %v5644
        %v5896 = vmul.f32 %v5886, %v5644
        %v5897 = vadd.f32 %v5871, %v5889
        %v5898 = vadd.f32 %v5872, %v5890
        %v5899 = vadd.f32 %v5873, %v5891
        %v5900 = vadd.f32 %v5874, %v5892
        %v5901 = vadd.f32 %v5875, %v5893
        %v5902 = vadd.f32 %v5876, %v5894
        %v5903 = vadd.f32 %v5877, %v5895
        %v5904 = vadd.f32 %v5878, %v5896
        %v5905 = vmul.f32 %v5880, %v5664
        %v5906 = vmul.f32 %v5881, %v5664
        %v5907 = vmul.f32 %v5882, %v5664
        %v5908 = vmul.f32 %v5883, %v5664
        %v5909 = vmul.f32 %v5884, %v5664
        %v5910 = vmul.f32 %v5885, %v5664
        %v5911 = vmul.f32 %v5886, %v5664
        %v5912 = vmul.f32 %v5887, %v5664
        %v5913 = vadd.f32 %v5897, %v5905
        %v5914 = vadd.f32 %v5898, %v5906
        %v5915 = vadd.f32 %v5899, %v5907
        %v5916 = vadd.f32 %v5900, %v5908
        %v5917 = vadd.f32 %v5901, %v5909
        %v5918 = vadd.f32 %v5902, %v5910
        %v5919 = vadd.f32 %v5903, %v5911
        %v5920 = vadd.f32 %v5904, %v5912
        %v5921 = vmul.f32 %v5881, %v5684
        %v5922 = vmul.f32 %v5882, %v5684
        %v5923 = vmul.f32 %v5883, %v5684
        %v5924 = vmul.f32 %v5884, %v5684
        %v5925 = vmul.f32 %v5885, %v5684
        %v5926 = vmul.f32 %v5886, %v5684
        %v5927 = vmul.f32 %v5887, %v5684
        %v5928 = vmul.f32 %v5888, %v5684
        %v5929 = vadd.f32 %v5913, %v5921
        %v5930 = vadd.f32 %v5914, %v5922
        %v5931 = vadd.f32 %v5915, %v5923
        %v5932 = vadd.f32 %v5916, %v5924
        %v5933 = vadd.f32 %v5917, %v5925
        %v5934 = vadd.f32 %v5918, %v5926
        %v5935 = vadd.f32 %v5919, %v5927
        %v5936 = vadd.f32 %v5920, %v5928
        %v5937 = vadd.f32 %v5929, 3.0
        %v5938 = vadd.f32 %v5930, 3.0
        %v5939 = vadd.f32 %v5931, 3.0
        %v5940 = vadd.f32 %v5932, 3.0
        %v5941 = vadd.f32 %v5933, 3.0
        %v5942 = vadd.f32 %v5934, 3.0
        %v5943 = vadd.f32 %v5935, 3.0
        %v5944 = vadd.f32 %v5936, 3.0
        %v5945 = vmax.f32 %v5937, 0.0
        %v5946 = vmax.f32 %v5938, 0.0
        %v5947 = vmax.f32 %v5939, 0.0
        %v5948 = vmax.f32 %v5940, 0.0
        %v5949 = vmax.f32 %v5941, 0.0
        %v5950 = vmax.f32 %v5942, 0.0
        %v5951 = vmax.f32 %v5943, 0.0
        %v5952 = vmax.f32 %v5944, 0.0
        %v5953 = vmin.f32 %v5945, 6.0
        %v5954 = vmin.f32 %v5946, 6.0
        %v5955 = vmin.f32 %v5947, 6.0
        %v5956 = vmin.f32 %v5948, 6.0
        %v5957 = vmin.f32 %v5949, 6.0
        %v5958 = vmin.f32 %v5950, 6.0
        %v5959 = vmin.f32 %v5951, 6.0
        %v5960 = vmin.f32 %v5952, 6.0
        %v5961 = vmul.f32 %v5953, 0.16666667
        %v5962 = vmul.f32 %v5954, 0.16666667
        %v5963 = vmul.f32 %v5955, 0.16666667
        %v5964 = vmul.f32 %v5956, 0.16666667
        %v5965 = vmul.f32 %v5957, 0.16666667
        %v5966 = vmul.f32 %v5958, 0.16666667
        %v5967 = vmul.f32 %v5959, 0.16666667
        %v5968 = vmul.f32 %v5960, 0.16666667
        %v5969 = vmul.f32 %v5929, %v5961
        %v5970 = vmul.f32 %v5930, %v5962
        %v5971 = vmul.f32 %v5931, %v5963
        %v5972 = vmul.f32 %v5932, %v5964
        %v5973 = vmul.f32 %v5933, %v5965
        %v5974 = vmul.f32 %v5934, %v5966
        %v5975 = vmul.f32 %v5935, %v5967
        %v5976 = vmul.f32 %v5936, %v5968
        %5977 = vst [vmem:[%s1327] sm:$0xff] %v5969
        %5978 = vst [vmem:[%s1327 + $0x8] sm:$0xff] %v5970
        %5979 = vst [vmem:[%s1327 + $0x10] sm:$0xff] %v5971
        %5980 = vst [vmem:[%s1327 + $0x18] sm:$0xff] %v5972
        %5981 = vst [vmem:[%s1327 + $0x20] sm:$0xff] %v5973
        %5982 = vst [vmem:[%s1327 + $0x28] sm:$0xff] %v5974
        %5983 = vst [vmem:[%s1327 + $0x30] sm:$0xff] %v5975
        %5984 = vst [vmem:[%s1327 + $0x38] sm:$0xff] %v5976
        %v5985 = vadd.f32 %v5969, %v5970
        %v5986 = vadd.f32 %v5985, %v5971
        %v5987 = vadd.f32 %v5986, %v5972
        %v5988 = vadd.f32 %v5987, %v5973
        %v5989 = vadd.f32 %v5988, %v5974
        %v5990 = vadd.f32 %v5989, %v5975
        %v5991 = vadd.f32 %v5990, %v5976
        %v5992 = vrot.slane %v5991, 4
        %v5993 = vadd.f32 %v5991, %v5992
        %v5994 = vrot.slane %v5993, 2
        %v5995 = vadd.f32 %v5993, %v5994
        %v5996 = vrot.slane %v5995, 1
        %v5997 = vadd.f32 %v5995, %v5996
        %v5998 = vadd.f32 %v5762, %v5997
        %v5999 = vmul.f32 %v5998, 0.0078125
        %v6000 = vld [vmem:[#allocation12] sm:$0xff]
        %v6001 = vld [vmem:[#allocation12 + $0x8] sm:$0xff]
        %v6002 = vld [vmem:[#allocation12 + $0x10] sm:$0xff]
        %v6003 = vld [vmem:[#allocation12 + $0x18] sm:$0xff]
        %v6004 = vld [vmem:[#allocation12 + $0x20] sm:$0xff]
        %v6005 = vld [vmem:[#allocation12 + $0x28] sm:$0xff]
        %v6006 = vld [vmem:[#allocation12 + $0x30] sm:$0xff]
        %v6007 = vld [vmem:[#allocation12 + $0x38] sm:$0xff]
        %v6008 = vld [vmem:[#allocation12 + $0x40] sm:$0xff]
        %v6009 = vld [vmem:[#allocation12 + $0x48] sm:$0xff]
        %v6010 = vld [vmem:[#allocation12 + $0x50] sm:$0xff]
        %v6011 = vld [vmem:[#allocation12 + $0x58] sm:$0xff]
        %v6012 = vld [vmem:[#allocation12 + $0x60] sm:$0xff]
        %v6013 = vld [vmem:[#allocation12 + $0x68] sm:$0xff]
        %v6014 = vld [vmem:[#allocation12 + $0x70] sm:$0xff]
        %v6015 = vld [vmem:[#allocation12 + $0x78] sm:$0xff]
        %v6016 = vld [vmem:[#allocation14] sm:$0x1]
        %6017 = vmatprep.subr.mxu0 0.0
        %6018 = vmatpush1.msra.mxu0 %v6000
        %6019 = vmatprep.subr.mxu0 0.0
        %6020 = vmatpush1.msra.mxu0 %v6001
        %6021 = vmatprep.subr.mxu0 0.0
        %6022 = vmatpush1.msra.mxu0 %v6002
        %6023 = vmatprep.subr.mxu0 0.0
        %6024 = vmatpush1.msra.mxu0 %v6003
        %6025 = vmatprep.subr.mxu0 0.0
        %6026 = vmatpush1.msra.mxu0 %v6004
        %6027 = vmatprep.subr.mxu0 0.0
        %6028 = vmatpush1.msra.mxu0 %v6005
        %6029 = vmatprep.subr.mxu0 0.0
        %6030 = vmatpush1.msra.mxu0 %v6006
        %6031 = vmatprep.subr.mxu0 0.0
        %6032 = vmatpush1.msra.mxu0 %v6007
        %6033 = vmatprep.subr.mxu0 0.0
        %6034 = vmatpush1.msra.mxu0 %v6008
        %6035 = vmatprep.subr.mxu0 0.0
        %6036 = vmatpush1.msra.mxu0 %v6009
        %6037 = vmatprep.subr.mxu0 0.0
        %6038 = vmatpush1.msra.mxu0 %v6010
        %6039 = vmatprep.subr.mxu0 0.0
        %6040 = vmatpush1.msra.mxu0 %v6011
        %6041 = vmatprep.subr.mxu0 0.0
        %6042 = vmatpush1.msra.mxu0 %v6012
        %6043 = vmatprep.subr.mxu0 0.0
        %6044 = vmatpush1.msra.mxu0 %v6013
        %6045 = vmatprep.subr.mxu0 0.0
        %6046 = vmatpush1.msra.mxu0 %v6014
        %6047 = vmatprep.subr.mxu0 0.0
        %6048 = vmatpush1.msra.mxu0 %v6015
        %6049 = vmatprep.subr.mxu0 0.0
        %6050 = vmatpush1.msra.mxu0 0.0
        %6051 = vmatprep.subr.mxu0 0.0
        %6052 = vmatpush1.msra.mxu0 0.0
        %6053 = vmatprep.subr.mxu0 0.0
        %6054 = vmatpush1.msra.mxu0 0.0
        %6055 = vmatprep.subr.mxu0 0.0
        %6056 = vmatpush1.msra.mxu0 0.0
        %6057 = vmatprep.subr.mxu0 0.0
        %6058 = vmatpush1.msra.mxu0 0.0
        %6059 = vmatprep.subr.mxu0 0.0
        %6060 = vmatpush1.msra.mxu0 0.0
        %6061 = vmatprep.subr.mxu0 0.0
        %6062 = vmatpush1.msra.mxu0 0.0
        %6063 = vmatprep.subr.mxu0 0.0
        %6064 = vmatpush1.msra.mxu0 0.0
        %6065 = vmatprep.subr.mxu0 0.0
        %6066 = vmatpush1.msra.mxu0 0.0
        %6067 = vmatprep.subr.mxu0 0.0
        %6068 = vmatpush1.msra.mxu0 0.0
        %6069 = vmatprep.subr.mxu0 0.0
        %6070 = vmatpush1.msra.mxu0 0.0
        %6071 = vmatprep.subr.mxu0 0.0
        %6072 = vmatpush1.msra.mxu0 0.0
        %6073 = vmatprep.subr.mxu0 0.0
        %6074 = vmatpush1.msra.mxu0 0.0
        %6075 = vmatprep.subr.mxu0 0.0
        %6076 = vmatpush1.msra.mxu0 0.0
        %6077 = vmatprep.subr.mxu0 0.0
        %6078 = vmatpush1.msra.mxu0 0.0
        %6079 = vmatprep.subr.mxu0 0.0
        %6080 = vmatpush1.msra.mxu0 0.0
        %6081 = vmatprep.mubr.f32.mxu0 0.0
        %6082 = vmatmul.mubr.f32.gmra.mrb[0].mxu0 %v5999
        %v6083 = vpop.f32.mrb[0].mxu0
        %v6084 = vadd.f32 %v6016, %v6083
        %v6085 = vpop.f32.mrb[0].mxu0
        %6086 = vdwg.mxu0
        %v6087 = vmax.f32 %v6084, 0.0
        %v6088 = vld [vmem:[#allocation15] sm:$0xff]
        %v6089 = vld [vmem:[#allocation15 + $0x8] sm:$0xff]
        %v6090 = vld [vmem:[#allocation15 + $0x10] sm:$0xff]
        %v6091 = vld [vmem:[#allocation15 + $0x18] sm:$0xff]
        %v6092 = vld [vmem:[%s6] sm:$0x1]
        %v6094 = vsel %vm1444, %v6087, 0
        %6096 = vmatprep.subr.mxu0 0.0
        %6097 = vmatpush1.msra.mxu0 %v6088
        %6098 = vmatprep.subr.mxu0 0.0
        %6099 = vmatpush1.msra.mxu0 %v6089
        %6100 = vmatprep.subr.mxu0 0.0
        %6101 = vmatpush1.msra.mxu0 %v6090
        %6102 = vmatprep.subr.mxu0 0.0
        %6103 = vmatpush1.msra.mxu0 %v6091
        %6104 = vmatprep.subr.mxu0 0.0
        %6105 = vmatpush1.msra.mxu0 0.0
        %6106 = vmatprep.subr.mxu0 0.0
        %6107 = vmatpush1.msra.mxu0 0.0
        %6108 = vmatprep.subr.mxu0 0.0
        %6109 = vmatpush1.msra.mxu0 0.0
        %6110 = vmatprep.subr.mxu0 0.0
        %6111 = vmatpush1.msra.mxu0 0.0
        %6112 = vmatprep.subr.mxu0 0.0
        %6113 = vmatpush1.msra.mxu0 0.0
        %6114 = vmatprep.subr.mxu0 0.0
        %6115 = vmatpush1.msra.mxu0 0.0
        %6116 = vmatprep.subr.mxu0 0.0
        %6117 = vmatpush1.msra.mxu0 0.0
        %6118 = vmatprep.subr.mxu0 0.0
        %6119 = vmatpush1.msra.mxu0 0.0
        %6120 = vmatprep.subr.mxu0 0.0
        %6121 = vmatpush1.msra.mxu0 0.0
        %6122 = vmatprep.subr.mxu0 0.0
        %6123 = vmatpush1.msra.mxu0 0.0
        %6124 = vmatprep.subr.mxu0 0.0
        %6125 = vmatpush1.msra.mxu0 0.0
        %6126 = vmatprep.subr.mxu0 0.0
        %6127 = vmatpush1.msra.mxu0 0.0
        %6128 = vmatprep.subr.mxu0 0.0
        %6129 = vmatpush1.msra.mxu0 0.0
        %6130 = vmatprep.subr.mxu0 0.0
        %6131 = vmatpush1.msra.mxu0 0.0
        %6132 = vmatprep.subr.mxu0 0.0
        %6133 = vmatpush1.msra.mxu0 0.0
        %6134 = vmatprep.subr.mxu0 0.0
        %6135 = vmatpush1.msra.mxu0 0.0
        %6136 = vmatprep.subr.mxu0 0.0
        %6137 = vmatpush1.msra.mxu0 0.0
        %6138 = vmatprep.subr.mxu0 0.0
        %6139 = vmatpush1.msra.mxu0 0.0
        %6140 = vmatprep.subr.mxu0 0.0
        %6141 = vmatpush1.msra.mxu0 0.0
        %6142 = vmatprep.subr.mxu0 0.0
        %6143 = vmatpush1.msra.mxu0 0.0
        %6144 = vmatprep.subr.mxu0 0.0
        %6145 = vmatpush1.msra.mxu0 0.0
        %6146 = vmatprep.subr.mxu0 0.0
        %6147 = vmatpush1.msra.mxu0 0.0
        %6148 = vmatprep.subr.mxu0 0.0
        %6149 = vmatpush1.msra.mxu0 0.0
        %6150 = vmatprep.subr.mxu0 0.0
        %6151 = vmatpush1.msra.mxu0 0.0
        %6152 = vmatprep.subr.mxu0 0.0
        %6153 = vmatpush1.msra.mxu0 0.0
        %6154 = vmatprep.subr.mxu0 0.0
        %6155 = vmatpush1.msra.mxu0 0.0
        %6156 = vmatprep.subr.mxu0 0.0
        %6157 = vmatpush1.msra.mxu0 0.0
        %6158 = vmatprep.subr.mxu0 0.0
        %6159 = vmatpush1.msra.mxu0 0.0
        %6160 = vmatprep.mubr.f32.mxu0 0.0
        %6161 = vmatmul.mubr.f32.gmra.mrb[0].mxu0 %v6094
        %v6162 = vpop.f32.mrb[0].mxu0
        %v6163 = vadd.f32 %v6092, %v6162
        %v6164 = vpop.f32.mrb[0].mxu0
        %6165 = vdwg.mxu0
        %v6166 = vadd.f32 %v6163, 3.0
        %v6167 = vmax.f32 %v6166, 0.0
        %v6168 = vmin.f32 %v6167, 6.0
        %v6169 = vmul.f32 %v6168, 0.16666667
        %v6170 = vlaneseq
        %v6171 = vshrl.u32 %v6170, 7
        %v6172 = vsub.s32 0, %v6171
        %v6173 = vrot.slane %v6169, %v6172
        %v6174 = vld [vmem:[%s1087] sm:$0xff]
        %v6175 = vld [vmem:[%s1087 + $0x8] sm:$0xff]
        %v6176 = vld [vmem:[%s1087 + $0x10] sm:$0xff]
        %v6177 = vld [vmem:[%s1087 + $0x18] sm:$0xff]
        %v6178 = vld [vmem:[%s1087 + $0x20] sm:$0xff]
        %v6179 = vld [vmem:[%s1087 + $0x28] sm:$0xff]
        %v6180 = vld [vmem:[%s1087 + $0x30] sm:$0xff]
        %v6181 = vld [vmem:[%s1087 + $0x38] sm:$0xff]
        %v6182 = vmul.f32 %v6174, %v6173
        %v6183 = vmul.f32 %v6175, %v6173
        %v6184 = vmul.f32 %v6176, %v6173
        %v6185 = vmul.f32 %v6177, %v6173
        %v6186 = vmul.f32 %v6178, %v6173
        %v6187 = vmul.f32 %v6179, %v6173
        %v6188 = vmul.f32 %v6180, %v6173
        %v6189 = vmul.f32 %v6181, %v6173
        %s6190 = scalar_lea.vmem %s557, %s1086 [#allocation6]
        %v6191 = vld [vmem:[%s6190] sm:$0xff]
        %v6192 = vld [vmem:[%s6190 + $0x8] sm:$0xff]
        %v6193 = vld [vmem:[%s6190 + $0x10] sm:$0xff]
        %v6194 = vld [vmem:[%s6190 + $0x18] sm:$0xff]
        %v6195 = vld [vmem:[%s6190 + $0x20] sm:$0xff]
        %v6196 = vld [vmem:[%s6190 + $0x28] sm:$0xff]
        %v6197 = vld [vmem:[%s6190 + $0x30] sm:$0xff]
        %v6198 = vld [vmem:[%s6190 + $0x38] sm:$0xff]
        %v6199 = vadd.f32 %v6182, %v6191
        %v6200 = vadd.f32 %v6183, %v6192
        %v6201 = vadd.f32 %v6184, %v6193
        %v6202 = vadd.f32 %v6185, %v6194
        %v6203 = vadd.f32 %v6186, %v6195
        %v6204 = vadd.f32 %v6187, %v6196
        %v6205 = vadd.f32 %v6188, %v6197
        %v6206 = vadd.f32 %v6189, %v6198
        %s6207 = scalar_lea.vmem %s639, %s1086 [#allocation23]
        %6208 = vst [vmem:[%s6207] sm:$0xff] %v6199
        %6209 = vst [vmem:[%s6207 + $0x8] sm:$0xff] %v6200
        %6210 = vst [vmem:[%s6207 + $0x10] sm:$0xff] %v6201
        %6211 = vst [vmem:[%s6207 + $0x18] sm:$0xff] %v6202
        %6212 = vst [vmem:[%s6207 + $0x20] sm:$0xff] %v6203
        %6213 = vst [vmem:[%s6207 + $0x28] sm:$0xff] %v6204
        %6214 = vst [vmem:[%s6207 + $0x30] sm:$0xff] %v6205
        %6215 = vst [vmem:[%s6207 + $0x38] sm:$0xff] %v6206
        %v6216 = vld [vmem:[%s1327] sm:$0xff]
        %v6217 = vld [vmem:[%s1327 + $0x8] sm:$0xff]
        %v6218 = vld [vmem:[%s1327 + $0x10] sm:$0xff]
        %v6219 = vld [vmem:[%s1327 + $0x18] sm:$0xff]
        %v6220 = vld [vmem:[%s1327 + $0x20] sm:$0xff]
        %v6221 = vld [vmem:[%s1327 + $0x28] sm:$0xff]
        %v6222 = vld [vmem:[%s1327 + $0x30] sm:$0xff]
        %v6223 = vld [vmem:[%s1327 + $0x38] sm:$0xff]
        %v6224 = vmul.f32 %v6216, %v6173
        %v6225 = vmul.f32 %v6217, %v6173
        %v6226 = vmul.f32 %v6218, %v6173
        %v6227 = vmul.f32 %v6219, %v6173
        %v6228 = vmul.f32 %v6220, %v6173
        %v6229 = vmul.f32 %v6221, %v6173
        %v6230 = vmul.f32 %v6222, %v6173
        %v6231 = vmul.f32 %v6223, %v6173
        %s6232 = scalar_lea.vmem %s557, %s1326 [#allocation6]
        %v6233 = vld [vmem:[%s6232] sm:$0xff]
        %v6234 = vld [vmem:[%s6232 + $0x8] sm:$0xff]
        %v6235 = vld [vmem:[%s6232 + $0x10] sm:$0xff]
        %v6236 = vld [vmem:[%s6232 + $0x18] sm:$0xff]
        %v6237 = vld [vmem:[%s6232 + $0x20] sm:$0xff]
        %v6238 = vld [vmem:[%s6232 + $0x28] sm:$0xff]
        %v6239 = vld [vmem:[%s6232 + $0x30] sm:$0xff]
        %v6240 = vld [vmem:[%s6232 + $0x38] sm:$0xff]
        %v6241 = vadd.f32 %v6224, %v6233
        %v6242 = vadd.f32 %v6225, %v6234
        %v6243 = vadd.f32 %v6226, %v6235
        %v6244 = vadd.f32 %v6227, %v6236
        %v6245 = vadd.f32 %v6228, %v6237
        %v6246 = vadd.f32 %v6229, %v6238
        %v6247 = vadd.f32 %v6230, %v6239
        %v6248 = vadd.f32 %v6231, %v6240
        %s6249 = scalar_lea.vmem %s639, %s1326 [#allocation23]
        %6250 = vst [vmem:[%s6249] sm:$0xff] %v6241
        %6251 = vst [vmem:[%s6249 + $0x8] sm:$0xff] %v6242
        %6252 = vst [vmem:[%s6249 + $0x10] sm:$0xff] %v6243
        %6253 = vst [vmem:[%s6249 + $0x18] sm:$0xff] %v6244
        %6254 = vst [vmem:[%s6249 + $0x20] sm:$0xff] %v6245
        %6255 = vst [vmem:[%s6249 + $0x28] sm:$0xff] %v6246
        %6256 = vst [vmem:[%s6249 + $0x30] sm:$0xff] %v6247
        %6257 = vst [vmem:[%s6249 + $0x38] sm:$0xff] %v6248
        %s6258 = sand.u32 %s365, 1
        %s6259 = scalar_lea.sflag [#allocation8], %s6258
        %s6260 = sand.u32 %s365, 1
        %s6261 = smul.addr %s6260, 128
        %s6262 = scalar_lea.vmem [#allocation23], %s6261
        // Predicated region
        $region121: #{_lambda_.1} parent=79 // pred_check
          %p6263 = pneg %p375
        $region122: #{_lambda_.1} parent=79 // pred_check_branch
          %6265 = sbr.rel (%p6263) target = $region124
        $region123: #{_lambda_.1} parent=79 // pred_region
          %s6267 = ssub.s32 2048, 2048
          %6268 = vsyncadd %s6259, %s6267
          %s6269 = smul.addr %s37, 16
          %s6270 = smul.addr %s6269, 128
          %s6271 = scalar_lea.hbm %s15, %s6270
          %s6272 = sshll.u32 %s6262, 4
          %s6273 = int_to_ptr.vmem [resolvable:$true] %s6272
          %6278 = dma.vmem_to_hbm [thread:$0]  %s6273, 2048, %s6271, %s6259, 128, 128, 8
        $region124: #{_lambda_.1} parent=79 // pred_fallthru
          _
      $region80: #{_lambda_.1} parent=5 // pred_fallthru
        _
      %p6279 = scmp.le.s32.totalorder 2, %s32
      // Predicated region
      $region125: #{_lambda_.1} parent=5 // pred_check
        %p6280 = pneg %p6279
      $region126: #{_lambda_.1} parent=5 // pred_check_branch
        %6282 = sbr.rel (%p6280) target = $region128
      $region127: #{_lambda_.1} parent=5 // pred_region
        %s6283 = ssub.s32 %s32, 2
        // Predicated region
        $region129: #{_lambda_.1} parent=127 // pred_check
          %p6284 = pneg %p381
        $region130: #{_lambda_.1} parent=127 // pred_check_branch
          %6286 = sbr.rel (%p6284) target = $region132
        $region131: #{_lambda_.1} parent=127 // pred_region
          %s6287 = sand.u32 %s366, 1
          %s6288 = scalar_lea.sflag [#allocation8], %s6287
          %s6289 = sand.u32 %s366, 1
          %s6290 = smul.addr %s6289, 128
          %s6291 = scalar_lea.vmem [#allocation23], %s6290
          %6292 = dma.done %s6288, 2048
        $region132: #{_lambda_.1} parent=127 // pred_fallthru
          _
      $region128: #{_lambda_.1} parent=5 // pred_fallthru
        _
    $region6: #{_lambda_.1} parent=1 // loop_footer
      %s36 = sadd.s32 1, %s32
    $region7: #{_lambda_.1} parent=1 // loop_footer_branch
      %31 = sbr.rel target = $region3
    $region8: #{_lambda_.1} parent=1 // loop_exit
      _
    %6293 = vsyncpa [#allocation7], 1
    %s6294 = scalar_lea.sflag [#allocation7], 1
    %6295 = vsyncpa %s6294, 1
    %6296 = vsyncpa [#allocation10], 1
    %6297 = vsyncpa [#allocation13], 1
    %6298 = vsyncpa [#allocation16], 1
    %6299 = vsyncpa [#allocation19], 1
    %6300 = vsyncpa [#allocation22], 1
    %6301 = vsyncpa [#allocation8], 1
    %s6302 = scalar_lea.sflag [#allocation8], 1
    %6303 = vsyncpa %s6302, 1

</llo_original>
